<compile_context>
chip_gen: v6e
topology: v6e:2x2x1
jax: 0.10.0
libtpu: 0.0.40
codegen_flags: <defaults>
</compile_context>

<pallas_src>
import functools

import jax
import jax.numpy as jnp
from jax import lax
from jax.experimental import pallas as pl
from jax.experimental.pallas import tpu as pltpu

EPS = 1e-5            # BatchNorm eps (PyTorch default)
NEG_SLOPE = 0.01      # LeakyReLU negative_slope (PyTorch default)
VMEM_LIMIT = 48 * 1024 * 1024   # > scoped default on v5e/v6e, < v7x 64 MiB physical


# --------------------------------------------------------------------------
# Pallas kernel 1: direct 3-D conv of one (n, d_out) output slab.
#   refs = [x_ref_0 .. x_ref_{n_d-1}, w_ref, b_ref, o_ref, (stats_ref)]
#     x_ref_i   : (1, 1, Hp, Wp, Cin)  padded slab at depth d + d_offs[i] (bf16)
#     w_ref     : (n_taps, Cin, Cout)  taps ordered (d, h, w) row-major   (bf16)
#     b_ref     : (1, Cout)            bias                               (f32)
#     o_ref     : (1, 1, H, W, Cout)   output slab
#     stats_ref : (1, 1, 2, Cout)      per-slab (sum, sum_of_squares)     (f32)
# --------------------------------------------------------------------------
def _conv_taps_kernel(*refs, n_d, h_offs, w_offs, compute_stats):
    x_refs = refs[:n_d]
    w_ref = refs[n_d]
    b_ref = refs[n_d + 1]
    o_ref = refs[n_d + 2]

    H, W, Cout = o_ref.shape[2], o_ref.shape[3], o_ref.shape[4]
    bias = b_ref[...]                                       # (1, Cout) f32

    def h_body(h, carry):
        s1, s2 = carry
        acc = jnp.zeros((W, Cout), jnp.float32)
        t = 0
        for x_ref in x_refs:                                # depth taps (static)
            for oh in h_offs:                               # height taps (static)
                row = x_ref[0, 0, h + oh]                   # (Wp, Cin) bf16
                for ow in w_offs:                           # width taps (static)
                    acc += jnp.dot(row[ow:ow + W, :], w_ref[t],
                                   preferred_element_type=jnp.float32)
                    t += 1
        acc = acc + bias                                    # (W, Cout) f32
        o_ref[0, 0, h] = acc.astype(o_ref.dtype)
        if compute_stats:
            s1 = s1 + jnp.sum(acc, axis=0, keepdims=True)
            s2 = s2 + jnp.sum(acc * acc, axis=0, keepdims=True)
        return s1, s2

    init = (jnp.zeros((1, Cout), jnp.float32),
            jnp.zeros((1, Cout), jnp.float32))
    s1, s2 = lax.fori_loop(0, H, h_body, init)

    if compute_stats:
        stats_ref = refs[n_d + 3]
        stats_ref[0, 0, 0:1, :] = s1
        stats_ref[0, 0, 1:2, :] = s2


def _shifted_depth_map(off):
    def index_map(n, d):
        return (n, d + off, 0, 0, 0)
    return index_map


def _conv_taps(xp, w_taps, b, d_offs, h_offs, w_offs, out_spatial, out_dtype,
               compute_stats=False):
    """Direct conv with arbitrary per-dimension tap offsets (no HBM im2col).

    xp          : (N, Dp, Hp, Wp, Cin) padded NDHWC input (bf16)
    w_taps      : (n_taps, Cin, Cout)  taps in (d, h, w) row-major offset order
    b           : (Cout,)              bias (f32)
    out_spatial : (Dout, H, W)
    Returns y (N, Dout, H, W, Cout) [, stats (N, Dout, 2, Cout)]
    """
    N, Dp, Hp, Wp, Cin = xp.shape
    Dout, H, W = out_spatial
    n_d = len(d_offs)
    n_taps = n_d * len(h_offs) * len(w_offs)
    Cout = w_taps.shape[-1]
    assert w_taps.shape[0] == n_taps

    w_bf = w_taps.astype(jnp.bfloat16)
    b_row = b.reshape(1, Cout).astype(jnp.float32)

    kernel = functools.partial(
        _conv_taps_kernel, n_d=n_d, h_offs=tuple(h_offs), w_offs=tuple(w_offs),
        compute_stats=compute_stats)

    # The same padded HBM array is passed n_d times with depth-shifted index
    # maps -> ~n_d x input reads total (vs. 27x with a materialized im2col).
    x_specs = [pl.BlockSpec((1, 1, Hp, Wp, Cin), _shifted_depth_map(off))
               for off in d_offs]
    in_specs = x_specs + [
        pl.BlockSpec((n_taps, Cin, Cout), lambda n, d: (0, 0, 0)),
        pl.BlockSpec((1, Cout), lambda n, d: (0, 0)),
    ]

    y_sds = jax.ShapeDtypeStruct((N, Dout, H, W, Cout), out_dtype)
    y_spec = pl.BlockSpec((1, 1, H, W, Cout), lambda n, d: (n, d, 0, 0, 0))

    if compute_stats:
        out_shape = (y_sds,
                     jax.ShapeDtypeStruct((N, Dout, 2, Cout), jnp.float32))
        out_specs = (y_spec,
                     pl.BlockSpec((1, 1, 2, Cout), lambda n, d: (n, d, 0, 0)))
    else:
        out_shape = y_sds
        out_specs = y_spec

    return pl.pallas_call(
        kernel,
        grid=(N, Dout),
        in_specs=in_specs,
        out_specs=out_specs,
        out_shape=out_shape,
        compiler_params=pltpu.CompilerParams(
            dimension_semantics=("parallel", "parallel"),
            vmem_limit_bytes=VMEM_LIMIT),
    )(*([xp] * n_d), w_bf, b_row)


def conv3d_same(x, w, b):
    """Conv3d(kernel=3, padding=1, stride=1) + fused BN partial statistics.
    x : (N, D, H, W, Cin) bf16 ; w : (3, 3, 3, Cin, Cout) ; b : (Cout,)."""
    N, D, H, W, Cin = x.shape
    Cout = w.shape[-1]
    xp = jnp.pad(x, ((0, 0), (1, 1), (1, 1), (1, 1), (0, 0)))
    w_taps = w.reshape(27, Cin, Cout)                 # (kd, kh, kw) row-major
    return _conv_taps(xp, w_taps, b, (0, 1, 2), (0, 1, 2), (0, 1, 2),
                      (D, H, W), jnp.bfloat16, compute_stats=True)


# stride-2, K=3, padding=1, output_padding=1 transposed conv:
#   per output parity, per dimension: (input offsets), (flipped-kernel indices)
_PARITY_OFFS = {0: (0,), 1: (0, 1)}
_PARITY_KIDX = {0: (1,), 1: (0, 2)}


def conv_transpose3d(x, w_pt, b):
    """ConvTranspose3d(kernel=3, stride=2, padding=1, output_padding=1) via
    sub-pixel decomposition: 8 output-parity convs on the *undilated* input.
    x : (N, D, H, W, Cin) bf16 ; w_pt : PyTorch layout (Cin, Cout, 3, 3, 3)."""
    N, D, H, W, Cin = x.shape
    Cout = w_pt.shape[1]
    # equivalent forward-conv weight: flip spatial dims -> (kd, kh, kw, Cin, Cout)
    w_eq = jnp.transpose(jnp.flip(w_pt, axis=(2, 3, 4)), (2, 3, 4, 0, 1))
    # one trailing zero per spatial dim covers the "+1" taps / output_padding
    xp = jnp.pad(x, ((0, 0), (0, 1), (0, 1), (0, 1), (0, 0)))

    outs = []
    for pd in (0, 1):
        for ph in (0, 1):
            for pw in (0, 1):
                dk, hk, wk = _PARITY_KIDX[pd], _PARITY_KIDX[ph], _PARITY_KIDX[pw]
                wt = w_eq[jnp.array(dk)][:, jnp.array(hk)][:, :, jnp.array(wk)]
                wt = wt.reshape(len(dk) * len(hk) * len(wk), Cin, Cout)
                outs.append(_conv_taps(
                    xp, wt, b,
                    _PARITY_OFFS[pd], _PARITY_OFFS[ph], _PARITY_OFFS[pw],
                    (D, H, W), jnp.bfloat16, compute_stats=False))
    # interleave parities: y[:, 2d+pd, 2h+ph, 2w+pw, :] = outs[(pd, ph, pw)]
    o = jnp.stack(outs, axis=0).reshape(2, 2, 2, N, D, H, W, Cout)
    o = jnp.transpose(o, (3, 4, 0, 5, 1, 6, 2, 7))
    return o.reshape(N, 2 * D, 2 * H, 2 * W, Cout)


# --------------------------------------------------------------------------
# Pallas kernel 2: BatchNorm normalize (precomputed scale/shift) + LeakyReLU,
# lane-dense (rows, W*C) view, row-tiled, "parallel".
# --------------------------------------------------------------------------
def _affine_lrelu_kernel(x_ref, s_ref, t_ref, o_ref):
    x = x_ref[...].astype(jnp.float32)
    y = x * s_ref[...] + t_ref[...]
    o_ref[...] = jnp.where(y >= 0.0, y, NEG_SLOPE * y).astype(o_ref.dtype)


def _pick_row_tile(rows, max_tile=1024):
    for cand in (1024, 512, 256, 128, 64, 32, 16):
        if cand <= max_tile and cand <= rows and rows % cand == 0:
            return cand
    return rows


def bn_lrelu(y, stats, gamma, beta, out_dtype):
    """Training-mode BatchNorm3d (batch stats, biased var) + LeakyReLU.
    y : (N, D, H, W, C) ; stats : (N, D, 2, C) per-slab (sum, sumsq) partials."""
    N, D, H, W, C = y.shape
    R = N * D * H * W

    tot = jnp.sum(stats, axis=(0, 1))                        # (2, C) f32, tiny
    mean = tot[0] / R
    var = tot[1] / R - mean * mean                           # biased variance
    scale = gamma.astype(jnp.float32) * lax.rsqrt(var + EPS)
    shift = beta.astype(jnp.float32) - mean * scale

    rows, lastd = N * D * H, W * C                           # lane-dense view
    y2 = y.reshape(rows, lastd)
    s_row = jnp.tile(scale, (W,)).reshape(1, lastd)
    t_row = jnp.tile(shift, (W,)).reshape(1, lastd)

    tr = _pick_row_tile(rows)
    out = pl.pallas_call(
        _affine_lrelu_kernel,
        out_shape=jax.ShapeDtypeStruct((rows, lastd), out_dtype),
        grid=(rows // tr,),
        in_specs=[pl.BlockSpec((tr, lastd), lambda i: (i, 0)),
                  pl.BlockSpec((1, lastd), lambda i: (0, 0)),
                  pl.BlockSpec((1, lastd), lambda i: (0, 0))],
        out_specs=pl.BlockSpec((tr, lastd), lambda i: (i, 0)),
        compiler_params=pltpu.CompilerParams(
            dimension_semantics=("parallel",),
            vmem_limit_bytes=VMEM_LIMIT),
    )(y2, s_row, t_row)
    return out.reshape(N, D, H, W, C)


# --------------------------------------------------------------------------
# DecodeBlock forward
# --------------------------------------------------------------------------
def decode_block_forward(x_ncdhw, params):
    # NCDHW (PyTorch) -> NDHWC; bf16 activations for the MXU, f32 accumulation.
    x = jnp.transpose(x_ncdhw, (0, 2, 3, 4, 1)).astype(jnp.bfloat16)

    y = conv_transpose3d(x, params["w_up"], params["b_up"])           # upconv
    y1, st1 = conv3d_same(y, params["w1"], params["b1"])              # conv1 (+BN1 stats)
    y1 = bn_lrelu(y1, st1, params["g1"], params["beta1"], jnp.bfloat16)
    y2, st2 = conv3d_same(y1, params["w2"], params["b2"])             # conv2 (+BN2 stats)
    y2 = bn_lrelu(y2, st2, params["g2"], params["beta2"], jnp.float32)

    # NDHWC -> NCDHW
    return jnp.transpose(y2, (0, 4, 1, 2, 3))


def init_params(key, in_channels, mid_channel, out_channels, k=3):
    ks = jax.random.split(key, 10)
    f32 = jnp.float32
    return {
        # ConvTranspose3d weight, PyTorch layout (Cin, Cout, K, K, K)
        "w_up": 0.1 * jax.random.normal(ks[0], (in_channels, in_channels, k, k, k), f32),
        "b_up": 0.05 * jax.random.normal(ks[1], (in_channels,), f32),
        # Conv3d weights in kernel layout (K, K, K, Cin, Cout)
        "w1": 0.1 * jax.random.normal(ks[2], (k, k, k, in_channels, mid_channel), f32),
        "b1": 0.05 * jax.random.normal(ks[3], (mid_channel,), f32),
        "g1": 1.0 + 0.1 * jax.random.normal(ks[4], (mid_channel,), f32),
        "beta1": 0.1 * jax.random.normal(ks[5], (mid_channel,), f32),
        "w2": 0.1 * jax.random.normal(ks[6], (k, k, k, mid_channel, out_channels), f32),
        "b2": 0.05 * jax.random.normal(ks[7], (out_channels,), f32),
        "g2": 1.0 + 0.1 * jax.random.normal(ks[8], (out_channels,), f32),
        "beta2": 0.1 * jax.random.normal(ks[9], (out_channels,), f32),
    }


if __name__ == "__main__":
    in_channels, mid_channel, out_channels = 4, 8, 4
    N, D, H, W = 2, 4, 4, 4

    key = jax.random.PRNGKey(0)
    k_x, k_p = jax.random.split(key)
    x = jax.random.normal(k_x, (N, in_channels, D, H, W), jnp.float32)  # NCDHW
    params = init_params(k_p, in_channels, mid_channel, out_channels)

    out = jax.jit(decode_block_forward)(x, params)
    out = jax.block_until_ready(out)

    expected_shape = (N, out_channels, 2 * D, 2 * H, 2 * W)
    assert out.shape == expected_shape, (out.shape, expected_shape)
    assert bool(jnp.all(jnp.isfinite(out)))
    print("KERNEL_OK")
</pallas_src>

<mosaic_0001>
module attributes {stable_mosaic.version = 11 : i64} {
  func.func @_conv_taps_kernel(%arg0: i32, %arg1: i32, %arg2: memref<1x1x5x5x4xbf16, #tpu.memory_space<vmem>>, %arg3: memref<2x4x4xbf16, #tpu.memory_space<vmem>>, %arg4: memref<1x4xf32, #tpu.memory_space<vmem>>, %arg5: memref<1x1x4x4x4xbf16, #tpu.memory_space<vmem>>) attributes {dimension_semantics = [#tpu.dimension_semantics<parallel>, #tpu.dimension_semantics<parallel>], iteration_bounds = array<i64: 2, 4>, scalar_prefetch = 0 : i64, scratch_operands = 0 : i64, tpu.core_type = #tpu.core_type<tc>, window_params = [{transform_indices = @transform_0, window_bounds = array<i64: 1, 1, 5, 5, 4>}, {pipeline_mode = #tpu.pipeline_mode<synchronous>, transform_indices = @transform_1, window_bounds = array<i64: 2, 4, 4>}, {pipeline_mode = #tpu.pipeline_mode<synchronous>, transform_indices = @transform_2, window_bounds = array<i64: 1, 4>}, {transform_indices = @transform_3, window_bounds = array<i64: 1, 1, 4, 4, 4>}]} {
    %c0 = arith.constant 0 : index
    %c0_0 = arith.constant 0 : index
    %0 = vector.load %arg4[%c0, %c0_0] : memref<1x4xf32, #tpu.memory_space<vmem>>, vector<1x4xf32>
    %c0_i32 = arith.constant 0 : i32
    %c4_i32 = arith.constant 4 : i32
    %1 = arith.addi %c0_i32, %c4_i32 : i32
    %c1_i32 = arith.constant 1 : i32
    scf.for %arg6 = %c0_i32 to %1 step %c1_i32  : i32 {
      %cst = arith.constant 0.000000e+00 : f32
      %2 = vector.broadcast %cst : f32 to vector<4x4xf32>
      %c0_i32_2 = arith.constant 0 : i32
      %3 = arith.addi %arg6, %c0_i32_2 : i32
      %c0_3 = arith.constant 0 : index
      %c0_4 = arith.constant 0 : index
      %4 = arith.index_cast %3 : i32 to index
      %c0_5 = arith.constant 0 : index
      %c0_6 = arith.constant 0 : index
      %5 = vector.load %arg2[%c0_3, %c0_4, %4, %c0_5, %c0_6] : memref<1x1x5x5x4xbf16, #tpu.memory_space<vmem>>, vector<1x1x1x5x4xbf16>
      %6 = vector.shape_cast %5 : vector<1x1x1x5x4xbf16> to vector<5x4xbf16>
      %7 = vector.extract_strided_slice %6 {offsets = [0, 0], sizes = [4, 4], strides = [1, 1]} : vector<5x4xbf16> to vector<4x4xbf16>
      %c0_7 = arith.constant 0 : index
      %c0_8 = arith.constant 0 : index
      %c0_9 = arith.constant 0 : index
      %8 = vector.load %arg3[%c0_7, %c0_8, %c0_9] : memref<2x4x4xbf16, #tpu.memory_space<vmem>>, vector<1x4x4xbf16>
      %9 = vector.shape_cast %8 : vector<1x4x4xbf16> to vector<4x4xbf16>
      %cst_10 = arith.constant dense<0.000000e+00> : vector<4x4xf32>
      %10 = tpu.matmul %7, %9, %cst_10 {dimension_numbers = #tpu.dot_dimension_numbers<[1], [0], [0], [1], [0, 0, 1, 1], [], []>} : vector<4x4xbf16>, vector<4x4xbf16>, vector<4x4xf32> -> vector<4x4xf32>
      %11 = arith.addf %2, %10 : vector<4x4xf32>
      %12 = vector.extract_strided_slice %6 {offsets = [1, 0], sizes = [4, 4], strides = [1, 1]} : vector<5x4xbf16> to vector<4x4xbf16>
      %c1 = arith.constant 1 : index
      %c0_11 = arith.constant 0 : index
      %c0_12 = arith.constant 0 : index
      %13 = vector.load %arg3[%c1, %c0_11, %c0_12] : memref<2x4x4xbf16, #tpu.memory_space<vmem>>, vector<1x4x4xbf16>
      %14 = vector.shape_cast %13 : vector<1x4x4xbf16> to vector<4x4xbf16>
      %cst_13 = arith.constant dense<0.000000e+00> : vector<4x4xf32>
      %15 = tpu.matmul %12, %14, %cst_13 {dimension_numbers = #tpu.dot_dimension_numbers<[1], [0], [0], [1], [0, 0, 1, 1], [], []>} : vector<4x4xbf16>, vector<4x4xbf16>, vector<4x4xf32> -> vector<4x4xf32>
      %16 = arith.addf %11, %15 : vector<4x4xf32>
      %17 = vector.broadcast %0 : vector<1x4xf32> to vector<4x4xf32>
      %18 = arith.addf %16, %17 : vector<4x4xf32>
      %19 = arith.truncf %18 : vector<4x4xf32> to vector<4x4xbf16>
      %c0_14 = arith.constant 0 : index
      %c0_15 = arith.constant 0 : index
      %20 = arith.index_cast %arg6 : i32 to index
      %c0_16 = arith.constant 0 : index
      %c0_17 = arith.constant 0 : index
      %21 = vector.load %arg5[%c0_14, %c0_15, %20, %c0_16, %c0_17] : memref<1x1x4x4x4xbf16, #tpu.memory_space<vmem>>, vector<1x1x1x4x4xbf16>
      %22 = vector.shape_cast %21 : vector<1x1x1x4x4xbf16> to vector<4x4xbf16>
      %23 = vector.shape_cast %19 : vector<4x4xbf16> to vector<1x1x1x4x4xbf16>
      tpu.vector_store %arg5[%c0_14, %c0_15, %20, %c0_16, %c0_17], %23 {strides = array<i32>} : memref<1x1x4x4x4xbf16, #tpu.memory_space<vmem>>, vector<1x1x1x4x4xbf16>,
    }
    %c4_i32_1 = arith.constant 4 : i32
    return
  }
  func.func @transform_0(%arg0: i32, %arg1: i32) -> (i32, i32, i32, i32, i32) {
    %c0_i32 = arith.constant 0 : i32
    %0 = arith.addi %arg1, %c0_i32 : i32
    %c0_i32_0 = arith.constant 0 : i32
    %c0_i32_1 = arith.constant 0 : i32
    %c0_i32_2 = arith.constant 0 : i32
    %c0_i32_3 = arith.constant 0 : i32
    return %arg0, %0, %c0_i32_0, %c0_i32_1, %c0_i32_2 : i32, i32, i32, i32, i32
  }
  func.func @transform_1(%arg0: i32, %arg1: i32) -> (i32, i32, i32) {
    %c0_i32 = arith.constant 0 : i32
    %c0_i32_0 = arith.constant 0 : i32
    %c0_i32_1 = arith.constant 0 : i32
    %c0_i32_2 = arith.constant 0 : i32
    return %c0_i32, %c0_i32_0, %c0_i32_1 : i32, i32, i32
  }
  func.func @transform_2(%arg0: i32, %arg1: i32) -> (i32, i32) {
    %c0_i32 = arith.constant 0 : i32
    %c0_i32_0 = arith.constant 0 : i32
    %c0_i32_1 = arith.constant 0 : i32
    return %c0_i32, %c0_i32_0 : i32, i32
  }
  func.func @transform_3(%arg0: i32, %arg1: i32) -> (i32, i32, i32, i32, i32) {
    %c0_i32 = arith.constant 0 : i32
    %c0_i32_0 = arith.constant 0 : i32
    %c0_i32_1 = arith.constant 0 : i32
    %c0_i32_2 = arith.constant 0 : i32
    return %arg0, %arg1, %c0_i32, %c0_i32_0, %c0_i32_1 : i32, i32, i32, i32, i32
  }
}

module attributes {stable_mosaic.version = 11 : i64} {
  func.func @_conv_taps_kernel(%arg0: i32, %arg1: i32, %arg2: memref<1x1x5x5x4xbf16, #tpu.memory_space<vmem>>, %arg3: memref<1x4x4xbf16, #tpu.memory_space<vmem>>, %arg4: memref<1x4xf32, #tpu.memory_space<vmem>>, %arg5: memref<1x1x4x4x4xbf16, #tpu.memory_space<vmem>>) attributes {dimension_semantics = [#tpu.dimension_semantics<parallel>, #tpu.dimension_semantics<parallel>], iteration_bounds = array<i64: 2, 4>, scalar_prefetch = 0 : i64, scratch_operands = 0 : i64, tpu.core_type = #tpu.core_type<tc>, window_params = [{transform_indices = @transform_0, window_bounds = array<i64: 1, 1, 5, 5, 4>}, {pipeline_mode = #tpu.pipeline_mode<synchronous>, transform_indices = @transform_1, window_bounds = array<i64: 1, 4, 4>}, {pipeline_mode = #tpu.pipeline_mode<synchronous>, transform_indices = @transform_2, window_bounds = array<i64: 1, 4>}, {transform_indices = @transform_3, window_bounds = array<i64: 1, 1, 4, 4, 4>}]} {
    %c0 = arith.constant 0 : index
    %c0_0 = arith.constant 0 : index
    %0 = vector.load %arg4[%c0, %c0_0] : memref<1x4xf32, #tpu.memory_space<vmem>>, vector<1x4xf32>
    %c0_i32 = arith.constant 0 : i32
    %c4_i32 = arith.constant 4 : i32
    %1 = arith.addi %c0_i32, %c4_i32 : i32
    %c1_i32 = arith.constant 1 : i32
    scf.for %arg6 = %c0_i32 to %1 step %c1_i32  : i32 {
      %cst = arith.constant 0.000000e+00 : f32
      %2 = vector.broadcast %cst : f32 to vector<4x4xf32>
      %c0_i32_2 = arith.constant 0 : i32
      %3 = arith.addi %arg6, %c0_i32_2 : i32
      %c0_3 = arith.constant 0 : index
      %c0_4 = arith.constant 0 : index
      %4 = arith.index_cast %3 : i32 to index
      %c0_5 = arith.constant 0 : index
      %c0_6 = arith.constant 0 : index
      %5 = vector.load %arg2[%c0_3, %c0_4, %4, %c0_5, %c0_6] : memref<1x1x5x5x4xbf16, #tpu.memory_space<vmem>>, vector<1x1x1x5x4xbf16>
      %6 = vector.shape_cast %5 : vector<1x1x1x5x4xbf16> to vector<5x4xbf16>
      %7 = vector.extract_strided_slice %6 {offsets = [0, 0], sizes = [4, 4], strides = [1, 1]} : vector<5x4xbf16> to vector<4x4xbf16>
      %c0_7 = arith.constant 0 : index
      %c0_8 = arith.constant 0 : index
      %c0_9 = arith.constant 0 : index
      %8 = vector.load %arg3[%c0_7, %c0_8, %c0_9] : memref<1x4x4xbf16, #tpu.memory_space<vmem>>, vector<1x4x4xbf16>
      %9 = vector.shape_cast %8 : vector<1x4x4xbf16> to vector<4x4xbf16>
      %cst_10 = arith.constant dense<0.000000e+00> : vector<4x4xf32>
      %10 = tpu.matmul %7, %9, %cst_10 {dimension_numbers = #tpu.dot_dimension_numbers<[1], [0], [0], [1], [0, 0, 1, 1], [], []>} : vector<4x4xbf16>, vector<4x4xbf16>, vector<4x4xf32> -> vector<4x4xf32>
      %11 = arith.addf %2, %10 : vector<4x4xf32>
      %12 = vector.broadcast %0 : vector<1x4xf32> to vector<4x4xf32>
      %13 = arith.addf %11, %12 : vector<4x4xf32>
      %14 = arith.truncf %13 : vector<4x4xf32> to vector<4x4xbf16>
      %c0_11 = arith.constant 0 : index
      %c0_12 = arith.constant 0 : index
      %15 = arith.index_cast %arg6 : i32 to index
      %c0_13 = arith.constant 0 : index
      %c0_14 = arith.constant 0 : index
      %16 = vector.load %arg5[%c0_11, %c0_12, %15, %c0_13, %c0_14] : memref<1x1x4x4x4xbf16, #tpu.memory_space<vmem>>, vector<1x1x1x4x4xbf16>
      %17 = vector.shape_cast %16 : vector<1x1x1x4x4xbf16> to vector<4x4xbf16>
      %18 = vector.shape_cast %14 : vector<4x4xbf16> to vector<1x1x1x4x4xbf16>
      tpu.vector_store %arg5[%c0_11, %c0_12, %15, %c0_13, %c0_14], %18 {strides = array<i32>} : memref<1x1x4x4x4xbf16, #tpu.memory_space<vmem>>, vector<1x1x1x4x4xbf16>,
    }
    %c4_i32_1 = arith.constant 4 : i32
    return
  }
  func.func @transform_0(%arg0: i32, %arg1: i32) -> (i32, i32, i32, i32, i32) {
    %c0_i32 = arith.constant 0 : i32
    %0 = arith.addi %arg1, %c0_i32 : i32
    %c0_i32_0 = arith.constant 0 : i32
    %c0_i32_1 = arith.constant 0 : i32
    %c0_i32_2 = arith.constant 0 : i32
    %c0_i32_3 = arith.constant 0 : i32
    return %arg0, %0, %c0_i32_0, %c0_i32_1, %c0_i32_2 : i32, i32, i32, i32, i32
  }
  func.func @transform_1(%arg0: i32, %arg1: i32) -> (i32, i32, i32) {
    %c0_i32 = arith.constant 0 : i32
    %c0_i32_0 = arith.constant 0 : i32
    %c0_i32_1 = arith.constant 0 : i32
    %c0_i32_2 = arith.constant 0 : i32
    return %c0_i32, %c0_i32_0, %c0_i32_1 : i32, i32, i32
  }
  func.func @transform_2(%arg0: i32, %arg1: i32) -> (i32, i32) {
    %c0_i32 = arith.constant 0 : i32
    %c0_i32_0 = arith.constant 0 : i32
    %c0_i32_1 = arith.constant 0 : i32
    return %c0_i32, %c0_i32_0 : i32, i32
  }
  func.func @transform_3(%arg0: i32, %arg1: i32) -> (i32, i32, i32, i32, i32) {
    %c0_i32 = arith.constant 0 : i32
    %c0_i32_0 = arith.constant 0 : i32
    %c0_i32_1 = arith.constant 0 : i32
    %c0_i32_2 = arith.constant 0 : i32
    return %arg0, %arg1, %c0_i32, %c0_i32_0, %c0_i32_1 : i32, i32, i32, i32, i32
  }
}

module attributes {stable_mosaic.version = 11 : i64} {
  func.func @_conv_taps_kernel(%arg0: i32, %arg1: i32, %arg2: memref<1x1x5x5x4xbf16, #tpu.memory_space<vmem>>, %arg3: memref<2x4x4xbf16, #tpu.memory_space<vmem>>, %arg4: memref<1x4xf32, #tpu.memory_space<vmem>>, %arg5: memref<1x1x4x4x4xbf16, #tpu.memory_space<vmem>>) attributes {dimension_semantics = [#tpu.dimension_semantics<parallel>, #tpu.dimension_semantics<parallel>], iteration_bounds = array<i64: 2, 4>, scalar_prefetch = 0 : i64, scratch_operands = 0 : i64, tpu.core_type = #tpu.core_type<tc>, window_params = [{transform_indices = @transform_0, window_bounds = array<i64: 1, 1, 5, 5, 4>}, {pipeline_mode = #tpu.pipeline_mode<synchronous>, transform_indices = @transform_1, window_bounds = array<i64: 2, 4, 4>}, {pipeline_mode = #tpu.pipeline_mode<synchronous>, transform_indices = @transform_2, window_bounds = array<i64: 1, 4>}, {transform_indices = @transform_3, window_bounds = array<i64: 1, 1, 4, 4, 4>}]} {
    %c0 = arith.constant 0 : index
    %c0_0 = arith.constant 0 : index
    %0 = vector.load %arg4[%c0, %c0_0] : memref<1x4xf32, #tpu.memory_space<vmem>>, vector<1x4xf32>
    %c0_i32 = arith.constant 0 : i32
    %c4_i32 = arith.constant 4 : i32
    %1 = arith.addi %c0_i32, %c4_i32 : i32
    %c1_i32 = arith.constant 1 : i32
    scf.for %arg6 = %c0_i32 to %1 step %c1_i32  : i32 {
      %cst = arith.constant 0.000000e+00 : f32
      %2 = vector.broadcast %cst : f32 to vector<4x4xf32>
      %c0_i32_2 = arith.constant 0 : i32
      %3 = arith.addi %arg6, %c0_i32_2 : i32
      %c0_3 = arith.constant 0 : index
      %c0_4 = arith.constant 0 : index
      %4 = arith.index_cast %3 : i32 to index
      %c0_5 = arith.constant 0 : index
      %c0_6 = arith.constant 0 : index
      %5 = vector.load %arg2[%c0_3, %c0_4, %4, %c0_5, %c0_6] : memref<1x1x5x5x4xbf16, #tpu.memory_space<vmem>>, vector<1x1x1x5x4xbf16>
      %6 = vector.shape_cast %5 : vector<1x1x1x5x4xbf16> to vector<5x4xbf16>
      %7 = vector.extract_strided_slice %6 {offsets = [0, 0], sizes = [4, 4], strides = [1, 1]} : vector<5x4xbf16> to vector<4x4xbf16>
      %c0_7 = arith.constant 0 : index
      %c0_8 = arith.constant 0 : index
      %c0_9 = arith.constant 0 : index
      %8 = vector.load %arg3[%c0_7, %c0_8, %c0_9] : memref<2x4x4xbf16, #tpu.memory_space<vmem>>, vector<1x4x4xbf16>
      %9 = vector.shape_cast %8 : vector<1x4x4xbf16> to vector<4x4xbf16>
      %cst_10 = arith.constant dense<0.000000e+00> : vector<4x4xf32>
      %10 = tpu.matmul %7, %9, %cst_10 {dimension_numbers = #tpu.dot_dimension_numbers<[1], [0], [0], [1], [0, 0, 1, 1], [], []>} : vector<4x4xbf16>, vector<4x4xbf16>, vector<4x4xf32> -> vector<4x4xf32>
      %11 = arith.addf %2, %10 : vector<4x4xf32>
      %c1_i32_11 = arith.constant 1 : i32
      %12 = arith.addi %arg6, %c1_i32_11 : i32
      %c0_12 = arith.constant 0 : index
      %c0_13 = arith.constant 0 : index
      %13 = arith.index_cast %12 : i32 to index
      %c0_14 = arith.constant 0 : index
      %c0_15 = arith.constant 0 : index
      %14 = vector.load %arg2[%c0_12, %c0_13, %13, %c0_14, %c0_15] : memref<1x1x5x5x4xbf16, #tpu.memory_space<vmem>>, vector<1x1x1x5x4xbf16>
      %15 = vector.shape_cast %14 : vector<1x1x1x5x4xbf16> to vector<5x4xbf16>
      %16 = vector.extract_strided_slice %15 {offsets = [0, 0], sizes = [4, 4], strides = [1, 1]} : vector<5x4xbf16> to vector<4x4xbf16>
      %c1 = arith.constant 1 : index
      %c0_16 = arith.constant 0 : index
      %c0_17 = arith.constant 0 : index
      %17 = vector.load %arg3[%c1, %c0_16, %c0_17] : memref<2x4x4xbf16, #tpu.memory_space<vmem>>, vector<1x4x4xbf16>
      %18 = vector.shape_cast %17 : vector<1x4x4xbf16> to vector<4x4xbf16>
      %cst_18 = arith.constant dense<0.000000e+00> : vector<4x4xf32>
      %19 = tpu.matmul %16, %18, %cst_18 {dimension_numbers = #tpu.dot_dimension_numbers<[1], [0], [0], [1], [0, 0, 1, 1], [], []>} : vector<4x4xbf16>, vector<4x4xbf16>, vector<4x4xf32> -> vector<4x4xf32>
      %20 = arith.addf %11, %19 : vector<4x4xf32>
      %21 = vector.broadcast %0 : vector<1x4xf32> to vector<4x4xf32>
      %22 = arith.addf %20, %21 : vector<4x4xf32>
      %23 = arith.truncf %22 : vector<4x4xf32> to vector<4x4xbf16>
      %c0_19 = arith.constant 0 : index
      %c0_20 = arith.constant 0 : index
      %24 = arith.index_cast %arg6 : i32 to index
      %c0_21 = arith.constant 0 : index
      %c0_22 = arith.constant 0 : index
      %25 = vector.load %arg5[%c0_19, %c0_20, %24, %c0_21, %c0_22] : memref<1x1x4x4x4xbf16, #tpu.memory_space<vmem>>, vector<1x1x1x4x4xbf16>
      %26 = vector.shape_cast %25 : vector<1x1x1x4x4xbf16> to vector<4x4xbf16>
      %27 = vector.shape_cast %23 : vector<4x4xbf16> to vector<1x1x1x4x4xbf16>
      tpu.vector_store %arg5[%c0_19, %c0_20, %24, %c0_21, %c0_22], %27 {strides = array<i32>} : memref<1x1x4x4x4xbf16, #tpu.memory_space<vmem>>, vector<1x1x1x4x4xbf16>,
    }
    %c4_i32_1 = arith.constant 4 : i32
    return
  }
  func.func @transform_0(%arg0: i32, %arg1: i32) -> (i32, i32, i32, i32, i32) {
    %c0_i32 = arith.constant 0 : i32
    %0 = arith.addi %arg1, %c0_i32 : i32
    %c0_i32_0 = arith.constant 0 : i32
    %c0_i32_1 = arith.constant 0 : i32
    %c0_i32_2 = arith.constant 0 : i32
    %c0_i32_3 = arith.constant 0 : i32
    return %arg0, %0, %c0_i32_0, %c0_i32_1, %c0_i32_2 : i32, i32, i32, i32, i32
  }
  func.func @transform_1(%arg0: i32, %arg1: i32) -> (i32, i32, i32) {
    %c0_i32 = arith.constant 0 : i32
    %c0_i32_0 = arith.constant 0 : i32
    %c0_i32_1 = arith.constant 0 : i32
    %c0_i32_2 = arith.constant 0 : i32
    return %c0_i32, %c0_i32_0, %c0_i32_1 : i32, i32, i32
  }
  func.func @transform_2(%arg0: i32, %arg1: i32) -> (i32, i32) {
    %c0_i32 = arith.constant 0 : i32
    %c0_i32_0 = arith.constant 0 : i32
    %c0_i32_1 = arith.constant 0 : i32
    return %c0_i32, %c0_i32_0 : i32, i32
  }
  func.func @transform_3(%arg0: i32, %arg1: i32) -> (i32, i32, i32, i32, i32) {
    %c0_i32 = arith.constant 0 : i32
    %c0_i32_0 = arith.constant 0 : i32
    %c0_i32_1 = arith.constant 0 : i32
    %c0_i32_2 = arith.constant 0 : i32
    return %arg0, %arg1, %c0_i32, %c0_i32_0, %c0_i32_1 : i32, i32, i32, i32, i32
  }
}

module attributes {stable_mosaic.version = 11 : i64} {
  func.func @_conv_taps_kernel(%arg0: i32, %arg1: i32, %arg2: memref<1x1x5x5x4xbf16, #tpu.memory_space<vmem>>, %arg3: memref<4x4x4xbf16, #tpu.memory_space<vmem>>, %arg4: memref<1x4xf32, #tpu.memory_space<vmem>>, %arg5: memref<1x1x4x4x4xbf16, #tpu.memory_space<vmem>>) attributes {dimension_semantics = [#tpu.dimension_semantics<parallel>, #tpu.dimension_semantics<parallel>], iteration_bounds = array<i64: 2, 4>, scalar_prefetch = 0 : i64, scratch_operands = 0 : i64, tpu.core_type = #tpu.core_type<tc>, window_params = [{transform_indices = @transform_0, window_bounds = array<i64: 1, 1, 5, 5, 4>}, {pipeline_mode = #tpu.pipeline_mode<synchronous>, transform_indices = @transform_1, window_bounds = array<i64: 4, 4, 4>}, {pipeline_mode = #tpu.pipeline_mode<synchronous>, transform_indices = @transform_2, window_bounds = array<i64: 1, 4>}, {transform_indices = @transform_3, window_bounds = array<i64: 1, 1, 4, 4, 4>}]} {
    %c0 = arith.constant 0 : index
    %c0_0 = arith.constant 0 : index
    %0 = vector.load %arg4[%c0, %c0_0] : memref<1x4xf32, #tpu.memory_space<vmem>>, vector<1x4xf32>
    %c0_i32 = arith.constant 0 : i32
    %c4_i32 = arith.constant 4 : i32
    %1 = arith.addi %c0_i32, %c4_i32 : i32
    %c1_i32 = arith.constant 1 : i32
    scf.for %arg6 = %c0_i32 to %1 step %c1_i32  : i32 {
      %cst = arith.constant 0.000000e+00 : f32
      %2 = vector.broadcast %cst : f32 to vector<4x4xf32>
      %c0_i32_2 = arith.constant 0 : i32
      %3 = arith.addi %arg6, %c0_i32_2 : i32
      %c0_3 = arith.constant 0 : index
      %c0_4 = arith.constant 0 : index
      %4 = arith.index_cast %3 : i32 to index
      %c0_5 = arith.constant 0 : index
      %c0_6 = arith.constant 0 : index
      %5 = vector.load %arg2[%c0_3, %c0_4, %4, %c0_5, %c0_6] : memref<1x1x5x5x4xbf16, #tpu.memory_space<vmem>>, vector<1x1x1x5x4xbf16>
      %6 = vector.shape_cast %5 : vector<1x1x1x5x4xbf16> to vector<5x4xbf16>
      %7 = vector.extract_strided_slice %6 {offsets = [0, 0], sizes = [4, 4], strides = [1, 1]} : vector<5x4xbf16> to vector<4x4xbf16>
      %c0_7 = arith.constant 0 : index
      %c0_8 = arith.constant 0 : index
      %c0_9 = arith.constant 0 : index
      %8 = vector.load %arg3[%c0_7, %c0_8, %c0_9] : memref<4x4x4xbf16, #tpu.memory_space<vmem>>, vector<1x4x4xbf16>
      %9 = vector.shape_cast %8 : vector<1x4x4xbf16> to vector<4x4xbf16>
      %cst_10 = arith.constant dense<0.000000e+00> : vector<4x4xf32>
      %10 = tpu.matmul %7, %9, %cst_10 {dimension_numbers = #tpu.dot_dimension_numbers<[1], [0], [0], [1], [0, 0, 1, 1], [], []>} : vector<4x4xbf16>, vector<4x4xbf16>, vector<4x4xf32> -> vector<4x4xf32>
      %11 = arith.addf %2, %10 : vector<4x4xf32>
      %12 = vector.extract_strided_slice %6 {offsets = [1, 0], sizes = [4, 4], strides = [1, 1]} : vector<5x4xbf16> to vector<4x4xbf16>
      %c1 = arith.constant 1 : index
      %c0_11 = arith.constant 0 : index
      %c0_12 = arith.constant 0 : index
      %13 = vector.load %arg3[%c1, %c0_11, %c0_12] : memref<4x4x4xbf16, #tpu.memory_space<vmem>>, vector<1x4x4xbf16>
      %14 = vector.shape_cast %13 : vector<1x4x4xbf16> to vector<4x4xbf16>
      %cst_13 = arith.constant dense<0.000000e+00> : vector<4x4xf32>
      %15 = tpu.matmul %12, %14, %cst_13 {dimension_numbers = #tpu.dot_dimension_numbers<[1], [0], [0], [1], [0, 0, 1, 1], [], []>} : vector<4x4xbf16>, vector<4x4xbf16>, vector<4x4xf32> -> vector<4x4xf32>
      %16 = arith.addf %11, %15 : vector<4x4xf32>
      %c1_i32_14 = arith.constant 1 : i32
      %17 = arith.addi %arg6, %c1_i32_14 : i32
      %c0_15 = arith.constant 0 : index
      %c0_16 = arith.constant 0 : index
      %18 = arith.index_cast %17 : i32 to index
      %c0_17 = arith.constant 0 : index
      %c0_18 = arith.constant 0 : index
      %19 = vector.load %arg2[%c0_15, %c0_16, %18, %c0_17, %c0_18] : memref<1x1x5x5x4xbf16, #tpu.memory_space<vmem>>, vector<1x1x1x5x4xbf16>
      %20 = vector.shape_cast %19 : vector<1x1x1x5x4xbf16> to vector<5x4xbf16>
      %21 = vector.extract_strided_slice %20 {offsets = [0, 0], sizes = [4, 4], strides = [1, 1]} : vector<5x4xbf16> to vector<4x4xbf16>
      %c2 = arith.constant 2 : index
      %c0_19 = arith.constant 0 : index
      %c0_20 = arith.constant 0 : index
      %22 = vector.load %arg3[%c2, %c0_19, %c0_20] : memref<4x4x4xbf16, #tpu.memory_space<vmem>>, vector<1x4x4xbf16>
      %23 = vector.shape_cast %22 : vector<1x4x4xbf16> to vector<4x4xbf16>
      %cst_21 = arith.constant dense<0.000000e+00> : vector<4x4xf32>
      %24 = tpu.matmul %21, %23, %cst_21 {dimension_numbers = #tpu.dot_dimension_numbers<[1], [0], [0], [1], [0, 0, 1, 1], [], []>} : vector<4x4xbf16>, vector<4x4xbf16>, vector<4x4xf32> -> vector<4x4xf32>
      %25 = arith.addf %16, %24 : vector<4x4xf32>
      %26 = vector.extract_strided_slice %20 {offsets = [1, 0], sizes = [4, 4], strides = [1, 1]} : vector<5x4xbf16> to vector<4x4xbf16>
      %c3 = arith.constant 3 : index
      %c0_22 = arith.constant 0 : index
      %c0_23 = arith.constant 0 : index
      %27 = vector.load %arg3[%c3, %c0_22, %c0_23] : memref<4x4x4xbf16, #tpu.memory_space<vmem>>, vector<1x4x4xbf16>
      %28 = vector.shape_cast %27 : vector<1x4x4xbf16> to vector<4x4xbf16>
      %cst_24 = arith.constant dense<0.000000e+00> : vector<4x4xf32>
      %29 = tpu.matmul %26, %28, %cst_24 {dimension_numbers = #tpu.dot_dimension_numbers<[1], [0], [0], [1], [0, 0, 1, 1], [], []>} : vector<4x4xbf16>, vector<4x4xbf16>, vector<4x4xf32> -> vector<4x4xf32>
      %30 = arith.addf %25, %29 : vector<4x4xf32>
      %31 = vector.broadcast %0 : vector<1x4xf32> to vector<4x4xf32>
      %32 = arith.addf %30, %31 : vector<4x4xf32>
      %33 = arith.truncf %32 : vector<4x4xf32> to vector<4x4xbf16>
      %c0_25 = arith.constant 0 : index
      %c0_26 = arith.constant 0 : index
      %34 = arith.index_cast %arg6 : i32 to index
      %c0_27 = arith.constant 0 : index
      %c0_28 = arith.constant 0 : index
      %35 = vector.load %arg5[%c0_25, %c0_26, %34, %c0_27, %c0_28] : memref<1x1x4x4x4xbf16, #tpu.memory_space<vmem>>, vector<1x1x1x4x4xbf16>
      %36 = vector.shape_cast %35 : vector<1x1x1x4x4xbf16> to vector<4x4xbf16>
      %37 = vector.shape_cast %33 : vector<4x4xbf16> to vector<1x1x1x4x4xbf16>
      tpu.vector_store %arg5[%c0_25, %c0_26, %34, %c0_27, %c0_28], %37 {strides = array<i32>} : memref<1x1x4x4x4xbf16, #tpu.memory_space<vmem>>, vector<1x1x1x4x4xbf16>,
    }
    %c4_i32_1 = arith.constant 4 : i32
    return
  }
  func.func @transform_0(%arg0: i32, %arg1: i32) -> (i32, i32, i32, i32, i32) {
    %c0_i32 = arith.constant 0 : i32
    %0 = arith.addi %arg1, %c0_i32 : i32
    %c0_i32_0 = arith.constant 0 : i32
    %c0_i32_1 = arith.constant 0 : i32
    %c0_i32_2 = arith.constant 0 : i32
    %c0_i32_3 = arith.constant 0 : i32
    return %arg0, %0, %c0_i32_0, %c0_i32_1, %c0_i32_2 : i32, i32, i32, i32, i32
  }
  func.func @transform_1(%arg0: i32, %arg1: i32) -> (i32, i32, i32) {
    %c0_i32 = arith.constant 0 : i32
    %c0_i32_0 = arith.constant 0 : i32
    %c0_i32_1 = arith.constant 0 : i32
    %c0_i32_2 = arith.constant 0 : i32
    return %c0_i32, %c0_i32_0, %c0_i32_1 : i32, i32, i32
  }
  func.func @transform_2(%arg0: i32, %arg1: i32) -> (i32, i32) {
    %c0_i32 = arith.constant 0 : i32
    %c0_i32_0 = arith.constant 0 : i32
    %c0_i32_1 = arith.constant 0 : i32
    return %c0_i32, %c0_i32_0 : i32, i32
  }
  func.func @transform_3(%arg0: i32, %arg1: i32) -> (i32, i32, i32, i32, i32) {
    %c0_i32 = arith.constant 0 : i32
    %c0_i32_0 = arith.constant 0 : i32
    %c0_i32_1 = arith.constant 0 : i32
    %c0_i32_2 = arith.constant 0 : i32
    return %arg0, %arg1, %c0_i32, %c0_i32_0, %c0_i32_1 : i32, i32, i32, i32, i32
  }
}

module attributes {stable_mosaic.version = 11 : i64} {
  func.func @_conv_taps_kernel(%arg0: i32, %arg1: i32, %arg2: memref<1x1x5x5x4xbf16, #tpu.memory_space<vmem>>, %arg3: memref<1x1x5x5x4xbf16, #tpu.memory_space<vmem>>, %arg4: memref<2x4x4xbf16, #tpu.memory_space<vmem>>, %arg5: memref<1x4xf32, #tpu.memory_space<vmem>>, %arg6: memref<1x1x4x4x4xbf16, #tpu.memory_space<vmem>>) attributes {dimension_semantics = [#tpu.dimension_semantics<parallel>, #tpu.dimension_semantics<parallel>], iteration_bounds = array<i64: 2, 4>, scalar_prefetch = 0 : i64, scratch_operands = 0 : i64, tpu.core_type = #tpu.core_type<tc>, window_params = [{transform_indices = @transform_0, window_bounds = array<i64: 1, 1, 5, 5, 4>}, {transform_indices = @transform_1, window_bounds = array<i64: 1, 1, 5, 5, 4>}, {pipeline_mode = #tpu.pipeline_mode<synchronous>, transform_indices = @transform_2, window_bounds = array<i64: 2, 4, 4>}, {pipeline_mode = #tpu.pipeline_mode<synchronous>, transform_indices = @transform_3, window_bounds = array<i64: 1, 4>}, {transform_indices = @transform_4, window_bounds = array<i64: 1, 1, 4, 4, 4>}]} {
    %c0 = arith.constant 0 : index
    %c0_0 = arith.constant 0 : index
    %0 = vector.load %arg5[%c0, %c0_0] : memref<1x4xf32, #tpu.memory_space<vmem>>, vector<1x4xf32>
    %c0_i32 = arith.constant 0 : i32
    %c4_i32 = arith.constant 4 : i32
    %1 = arith.addi %c0_i32, %c4_i32 : i32
    %c1_i32 = arith.constant 1 : i32
    scf.for %arg7 = %c0_i32 to %1 step %c1_i32  : i32 {
      %cst = arith.constant 0.000000e+00 : f32
      %2 = vector.broadcast %cst : f32 to vector<4x4xf32>
      %c0_i32_2 = arith.constant 0 : i32
      %3 = arith.addi %arg7, %c0_i32_2 : i32
      %c0_3 = arith.constant 0 : index
      %c0_4 = arith.constant 0 : index
      %4 = arith.index_cast %3 : i32 to index
      %c0_5 = arith.constant 0 : index
      %c0_6 = arith.constant 0 : index
      %5 = vector.load %arg2[%c0_3, %c0_4, %4, %c0_5, %c0_6] : memref<1x1x5x5x4xbf16, #tpu.memory_space<vmem>>, vector<1x1x1x5x4xbf16>
      %6 = vector.shape_cast %5 : vector<1x1x1x5x4xbf16> to vector<5x4xbf16>
      %7 = vector.extract_strided_slice %6 {offsets = [0, 0], sizes = [4, 4], strides = [1, 1]} : vector<5x4xbf16> to vector<4x4xbf16>
      %c0_7 = arith.constant 0 : index
      %c0_8 = arith.constant 0 : index
      %c0_9 = arith.constant 0 : index
      %8 = vector.load %arg4[%c0_7, %c0_8, %c0_9] : memref<2x4x4xbf16, #tpu.memory_space<vmem>>, vector<1x4x4xbf16>
      %9 = vector.shape_cast %8 : vector<1x4x4xbf16> to vector<4x4xbf16>
      %cst_10 = arith.constant dense<0.000000e+00> : vector<4x4xf32>
      %10 = tpu.matmul %7, %9, %cst_10 {dimension_numbers = #tpu.dot_dimension_numbers<[1], [0], [0], [1], [0, 0, 1, 1], [], []>} : vector<4x4xbf16>, vector<4x4xbf16>, vector<4x4xf32> -> vector<4x4xf32>
      %11 = arith.addf %2, %10 : vector<4x4xf32>
      %c0_i32_11 = arith.constant 0 : i32
      %12 = arith.addi %arg7, %c0_i32_11 : i32
      %c0_12 = arith.constant 0 : index
      %c0_13 = arith.constant 0 : index
      %13 = arith.index_cast %12 : i32 to index
      %c0_14 = arith.constant 0 : index
      %c0_15 = arith.constant 0 : index
      %14 = vector.load %arg3[%c0_12, %c0_13, %13, %c0_14, %c0_15] : memref<1x1x5x5x4xbf16, #tpu.memory_space<vmem>>, vector<1x1x1x5x4xbf16>
      %15 = vector.shape_cast %14 : vector<1x1x1x5x4xbf16> to vector<5x4xbf16>
      %16 = vector.extract_strided_slice %15 {offsets = [0, 0], sizes = [4, 4], strides = [1, 1]} : vector<5x4xbf16> to vector<4x4xbf16>
      %c1 = arith.constant 1 : index
      %c0_16 = arith.constant 0 : index
      %c0_17 = arith.constant 0 : index
      %17 = vector.load %arg4[%c1, %c0_16, %c0_17] : memref<2x4x4xbf16, #tpu.memory_space<vmem>>, vector<1x4x4xbf16>
      %18 = vector.shape_cast %17 : vector<1x4x4xbf16> to vector<4x4xbf16>
      %cst_18 = arith.constant dense<0.000000e+00> : vector<4x4xf32>
      %19 = tpu.matmul %16, %18, %cst_18 {dimension_numbers = #tpu.dot_dimension_numbers<[1], [0], [0], [1], [0, 0, 1, 1], [], []>} : vector<4x4xbf16>, vector<4x4xbf16>, vector<4x4xf32> -> vector<4x4xf32>
      %20 = arith.addf %11, %19 : vector<4x4xf32>
      %21 = vector.broadcast %0 : vector<1x4xf32> to vector<4x4xf32>
      %22 = arith.addf %20, %21 : vector<4x4xf32>
      %23 = arith.truncf %22 : vector<4x4xf32> to vector<4x4xbf16>
      %c0_19 = arith.constant 0 : index
      %c0_20 = arith.constant 0 : index
      %24 = arith.index_cast %arg7 : i32 to index
      %c0_21 = arith.constant 0 : index
      %c0_22 = arith.constant 0 : index
      %25 = vector.load %arg6[%c0_19, %c0_20, %24, %c0_21, %c0_22] : memref<1x1x4x4x4xbf16, #tpu.memory_space<vmem>>, vector<1x1x1x4x4xbf16>
      %26 = vector.shape_cast %25 : vector<1x1x1x4x4xbf16> to vector<4x4xbf16>
      %27 = vector.shape_cast %23 : vector<4x4xbf16> to vector<1x1x1x4x4xbf16>
      tpu.vector_store %arg6[%c0_19, %c0_20, %24, %c0_21, %c0_22], %27 {strides = array<i32>} : memref<1x1x4x4x4xbf16, #tpu.memory_space<vmem>>, vector<1x1x1x4x4xbf16>,
    }
    %c4_i32_1 = arith.constant 4 : i32
    return
  }
  func.func @transform_0(%arg0: i32, %arg1: i32) -> (i32, i32, i32, i32, i32) {
    %c0_i32 = arith.constant 0 : i32
    %0 = arith.addi %arg1, %c0_i32 : i32
    %c0_i32_0 = arith.constant 0 : i32
    %c0_i32_1 = arith.constant 0 : i32
    %c0_i32_2 = arith.constant 0 : i32
    %c0_i32_3 = arith.constant 0 : i32
    return %arg0, %0, %c0_i32_0, %c0_i32_1, %c0_i32_2 : i32, i32, i32, i32, i32
  }
  func.func @transform_1(%arg0: i32, %arg1: i32) -> (i32, i32, i32, i32, i32) {
    %c1_i32 = arith.constant 1 : i32
    %0 = arith.addi %arg1, %c1_i32 : i32
    %c0_i32 = arith.constant 0 : i32
    %c0_i32_0 = arith.constant 0 : i32
    %c0_i32_1 = arith.constant 0 : i32
    %c0_i32_2 = arith.constant 0 : i32
    return %arg0, %0, %c0_i32, %c0_i32_0, %c0_i32_1 : i32, i32, i32, i32, i32
  }
  func.func @transform_2(%arg0: i32, %arg1: i32) -> (i32, i32, i32) {
    %c0_i32 = arith.constant 0 : i32
    %c0_i32_0 = arith.constant 0 : i32
    %c0_i32_1 = arith.constant 0 : i32
    %c0_i32_2 = arith.constant 0 : i32
    return %c0_i32, %c0_i32_0, %c0_i32_1 : i32, i32, i32
  }
  func.func @transform_3(%arg0: i32, %arg1: i32) -> (i32, i32) {
    %c0_i32 = arith.constant 0 : i32
    %c0_i32_0 = arith.constant 0 : i32
    %c0_i32_1 = arith.constant 0 : i32
    return %c0_i32, %c0_i32_0 : i32, i32
  }
  func.func @transform_4(%arg0: i32, %arg1: i32) -> (i32, i32, i32, i32, i32) {
    %c0_i32 = arith.constant 0 : i32
    %c0_i32_0 = arith.constant 0 : i32
    %c0_i32_1 = arith.constant 0 : i32
    %c0_i32_2 = arith.constant 0 : i32
    return %arg0, %arg1, %c0_i32, %c0_i32_0, %c0_i32_1 : i32, i32, i32, i32, i32
  }
}

module attributes {stable_mosaic.version = 11 : i64} {
  func.func @_conv_taps_kernel(%arg0: i32, %arg1: i32, %arg2: memref<1x1x5x5x4xbf16, #tpu.memory_space<vmem>>, %arg3: memref<1x1x5x5x4xbf16, #tpu.memory_space<vmem>>, %arg4: memref<4x4x4xbf16, #tpu.memory_space<vmem>>, %arg5: memref<1x4xf32, #tpu.memory_space<vmem>>, %arg6: memref<1x1x4x4x4xbf16, #tpu.memory_space<vmem>>) attributes {dimension_semantics = [#tpu.dimension_semantics<parallel>, #tpu.dimension_semantics<parallel>], iteration_bounds = array<i64: 2, 4>, scalar_prefetch = 0 : i64, scratch_operands = 0 : i64, tpu.core_type = #tpu.core_type<tc>, window_params = [{transform_indices = @transform_0, window_bounds = array<i64: 1, 1, 5, 5, 4>}, {transform_indices = @transform_1, window_bounds = array<i64: 1, 1, 5, 5, 4>}, {pipeline_mode = #tpu.pipeline_mode<synchronous>, transform_indices = @transform_2, window_bounds = array<i64: 4, 4, 4>}, {pipeline_mode = #tpu.pipeline_mode<synchronous>, transform_indices = @transform_3, window_bounds = array<i64: 1, 4>}, {transform_indices = @transform_4, window_bounds = array<i64: 1, 1, 4, 4, 4>}]} {
    %c0 = arith.constant 0 : index
    %c0_0 = arith.constant 0 : index
    %0 = vector.load %arg5[%c0, %c0_0] : memref<1x4xf32, #tpu.memory_space<vmem>>, vector<1x4xf32>
    %c0_i32 = arith.constant 0 : i32
    %c4_i32 = arith.constant 4 : i32
    %1 = arith.addi %c0_i32, %c4_i32 : i32
    %c1_i32 = arith.constant 1 : i32
    scf.for %arg7 = %c0_i32 to %1 step %c1_i32  : i32 {
      %cst = arith.constant 0.000000e+00 : f32
      %2 = vector.broadcast %cst : f32 to vector<4x4xf32>
      %c0_i32_2 = arith.constant 0 : i32
      %3 = arith.addi %arg7, %c0_i32_2 : i32
      %c0_3 = arith.constant 0 : index
      %c0_4 = arith.constant 0 : index
      %4 = arith.index_cast %3 : i32 to index
      %c0_5 = arith.constant 0 : index
      %c0_6 = arith.constant 0 : index
      %5 = vector.load %arg2[%c0_3, %c0_4, %4, %c0_5, %c0_6] : memref<1x1x5x5x4xbf16, #tpu.memory_space<vmem>>, vector<1x1x1x5x4xbf16>
      %6 = vector.shape_cast %5 : vector<1x1x1x5x4xbf16> to vector<5x4xbf16>
      %7 = vector.extract_strided_slice %6 {offsets = [0, 0], sizes = [4, 4], strides = [1, 1]} : vector<5x4xbf16> to vector<4x4xbf16>
      %c0_7 = arith.constant 0 : index
      %c0_8 = arith.constant 0 : index
      %c0_9 = arith.constant 0 : index
      %8 = vector.load %arg4[%c0_7, %c0_8, %c0_9] : memref<4x4x4xbf16, #tpu.memory_space<vmem>>, vector<1x4x4xbf16>
      %9 = vector.shape_cast %8 : vector<1x4x4xbf16> to vector<4x4xbf16>
      %cst_10 = arith.constant dense<0.000000e+00> : vector<4x4xf32>
      %10 = tpu.matmul %7, %9, %cst_10 {dimension_numbers = #tpu.dot_dimension_numbers<[1], [0], [0], [1], [0, 0, 1, 1], [], []>} : vector<4x4xbf16>, vector<4x4xbf16>, vector<4x4xf32> -> vector<4x4xf32>
      %11 = arith.addf %2, %10 : vector<4x4xf32>
      %12 = vector.extract_strided_slice %6 {offsets = [1, 0], sizes = [4, 4], strides = [1, 1]} : vector<5x4xbf16> to vector<4x4xbf16>
      %c1 = arith.constant 1 : index
      %c0_11 = arith.constant 0 : index
      %c0_12 = arith.constant 0 : index
      %13 = vector.load %arg4[%c1, %c0_11, %c0_12] : memref<4x4x4xbf16, #tpu.memory_space<vmem>>, vector<1x4x4xbf16>
      %14 = vector.shape_cast %13 : vector<1x4x4xbf16> to vector<4x4xbf16>
      %cst_13 = arith.constant dense<0.000000e+00> : vector<4x4xf32>
      %15 = tpu.matmul %12, %14, %cst_13 {dimension_numbers = #tpu.dot_dimension_numbers<[1], [0], [0], [1], [0, 0, 1, 1], [], []>} : vector<4x4xbf16>, vector<4x4xbf16>, vector<4x4xf32> -> vector<4x4xf32>
      %16 = arith.addf %11, %15 : vector<4x4xf32>
      %c0_i32_14 = arith.constant 0 : i32
      %17 = arith.addi %arg7, %c0_i32_14 : i32
      %c0_15 = arith.constant 0 : index
      %c0_16 = arith.constant 0 : index
      %18 = arith.index_cast %17 : i32 to index
      %c0_17 = arith.constant 0 : index
      %c0_18 = arith.constant 0 : index
      %19 = vector.load %arg3[%c0_15, %c0_16, %18, %c0_17, %c0_18] : memref<1x1x5x5x4xbf16, #tpu.memory_space<vmem>>, vector<1x1x1x5x4xbf16>
      %20 = vector.shape_cast %19 : vector<1x1x1x5x4xbf16> to vector<5x4xbf16>
      %21 = vector.extract_strided_slice %20 {offsets = [0, 0], sizes = [4, 4], strides = [1, 1]} : vector<5x4xbf16> to vector<4x4xbf16>
      %c2 = arith.constant 2 : index
      %c0_19 = arith.constant 0 : index
      %c0_20 = arith.constant 0 : index
      %22 = vector.load %arg4[%c2, %c0_19, %c0_20] : memref<4x4x4xbf16, #tpu.memory_space<vmem>>, vector<1x4x4xbf16>
      %23 = vector.shape_cast %22 : vector<1x4x4xbf16> to vector<4x4xbf16>
      %cst_21 = arith.constant dense<0.000000e+00> : vector<4x4xf32>
      %24 = tpu.matmul %21, %23, %cst_21 {dimension_numbers = #tpu.dot_dimension_numbers<[1], [0], [0], [1], [0, 0, 1, 1], [], []>} : vector<4x4xbf16>, vector<4x4xbf16>, vector<4x4xf32> -> vector<4x4xf32>
      %25 = arith.addf %16, %24 : vector<4x4xf32>
      %26 = vector.extract_strided_slice %20 {offsets = [1, 0], sizes = [4, 4], strides = [1, 1]} : vector<5x4xbf16> to vector<4x4xbf16>
      %c3 = arith.constant 3 : index
      %c0_22 = arith.constant 0 : index
      %c0_23 = arith.constant 0 : index
      %27 = vector.load %arg4[%c3, %c0_22, %c0_23] : memref<4x4x4xbf16, #tpu.memory_space<vmem>>, vector<1x4x4xbf16>
      %28 = vector.shape_cast %27 : vector<1x4x4xbf16> to vector<4x4xbf16>
      %cst_24 = arith.constant dense<0.000000e+00> : vector<4x4xf32>
      %29 = tpu.matmul %26, %28, %cst_24 {dimension_numbers = #tpu.dot_dimension_numbers<[1], [0], [0], [1], [0, 0, 1, 1], [], []>} : vector<4x4xbf16>, vector<4x4xbf16>, vector<4x4xf32> -> vector<4x4xf32>
      %30 = arith.addf %25, %29 : vector<4x4xf32>
      %31 = vector.broadcast %0 : vector<1x4xf32> to vector<4x4xf32>
      %32 = arith.addf %30, %31 : vector<4x4xf32>
      %33 = arith.truncf %32 : vector<4x4xf32> to vector<4x4xbf16>
      %c0_25 = arith.constant 0 : index
      %c0_26 = arith.constant 0 : index
      %34 = arith.index_cast %arg7 : i32 to index
      %c0_27 = arith.constant 0 : index
      %c0_28 = arith.constant 0 : index
      %35 = vector.load %arg6[%c0_25, %c0_26, %34, %c0_27, %c0_28] : memref<1x1x4x4x4xbf16, #tpu.memory_space<vmem>>, vector<1x1x1x4x4xbf16>
      %36 = vector.shape_cast %35 : vector<1x1x1x4x4xbf16> to vector<4x4xbf16>
      %37 = vector.shape_cast %33 : vector<4x4xbf16> to vector<1x1x1x4x4xbf16>
      tpu.vector_store %arg6[%c0_25, %c0_26, %34, %c0_27, %c0_28], %37 {strides = array<i32>} : memref<1x1x4x4x4xbf16, #tpu.memory_space<vmem>>, vector<1x1x1x4x4xbf16>,
    }
    %c4_i32_1 = arith.constant 4 : i32
    return
  }
  func.func @transform_0(%arg0: i32, %arg1: i32) -> (i32, i32, i32, i32, i32) {
    %c0_i32 = arith.constant 0 : i32
    %0 = arith.addi %arg1, %c0_i32 : i32
    %c0_i32_0 = arith.constant 0 : i32
    %c0_i32_1 = arith.constant 0 : i32
    %c0_i32_2 = arith.constant 0 : i32
    %c0_i32_3 = arith.constant 0 : i32
    return %arg0, %0, %c0_i32_0, %c0_i32_1, %c0_i32_2 : i32, i32, i32, i32, i32
  }
  func.func @transform_1(%arg0: i32, %arg1: i32) -> (i32, i32, i32, i32, i32) {
    %c1_i32 = arith.constant 1 : i32
    %0 = arith.addi %arg1, %c1_i32 : i32
    %c0_i32 = arith.constant 0 : i32
    %c0_i32_0 = arith.constant 0 : i32
    %c0_i32_1 = arith.constant 0 : i32
    %c0_i32_2 = arith.constant 0 : i32
    return %arg0, %0, %c0_i32, %c0_i32_0, %c0_i32_1 : i32, i32, i32, i32, i32
  }
  func.func @transform_2(%arg0: i32, %arg1: i32) -> (i32, i32, i32) {
    %c0_i32 = arith.constant 0 : i32
    %c0_i32_0 = arith.constant 0 : i32
    %c0_i32_1 = arith.constant 0 : i32
    %c0_i32_2 = arith.constant 0 : i32
    return %c0_i32, %c0_i32_0, %c0_i32_1 : i32, i32, i32
  }
  func.func @transform_3(%arg0: i32, %arg1: i32) -> (i32, i32) {
    %c0_i32 = arith.constant 0 : i32
    %c0_i32_0 = arith.constant 0 : i32
    %c0_i32_1 = arith.constant 0 : i32
    return %c0_i32, %c0_i32_0 : i32, i32
  }
  func.func @transform_4(%arg0: i32, %arg1: i32) -> (i32, i32, i32, i32, i32) {
    %c0_i32 = arith.constant 0 : i32
    %c0_i32_0 = arith.constant 0 : i32
    %c0_i32_1 = arith.constant 0 : i32
    %c0_i32_2 = arith.constant 0 : i32
    return %arg0, %arg1, %c0_i32, %c0_i32_0, %c0_i32_1 : i32, i32, i32, i32, i32
  }
}

module attributes {stable_mosaic.version = 11 : i64} {
  func.func @_conv_taps_kernel(%arg0: i32, %arg1: i32, %arg2: memref<1x1x5x5x4xbf16, #tpu.memory_space<vmem>>, %arg3: memref<1x1x5x5x4xbf16, #tpu.memory_space<vmem>>, %arg4: memref<4x4x4xbf16, #tpu.memory_space<vmem>>, %arg5: memref<1x4xf32, #tpu.memory_space<vmem>>, %arg6: memref<1x1x4x4x4xbf16, #tpu.memory_space<vmem>>) attributes {dimension_semantics = [#tpu.dimension_semantics<parallel>, #tpu.dimension_semantics<parallel>], iteration_bounds = array<i64: 2, 4>, scalar_prefetch = 0 : i64, scratch_operands = 0 : i64, tpu.core_type = #tpu.core_type<tc>, window_params = [{transform_indices = @transform_0, window_bounds = array<i64: 1, 1, 5, 5, 4>}, {transform_indices = @transform_1, window_bounds = array<i64: 1, 1, 5, 5, 4>}, {pipeline_mode = #tpu.pipeline_mode<synchronous>, transform_indices = @transform_2, window_bounds = array<i64: 4, 4, 4>}, {pipeline_mode = #tpu.pipeline_mode<synchronous>, transform_indices = @transform_3, window_bounds = array<i64: 1, 4>}, {transform_indices = @transform_4, window_bounds = array<i64: 1, 1, 4, 4, 4>}]} {
    %c0 = arith.constant 0 : index
    %c0_0 = arith.constant 0 : index
    %0 = vector.load %arg5[%c0, %c0_0] : memref<1x4xf32, #tpu.memory_space<vmem>>, vector<1x4xf32>
    %c0_i32 = arith.constant 0 : i32
    %c4_i32 = arith.constant 4 : i32
    %1 = arith.addi %c0_i32, %c4_i32 : i32
    %c1_i32 = arith.constant 1 : i32
    scf.for %arg7 = %c0_i32 to %1 step %c1_i32  : i32 {
      %cst = arith.constant 0.000000e+00 : f32
      %2 = vector.broadcast %cst : f32 to vector<4x4xf32>
      %c0_i32_2 = arith.constant 0 : i32
      %3 = arith.addi %arg7, %c0_i32_2 : i32
      %c0_3 = arith.constant 0 : index
      %c0_4 = arith.constant 0 : index
      %4 = arith.index_cast %3 : i32 to index
      %c0_5 = arith.constant 0 : index
      %c0_6 = arith.constant 0 : index
      %5 = vector.load %arg2[%c0_3, %c0_4, %4, %c0_5, %c0_6] : memref<1x1x5x5x4xbf16, #tpu.memory_space<vmem>>, vector<1x1x1x5x4xbf16>
      %6 = vector.shape_cast %5 : vector<1x1x1x5x4xbf16> to vector<5x4xbf16>
      %7 = vector.extract_strided_slice %6 {offsets = [0, 0], sizes = [4, 4], strides = [1, 1]} : vector<5x4xbf16> to vector<4x4xbf16>
      %c0_7 = arith.constant 0 : index
      %c0_8 = arith.constant 0 : index
      %c0_9 = arith.constant 0 : index
      %8 = vector.load %arg4[%c0_7, %c0_8, %c0_9] : memref<4x4x4xbf16, #tpu.memory_space<vmem>>, vector<1x4x4xbf16>
      %9 = vector.shape_cast %8 : vector<1x4x4xbf16> to vector<4x4xbf16>
      %cst_10 = arith.constant dense<0.000000e+00> : vector<4x4xf32>
      %10 = tpu.matmul %7, %9, %cst_10 {dimension_numbers = #tpu.dot_dimension_numbers<[1], [0], [0], [1], [0, 0, 1, 1], [], []>} : vector<4x4xbf16>, vector<4x4xbf16>, vector<4x4xf32> -> vector<4x4xf32>
      %11 = arith.addf %2, %10 : vector<4x4xf32>
      %c1_i32_11 = arith.constant 1 : i32
      %12 = arith.addi %arg7, %c1_i32_11 : i32
      %c0_12 = arith.constant 0 : index
      %c0_13 = arith.constant 0 : index
      %13 = arith.index_cast %12 : i32 to index
      %c0_14 = arith.constant 0 : index
      %c0_15 = arith.constant 0 : index
      %14 = vector.load %arg2[%c0_12, %c0_13, %13, %c0_14, %c0_15] : memref<1x1x5x5x4xbf16, #tpu.memory_space<vmem>>, vector<1x1x1x5x4xbf16>
      %15 = vector.shape_cast %14 : vector<1x1x1x5x4xbf16> to vector<5x4xbf16>
      %16 = vector.extract_strided_slice %15 {offsets = [0, 0], sizes = [4, 4], strides = [1, 1]} : vector<5x4xbf16> to vector<4x4xbf16>
      %c1 = arith.constant 1 : index
      %c0_16 = arith.constant 0 : index
      %c0_17 = arith.constant 0 : index
      %17 = vector.load %arg4[%c1, %c0_16, %c0_17] : memref<4x4x4xbf16, #tpu.memory_space<vmem>>, vector<1x4x4xbf16>
      %18 = vector.shape_cast %17 : vector<1x4x4xbf16> to vector<4x4xbf16>
      %cst_18 = arith.constant dense<0.000000e+00> : vector<4x4xf32>
      %19 = tpu.matmul %16, %18, %cst_18 {dimension_numbers = #tpu.dot_dimension_numbers<[1], [0], [0], [1], [0, 0, 1, 1], [], []>} : vector<4x4xbf16>, vector<4x4xbf16>, vector<4x4xf32> -> vector<4x4xf32>
      %20 = arith.addf %11, %19 : vector<4x4xf32>
      %c0_i32_19 = arith.constant 0 : i32
      %21 = arith.addi %arg7, %c0_i32_19 : i32
      %c0_20 = arith.constant 0 : index
      %c0_21 = arith.constant 0 : index
      %22 = arith.index_cast %21 : i32 to index
      %c0_22 = arith.constant 0 : index
      %c0_23 = arith.constant 0 : index
      %23 = vector.load %arg3[%c0_20, %c0_21, %22, %c0_22, %c0_23] : memref<1x1x5x5x4xbf16, #tpu.memory_space<vmem>>, vector<1x1x1x5x4xbf16>
      %24 = vector.shape_cast %23 : vector<1x1x1x5x4xbf16> to vector<5x4xbf16>
      %25 = vector.extract_strided_slice %24 {offsets = [0, 0], sizes = [4, 4], strides = [1, 1]} : vector<5x4xbf16> to vector<4x4xbf16>
      %c2 = arith.constant 2 : index
      %c0_24 = arith.constant 0 : index
      %c0_25 = arith.constant 0 : index
      %26 = vector.load %arg4[%c2, %c0_24, %c0_25] : memref<4x4x4xbf16, #tpu.memory_space<vmem>>, vector<1x4x4xbf16>
      %27 = vector.shape_cast %26 : vector<1x4x4xbf16> to vector<4x4xbf16>
      %cst_26 = arith.constant dense<0.000000e+00> : vector<4x4xf32>
      %28 = tpu.matmul %25, %27, %cst_26 {dimension_numbers = #tpu.dot_dimension_numbers<[1], [0], [0], [1], [0, 0, 1, 1], [], []>} : vector<4x4xbf16>, vector<4x4xbf16>, vector<4x4xf32> -> vector<4x4xf32>
      %29 = arith.addf %20, %28 : vector<4x4xf32>
      %c1_i32_27 = arith.constant 1 : i32
      %30 = arith.addi %arg7, %c1_i32_27 : i32
      %c0_28 = arith.constant 0 : index
      %c0_29 = arith.constant 0 : index
      %31 = arith.index_cast %30 : i32 to index
      %c0_30 = arith.constant 0 : index
      %c0_31 = arith.constant 0 : index
      %32 = vector.load %arg3[%c0_28, %c0_29, %31, %c0_30, %c0_31] : memref<1x1x5x5x4xbf16, #tpu.memory_space<vmem>>, vector<1x1x1x5x4xbf16>
      %33 = vector.shape_cast %32 : vector<1x1x1x5x4xbf16> to vector<5x4xbf16>
      %34 = vector.extract_strided_slice %33 {offsets = [0, 0], sizes = [4, 4], strides = [1, 1]} : vector<5x4xbf16> to vector<4x4xbf16>
      %c3 = arith.constant 3 : index
      %c0_32 = arith.constant 0 : index
      %c0_33 = arith.constant 0 : index
      %35 = vector.load %arg4[%c3, %c0_32, %c0_33] : memref<4x4x4xbf16, #tpu.memory_space<vmem>>, vector<1x4x4xbf16>
      %36 = vector.shape_cast %35 : vector<1x4x4xbf16> to vector<4x4xbf16>
      %cst_34 = arith.constant dense<0.000000e+00> : vector<4x4xf32>
      %37 = tpu.matmul %34, %36, %cst_34 {dimension_numbers = #tpu.dot_dimension_numbers<[1], [0], [0], [1], [0, 0, 1, 1], [], []>} : vector<4x4xbf16>, vector<4x4xbf16>, vector<4x4xf32> -> vector<4x4xf32>
      %38 = arith.addf %29, %37 : vector<4x4xf32>
      %39 = vector.broadcast %0 : vector<1x4xf32> to vector<4x4xf32>
      %40 = arith.addf %38, %39 : vector<4x4xf32>
      %41 = arith.truncf %40 : vector<4x4xf32> to vector<4x4xbf16>
      %c0_35 = arith.constant 0 : index
      %c0_36 = arith.constant 0 : index
      %42 = arith.index_cast %arg7 : i32 to index
      %c0_37 = arith.constant 0 : index
      %c0_38 = arith.constant 0 : index
      %43 = vector.load %arg6[%c0_35, %c0_36, %42, %c0_37, %c0_38] : memref<1x1x4x4x4xbf16, #tpu.memory_space<vmem>>, vector<1x1x1x4x4xbf16>
      %44 = vector.shape_cast %43 : vector<1x1x1x4x4xbf16> to vector<4x4xbf16>
      %45 = vector.shape_cast %41 : vector<4x4xbf16> to vector<1x1x1x4x4xbf16>
      tpu.vector_store %arg6[%c0_35, %c0_36, %42, %c0_37, %c0_38], %45 {strides = array<i32>} : memref<1x1x4x4x4xbf16, #tpu.memory_space<vmem>>, vector<1x1x1x4x4xbf16>,
    }
    %c4_i32_1 = arith.constant 4 : i32
    return
  }
  func.func @transform_0(%arg0: i32, %arg1: i32) -> (i32, i32, i32, i32, i32) {
    %c0_i32 = arith.constant 0 : i32
    %0 = arith.addi %arg1, %c0_i32 : i32
    %c0_i32_0 = arith.constant 0 : i32
    %c0_i32_1 = arith.constant 0 : i32
    %c0_i32_2 = arith.constant 0 : i32
    %c0_i32_3 = arith.constant 0 : i32
    return %arg0, %0, %c0_i32_0, %c0_i32_1, %c0_i32_2 : i32, i32, i32, i32, i32
  }
  func.func @transform_1(%arg0: i32, %arg1: i32) -> (i32, i32, i32, i32, i32) {
    %c1_i32 = arith.constant 1 : i32
    %0 = arith.addi %arg1, %c1_i32 : i32
    %c0_i32 = arith.constant 0 : i32
    %c0_i32_0 = arith.constant 0 : i32
    %c0_i32_1 = arith.constant 0 : i32
    %c0_i32_2 = arith.constant 0 : i32
    return %arg0, %0, %c0_i32, %c0_i32_0, %c0_i32_1 : i32, i32, i32, i32, i32
  }
  func.func @transform_2(%arg0: i32, %arg1: i32) -> (i32, i32, i32) {
    %c0_i32 = arith.constant 0 : i32
    %c0_i32_0 = arith.constant 0 : i32
    %c0_i32_1 = arith.constant 0 : i32
    %c0_i32_2 = arith.constant 0 : i32
    return %c0_i32, %c0_i32_0, %c0_i32_1 : i32, i32, i32
  }
  func.func @transform_3(%arg0: i32, %arg1: i32) -> (i32, i32) {
    %c0_i32 = arith.constant 0 : i32
    %c0_i32_0 = arith.constant 0 : i32
    %c0_i32_1 = arith.constant 0 : i32
    return %c0_i32, %c0_i32_0 : i32, i32
  }
  func.func @transform_4(%arg0: i32, %arg1: i32) -> (i32, i32, i32, i32, i32) {
    %c0_i32 = arith.constant 0 : i32
    %c0_i32_0 = arith.constant 0 : i32
    %c0_i32_1 = arith.constant 0 : i32
    %c0_i32_2 = arith.constant 0 : i32
    return %arg0, %arg1, %c0_i32, %c0_i32_0, %c0_i32_1 : i32, i32, i32, i32, i32
  }
}

module attributes {stable_mosaic.version = 11 : i64} {
  func.func @_conv_taps_kernel(%arg0: i32, %arg1: i32, %arg2: memref<1x1x5x5x4xbf16, #tpu.memory_space<vmem>>, %arg3: memref<1x1x5x5x4xbf16, #tpu.memory_space<vmem>>, %arg4: memref<8x4x4xbf16, #tpu.memory_space<vmem>>, %arg5: memref<1x4xf32, #tpu.memory_space<vmem>>, %arg6: memref<1x1x4x4x4xbf16, #tpu.memory_space<vmem>>) attributes {dimension_semantics = [#tpu.dimension_semantics<parallel>, #tpu.dimension_semantics<parallel>], iteration_bounds = array<i64: 2, 4>, scalar_prefetch = 0 : i64, scratch_operands = 0 : i64, tpu.core_type = #tpu.core_type<tc>, window_params = [{transform_indices = @transform_0, window_bounds = array<i64: 1, 1, 5, 5, 4>}, {transform_indices = @transform_1, window_bounds = array<i64: 1, 1, 5, 5, 4>}, {pipeline_mode = #tpu.pipeline_mode<synchronous>, transform_indices = @transform_2, window_bounds = array<i64: 8, 4, 4>}, {pipeline_mode = #tpu.pipeline_mode<synchronous>, transform_indices = @transform_3, window_bounds = array<i64: 1, 4>}, {transform_indices = @transform_4, window_bounds = array<i64: 1, 1, 4, 4, 4>}]} {
    %c0 = arith.constant 0 : index
    %c0_0 = arith.constant 0 : index
    %0 = vector.load %arg5[%c0, %c0_0] : memref<1x4xf32, #tpu.memory_space<vmem>>, vector<1x4xf32>
    %c0_i32 = arith.constant 0 : i32
    %c4_i32 = arith.constant 4 : i32
    %1 = arith.addi %c0_i32, %c4_i32 : i32
    %c1_i32 = arith.constant 1 : i32
    scf.for %arg7 = %c0_i32 to %1 step %c1_i32  : i32 {
      %cst = arith.constant 0.000000e+00 : f32
      %2 = vector.broadcast %cst : f32 to vector<4x4xf32>
      %c0_i32_2 = arith.constant 0 : i32
      %3 = arith.addi %arg7, %c0_i32_2 : i32
      %c0_3 = arith.constant 0 : index
      %c0_4 = arith.constant 0 : index
      %4 = arith.index_cast %3 : i32 to index
      %c0_5 = arith.constant 0 : index
      %c0_6 = arith.constant 0 : index
      %5 = vector.load %arg2[%c0_3, %c0_4, %4, %c0_5, %c0_6] : memref<1x1x5x5x4xbf16, #tpu.memory_space<vmem>>, vector<1x1x1x5x4xbf16>
      %6 = vector.shape_cast %5 : vector<1x1x1x5x4xbf16> to vector<5x4xbf16>
      %7 = vector.extract_strided_slice %6 {offsets = [0, 0], sizes = [4, 4], strides = [1, 1]} : vector<5x4xbf16> to vector<4x4xbf16>
      %c0_7 = arith.constant 0 : index
      %c0_8 = arith.constant 0 : index
      %c0_9 = arith.constant 0 : index
      %8 = vector.load %arg4[%c0_7, %c0_8, %c0_9] : memref<8x4x4xbf16, #tpu.memory_space<vmem>>, vector<1x4x4xbf16>
      %9 = vector.shape_cast %8 : vector<1x4x4xbf16> to vector<4x4xbf16>
      %cst_10 = arith.constant dense<0.000000e+00> : vector<4x4xf32>
      %10 = tpu.matmul %7, %9, %cst_10 {dimension_numbers = #tpu.dot_dimension_numbers<[1], [0], [0], [1], [0, 0, 1, 1], [], []>} : vector<4x4xbf16>, vector<4x4xbf16>, vector<4x4xf32> -> vector<4x4xf32>
      %11 = arith.addf %2, %10 : vector<4x4xf32>
      %12 = vector.extract_strided_slice %6 {offsets = [1, 0], sizes = [4, 4], strides = [1, 1]} : vector<5x4xbf16> to vector<4x4xbf16>
      %c1 = arith.constant 1 : index
      %c0_11 = arith.constant 0 : index
      %c0_12 = arith.constant 0 : index
      %13 = vector.load %arg4[%c1, %c0_11, %c0_12] : memref<8x4x4xbf16, #tpu.memory_space<vmem>>, vector<1x4x4xbf16>
      %14 = vector.shape_cast %13 : vector<1x4x4xbf16> to vector<4x4xbf16>
      %cst_13 = arith.constant dense<0.000000e+00> : vector<4x4xf32>
      %15 = tpu.matmul %12, %14, %cst_13 {dimension_numbers = #tpu.dot_dimension_numbers<[1], [0], [0], [1], [0, 0, 1, 1], [], []>} : vector<4x4xbf16>, vector<4x4xbf16>, vector<4x4xf32> -> vector<4x4xf32>
      %16 = arith.addf %11, %15 : vector<4x4xf32>
      %c1_i32_14 = arith.constant 1 : i32
      %17 = arith.addi %arg7, %c1_i32_14 : i32
      %c0_15 = arith.constant 0 : index
      %c0_16 = arith.constant 0 : index
      %18 = arith.index_cast %17 : i32 to index
      %c0_17 = arith.constant 0 : index
      %c0_18 = arith.constant 0 : index
      %19 = vector.load %arg2[%c0_15, %c0_16, %18, %c0_17, %c0_18] : memref<1x1x5x5x4xbf16, #tpu.memory_space<vmem>>, vector<1x1x1x5x4xbf16>
      %20 = vector.shape_cast %19 : vector<1x1x1x5x4xbf16> to vector<5x4xbf16>
      %21 = vector.extract_strided_slice %20 {offsets = [0, 0], sizes = [4, 4], strides = [1, 1]} : vector<5x4xbf16> to vector<4x4xbf16>
      %c2 = arith.constant 2 : index
      %c0_19 = arith.constant 0 : index
      %c0_20 = arith.constant 0 : index
      %22 = vector.load %arg4[%c2, %c0_19, %c0_20] : memref<8x4x4xbf16, #tpu.memory_space<vmem>>, vector<1x4x4xbf16>
      %23 = vector.shape_cast %22 : vector<1x4x4xbf16> to vector<4x4xbf16>
      %cst_21 = arith.constant dense<0.000000e+00> : vector<4x4xf32>
      %24 = tpu.matmul %21, %23, %cst_21 {dimension_numbers = #tpu.dot_dimension_numbers<[1], [0], [0], [1], [0, 0, 1, 1], [], []>} : vector<4x4xbf16>, vector<4x4xbf16>, vector<4x4xf32> -> vector<4x4xf32>
      %25 = arith.addf %16, %24 : vector<4x4xf32>
      %26 = vector.extract_strided_slice %20 {offsets = [1, 0], sizes = [4, 4], strides = [1, 1]} : vector<5x4xbf16> to vector<4x4xbf16>
      %c3 = arith.constant 3 : index
      %c0_22 = arith.constant 0 : index
      %c0_23 = arith.constant 0 : index
      %27 = vector.load %arg4[%c3, %c0_22, %c0_23] : memref<8x4x4xbf16, #tpu.memory_space<vmem>>, vector<1x4x4xbf16>
      %28 = vector.shape_cast %27 : vector<1x4x4xbf16> to vector<4x4xbf16>
      %cst_24 = arith.constant dense<0.000000e+00> : vector<4x4xf32>
      %29 = tpu.matmul %26, %28, %cst_24 {dimension_numbers = #tpu.dot_dimension_numbers<[1], [0], [0], [1], [0, 0, 1, 1], [], []>} : vector<4x4xbf16>, vector<4x4xbf16>, vector<4x4xf32> -> vector<4x4xf32>
      %30 = arith.addf %25, %29 : vector<4x4xf32>
      %c0_i32_25 = arith.constant 0 : i32
      %31 = arith.addi %arg7, %c0_i32_25 : i32
      %c0_26 = arith.constant 0 : index
      %c0_27 = arith.constant 0 : index
      %32 = arith.index_cast %31 : i32 to index
      %c0_28 = arith.constant 0 : index
      %c0_29 = arith.constant 0 : index
      %33 = vector.load %arg3[%c0_26, %c0_27, %32, %c0_28, %c0_29] : memref<1x1x5x5x4xbf16, #tpu.memory_space<vmem>>, vector<1x1x1x5x4xbf16>
      %34 = vector.shape_cast %33 : vector<1x1x1x5x4xbf16> to vector<5x4xbf16>
      %35 = vector.extract_strided_slice %34 {offsets = [0, 0], sizes = [4, 4], strides = [1, 1]} : vector<5x4xbf16> to vector<4x4xbf16>
      %c4 = arith.constant 4 : index
      %c0_30 = arith.constant 0 : index
      %c0_31 = arith.constant 0 : index
      %36 = vector.load %arg4[%c4, %c0_30, %c0_31] : memref<8x4x4xbf16, #tpu.memory_space<vmem>>, vector<1x4x4xbf16>
      %37 = vector.shape_cast %36 : vector<1x4x4xbf16> to vector<4x4xbf16>
      %cst_32 = arith.constant dense<0.000000e+00> : vector<4x4xf32>
      %38 = tpu.matmul %35, %37, %cst_32 {dimension_numbers = #tpu.dot_dimension_numbers<[1], [0], [0], [1], [0, 0, 1, 1], [], []>} : vector<4x4xbf16>, vector<4x4xbf16>, vector<4x4xf32> -> vector<4x4xf32>
      %39 = arith.addf %30, %38 : vector<4x4xf32>
      %40 = vector.extract_strided_slice %34 {offsets = [1, 0], sizes = [4, 4], strides = [1, 1]} : vector<5x4xbf16> to vector<4x4xbf16>
      %c5 = arith.constant 5 : index
      %c0_33 = arith.constant 0 : index
      %c0_34 = arith.constant 0 : index
      %41 = vector.load %arg4[%c5, %c0_33, %c0_34] : memref<8x4x4xbf16, #tpu.memory_space<vmem>>, vector<1x4x4xbf16>
      %42 = vector.shape_cast %41 : vector<1x4x4xbf16> to vector<4x4xbf16>
      %cst_35 = arith.constant dense<0.000000e+00> : vector<4x4xf32>
      %43 = tpu.matmul %40, %42, %cst_35 {dimension_numbers = #tpu.dot_dimension_numbers<[1], [0], [0], [1], [0, 0, 1, 1], [], []>} : vector<4x4xbf16>, vector<4x4xbf16>, vector<4x4xf32> -> vector<4x4xf32>
      %44 = arith.addf %39, %43 : vector<4x4xf32>
      %c1_i32_36 = arith.constant 1 : i32
      %45 = arith.addi %arg7, %c1_i32_36 : i32
      %c0_37 = arith.constant 0 : index
      %c0_38 = arith.constant 0 : index
      %46 = arith.index_cast %45 : i32 to index
      %c0_39 = arith.constant 0 : index
      %c0_40 = arith.constant 0 : index
      %47 = vector.load %arg3[%c0_37, %c0_38, %46, %c0_39, %c0_40] : memref<1x1x5x5x4xbf16, #tpu.memory_space<vmem>>, vector<1x1x1x5x4xbf16>
      %48 = vector.shape_cast %47 : vector<1x1x1x5x4xbf16> to vector<5x4xbf16>
      %49 = vector.extract_strided_slice %48 {offsets = [0, 0], sizes = [4, 4], strides = [1, 1]} : vector<5x4xbf16> to vector<4x4xbf16>
      %c6 = arith.constant 6 : index
      %c0_41 = arith.constant 0 : index
      %c0_42 = arith.constant 0 : index
      %50 = vector.load %arg4[%c6, %c0_41, %c0_42] : memref<8x4x4xbf16, #tpu.memory_space<vmem>>, vector<1x4x4xbf16>
      %51 = vector.shape_cast %50 : vector<1x4x4xbf16> to vector<4x4xbf16>
      %cst_43 = arith.constant dense<0.000000e+00> : vector<4x4xf32>
      %52 = tpu.matmul %49, %51, %cst_43 {dimension_numbers = #tpu.dot_dimension_numbers<[1], [0], [0], [1], [0, 0, 1, 1], [], []>} : vector<4x4xbf16>, vector<4x4xbf16>, vector<4x4xf32> -> vector<4x4xf32>
      %53 = arith.addf %44, %52 : vector<4x4xf32>
      %54 = vector.extract_strided_slice %48 {offsets = [1, 0], sizes = [4, 4], strides = [1, 1]} : vector<5x4xbf16> to vector<4x4xbf16>
      %c7 = arith.constant 7 : index
      %c0_44 = arith.constant 0 : index
      %c0_45 = arith.constant 0 : index
      %55 = vector.load %arg4[%c7, %c0_44, %c0_45] : memref<8x4x4xbf16, #tpu.memory_space<vmem>>, vector<1x4x4xbf16>
      %56 = vector.shape_cast %55 : vector<1x4x4xbf16> to vector<4x4xbf16>
      %cst_46 = arith.constant dense<0.000000e+00> : vector<4x4xf32>
      %57 = tpu.matmul %54, %56, %cst_46 {dimension_numbers = #tpu.dot_dimension_numbers<[1], [0], [0], [1], [0, 0, 1, 1], [], []>} : vector<4x4xbf16>, vector<4x4xbf16>, vector<4x4xf32> -> vector<4x4xf32>
      %58 = arith.addf %53, %57 : vector<4x4xf32>
      %59 = vector.broadcast %0 : vector<1x4xf32> to vector<4x4xf32>
      %60 = arith.addf %58, %59 : vector<4x4xf32>
      %61 = arith.truncf %60 : vector<4x4xf32> to vector<4x4xbf16>
      %c0_47 = arith.constant 0 : index
      %c0_48 = arith.constant 0 : index
      %62 = arith.index_cast %arg7 : i32 to index
      %c0_49 = arith.constant 0 : index
      %c0_50 = arith.constant 0 : index
      %63 = vector.load %arg6[%c0_47, %c0_48, %62, %c0_49, %c0_50] : memref<1x1x4x4x4xbf16, #tpu.memory_space<vmem>>, vector<1x1x1x4x4xbf16>
      %64 = vector.shape_cast %63 : vector<1x1x1x4x4xbf16> to vector<4x4xbf16>
      %65 = vector.shape_cast %61 : vector<4x4xbf16> to vector<1x1x1x4x4xbf16>
      tpu.vector_store %arg6[%c0_47, %c0_48, %62, %c0_49, %c0_50], %65 {strides = array<i32>} : memref<1x1x4x4x4xbf16, #tpu.memory_space<vmem>>, vector<1x1x1x4x4xbf16>,
    }
    %c4_i32_1 = arith.constant 4 : i32
    return
  }
  func.func @transform_0(%arg0: i32, %arg1: i32) -> (i32, i32, i32, i32, i32) {
    %c0_i32 = arith.constant 0 : i32
    %0 = arith.addi %arg1, %c0_i32 : i32
    %c0_i32_0 = arith.constant 0 : i32
    %c0_i32_1 = arith.constant 0 : i32
    %c0_i32_2 = arith.constant 0 : i32
    %c0_i32_3 = arith.constant 0 : i32
    return %arg0, %0, %c0_i32_0, %c0_i32_1, %c0_i32_2 : i32, i32, i32, i32, i32
  }
  func.func @transform_1(%arg0: i32, %arg1: i32) -> (i32, i32, i32, i32, i32) {
    %c1_i32 = arith.constant 1 : i32
    %0 = arith.addi %arg1, %c1_i32 : i32
    %c0_i32 = arith.constant 0 : i32
    %c0_i32_0 = arith.constant 0 : i32
    %c0_i32_1 = arith.constant 0 : i32
    %c0_i32_2 = arith.constant 0 : i32
    return %arg0, %0, %c0_i32, %c0_i32_0, %c0_i32_1 : i32, i32, i32, i32, i32
  }
  func.func @transform_2(%arg0: i32, %arg1: i32) -> (i32, i32, i32) {
    %c0_i32 = arith.constant 0 : i32
    %c0_i32_0 = arith.constant 0 : i32
    %c0_i32_1 = arith.constant 0 : i32
    %c0_i32_2 = arith.constant 0 : i32
    return %c0_i32, %c0_i32_0, %c0_i32_1 : i32, i32, i32
  }
  func.func @transform_3(%arg0: i32, %arg1: i32) -> (i32, i32) {
    %c0_i32 = arith.constant 0 : i32
    %c0_i32_0 = arith.constant 0 : i32
    %c0_i32_1 = arith.constant 0 : i32
    return %c0_i32, %c0_i32_0 : i32, i32
  }
  func.func @transform_4(%arg0: i32, %arg1: i32) -> (i32, i32, i32, i32, i32) {
    %c0_i32 = arith.constant 0 : i32
    %c0_i32_0 = arith.constant 0 : i32
    %c0_i32_1 = arith.constant 0 : i32
    %c0_i32_2 = arith.constant 0 : i32
    return %arg0, %arg1, %c0_i32, %c0_i32_0, %c0_i32_1 : i32, i32, i32, i32, i32
  }
}

module attributes {stable_mosaic.version = 11 : i64} {
  func.func @_conv_taps_kernel(%arg0: i32, %arg1: i32, %arg2: memref<1x1x10x10x4xbf16, #tpu.memory_space<vmem>>, %arg3: memref<1x1x10x10x4xbf16, #tpu.memory_space<vmem>>, %arg4: memref<1x1x10x10x4xbf16, #tpu.memory_space<vmem>>, %arg5: memref<27x4x8xbf16, #tpu.memory_space<vmem>>, %arg6: memref<1x8xf32, #tpu.memory_space<vmem>>, %arg7: memref<1x1x8x8x8xbf16, #tpu.memory_space<vmem>>, %arg8: memref<1x1x2x8xf32, #tpu.memory_space<vmem>>) attributes {dimension_semantics = [#tpu.dimension_semantics<parallel>, #tpu.dimension_semantics<parallel>], iteration_bounds = array<i64: 2, 8>, scalar_prefetch = 0 : i64, scratch_operands = 0 : i64, tpu.core_type = #tpu.core_type<tc>, window_params = [{transform_indices = @transform_0, window_bounds = array<i64: 1, 1, 10, 10, 4>}, {transform_indices = @transform_1, window_bounds = array<i64: 1, 1, 10, 10, 4>}, {transform_indices = @transform_2, window_bounds = array<i64: 1, 1, 10, 10, 4>}, {pipeline_mode = #tpu.pipeline_mode<synchronous>, transform_indices = @transform_3, window_bounds = array<i64: 27, 4, 8>}, {pipeline_mode = #tpu.pipeline_mode<synchronous>, transform_indices = @transform_4, window_bounds = array<i64: 1, 8>}, {transform_indices = @transform_5, window_bounds = array<i64: 1, 1, 8, 8, 8>}, {transform_indices = @transform_6, window_bounds = array<i64: 1, 1, 2, 8>}]} {
    %c0 = arith.constant 0 : index
    %c0_0 = arith.constant 0 : index
    %0 = vector.load %arg6[%c0, %c0_0] : memref<1x8xf32, #tpu.memory_space<vmem>>, vector<1x8xf32>
    %cst = arith.constant 0.000000e+00 : f32
    %1 = vector.broadcast %cst : f32 to vector<1x8xf32>
    %cst_1 = arith.constant 0.000000e+00 : f32
    %2 = vector.broadcast %cst_1 : f32 to vector<1x8xf32>
    %c0_i32 = arith.constant 0 : i32
    %c8_i32 = arith.constant 8 : i32
    %3 = arith.addi %c0_i32, %c8_i32 : i32
    %c1_i32 = arith.constant 1 : i32
    %4:2 = scf.for %arg9 = %c0_i32 to %3 step %c1_i32 iter_args(%arg10 = %1, %arg11 = %2) -> (vector<1x8xf32>, vector<1x8xf32>)  : i32 {
      %cst_10 = arith.constant 0.000000e+00 : f32
      %11 = vector.broadcast %cst_10 : f32 to vector<8x8xf32>
      %c0_i32_11 = arith.constant 0 : i32
      %12 = arith.addi %arg9, %c0_i32_11 : i32
      %c0_12 = arith.constant 0 : index
      %c0_13 = arith.constant 0 : index
      %13 = arith.index_cast %12 : i32 to index
      %c0_14 = arith.constant 0 : index
      %c0_15 = arith.constant 0 : index
      %14 = vector.load %arg2[%c0_12, %c0_13, %13, %c0_14, %c0_15] : memref<1x1x10x10x4xbf16, #tpu.memory_space<vmem>>, vector<1x1x1x10x4xbf16>
      %15 = vector.shape_cast %14 : vector<1x1x1x10x4xbf16> to vector<10x4xbf16>
      %16 = vector.extract_strided_slice %15 {offsets = [0, 0], sizes = [8, 4], strides = [1, 1]} : vector<10x4xbf16> to vector<8x4xbf16>
      %c0_16 = arith.constant 0 : index
      %c0_17 = arith.constant 0 : index
      %c0_18 = arith.constant 0 : index
      %17 = vector.load %arg5[%c0_16, %c0_17, %c0_18] : memref<27x4x8xbf16, #tpu.memory_space<vmem>>, vector<1x4x8xbf16>
      %18 = vector.shape_cast %17 : vector<1x4x8xbf16> to vector<4x8xbf16>
      %cst_19 = arith.constant dense<0.000000e+00> : vector<8x8xf32>
      %19 = tpu.matmul %16, %18, %cst_19 {dimension_numbers = #tpu.dot_dimension_numbers<[1], [0], [0], [1], [0, 0, 1, 1], [], []>} : vector<8x4xbf16>, vector<4x8xbf16>, vector<8x8xf32> -> vector<8x8xf32>
      %20 = arith.addf %11, %19 : vector<8x8xf32>
      %21 = vector.extract_strided_slice %15 {offsets = [1, 0], sizes = [8, 4], strides = [1, 1]} : vector<10x4xbf16> to vector<8x4xbf16>
      %c1_20 = arith.constant 1 : index
      %c0_21 = arith.constant 0 : index
      %c0_22 = arith.constant 0 : index
      %22 = vector.load %arg5[%c1_20, %c0_21, %c0_22] : memref<27x4x8xbf16, #tpu.memory_space<vmem>>, vector<1x4x8xbf16>
      %23 = vector.shape_cast %22 : vector<1x4x8xbf16> to vector<4x8xbf16>
      %cst_23 = arith.constant dense<0.000000e+00> : vector<8x8xf32>
      %24 = tpu.matmul %21, %23, %cst_23 {dimension_numbers = #tpu.dot_dimension_numbers<[1], [0], [0], [1], [0, 0, 1, 1], [], []>} : vector<8x4xbf16>, vector<4x8xbf16>, vector<8x8xf32> -> vector<8x8xf32>
      %25 = arith.addf %20, %24 : vector<8x8xf32>
      %26 = vector.extract_strided_slice %15 {offsets = [2, 0], sizes = [8, 4], strides = [1, 1]} : vector<10x4xbf16> to vector<8x4xbf16>
      %c2 = arith.constant 2 : index
      %c0_24 = arith.constant 0 : index
      %c0_25 = arith.constant 0 : index
      %27 = vector.load %arg5[%c2, %c0_24, %c0_25] : memref<27x4x8xbf16, #tpu.memory_space<vmem>>, vector<1x4x8xbf16>
      %28 = vector.shape_cast %27 : vector<1x4x8xbf16> to vector<4x8xbf16>
      %cst_26 = arith.constant dense<0.000000e+00> : vector<8x8xf32>
      %29 = tpu.matmul %26, %28, %cst_26 {dimension_numbers = #tpu.dot_dimension_numbers<[1], [0], [0], [1], [0, 0, 1, 1], [], []>} : vector<8x4xbf16>, vector<4x8xbf16>, vector<8x8xf32> -> vector<8x8xf32>
      %30 = arith.addf %25, %29 : vector<8x8xf32>
      %c1_i32_27 = arith.constant 1 : i32
      %31 = arith.addi %arg9, %c1_i32_27 : i32
      %c0_28 = arith.constant 0 : index
      %c0_29 = arith.constant 0 : index
      %32 = arith.index_cast %31 : i32 to index
      %c0_30 = arith.constant 0 : index
      %c0_31 = arith.constant 0 : index
      %33 = vector.load %arg2[%c0_28, %c0_29, %32, %c0_30, %c0_31] : memref<1x1x10x10x4xbf16, #tpu.memory_space<vmem>>, vector<1x1x1x10x4xbf16>
      %34 = vector.shape_cast %33 : vector<1x1x1x10x4xbf16> to vector<10x4xbf16>
      %35 = vector.extract_strided_slice %34 {offsets = [0, 0], sizes = [8, 4], strides = [1, 1]} : vector<10x4xbf16> to vector<8x4xbf16>
      %c3 = arith.constant 3 : index
      %c0_32 = arith.constant 0 : index
      %c0_33 = arith.constant 0 : index
      %36 = vector.load %arg5[%c3, %c0_32, %c0_33] : memref<27x4x8xbf16, #tpu.memory_space<vmem>>, vector<1x4x8xbf16>
      %37 = vector.shape_cast %36 : vector<1x4x8xbf16> to vector<4x8xbf16>
      %cst_34 = arith.constant dense<0.000000e+00> : vector<8x8xf32>
      %38 = tpu.matmul %35, %37, %cst_34 {dimension_numbers = #tpu.dot_dimension_numbers<[1], [0], [0], [1], [0, 0, 1, 1], [], []>} : vector<8x4xbf16>, vector<4x8xbf16>, vector<8x8xf32> -> vector<8x8xf32>
      %39 = arith.addf %30, %38 : vector<8x8xf32>
      %40 = vector.extract_strided_slice %34 {offsets = [1, 0], sizes = [8, 4], strides = [1, 1]} : vector<10x4xbf16> to vector<8x4xbf16>
      %c4 = arith.constant 4 : index
      %c0_35 = arith.constant 0 : index
      %c0_36 = arith.constant 0 : index
      %41 = vector.load %arg5[%c4, %c0_35, %c0_36] : memref<27x4x8xbf16, #tpu.memory_space<vmem>>, vector<1x4x8xbf16>
      %42 = vector.shape_cast %41 : vector<1x4x8xbf16> to vector<4x8xbf16>
      %cst_37 = arith.constant dense<0.000000e+00> : vector<8x8xf32>
      %43 = tpu.matmul %40, %42, %cst_37 {dimension_numbers = #tpu.dot_dimension_numbers<[1], [0], [0], [1], [0, 0, 1, 1], [], []>} : vector<8x4xbf16>, vector<4x8xbf16>, vector<8x8xf32> -> vector<8x8xf32>
      %44 = arith.addf %39, %43 : vector<8x8xf32>
      %45 = vector.extract_strided_slice %34 {offsets = [2, 0], sizes = [8, 4], strides = [1, 1]} : vector<10x4xbf16> to vector<8x4xbf16>
      %c5 = arith.constant 5 : index
      %c0_38 = arith.constant 0 : index
      %c0_39 = arith.constant 0 : index
      %46 = vector.load %arg5[%c5, %c0_38, %c0_39] : memref<27x4x8xbf16, #tpu.memory_space<vmem>>, vector<1x4x8xbf16>
      %47 = vector.shape_cast %46 : vector<1x4x8xbf16> to vector<4x8xbf16>
      %cst_40 = arith.constant dense<0.000000e+00> : vector<8x8xf32>
      %48 = tpu.matmul %45, %47, %cst_40 {dimension_numbers = #tpu.dot_dimension_numbers<[1], [0], [0], [1], [0, 0, 1, 1], [], []>} : vector<8x4xbf16>, vector<4x8xbf16>, vector<8x8xf32> -> vector<8x8xf32>
      %49 = arith.addf %44, %48 : vector<8x8xf32>
      %c2_i32 = arith.constant 2 : i32
      %50 = arith.addi %arg9, %c2_i32 : i32
      %c0_41 = arith.constant 0 : index
      %c0_42 = arith.constant 0 : index
      %51 = arith.index_cast %50 : i32 to index
      %c0_43 = arith.constant 0 : index
      %c0_44 = arith.constant 0 : index
      %52 = vector.load %arg2[%c0_41, %c0_42, %51, %c0_43, %c0_44] : memref<1x1x10x10x4xbf16, #tpu.memory_space<vmem>>, vector<1x1x1x10x4xbf16>
      %53 = vector.shape_cast %52 : vector<1x1x1x10x4xbf16> to vector<10x4xbf16>
      %54 = vector.extract_strided_slice %53 {offsets = [0, 0], sizes = [8, 4], strides = [1, 1]} : vector<10x4xbf16> to vector<8x4xbf16>
      %c6 = arith.constant 6 : index
      %c0_45 = arith.constant 0 : index
      %c0_46 = arith.constant 0 : index
      %55 = vector.load %arg5[%c6, %c0_45, %c0_46] : memref<27x4x8xbf16, #tpu.memory_space<vmem>>, vector<1x4x8xbf16>
      %56 = vector.shape_cast %55 : vector<1x4x8xbf16> to vector<4x8xbf16>
      %cst_47 = arith.constant dense<0.000000e+00> : vector<8x8xf32>
      %57 = tpu.matmul %54, %56, %cst_47 {dimension_numbers = #tpu.dot_dimension_numbers<[1], [0], [0], [1], [0, 0, 1, 1], [], []>} : vector<8x4xbf16>, vector<4x8xbf16>, vector<8x8xf32> -> vector<8x8xf32>
      %58 = arith.addf %49, %57 : vector<8x8xf32>
      %59 = vector.extract_strided_slice %53 {offsets = [1, 0], sizes = [8, 4], strides = [1, 1]} : vector<10x4xbf16> to vector<8x4xbf16>
      %c7 = arith.constant 7 : index
      %c0_48 = arith.constant 0 : index
      %c0_49 = arith.constant 0 : index
      %60 = vector.load %arg5[%c7, %c0_48, %c0_49] : memref<27x4x8xbf16, #tpu.memory_space<vmem>>, vector<1x4x8xbf16>
      %61 = vector.shape_cast %60 : vector<1x4x8xbf16> to vector<4x8xbf16>
      %cst_50 = arith.constant dense<0.000000e+00> : vector<8x8xf32>
      %62 = tpu.matmul %59, %61, %cst_50 {dimension_numbers = #tpu.dot_dimension_numbers<[1], [0], [0], [1], [0, 0, 1, 1], [], []>} : vector<8x4xbf16>, vector<4x8xbf16>, vector<8x8xf32> -> vector<8x8xf32>
      %63 = arith.addf %58, %62 : vector<8x8xf32>
      %64 = vector.extract_strided_slice %53 {offsets = [2, 0], sizes = [8, 4], strides = [1, 1]} : vector<10x4xbf16> to vector<8x4xbf16>
      %c8 = arith.constant 8 : index
      %c0_51 = arith.constant 0 : index
      %c0_52 = arith.constant 0 : index
      %65 = vector.load %arg5[%c8, %c0_51, %c0_52] : memref<27x4x8xbf16, #tpu.memory_space<vmem>>, vector<1x4x8xbf16>
      %66 = vector.shape_cast %65 : vector<1x4x8xbf16> to vector<4x8xbf16>
      %cst_53 = arith.constant dense<0.000000e+00> : vector<8x8xf32>
      %67 = tpu.matmul %64, %66, %cst_53 {dimension_numbers = #tpu.dot_dimension_numbers<[1], [0], [0], [1], [0, 0, 1, 1], [], []>} : vector<8x4xbf16>, vector<4x8xbf16>, vector<8x8xf32> -> vector<8x8xf32>
      %68 = arith.addf %63, %67 : vector<8x8xf32>
      %c0_i32_54 = arith.constant 0 : i32
      %69 = arith.addi %arg9, %c0_i32_54 : i32
      %c0_55 = arith.constant 0 : index
      %c0_56 = arith.constant 0 : index
      %70 = arith.index_cast %69 : i32 to index
      %c0_57 = arith.constant 0 : index
      %c0_58 = arith.constant 0 : index
      %71 = vector.load %arg3[%c0_55, %c0_56, %70, %c0_57, %c0_58] : memref<1x1x10x10x4xbf16, #tpu.memory_space<vmem>>, vector<1x1x1x10x4xbf16>
      %72 = vector.shape_cast %71 : vector<1x1x1x10x4xbf16> to vector<10x4xbf16>
      %73 = vector.extract_strided_slice %72 {offsets = [0, 0], sizes = [8, 4], strides = [1, 1]} : vector<10x4xbf16> to vector<8x4xbf16>
      %c9 = arith.constant 9 : index
      %c0_59 = arith.constant 0 : index
      %c0_60 = arith.constant 0 : index
      %74 = vector.load %arg5[%c9, %c0_59, %c0_60] : memref<27x4x8xbf16, #tpu.memory_space<vmem>>, vector<1x4x8xbf16>
      %75 = vector.shape_cast %74 : vector<1x4x8xbf16> to vector<4x8xbf16>
      %cst_61 = arith.constant dense<0.000000e+00> : vector<8x8xf32>
      %76 = tpu.matmul %73, %75, %cst_61 {dimension_numbers = #tpu.dot_dimension_numbers<[1], [0], [0], [1], [0, 0, 1, 1], [], []>} : vector<8x4xbf16>, vector<4x8xbf16>, vector<8x8xf32> -> vector<8x8xf32>
      %77 = arith.addf %68, %76 : vector<8x8xf32>
      %78 = vector.extract_strided_slice %72 {offsets = [1, 0], sizes = [8, 4], strides = [1, 1]} : vector<10x4xbf16> to vector<8x4xbf16>
      %c10 = arith.constant 10 : index
      %c0_62 = arith.constant 0 : index
      %c0_63 = arith.constant 0 : index
      %79 = vector.load %arg5[%c10, %c0_62, %c0_63] : memref<27x4x8xbf16, #tpu.memory_space<vmem>>, vector<1x4x8xbf16>
      %80 = vector.shape_cast %79 : vector<1x4x8xbf16> to vector<4x8xbf16>
      %cst_64 = arith.constant dense<0.000000e+00> : vector<8x8xf32>
      %81 = tpu.matmul %78, %80, %cst_64 {dimension_numbers = #tpu.dot_dimension_numbers<[1], [0], [0], [1], [0, 0, 1, 1], [], []>} : vector<8x4xbf16>, vector<4x8xbf16>, vector<8x8xf32> -> vector<8x8xf32>
      %82 = arith.addf %77, %81 : vector<8x8xf32>
      %83 = vector.extract_strided_slice %72 {offsets = [2, 0], sizes = [8, 4], strides = [1, 1]} : vector<10x4xbf16> to vector<8x4xbf16>
      %c11 = arith.constant 11 : index
      %c0_65 = arith.constant 0 : index
      %c0_66 = arith.constant 0 : index
      %84 = vector.load %arg5[%c11, %c0_65, %c0_66] : memref<27x4x8xbf16, #tpu.memory_space<vmem>>, vector<1x4x8xbf16>
      %85 = vector.shape_cast %84 : vector<1x4x8xbf16> to vector<4x8xbf16>
      %cst_67 = arith.constant dense<0.000000e+00> : vector<8x8xf32>
      %86 = tpu.matmul %83, %85, %cst_67 {dimension_numbers = #tpu.dot_dimension_numbers<[1], [0], [0], [1], [0, 0, 1, 1], [], []>} : vector<8x4xbf16>, vector<4x8xbf16>, vector<8x8xf32> -> vector<8x8xf32>
      %87 = arith.addf %82, %86 : vector<8x8xf32>
      %c1_i32_68 = arith.constant 1 : i32
      %88 = arith.addi %arg9, %c1_i32_68 : i32
      %c0_69 = arith.constant 0 : index
      %c0_70 = arith.constant 0 : index
      %89 = arith.index_cast %88 : i32 to index
      %c0_71 = arith.constant 0 : index
      %c0_72 = arith.constant 0 : index
      %90 = vector.load %arg3[%c0_69, %c0_70, %89, %c0_71, %c0_72] : memref<1x1x10x10x4xbf16, #tpu.memory_space<vmem>>, vector<1x1x1x10x4xbf16>
      %91 = vector.shape_cast %90 : vector<1x1x1x10x4xbf16> to vector<10x4xbf16>
      %92 = vector.extract_strided_slice %91 {offsets = [0, 0], sizes = [8, 4], strides = [1, 1]} : vector<10x4xbf16> to vector<8x4xbf16>
      %c12 = arith.constant 12 : index
      %c0_73 = arith.constant 0 : index
      %c0_74 = arith.constant 0 : index
      %93 = vector.load %arg5[%c12, %c0_73, %c0_74] : memref<27x4x8xbf16, #tpu.memory_space<vmem>>, vector<1x4x8xbf16>
      %94 = vector.shape_cast %93 : vector<1x4x8xbf16> to vector<4x8xbf16>
      %cst_75 = arith.constant dense<0.000000e+00> : vector<8x8xf32>
      %95 = tpu.matmul %92, %94, %cst_75 {dimension_numbers = #tpu.dot_dimension_numbers<[1], [0], [0], [1], [0, 0, 1, 1], [], []>} : vector<8x4xbf16>, vector<4x8xbf16>, vector<8x8xf32> -> vector<8x8xf32>
      %96 = arith.addf %87, %95 : vector<8x8xf32>
      %97 = vector.extract_strided_slice %91 {offsets = [1, 0], sizes = [8, 4], strides = [1, 1]} : vector<10x4xbf16> to vector<8x4xbf16>
      %c13 = arith.constant 13 : index
      %c0_76 = arith.constant 0 : index
      %c0_77 = arith.constant 0 : index
      %98 = vector.load %arg5[%c13, %c0_76, %c0_77] : memref<27x4x8xbf16, #tpu.memory_space<vmem>>, vector<1x4x8xbf16>
      %99 = vector.shape_cast %98 : vector<1x4x8xbf16> to vector<4x8xbf16>
      %cst_78 = arith.constant dense<0.000000e+00> : vector<8x8xf32>
      %100 = tpu.matmul %97, %99, %cst_78 {dimension_numbers = #tpu.dot_dimension_numbers<[1], [0], [0], [1], [0, 0, 1, 1], [], []>} : vector<8x4xbf16>, vector<4x8xbf16>, vector<8x8xf32> -> vector<8x8xf32>
      %101 = arith.addf %96, %100 : vector<8x8xf32>
      %102 = vector.extract_strided_slice %91 {offsets = [2, 0], sizes = [8, 4], strides = [1, 1]} : vector<10x4xbf16> to vector<8x4xbf16>
      %c14 = arith.constant 14 : index
      %c0_79 = arith.constant 0 : index
      %c0_80 = arith.constant 0 : index
      %103 = vector.load %arg5[%c14, %c0_79, %c0_80] : memref<27x4x8xbf16, #tpu.memory_space<vmem>>, vector<1x4x8xbf16>
      %104 = vector.shape_cast %103 : vector<1x4x8xbf16> to vector<4x8xbf16>
      %cst_81 = arith.constant dense<0.000000e+00> : vector<8x8xf32>
      %105 = tpu.matmul %102, %104, %cst_81 {dimension_numbers = #tpu.dot_dimension_numbers<[1], [0], [0], [1], [0, 0, 1, 1], [], []>} : vector<8x4xbf16>, vector<4x8xbf16>, vector<8x8xf32> -> vector<8x8xf32>
      %106 = arith.addf %101, %105 : vector<8x8xf32>
      %c2_i32_82 = arith.constant 2 : i32
      %107 = arith.addi %arg9, %c2_i32_82 : i32
      %c0_83 = arith.constant 0 : index
      %c0_84 = arith.constant 0 : index
      %108 = arith.index_cast %107 : i32 to index
      %c0_85 = arith.constant 0 : index
      %c0_86 = arith.constant 0 : index
      %109 = vector.load %arg3[%c0_83, %c0_84, %108, %c0_85, %c0_86] : memref<1x1x10x10x4xbf16, #tpu.memory_space<vmem>>, vector<1x1x1x10x4xbf16>
      %110 = vector.shape_cast %109 : vector<1x1x1x10x4xbf16> to vector<10x4xbf16>
      %111 = vector.extract_strided_slice %110 {offsets = [0, 0], sizes = [8, 4], strides = [1, 1]} : vector<10x4xbf16> to vector<8x4xbf16>
      %c15 = arith.constant 15 : index
      %c0_87 = arith.constant 0 : index
      %c0_88 = arith.constant 0 : index
      %112 = vector.load %arg5[%c15, %c0_87, %c0_88] : memref<27x4x8xbf16, #tpu.memory_space<vmem>>, vector<1x4x8xbf16>
      %113 = vector.shape_cast %112 : vector<1x4x8xbf16> to vector<4x8xbf16>
      %cst_89 = arith.constant dense<0.000000e+00> : vector<8x8xf32>
      %114 = tpu.matmul %111, %113, %cst_89 {dimension_numbers = #tpu.dot_dimension_numbers<[1], [0], [0], [1], [0, 0, 1, 1], [], []>} : vector<8x4xbf16>, vector<4x8xbf16>, vector<8x8xf32> -> vector<8x8xf32>
      %115 = arith.addf %106, %114 : vector<8x8xf32>
      %116 = vector.extract_strided_slice %110 {offsets = [1, 0], sizes = [8, 4], strides = [1, 1]} : vector<10x4xbf16> to vector<8x4xbf16>
      %c16 = arith.constant 16 : index
      %c0_90 = arith.constant 0 : index
      %c0_91 = arith.constant 0 : index
      %117 = vector.load %arg5[%c16, %c0_90, %c0_91] : memref<27x4x8xbf16, #tpu.memory_space<vmem>>, vector<1x4x8xbf16>
      %118 = vector.shape_cast %117 : vector<1x4x8xbf16> to vector<4x8xbf16>
      %cst_92 = arith.constant dense<0.000000e+00> : vector<8x8xf32>
      %119 = tpu.matmul %116, %118, %cst_92 {dimension_numbers = #tpu.dot_dimension_numbers<[1], [0], [0], [1], [0, 0, 1, 1], [], []>} : vector<8x4xbf16>, vector<4x8xbf16>, vector<8x8xf32> -> vector<8x8xf32>
      %120 = arith.addf %115, %119 : vector<8x8xf32>
      %121 = vector.extract_strided_slice %110 {offsets = [2, 0], sizes = [8, 4], strides = [1, 1]} : vector<10x4xbf16> to vector<8x4xbf16>
      %c17 = arith.constant 17 : index
      %c0_93 = arith.constant 0 : index
      %c0_94 = arith.constant 0 : index
      %122 = vector.load %arg5[%c17, %c0_93, %c0_94] : memref<27x4x8xbf16, #tpu.memory_space<vmem>>, vector<1x4x8xbf16>
      %123 = vector.shape_cast %122 : vector<1x4x8xbf16> to vector<4x8xbf16>
      %cst_95 = arith.constant dense<0.000000e+00> : vector<8x8xf32>
      %124 = tpu.matmul %121, %123, %cst_95 {dimension_numbers = #tpu.dot_dimension_numbers<[1], [0], [0], [1], [0, 0, 1, 1], [], []>} : vector<8x4xbf16>, vector<4x8xbf16>, vector<8x8xf32> -> vector<8x8xf32>
      %125 = arith.addf %120, %124 : vector<8x8xf32>
      %c0_i32_96 = arith.constant 0 : i32
      %126 = arith.addi %arg9, %c0_i32_96 : i32
      %c0_97 = arith.constant 0 : index
      %c0_98 = arith.constant 0 : index
      %127 = arith.index_cast %126 : i32 to index
      %c0_99 = arith.constant 0 : index
      %c0_100 = arith.constant 0 : index
      %128 = vector.load %arg4[%c0_97, %c0_98, %127, %c0_99, %c0_100] : memref<1x1x10x10x4xbf16, #tpu.memory_space<vmem>>, vector<1x1x1x10x4xbf16>
      %129 = vector.shape_cast %128 : vector<1x1x1x10x4xbf16> to vector<10x4xbf16>
      %130 = vector.extract_strided_slice %129 {offsets = [0, 0], sizes = [8, 4], strides = [1, 1]} : vector<10x4xbf16> to vector<8x4xbf16>
      %c18 = arith.constant 18 : index
      %c0_101 = arith.constant 0 : index
      %c0_102 = arith.constant 0 : index
      %131 = vector.load %arg5[%c18, %c0_101, %c0_102] : memref<27x4x8xbf16, #tpu.memory_space<vmem>>, vector<1x4x8xbf16>
      %132 = vector.shape_cast %131 : vector<1x4x8xbf16> to vector<4x8xbf16>
      %cst_103 = arith.constant dense<0.000000e+00> : vector<8x8xf32>
      %133 = tpu.matmul %130, %132, %cst_103 {dimension_numbers = #tpu.dot_dimension_numbers<[1], [0], [0], [1], [0, 0, 1, 1], [], []>} : vector<8x4xbf16>, vector<4x8xbf16>, vector<8x8xf32> -> vector<8x8xf32>
      %134 = arith.addf %125, %133 : vector<8x8xf32>
      %135 = vector.extract_strided_slice %129 {offsets = [1, 0], sizes = [8, 4], strides = [1, 1]} : vector<10x4xbf16> to vector<8x4xbf16>
      %c19 = arith.constant 19 : index
      %c0_104 = arith.constant 0 : index
      %c0_105 = arith.constant 0 : index
      %136 = vector.load %arg5[%c19, %c0_104, %c0_105] : memref<27x4x8xbf16, #tpu.memory_space<vmem>>, vector<1x4x8xbf16>
      %137 = vector.shape_cast %136 : vector<1x4x8xbf16> to vector<4x8xbf16>
      %cst_106 = arith.constant dense<0.000000e+00> : vector<8x8xf32>
      %138 = tpu.matmul %135, %137, %cst_106 {dimension_numbers = #tpu.dot_dimension_numbers<[1], [0], [0], [1], [0, 0, 1, 1], [], []>} : vector<8x4xbf16>, vector<4x8xbf16>, vector<8x8xf32> -> vector<8x8xf32>
      %139 = arith.addf %134, %138 : vector<8x8xf32>
      %140 = vector.extract_strided_slice %129 {offsets = [2, 0], sizes = [8, 4], strides = [1, 1]} : vector<10x4xbf16> to vector<8x4xbf16>
      %c20 = arith.constant 20 : index
      %c0_107 = arith.constant 0 : index
      %c0_108 = arith.constant 0 : index
      %141 = vector.load %arg5[%c20, %c0_107, %c0_108] : memref<27x4x8xbf16, #tpu.memory_space<vmem>>, vector<1x4x8xbf16>
      %142 = vector.shape_cast %141 : vector<1x4x8xbf16> to vector<4x8xbf16>
      %cst_109 = arith.constant dense<0.000000e+00> : vector<8x8xf32>
      %143 = tpu.matmul %140, %142, %cst_109 {dimension_numbers = #tpu.dot_dimension_numbers<[1], [0], [0], [1], [0, 0, 1, 1], [], []>} : vector<8x4xbf16>, vector<4x8xbf16>, vector<8x8xf32> -> vector<8x8xf32>
      %144 = arith.addf %139, %143 : vector<8x8xf32>
      %c1_i32_110 = arith.constant 1 : i32
      %145 = arith.addi %arg9, %c1_i32_110 : i32
      %c0_111 = arith.constant 0 : index
      %c0_112 = arith.constant 0 : index
      %146 = arith.index_cast %145 : i32 to index
      %c0_113 = arith.constant 0 : index
      %c0_114 = arith.constant 0 : index
      %147 = vector.load %arg4[%c0_111, %c0_112, %146, %c0_113, %c0_114] : memref<1x1x10x10x4xbf16, #tpu.memory_space<vmem>>, vector<1x1x1x10x4xbf16>
      %148 = vector.shape_cast %147 : vector<1x1x1x10x4xbf16> to vector<10x4xbf16>
      %149 = vector.extract_strided_slice %148 {offsets = [0, 0], sizes = [8, 4], strides = [1, 1]} : vector<10x4xbf16> to vector<8x4xbf16>
      %c21 = arith.constant 21 : index
      %c0_115 = arith.constant 0 : index
      %c0_116 = arith.constant 0 : index
      %150 = vector.load %arg5[%c21, %c0_115, %c0_116] : memref<27x4x8xbf16, #tpu.memory_space<vmem>>, vector<1x4x8xbf16>
      %151 = vector.shape_cast %150 : vector<1x4x8xbf16> to vector<4x8xbf16>
      %cst_117 = arith.constant dense<0.000000e+00> : vector<8x8xf32>
      %152 = tpu.matmul %149, %151, %cst_117 {dimension_numbers = #tpu.dot_dimension_numbers<[1], [0], [0], [1], [0, 0, 1, 1], [], []>} : vector<8x4xbf16>, vector<4x8xbf16>, vector<8x8xf32> -> vector<8x8xf32>
      %153 = arith.addf %144, %152 : vector<8x8xf32>
      %154 = vector.extract_strided_slice %148 {offsets = [1, 0], sizes = [8, 4], strides = [1, 1]} : vector<10x4xbf16> to vector<8x4xbf16>
      %c22 = arith.constant 22 : index
      %c0_118 = arith.constant 0 : index
      %c0_119 = arith.constant 0 : index
      %155 = vector.load %arg5[%c22, %c0_118, %c0_119] : memref<27x4x8xbf16, #tpu.memory_space<vmem>>, vector<1x4x8xbf16>
      %156 = vector.shape_cast %155 : vector<1x4x8xbf16> to vector<4x8xbf16>
      %cst_120 = arith.constant dense<0.000000e+00> : vector<8x8xf32>
      %157 = tpu.matmul %154, %156, %cst_120 {dimension_numbers = #tpu.dot_dimension_numbers<[1], [0], [0], [1], [0, 0, 1, 1], [], []>} : vector<8x4xbf16>, vector<4x8xbf16>, vector<8x8xf32> -> vector<8x8xf32>
      %158 = arith.addf %153, %157 : vector<8x8xf32>
      %159 = vector.extract_strided_slice %148 {offsets = [2, 0], sizes = [8, 4], strides = [1, 1]} : vector<10x4xbf16> to vector<8x4xbf16>
      %c23 = arith.constant 23 : index
      %c0_121 = arith.constant 0 : index
      %c0_122 = arith.constant 0 : index
      %160 = vector.load %arg5[%c23, %c0_121, %c0_122] : memref<27x4x8xbf16, #tpu.memory_space<vmem>>, vector<1x4x8xbf16>
      %161 = vector.shape_cast %160 : vector<1x4x8xbf16> to vector<4x8xbf16>
      %cst_123 = arith.constant dense<0.000000e+00> : vector<8x8xf32>
      %162 = tpu.matmul %159, %161, %cst_123 {dimension_numbers = #tpu.dot_dimension_numbers<[1], [0], [0], [1], [0, 0, 1, 1], [], []>} : vector<8x4xbf16>, vector<4x8xbf16>, vector<8x8xf32> -> vector<8x8xf32>
      %163 = arith.addf %158, %162 : vector<8x8xf32>
      %c2_i32_124 = arith.constant 2 : i32
      %164 = arith.addi %arg9, %c2_i32_124 : i32
      %c0_125 = arith.constant 0 : index
      %c0_126 = arith.constant 0 : index
      %165 = arith.index_cast %164 : i32 to index
      %c0_127 = arith.constant 0 : index
      %c0_128 = arith.constant 0 : index
      %166 = vector.load %arg4[%c0_125, %c0_126, %165, %c0_127, %c0_128] : memref<1x1x10x10x4xbf16, #tpu.memory_space<vmem>>, vector<1x1x1x10x4xbf16>
      %167 = vector.shape_cast %166 : vector<1x1x1x10x4xbf16> to vector<10x4xbf16>
      %168 = vector.extract_strided_slice %167 {offsets = [0, 0], sizes = [8, 4], strides = [1, 1]} : vector<10x4xbf16> to vector<8x4xbf16>
      %c24 = arith.constant 24 : index
      %c0_129 = arith.constant 0 : index
      %c0_130 = arith.constant 0 : index
      %169 = vector.load %arg5[%c24, %c0_129, %c0_130] : memref<27x4x8xbf16, #tpu.memory_space<vmem>>, vector<1x4x8xbf16>
      %170 = vector.shape_cast %169 : vector<1x4x8xbf16> to vector<4x8xbf16>
      %cst_131 = arith.constant dense<0.000000e+00> : vector<8x8xf32>
      %171 = tpu.matmul %168, %170, %cst_131 {dimension_numbers = #tpu.dot_dimension_numbers<[1], [0], [0], [1], [0, 0, 1, 1], [], []>} : vector<8x4xbf16>, vector<4x8xbf16>, vector<8x8xf32> -> vector<8x8xf32>
      %172 = arith.addf %163, %171 : vector<8x8xf32>
      %173 = vector.extract_strided_slice %167 {offsets = [1, 0], sizes = [8, 4], strides = [1, 1]} : vector<10x4xbf16> to vector<8x4xbf16>
      %c25 = arith.constant 25 : index
      %c0_132 = arith.constant 0 : index
      %c0_133 = arith.constant 0 : index
      %174 = vector.load %arg5[%c25, %c0_132, %c0_133] : memref<27x4x8xbf16, #tpu.memory_space<vmem>>, vector<1x4x8xbf16>
      %175 = vector.shape_cast %174 : vector<1x4x8xbf16> to vector<4x8xbf16>
      %cst_134 = arith.constant dense<0.000000e+00> : vector<8x8xf32>
      %176 = tpu.matmul %173, %175, %cst_134 {dimension_numbers = #tpu.dot_dimension_numbers<[1], [0], [0], [1], [0, 0, 1, 1], [], []>} : vector<8x4xbf16>, vector<4x8xbf16>, vector<8x8xf32> -> vector<8x8xf32>
      %177 = arith.addf %172, %176 : vector<8x8xf32>
      %178 = vector.extract_strided_slice %167 {offsets = [2, 0], sizes = [8, 4], strides = [1, 1]} : vector<10x4xbf16> to vector<8x4xbf16>
      %c26 = arith.constant 26 : index
      %c0_135 = arith.constant 0 : index
      %c0_136 = arith.constant 0 : index
      %179 = vector.load %arg5[%c26, %c0_135, %c0_136] : memref<27x4x8xbf16, #tpu.memory_space<vmem>>, vector<1x4x8xbf16>
      %180 = vector.shape_cast %179 : vector<1x4x8xbf16> to vector<4x8xbf16>
      %cst_137 = arith.constant dense<0.000000e+00> : vector<8x8xf32>
      %181 = tpu.matmul %178, %180, %cst_137 {dimension_numbers = #tpu.dot_dimension_numbers<[1], [0], [0], [1], [0, 0, 1, 1], [], []>} : vector<8x4xbf16>, vector<4x8xbf16>, vector<8x8xf32> -> vector<8x8xf32>
      %182 = arith.addf %177, %181 : vector<8x8xf32>
      %183 = vector.broadcast %0 : vector<1x8xf32> to vector<8x8xf32>
      %184 = arith.addf %182, %183 : vector<8x8xf32>
      %185 = arith.truncf %184 : vector<8x8xf32> to vector<8x8xbf16>
      %c0_138 = arith.constant 0 : index
      %c0_139 = arith.constant 0 : index
      %186 = arith.index_cast %arg9 : i32 to index
      %c0_140 = arith.constant 0 : index
      %c0_141 = arith.constant 0 : index
      %187 = vector.load %arg7[%c0_138, %c0_139, %186, %c0_140, %c0_141] : memref<1x1x8x8x8xbf16, #tpu.memory_space<vmem>>, vector<1x1x1x8x8xbf16>
      %188 = vector.shape_cast %187 : vector<1x1x1x8x8xbf16> to vector<8x8xbf16>
      %189 = vector.shape_cast %185 : vector<8x8xbf16> to vector<1x1x1x8x8xbf16>
      tpu.vector_store %arg7[%c0_138, %c0_139, %186, %c0_140, %c0_141], %189 {strides = array<i32>} : memref<1x1x8x8x8xbf16, #tpu.memory_space<vmem>>, vector<1x1x1x8x8xbf16>,
      %cst_142 = arith.constant dense<0.000000e+00> : vector<8xf32>
      %190 = vector.multi_reduction <add>, %184, %cst_142 [0] : vector<8x8xf32> to vector<8xf32>
      %191 = vector.shape_cast %190 : vector<8xf32> to vector<1x8xf32>
      %192 = arith.addf %arg10, %191 : vector<1x8xf32>
      %193 = arith.mulf %184, %184 : vector<8x8xf32>
      %cst_143 = arith.constant dense<0.000000e+00> : vector<8xf32>
      %194 = vector.multi_reduction <add>, %193, %cst_143 [0] : vector<8x8xf32> to vector<8xf32>
      %195 = vector.shape_cast %194 : vector<8xf32> to vector<1x8xf32>
      %196 = arith.addf %arg11, %195 : vector<1x8xf32>
      scf.yield %192, %196 : vector<1x8xf32>, vector<1x8xf32>
    }
    %c8_i32_2 = arith.constant 8 : i32
    %c0_3 = arith.constant 0 : index
    %c0_4 = arith.constant 0 : index
    %c0_5 = arith.constant 0 : index
    %c0_6 = arith.constant 0 : index
    %5 = vector.load %arg8[%c0_3, %c0_4, %c0_5, %c0_6] : memref<1x1x2x8xf32, #tpu.memory_space<vmem>>, vector<1x1x1x8xf32>
    %6 = vector.shape_cast %5 : vector<1x1x1x8xf32> to vector<1x8xf32>
    %7 = vector.shape_cast %4#0 : vector<1x8xf32> to vector<1x1x1x8xf32>
    tpu.vector_store %arg8[%c0_3, %c0_4, %c0_5, %c0_6], %7 {strides = array<i32>} : memref<1x1x2x8xf32, #tpu.memory_space<vmem>>, vector<1x1x1x8xf32>,
    %c0_7 = arith.constant 0 : index
    %c0_8 = arith.constant 0 : index
    %c1 = arith.constant 1 : index
    %c0_9 = arith.constant 0 : index
    %8 = vector.load %arg8[%c0_7, %c0_8, %c1, %c0_9] : memref<1x1x2x8xf32, #tpu.memory_space<vmem>>, vector<1x1x1x8xf32>
    %9 = vector.shape_cast %8 : vector<1x1x1x8xf32> to vector<1x8xf32>
    %10 = vector.shape_cast %4#1 : vector<1x8xf32> to vector<1x1x1x8xf32>
    tpu.vector_store %arg8[%c0_7, %c0_8, %c1, %c0_9], %10 {strides = array<i32>} : memref<1x1x2x8xf32, #tpu.memory_space<vmem>>, vector<1x1x1x8xf32>,
    return
  }
  func.func @transform_0(%arg0: i32, %arg1: i32) -> (i32, i32, i32, i32, i32) {
    %c0_i32 = arith.constant 0 : i32
    %0 = arith.addi %arg1, %c0_i32 : i32
    %c0_i32_0 = arith.constant 0 : i32
    %c0_i32_1 = arith.constant 0 : i32
    %c0_i32_2 = arith.constant 0 : i32
    %c0_i32_3 = arith.constant 0 : i32
    return %arg0, %0, %c0_i32_0, %c0_i32_1, %c0_i32_2 : i32, i32, i32, i32, i32
  }
  func.func @transform_1(%arg0: i32, %arg1: i32) -> (i32, i32, i32, i32, i32) {
    %c1_i32 = arith.constant 1 : i32
    %0 = arith.addi %arg1, %c1_i32 : i32
    %c0_i32 = arith.constant 0 : i32
    %c0_i32_0 = arith.constant 0 : i32
    %c0_i32_1 = arith.constant 0 : i32
    %c0_i32_2 = arith.constant 0 : i32
    return %arg0, %0, %c0_i32, %c0_i32_0, %c0_i32_1 : i32, i32, i32, i32, i32
  }
  func.func @transform_2(%arg0: i32, %arg1: i32) -> (i32, i32, i32, i32, i32) {
    %c2_i32 = arith.constant 2 : i32
    %0 = arith.addi %arg1, %c2_i32 : i32
    %c0_i32 = arith.constant 0 : i32
    %c0_i32_0 = arith.constant 0 : i32
    %c0_i32_1 = arith.constant 0 : i32
    %c0_i32_2 = arith.constant 0 : i32
    return %arg0, %0, %c0_i32, %c0_i32_0, %c0_i32_1 : i32, i32, i32, i32, i32
  }
  func.func @transform_3(%arg0: i32, %arg1: i32) -> (i32, i32, i32) {
    %c0_i32 = arith.constant 0 : i32
    %c0_i32_0 = arith.constant 0 : i32
    %c0_i32_1 = arith.constant 0 : i32
    %c0_i32_2 = arith.constant 0 : i32
    return %c0_i32, %c0_i32_0, %c0_i32_1 : i32, i32, i32
  }
  func.func @transform_4(%arg0: i32, %arg1: i32) -> (i32, i32) {
    %c0_i32 = arith.constant 0 : i32
    %c0_i32_0 = arith.constant 0 : i32
    %c0_i32_1 = arith.constant 0 : i32
    return %c0_i32, %c0_i32_0 : i32, i32
  }
  func.func @transform_5(%arg0: i32, %arg1: i32) -> (i32, i32, i32, i32, i32) {
    %c0_i32 = arith.constant 0 : i32
    %c0_i32_0 = arith.constant 0 : i32
    %c0_i32_1 = arith.constant 0 : i32
    %c0_i32_2 = arith.constant 0 : i32
    return %arg0, %arg1, %c0_i32, %c0_i32_0, %c0_i32_1 : i32, i32, i32, i32, i32
  }
  func.func @transform_6(%arg0: i32, %arg1: i32) -> (i32, i32, i32, i32) {
    %c0_i32 = arith.constant 0 : i32
    %c0_i32_0 = arith.constant 0 : i32
    %c0_i32_1 = arith.constant 0 : i32
    return %arg0, %arg1, %c0_i32, %c0_i32_0 : i32, i32, i32, i32
  }
}

module attributes {stable_mosaic.version = 11 : i64} {
  func.func @_affine_lrelu_kernel(%arg0: i32, %arg1: memref<128x64xbf16, #tpu.memory_space<vmem>>, %arg2: memref<1x64xf32, #tpu.memory_space<vmem>>, %arg3: memref<1x64xf32, #tpu.memory_space<vmem>>, %arg4: memref<128x64xbf16, #tpu.memory_space<vmem>>) attributes {dimension_semantics = [#tpu.dimension_semantics<parallel>], iteration_bounds = array<i64: 1>, scalar_prefetch = 0 : i64, scratch_operands = 0 : i64, tpu.core_type = #tpu.core_type<tc>, window_params = [{transform_indices = @transform_0, window_bounds = array<i64: 128, 64>}, {pipeline_mode = #tpu.pipeline_mode<synchronous>, transform_indices = @transform_1, window_bounds = array<i64: 1, 64>}, {pipeline_mode = #tpu.pipeline_mode<synchronous>, transform_indices = @transform_2, window_bounds = array<i64: 1, 64>}, {transform_indices = @transform_3, window_bounds = array<i64: 128, 64>}]} {
    %c0 = arith.constant 0 : index
    %c0_0 = arith.constant 0 : index
    %0 = vector.load %arg1[%c0, %c0_0] : memref<128x64xbf16, #tpu.memory_space<vmem>>, vector<128x64xbf16>
    %1 = arith.extf %0 : vector<128x64xbf16> to vector<128x64xf32>
    %c0_1 = arith.constant 0 : index
    %c0_2 = arith.constant 0 : index
    %2 = vector.load %arg2[%c0_1, %c0_2] : memref<1x64xf32, #tpu.memory_space<vmem>>, vector<1x64xf32>
    %3 = vector.broadcast %2 : vector<1x64xf32> to vector<128x64xf32>
    %4 = arith.mulf %1, %3 : vector<128x64xf32>
    %c0_3 = arith.constant 0 : index
    %c0_4 = arith.constant 0 : index
    %5 = vector.load %arg3[%c0_3, %c0_4] : memref<1x64xf32, #tpu.memory_space<vmem>>, vector<1x64xf32>
    %6 = vector.broadcast %5 : vector<1x64xf32> to vector<128x64xf32>
    %7 = arith.addf %4, %6 : vector<128x64xf32>
    %cst = arith.constant 0.000000e+00 : f32
    %8 = vector.broadcast %cst : f32 to vector<128x64xf32>
    %9 = arith.cmpf oge, %7, %8 : vector<128x64xf32>
    %cst_5 = arith.constant 0.00999999977 : f32
    %10 = vector.broadcast %cst_5 : f32 to vector<128x64xf32>
    %11 = arith.mulf %10, %7 : vector<128x64xf32>
    %12 = arith.select %9, %7, %11 : vector<128x64xi1>, vector<128x64xf32>
    %13 = arith.truncf %12 : vector<128x64xf32> to vector<128x64xbf16>
    %c0_6 = arith.constant 0 : index
    %c0_7 = arith.constant 0 : index
    %14 = vector.load %arg4[%c0_6, %c0_7] : memref<128x64xbf16, #tpu.memory_space<vmem>>, vector<128x64xbf16>
    tpu.vector_store %arg4[%c0_6, %c0_7], %13 {strides = array<i32>} : memref<128x64xbf16, #tpu.memory_space<vmem>>, vector<128x64xbf16>,
    return
  }
  func.func @transform_0(%arg0: i32) -> (i32, i32) {
    %c0_i32 = arith.constant 0 : i32
    %c0_i32_0 = arith.constant 0 : i32
    return %arg0, %c0_i32 : i32, i32
  }
  func.func @transform_1(%arg0: i32) -> (i32, i32) {
    %c0_i32 = arith.constant 0 : i32
    %c0_i32_0 = arith.constant 0 : i32
    %c0_i32_1 = arith.constant 0 : i32
    return %c0_i32, %c0_i32_0 : i32, i32
  }
  func.func @transform_2(%arg0: i32) -> (i32, i32) {
    %c0_i32 = arith.constant 0 : i32
    %c0_i32_0 = arith.constant 0 : i32
    %c0_i32_1 = arith.constant 0 : i32
    return %c0_i32, %c0_i32_0 : i32, i32
  }
  func.func @transform_3(%arg0: i32) -> (i32, i32) {
    %c0_i32 = arith.constant 0 : i32
    %c0_i32_0 = arith.constant 0 : i32
    return %arg0, %c0_i32 : i32, i32
  }
}

module attributes {stable_mosaic.version = 11 : i64} {
  func.func @_conv_taps_kernel(%arg0: i32, %arg1: i32, %arg2: memref<1x1x10x10x8xbf16, #tpu.memory_space<vmem>>, %arg3: memref<1x1x10x10x8xbf16, #tpu.memory_space<vmem>>, %arg4: memref<1x1x10x10x8xbf16, #tpu.memory_space<vmem>>, %arg5: memref<27x8x4xbf16, #tpu.memory_space<vmem>>, %arg6: memref<1x4xf32, #tpu.memory_space<vmem>>, %arg7: memref<1x1x8x8x4xbf16, #tpu.memory_space<vmem>>, %arg8: memref<1x1x2x4xf32, #tpu.memory_space<vmem>>) attributes {dimension_semantics = [#tpu.dimension_semantics<parallel>, #tpu.dimension_semantics<parallel>], iteration_bounds = array<i64: 2, 8>, scalar_prefetch = 0 : i64, scratch_operands = 0 : i64, tpu.core_type = #tpu.core_type<tc>, window_params = [{transform_indices = @transform_0, window_bounds = array<i64: 1, 1, 10, 10, 8>}, {transform_indices = @transform_1, window_bounds = array<i64: 1, 1, 10, 10, 8>}, {transform_indices = @transform_2, window_bounds = array<i64: 1, 1, 10, 10, 8>}, {pipeline_mode = #tpu.pipeline_mode<synchronous>, transform_indices = @transform_3, window_bounds = array<i64: 27, 8, 4>}, {pipeline_mode = #tpu.pipeline_mode<synchronous>, transform_indices = @transform_4, window_bounds = array<i64: 1, 4>}, {transform_indices = @transform_5, window_bounds = array<i64: 1, 1, 8, 8, 4>}, {transform_indices = @transform_6, window_bounds = array<i64: 1, 1, 2, 4>}]} {
    %c0 = arith.constant 0 : index
    %c0_0 = arith.constant 0 : index
    %0 = vector.load %arg6[%c0, %c0_0] : memref<1x4xf32, #tpu.memory_space<vmem>>, vector<1x4xf32>
    %cst = arith.constant 0.000000e+00 : f32
    %1 = vector.broadcast %cst : f32 to vector<1x4xf32>
    %cst_1 = arith.constant 0.000000e+00 : f32
    %2 = vector.broadcast %cst_1 : f32 to vector<1x4xf32>
    %c0_i32 = arith.constant 0 : i32
    %c8_i32 = arith.constant 8 : i32
    %3 = arith.addi %c0_i32, %c8_i32 : i32
    %c1_i32 = arith.constant 1 : i32
    %4:2 = scf.for %arg9 = %c0_i32 to %3 step %c1_i32 iter_args(%arg10 = %1, %arg11 = %2) -> (vector<1x4xf32>, vector<1x4xf32>)  : i32 {
      %cst_10 = arith.constant 0.000000e+00 : f32
      %11 = vector.broadcast %cst_10 : f32 to vector<8x4xf32>
      %c0_i32_11 = arith.constant 0 : i32
      %12 = arith.addi %arg9, %c0_i32_11 : i32
      %c0_12 = arith.constant 0 : index
      %c0_13 = arith.constant 0 : index
      %13 = arith.index_cast %12 : i32 to index
      %c0_14 = arith.constant 0 : index
      %c0_15 = arith.constant 0 : index
      %14 = vector.load %arg2[%c0_12, %c0_13, %13, %c0_14, %c0_15] : memref<1x1x10x10x8xbf16, #tpu.memory_space<vmem>>, vector<1x1x1x10x8xbf16>
      %15 = vector.shape_cast %14 : vector<1x1x1x10x8xbf16> to vector<10x8xbf16>
      %16 = vector.extract_strided_slice %15 {offsets = [0, 0], sizes = [8, 8], strides = [1, 1]} : vector<10x8xbf16> to vector<8x8xbf16>
      %c0_16 = arith.constant 0 : index
      %c0_17 = arith.constant 0 : index
      %c0_18 = arith.constant 0 : index
      %17 = vector.load %arg5[%c0_16, %c0_17, %c0_18] : memref<27x8x4xbf16, #tpu.memory_space<vmem>>, vector<1x8x4xbf16>
      %18 = vector.shape_cast %17 : vector<1x8x4xbf16> to vector<8x4xbf16>
      %cst_19 = arith.constant dense<0.000000e+00> : vector<8x4xf32>
      %19 = tpu.matmul %16, %18, %cst_19 {dimension_numbers = #tpu.dot_dimension_numbers<[1], [0], [0], [1], [0, 0, 1, 1], [], []>} : vector<8x8xbf16>, vector<8x4xbf16>, vector<8x4xf32> -> vector<8x4xf32>
      %20 = arith.addf %11, %19 : vector<8x4xf32>
      %21 = vector.extract_strided_slice %15 {offsets = [1, 0], sizes = [8, 8], strides = [1, 1]} : vector<10x8xbf16> to vector<8x8xbf16>
      %c1_20 = arith.constant 1 : index
      %c0_21 = arith.constant 0 : index
      %c0_22 = arith.constant 0 : index
      %22 = vector.load %arg5[%c1_20, %c0_21, %c0_22] : memref<27x8x4xbf16, #tpu.memory_space<vmem>>, vector<1x8x4xbf16>
      %23 = vector.shape_cast %22 : vector<1x8x4xbf16> to vector<8x4xbf16>
      %cst_23 = arith.constant dense<0.000000e+00> : vector<8x4xf32>
      %24 = tpu.matmul %21, %23, %cst_23 {dimension_numbers = #tpu.dot_dimension_numbers<[1], [0], [0], [1], [0, 0, 1, 1], [], []>} : vector<8x8xbf16>, vector<8x4xbf16>, vector<8x4xf32> -> vector<8x4xf32>
      %25 = arith.addf %20, %24 : vector<8x4xf32>
      %26 = vector.extract_strided_slice %15 {offsets = [2, 0], sizes = [8, 8], strides = [1, 1]} : vector<10x8xbf16> to vector<8x8xbf16>
      %c2 = arith.constant 2 : index
      %c0_24 = arith.constant 0 : index
      %c0_25 = arith.constant 0 : index
      %27 = vector.load %arg5[%c2, %c0_24, %c0_25] : memref<27x8x4xbf16, #tpu.memory_space<vmem>>, vector<1x8x4xbf16>
      %28 = vector.shape_cast %27 : vector<1x8x4xbf16> to vector<8x4xbf16>
      %cst_26 = arith.constant dense<0.000000e+00> : vector<8x4xf32>
      %29 = tpu.matmul %26, %28, %cst_26 {dimension_numbers = #tpu.dot_dimension_numbers<[1], [0], [0], [1], [0, 0, 1, 1], [], []>} : vector<8x8xbf16>, vector<8x4xbf16>, vector<8x4xf32> -> vector<8x4xf32>
      %30 = arith.addf %25, %29 : vector<8x4xf32>
      %c1_i32_27 = arith.constant 1 : i32
      %31 = arith.addi %arg9, %c1_i32_27 : i32
      %c0_28 = arith.constant 0 : index
      %c0_29 = arith.constant 0 : index
      %32 = arith.index_cast %31 : i32 to index
      %c0_30 = arith.constant 0 : index
      %c0_31 = arith.constant 0 : index
      %33 = vector.load %arg2[%c0_28, %c0_29, %32, %c0_30, %c0_31] : memref<1x1x10x10x8xbf16, #tpu.memory_space<vmem>>, vector<1x1x1x10x8xbf16>
      %34 = vector.shape_cast %33 : vector<1x1x1x10x8xbf16> to vector<10x8xbf16>
      %35 = vector.extract_strided_slice %34 {offsets = [0, 0], sizes = [8, 8], strides = [1, 1]} : vector<10x8xbf16> to vector<8x8xbf16>
      %c3 = arith.constant 3 : index
      %c0_32 = arith.constant 0 : index
      %c0_33 = arith.constant 0 : index
      %36 = vector.load %arg5[%c3, %c0_32, %c0_33] : memref<27x8x4xbf16, #tpu.memory_space<vmem>>, vector<1x8x4xbf16>
      %37 = vector.shape_cast %36 : vector<1x8x4xbf16> to vector<8x4xbf16>
      %cst_34 = arith.constant dense<0.000000e+00> : vector<8x4xf32>
      %38 = tpu.matmul %35, %37, %cst_34 {dimension_numbers = #tpu.dot_dimension_numbers<[1], [0], [0], [1], [0, 0, 1, 1], [], []>} : vector<8x8xbf16>, vector<8x4xbf16>, vector<8x4xf32> -> vector<8x4xf32>
      %39 = arith.addf %30, %38 : vector<8x4xf32>
      %40 = vector.extract_strided_slice %34 {offsets = [1, 0], sizes = [8, 8], strides = [1, 1]} : vector<10x8xbf16> to vector<8x8xbf16>
      %c4 = arith.constant 4 : index
      %c0_35 = arith.constant 0 : index
      %c0_36 = arith.constant 0 : index
      %41 = vector.load %arg5[%c4, %c0_35, %c0_36] : memref<27x8x4xbf16, #tpu.memory_space<vmem>>, vector<1x8x4xbf16>
      %42 = vector.shape_cast %41 : vector<1x8x4xbf16> to vector<8x4xbf16>
      %cst_37 = arith.constant dense<0.000000e+00> : vector<8x4xf32>
      %43 = tpu.matmul %40, %42, %cst_37 {dimension_numbers = #tpu.dot_dimension_numbers<[1], [0], [0], [1], [0, 0, 1, 1], [], []>} : vector<8x8xbf16>, vector<8x4xbf16>, vector<8x4xf32> -> vector<8x4xf32>
      %44 = arith.addf %39, %43 : vector<8x4xf32>
      %45 = vector.extract_strided_slice %34 {offsets = [2, 0], sizes = [8, 8], strides = [1, 1]} : vector<10x8xbf16> to vector<8x8xbf16>
      %c5 = arith.constant 5 : index
      %c0_38 = arith.constant 0 : index
      %c0_39 = arith.constant 0 : index
      %46 = vector.load %arg5[%c5, %c0_38, %c0_39] : memref<27x8x4xbf16, #tpu.memory_space<vmem>>, vector<1x8x4xbf16>
      %47 = vector.shape_cast %46 : vector<1x8x4xbf16> to vector<8x4xbf16>
      %cst_40 = arith.constant dense<0.000000e+00> : vector<8x4xf32>
      %48 = tpu.matmul %45, %47, %cst_40 {dimension_numbers = #tpu.dot_dimension_numbers<[1], [0], [0], [1], [0, 0, 1, 1], [], []>} : vector<8x8xbf16>, vector<8x4xbf16>, vector<8x4xf32> -> vector<8x4xf32>
      %49 = arith.addf %44, %48 : vector<8x4xf32>
      %c2_i32 = arith.constant 2 : i32
      %50 = arith.addi %arg9, %c2_i32 : i32
      %c0_41 = arith.constant 0 : index
      %c0_42 = arith.constant 0 : index
      %51 = arith.index_cast %50 : i32 to index
      %c0_43 = arith.constant 0 : index
      %c0_44 = arith.constant 0 : index
      %52 = vector.load %arg2[%c0_41, %c0_42, %51, %c0_43, %c0_44] : memref<1x1x10x10x8xbf16, #tpu.memory_space<vmem>>, vector<1x1x1x10x8xbf16>
      %53 = vector.shape_cast %52 : vector<1x1x1x10x8xbf16> to vector<10x8xbf16>
      %54 = vector.extract_strided_slice %53 {offsets = [0, 0], sizes = [8, 8], strides = [1, 1]} : vector<10x8xbf16> to vector<8x8xbf16>
      %c6 = arith.constant 6 : index
      %c0_45 = arith.constant 0 : index
      %c0_46 = arith.constant 0 : index
      %55 = vector.load %arg5[%c6, %c0_45, %c0_46] : memref<27x8x4xbf16, #tpu.memory_space<vmem>>, vector<1x8x4xbf16>
      %56 = vector.shape_cast %55 : vector<1x8x4xbf16> to vector<8x4xbf16>
      %cst_47 = arith.constant dense<0.000000e+00> : vector<8x4xf32>
      %57 = tpu.matmul %54, %56, %cst_47 {dimension_numbers = #tpu.dot_dimension_numbers<[1], [0], [0], [1], [0, 0, 1, 1], [], []>} : vector<8x8xbf16>, vector<8x4xbf16>, vector<8x4xf32> -> vector<8x4xf32>
      %58 = arith.addf %49, %57 : vector<8x4xf32>
      %59 = vector.extract_strided_slice %53 {offsets = [1, 0], sizes = [8, 8], strides = [1, 1]} : vector<10x8xbf16> to vector<8x8xbf16>
      %c7 = arith.constant 7 : index
      %c0_48 = arith.constant 0 : index
      %c0_49 = arith.constant 0 : index
      %60 = vector.load %arg5[%c7, %c0_48, %c0_49] : memref<27x8x4xbf16, #tpu.memory_space<vmem>>, vector<1x8x4xbf16>
      %61 = vector.shape_cast %60 : vector<1x8x4xbf16> to vector<8x4xbf16>
      %cst_50 = arith.constant dense<0.000000e+00> : vector<8x4xf32>
      %62 = tpu.matmul %59, %61, %cst_50 {dimension_numbers = #tpu.dot_dimension_numbers<[1], [0], [0], [1], [0, 0, 1, 1], [], []>} : vector<8x8xbf16>, vector<8x4xbf16>, vector<8x4xf32> -> vector<8x4xf32>
      %63 = arith.addf %58, %62 : vector<8x4xf32>
      %64 = vector.extract_strided_slice %53 {offsets = [2, 0], sizes = [8, 8], strides = [1, 1]} : vector<10x8xbf16> to vector<8x8xbf16>
      %c8 = arith.constant 8 : index
      %c0_51 = arith.constant 0 : index
      %c0_52 = arith.constant 0 : index
      %65 = vector.load %arg5[%c8, %c0_51, %c0_52] : memref<27x8x4xbf16, #tpu.memory_space<vmem>>, vector<1x8x4xbf16>
      %66 = vector.shape_cast %65 : vector<1x8x4xbf16> to vector<8x4xbf16>
      %cst_53 = arith.constant dense<0.000000e+00> : vector<8x4xf32>
      %67 = tpu.matmul %64, %66, %cst_53 {dimension_numbers = #tpu.dot_dimension_numbers<[1], [0], [0], [1], [0, 0, 1, 1], [], []>} : vector<8x8xbf16>, vector<8x4xbf16>, vector<8x4xf32> -> vector<8x4xf32>
      %68 = arith.addf %63, %67 : vector<8x4xf32>
      %c0_i32_54 = arith.constant 0 : i32
      %69 = arith.addi %arg9, %c0_i32_54 : i32
      %c0_55 = arith.constant 0 : index
      %c0_56 = arith.constant 0 : index
      %70 = arith.index_cast %69 : i32 to index
      %c0_57 = arith.constant 0 : index
      %c0_58 = arith.constant 0 : index
      %71 = vector.load %arg3[%c0_55, %c0_56, %70, %c0_57, %c0_58] : memref<1x1x10x10x8xbf16, #tpu.memory_space<vmem>>, vector<1x1x1x10x8xbf16>
      %72 = vector.shape_cast %71 : vector<1x1x1x10x8xbf16> to vector<10x8xbf16>
      %73 = vector.extract_strided_slice %72 {offsets = [0, 0], sizes = [8, 8], strides = [1, 1]} : vector<10x8xbf16> to vector<8x8xbf16>
      %c9 = arith.constant 9 : index
      %c0_59 = arith.constant 0 : index
      %c0_60 = arith.constant 0 : index
      %74 = vector.load %arg5[%c9, %c0_59, %c0_60] : memref<27x8x4xbf16, #tpu.memory_space<vmem>>, vector<1x8x4xbf16>
      %75 = vector.shape_cast %74 : vector<1x8x4xbf16> to vector<8x4xbf16>
      %cst_61 = arith.constant dense<0.000000e+00> : vector<8x4xf32>
      %76 = tpu.matmul %73, %75, %cst_61 {dimension_numbers = #tpu.dot_dimension_numbers<[1], [0], [0], [1], [0, 0, 1, 1], [], []>} : vector<8x8xbf16>, vector<8x4xbf16>, vector<8x4xf32> -> vector<8x4xf32>
      %77 = arith.addf %68, %76 : vector<8x4xf32>
      %78 = vector.extract_strided_slice %72 {offsets = [1, 0], sizes = [8, 8], strides = [1, 1]} : vector<10x8xbf16> to vector<8x8xbf16>
      %c10 = arith.constant 10 : index
      %c0_62 = arith.constant 0 : index
      %c0_63 = arith.constant 0 : index
      %79 = vector.load %arg5[%c10, %c0_62, %c0_63] : memref<27x8x4xbf16, #tpu.memory_space<vmem>>, vector<1x8x4xbf16>
      %80 = vector.shape_cast %79 : vector<1x8x4xbf16> to vector<8x4xbf16>
      %cst_64 = arith.constant dense<0.000000e+00> : vector<8x4xf32>
      %81 = tpu.matmul %78, %80, %cst_64 {dimension_numbers = #tpu.dot_dimension_numbers<[1], [0], [0], [1], [0, 0, 1, 1], [], []>} : vector<8x8xbf16>, vector<8x4xbf16>, vector<8x4xf32> -> vector<8x4xf32>
      %82 = arith.addf %77, %81 : vector<8x4xf32>
      %83 = vector.extract_strided_slice %72 {offsets = [2, 0], sizes = [8, 8], strides = [1, 1]} : vector<10x8xbf16> to vector<8x8xbf16>
      %c11 = arith.constant 11 : index
      %c0_65 = arith.constant 0 : index
      %c0_66 = arith.constant 0 : index
      %84 = vector.load %arg5[%c11, %c0_65, %c0_66] : memref<27x8x4xbf16, #tpu.memory_space<vmem>>, vector<1x8x4xbf16>
      %85 = vector.shape_cast %84 : vector<1x8x4xbf16> to vector<8x4xbf16>
      %cst_67 = arith.constant dense<0.000000e+00> : vector<8x4xf32>
      %86 = tpu.matmul %83, %85, %cst_67 {dimension_numbers = #tpu.dot_dimension_numbers<[1], [0], [0], [1], [0, 0, 1, 1], [], []>} : vector<8x8xbf16>, vector<8x4xbf16>, vector<8x4xf32> -> vector<8x4xf32>
      %87 = arith.addf %82, %86 : vector<8x4xf32>
      %c1_i32_68 = arith.constant 1 : i32
      %88 = arith.addi %arg9, %c1_i32_68 : i32
      %c0_69 = arith.constant 0 : index
      %c0_70 = arith.constant 0 : index
      %89 = arith.index_cast %88 : i32 to index
      %c0_71 = arith.constant 0 : index
      %c0_72 = arith.constant 0 : index
      %90 = vector.load %arg3[%c0_69, %c0_70, %89, %c0_71, %c0_72] : memref<1x1x10x10x8xbf16, #tpu.memory_space<vmem>>, vector<1x1x1x10x8xbf16>
      %91 = vector.shape_cast %90 : vector<1x1x1x10x8xbf16> to vector<10x8xbf16>
      %92 = vector.extract_strided_slice %91 {offsets = [0, 0], sizes = [8, 8], strides = [1, 1]} : vector<10x8xbf16> to vector<8x8xbf16>
      %c12 = arith.constant 12 : index
      %c0_73 = arith.constant 0 : index
      %c0_74 = arith.constant 0 : index
      %93 = vector.load %arg5[%c12, %c0_73, %c0_74] : memref<27x8x4xbf16, #tpu.memory_space<vmem>>, vector<1x8x4xbf16>
      %94 = vector.shape_cast %93 : vector<1x8x4xbf16> to vector<8x4xbf16>
      %cst_75 = arith.constant dense<0.000000e+00> : vector<8x4xf32>
      %95 = tpu.matmul %92, %94, %cst_75 {dimension_numbers = #tpu.dot_dimension_numbers<[1], [0], [0], [1], [0, 0, 1, 1], [], []>} : vector<8x8xbf16>, vector<8x4xbf16>, vector<8x4xf32> -> vector<8x4xf32>
      %96 = arith.addf %87, %95 : vector<8x4xf32>
      %97 = vector.extract_strided_slice %91 {offsets = [1, 0], sizes = [8, 8], strides = [1, 1]} : vector<10x8xbf16> to vector<8x8xbf16>
      %c13 = arith.constant 13 : index
      %c0_76 = arith.constant 0 : index
      %c0_77 = arith.constant 0 : index
      %98 = vector.load %arg5[%c13, %c0_76, %c0_77] : memref<27x8x4xbf16, #tpu.memory_space<vmem>>, vector<1x8x4xbf16>
      %99 = vector.shape_cast %98 : vector<1x8x4xbf16> to vector<8x4xbf16>
      %cst_78 = arith.constant dense<0.000000e+00> : vector<8x4xf32>
      %100 = tpu.matmul %97, %99, %cst_78 {dimension_numbers = #tpu.dot_dimension_numbers<[1], [0], [0], [1], [0, 0, 1, 1], [], []>} : vector<8x8xbf16>, vector<8x4xbf16>, vector<8x4xf32> -> vector<8x4xf32>
      %101 = arith.addf %96, %100 : vector<8x4xf32>
      %102 = vector.extract_strided_slice %91 {offsets = [2, 0], sizes = [8, 8], strides = [1, 1]} : vector<10x8xbf16> to vector<8x8xbf16>
      %c14 = arith.constant 14 : index
      %c0_79 = arith.constant 0 : index
      %c0_80 = arith.constant 0 : index
      %103 = vector.load %arg5[%c14, %c0_79, %c0_80] : memref<27x8x4xbf16, #tpu.memory_space<vmem>>, vector<1x8x4xbf16>
      %104 = vector.shape_cast %103 : vector<1x8x4xbf16> to vector<8x4xbf16>
      %cst_81 = arith.constant dense<0.000000e+00> : vector<8x4xf32>
      %105 = tpu.matmul %102, %104, %cst_81 {dimension_numbers = #tpu.dot_dimension_numbers<[1], [0], [0], [1], [0, 0, 1, 1], [], []>} : vector<8x8xbf16>, vector<8x4xbf16>, vector<8x4xf32> -> vector<8x4xf32>
      %106 = arith.addf %101, %105 : vector<8x4xf32>
      %c2_i32_82 = arith.constant 2 : i32
      %107 = arith.addi %arg9, %c2_i32_82 : i32
      %c0_83 = arith.constant 0 : index
      %c0_84 = arith.constant 0 : index
      %108 = arith.index_cast %107 : i32 to index
      %c0_85 = arith.constant 0 : index
      %c0_86 = arith.constant 0 : index
      %109 = vector.load %arg3[%c0_83, %c0_84, %108, %c0_85, %c0_86] : memref<1x1x10x10x8xbf16, #tpu.memory_space<vmem>>, vector<1x1x1x10x8xbf16>
      %110 = vector.shape_cast %109 : vector<1x1x1x10x8xbf16> to vector<10x8xbf16>
      %111 = vector.extract_strided_slice %110 {offsets = [0, 0], sizes = [8, 8], strides = [1, 1]} : vector<10x8xbf16> to vector<8x8xbf16>
      %c15 = arith.constant 15 : index
      %c0_87 = arith.constant 0 : index
      %c0_88 = arith.constant 0 : index
      %112 = vector.load %arg5[%c15, %c0_87, %c0_88] : memref<27x8x4xbf16, #tpu.memory_space<vmem>>, vector<1x8x4xbf16>
      %113 = vector.shape_cast %112 : vector<1x8x4xbf16> to vector<8x4xbf16>
      %cst_89 = arith.constant dense<0.000000e+00> : vector<8x4xf32>
      %114 = tpu.matmul %111, %113, %cst_89 {dimension_numbers = #tpu.dot_dimension_numbers<[1], [0], [0], [1], [0, 0, 1, 1], [], []>} : vector<8x8xbf16>, vector<8x4xbf16>, vector<8x4xf32> -> vector<8x4xf32>
      %115 = arith.addf %106, %114 : vector<8x4xf32>
      %116 = vector.extract_strided_slice %110 {offsets = [1, 0], sizes = [8, 8], strides = [1, 1]} : vector<10x8xbf16> to vector<8x8xbf16>
      %c16 = arith.constant 16 : index
      %c0_90 = arith.constant 0 : index
      %c0_91 = arith.constant 0 : index
      %117 = vector.load %arg5[%c16, %c0_90, %c0_91] : memref<27x8x4xbf16, #tpu.memory_space<vmem>>, vector<1x8x4xbf16>
      %118 = vector.shape_cast %117 : vector<1x8x4xbf16> to vector<8x4xbf16>
      %cst_92 = arith.constant dense<0.000000e+00> : vector<8x4xf32>
      %119 = tpu.matmul %116, %118, %cst_92 {dimension_numbers = #tpu.dot_dimension_numbers<[1], [0], [0], [1], [0, 0, 1, 1], [], []>} : vector<8x8xbf16>, vector<8x4xbf16>, vector<8x4xf32> -> vector<8x4xf32>
      %120 = arith.addf %115, %119 : vector<8x4xf32>
      %121 = vector.extract_strided_slice %110 {offsets = [2, 0], sizes = [8, 8], strides = [1, 1]} : vector<10x8xbf16> to vector<8x8xbf16>
      %c17 = arith.constant 17 : index
      %c0_93 = arith.constant 0 : index
      %c0_94 = arith.constant 0 : index
      %122 = vector.load %arg5[%c17, %c0_93, %c0_94] : memref<27x8x4xbf16, #tpu.memory_space<vmem>>, vector<1x8x4xbf16>
      %123 = vector.shape_cast %122 : vector<1x8x4xbf16> to vector<8x4xbf16>
      %cst_95 = arith.constant dense<0.000000e+00> : vector<8x4xf32>
      %124 = tpu.matmul %121, %123, %cst_95 {dimension_numbers = #tpu.dot_dimension_numbers<[1], [0], [0], [1], [0, 0, 1, 1], [], []>} : vector<8x8xbf16>, vector<8x4xbf16>, vector<8x4xf32> -> vector<8x4xf32>
      %125 = arith.addf %120, %124 : vector<8x4xf32>
      %c0_i32_96 = arith.constant 0 : i32
      %126 = arith.addi %arg9, %c0_i32_96 : i32
      %c0_97 = arith.constant 0 : index
      %c0_98 = arith.constant 0 : index
      %127 = arith.index_cast %126 : i32 to index
      %c0_99 = arith.constant 0 : index
      %c0_100 = arith.constant 0 : index
      %128 = vector.load %arg4[%c0_97, %c0_98, %127, %c0_99, %c0_100] : memref<1x1x10x10x8xbf16, #tpu.memory_space<vmem>>, vector<1x1x1x10x8xbf16>
      %129 = vector.shape_cast %128 : vector<1x1x1x10x8xbf16> to vector<10x8xbf16>
      %130 = vector.extract_strided_slice %129 {offsets = [0, 0], sizes = [8, 8], strides = [1, 1]} : vector<10x8xbf16> to vector<8x8xbf16>
      %c18 = arith.constant 18 : index
      %c0_101 = arith.constant 0 : index
      %c0_102 = arith.constant 0 : index
      %131 = vector.load %arg5[%c18, %c0_101, %c0_102] : memref<27x8x4xbf16, #tpu.memory_space<vmem>>, vector<1x8x4xbf16>
      %132 = vector.shape_cast %131 : vector<1x8x4xbf16> to vector<8x4xbf16>
      %cst_103 = arith.constant dense<0.000000e+00> : vector<8x4xf32>
      %133 = tpu.matmul %130, %132, %cst_103 {dimension_numbers = #tpu.dot_dimension_numbers<[1], [0], [0], [1], [0, 0, 1, 1], [], []>} : vector<8x8xbf16>, vector<8x4xbf16>, vector<8x4xf32> -> vector<8x4xf32>
      %134 = arith.addf %125, %133 : vector<8x4xf32>
      %135 = vector.extract_strided_slice %129 {offsets = [1, 0], sizes = [8, 8], strides = [1, 1]} : vector<10x8xbf16> to vector<8x8xbf16>
      %c19 = arith.constant 19 : index
      %c0_104 = arith.constant 0 : index
      %c0_105 = arith.constant 0 : index
      %136 = vector.load %arg5[%c19, %c0_104, %c0_105] : memref<27x8x4xbf16, #tpu.memory_space<vmem>>, vector<1x8x4xbf16>
      %137 = vector.shape_cast %136 : vector<1x8x4xbf16> to vector<8x4xbf16>
      %cst_106 = arith.constant dense<0.000000e+00> : vector<8x4xf32>
      %138 = tpu.matmul %135, %137, %cst_106 {dimension_numbers = #tpu.dot_dimension_numbers<[1], [0], [0], [1], [0, 0, 1, 1], [], []>} : vector<8x8xbf16>, vector<8x4xbf16>, vector<8x4xf32> -> vector<8x4xf32>
      %139 = arith.addf %134, %138 : vector<8x4xf32>
      %140 = vector.extract_strided_slice %129 {offsets = [2, 0], sizes = [8, 8], strides = [1, 1]} : vector<10x8xbf16> to vector<8x8xbf16>
      %c20 = arith.constant 20 : index
      %c0_107 = arith.constant 0 : index
      %c0_108 = arith.constant 0 : index
      %141 = vector.load %arg5[%c20, %c0_107, %c0_108] : memref<27x8x4xbf16, #tpu.memory_space<vmem>>, vector<1x8x4xbf16>
      %142 = vector.shape_cast %141 : vector<1x8x4xbf16> to vector<8x4xbf16>
      %cst_109 = arith.constant dense<0.000000e+00> : vector<8x4xf32>
      %143 = tpu.matmul %140, %142, %cst_109 {dimension_numbers = #tpu.dot_dimension_numbers<[1], [0], [0], [1], [0, 0, 1, 1], [], []>} : vector<8x8xbf16>, vector<8x4xbf16>, vector<8x4xf32> -> vector<8x4xf32>
      %144 = arith.addf %139, %143 : vector<8x4xf32>
      %c1_i32_110 = arith.constant 1 : i32
      %145 = arith.addi %arg9, %c1_i32_110 : i32
      %c0_111 = arith.constant 0 : index
      %c0_112 = arith.constant 0 : index
      %146 = arith.index_cast %145 : i32 to index
      %c0_113 = arith.constant 0 : index
      %c0_114 = arith.constant 0 : index
      %147 = vector.load %arg4[%c0_111, %c0_112, %146, %c0_113, %c0_114] : memref<1x1x10x10x8xbf16, #tpu.memory_space<vmem>>, vector<1x1x1x10x8xbf16>
      %148 = vector.shape_cast %147 : vector<1x1x1x10x8xbf16> to vector<10x8xbf16>
      %149 = vector.extract_strided_slice %148 {offsets = [0, 0], sizes = [8, 8], strides = [1, 1]} : vector<10x8xbf16> to vector<8x8xbf16>
      %c21 = arith.constant 21 : index
      %c0_115 = arith.constant 0 : index
      %c0_116 = arith.constant 0 : index
      %150 = vector.load %arg5[%c21, %c0_115, %c0_116] : memref<27x8x4xbf16, #tpu.memory_space<vmem>>, vector<1x8x4xbf16>
      %151 = vector.shape_cast %150 : vector<1x8x4xbf16> to vector<8x4xbf16>
      %cst_117 = arith.constant dense<0.000000e+00> : vector<8x4xf32>
      %152 = tpu.matmul %149, %151, %cst_117 {dimension_numbers = #tpu.dot_dimension_numbers<[1], [0], [0], [1], [0, 0, 1, 1], [], []>} : vector<8x8xbf16>, vector<8x4xbf16>, vector<8x4xf32> -> vector<8x4xf32>
      %153 = arith.addf %144, %152 : vector<8x4xf32>
      %154 = vector.extract_strided_slice %148 {offsets = [1, 0], sizes = [8, 8], strides = [1, 1]} : vector<10x8xbf16> to vector<8x8xbf16>
      %c22 = arith.constant 22 : index
      %c0_118 = arith.constant 0 : index
      %c0_119 = arith.constant 0 : index
      %155 = vector.load %arg5[%c22, %c0_118, %c0_119] : memref<27x8x4xbf16, #tpu.memory_space<vmem>>, vector<1x8x4xbf16>
      %156 = vector.shape_cast %155 : vector<1x8x4xbf16> to vector<8x4xbf16>
      %cst_120 = arith.constant dense<0.000000e+00> : vector<8x4xf32>
      %157 = tpu.matmul %154, %156, %cst_120 {dimension_numbers = #tpu.dot_dimension_numbers<[1], [0], [0], [1], [0, 0, 1, 1], [], []>} : vector<8x8xbf16>, vector<8x4xbf16>, vector<8x4xf32> -> vector<8x4xf32>
      %158 = arith.addf %153, %157 : vector<8x4xf32>
      %159 = vector.extract_strided_slice %148 {offsets = [2, 0], sizes = [8, 8], strides = [1, 1]} : vector<10x8xbf16> to vector<8x8xbf16>
      %c23 = arith.constant 23 : index
      %c0_121 = arith.constant 0 : index
      %c0_122 = arith.constant 0 : index
      %160 = vector.load %arg5[%c23, %c0_121, %c0_122] : memref<27x8x4xbf16, #tpu.memory_space<vmem>>, vector<1x8x4xbf16>
      %161 = vector.shape_cast %160 : vector<1x8x4xbf16> to vector<8x4xbf16>
      %cst_123 = arith.constant dense<0.000000e+00> : vector<8x4xf32>
      %162 = tpu.matmul %159, %161, %cst_123 {dimension_numbers = #tpu.dot_dimension_numbers<[1], [0], [0], [1], [0, 0, 1, 1], [], []>} : vector<8x8xbf16>, vector<8x4xbf16>, vector<8x4xf32> -> vector<8x4xf32>
      %163 = arith.addf %158, %162 : vector<8x4xf32>
      %c2_i32_124 = arith.constant 2 : i32
      %164 = arith.addi %arg9, %c2_i32_124 : i32
      %c0_125 = arith.constant 0 : index
      %c0_126 = arith.constant 0 : index
      %165 = arith.index_cast %164 : i32 to index
      %c0_127 = arith.constant 0 : index
      %c0_128 = arith.constant 0 : index
      %166 = vector.load %arg4[%c0_125, %c0_126, %165, %c0_127, %c0_128] : memref<1x1x10x10x8xbf16, #tpu.memory_space<vmem>>, vector<1x1x1x10x8xbf16>
      %167 = vector.shape_cast %166 : vector<1x1x1x10x8xbf16> to vector<10x8xbf16>
      %168 = vector.extract_strided_slice %167 {offsets = [0, 0], sizes = [8, 8], strides = [1, 1]} : vector<10x8xbf16> to vector<8x8xbf16>
      %c24 = arith.constant 24 : index
      %c0_129 = arith.constant 0 : index
      %c0_130 = arith.constant 0 : index
      %169 = vector.load %arg5[%c24, %c0_129, %c0_130] : memref<27x8x4xbf16, #tpu.memory_space<vmem>>, vector<1x8x4xbf16>
      %170 = vector.shape_cast %169 : vector<1x8x4xbf16> to vector<8x4xbf16>
      %cst_131 = arith.constant dense<0.000000e+00> : vector<8x4xf32>
      %171 = tpu.matmul %168, %170, %cst_131 {dimension_numbers = #tpu.dot_dimension_numbers<[1], [0], [0], [1], [0, 0, 1, 1], [], []>} : vector<8x8xbf16>, vector<8x4xbf16>, vector<8x4xf32> -> vector<8x4xf32>
      %172 = arith.addf %163, %171 : vector<8x4xf32>
      %173 = vector.extract_strided_slice %167 {offsets = [1, 0], sizes = [8, 8], strides = [1, 1]} : vector<10x8xbf16> to vector<8x8xbf16>
      %c25 = arith.constant 25 : index
      %c0_132 = arith.constant 0 : index
      %c0_133 = arith.constant 0 : index
      %174 = vector.load %arg5[%c25, %c0_132, %c0_133] : memref<27x8x4xbf16, #tpu.memory_space<vmem>>, vector<1x8x4xbf16>
      %175 = vector.shape_cast %174 : vector<1x8x4xbf16> to vector<8x4xbf16>
      %cst_134 = arith.constant dense<0.000000e+00> : vector<8x4xf32>
      %176 = tpu.matmul %173, %175, %cst_134 {dimension_numbers = #tpu.dot_dimension_numbers<[1], [0], [0], [1], [0, 0, 1, 1], [], []>} : vector<8x8xbf16>, vector<8x4xbf16>, vector<8x4xf32> -> vector<8x4xf32>
      %177 = arith.addf %172, %176 : vector<8x4xf32>
      %178 = vector.extract_strided_slice %167 {offsets = [2, 0], sizes = [8, 8], strides = [1, 1]} : vector<10x8xbf16> to vector<8x8xbf16>
      %c26 = arith.constant 26 : index
      %c0_135 = arith.constant 0 : index
      %c0_136 = arith.constant 0 : index
      %179 = vector.load %arg5[%c26, %c0_135, %c0_136] : memref<27x8x4xbf16, #tpu.memory_space<vmem>>, vector<1x8x4xbf16>
      %180 = vector.shape_cast %179 : vector<1x8x4xbf16> to vector<8x4xbf16>
      %cst_137 = arith.constant dense<0.000000e+00> : vector<8x4xf32>
      %181 = tpu.matmul %178, %180, %cst_137 {dimension_numbers = #tpu.dot_dimension_numbers<[1], [0], [0], [1], [0, 0, 1, 1], [], []>} : vector<8x8xbf16>, vector<8x4xbf16>, vector<8x4xf32> -> vector<8x4xf32>
      %182 = arith.addf %177, %181 : vector<8x4xf32>
      %183 = vector.broadcast %0 : vector<1x4xf32> to vector<8x4xf32>
      %184 = arith.addf %182, %183 : vector<8x4xf32>
      %185 = arith.truncf %184 : vector<8x4xf32> to vector<8x4xbf16>
      %c0_138 = arith.constant 0 : index
      %c0_139 = arith.constant 0 : index
      %186 = arith.index_cast %arg9 : i32 to index
      %c0_140 = arith.constant 0 : index
      %c0_141 = arith.constant 0 : index
      %187 = vector.load %arg7[%c0_138, %c0_139, %186, %c0_140, %c0_141] : memref<1x1x8x8x4xbf16, #tpu.memory_space<vmem>>, vector<1x1x1x8x4xbf16>
      %188 = vector.shape_cast %187 : vector<1x1x1x8x4xbf16> to vector<8x4xbf16>
      %189 = vector.shape_cast %185 : vector<8x4xbf16> to vector<1x1x1x8x4xbf16>
      tpu.vector_store %arg7[%c0_138, %c0_139, %186, %c0_140, %c0_141], %189 {strides = array<i32>} : memref<1x1x8x8x4xbf16, #tpu.memory_space<vmem>>, vector<1x1x1x8x4xbf16>,
      %cst_142 = arith.constant dense<0.000000e+00> : vector<4xf32>
      %190 = vector.multi_reduction <add>, %184, %cst_142 [0] : vector<8x4xf32> to vector<4xf32>
      %191 = vector.shape_cast %190 : vector<4xf32> to vector<1x4xf32>
      %192 = arith.addf %arg10, %191 : vector<1x4xf32>
      %193 = arith.mulf %184, %184 : vector<8x4xf32>
      %cst_143 = arith.constant dense<0.000000e+00> : vector<4xf32>
      %194 = vector.multi_reduction <add>, %193, %cst_143 [0] : vector<8x4xf32> to vector<4xf32>
      %195 = vector.shape_cast %194 : vector<4xf32> to vector<1x4xf32>
      %196 = arith.addf %arg11, %195 : vector<1x4xf32>
      scf.yield %192, %196 : vector<1x4xf32>, vector<1x4xf32>
    }
    %c8_i32_2 = arith.constant 8 : i32
    %c0_3 = arith.constant 0 : index
    %c0_4 = arith.constant 0 : index
    %c0_5 = arith.constant 0 : index
    %c0_6 = arith.constant 0 : index
    %5 = vector.load %arg8[%c0_3, %c0_4, %c0_5, %c0_6] : memref<1x1x2x4xf32, #tpu.memory_space<vmem>>, vector<1x1x1x4xf32>
    %6 = vector.shape_cast %5 : vector<1x1x1x4xf32> to vector<1x4xf32>
    %7 = vector.shape_cast %4#0 : vector<1x4xf32> to vector<1x1x1x4xf32>
    tpu.vector_store %arg8[%c0_3, %c0_4, %c0_5, %c0_6], %7 {strides = array<i32>} : memref<1x1x2x4xf32, #tpu.memory_space<vmem>>, vector<1x1x1x4xf32>,
    %c0_7 = arith.constant 0 : index
    %c0_8 = arith.constant 0 : index
    %c1 = arith.constant 1 : index
    %c0_9 = arith.constant 0 : index
    %8 = vector.load %arg8[%c0_7, %c0_8, %c1, %c0_9] : memref<1x1x2x4xf32, #tpu.memory_space<vmem>>, vector<1x1x1x4xf32>
    %9 = vector.shape_cast %8 : vector<1x1x1x4xf32> to vector<1x4xf32>
    %10 = vector.shape_cast %4#1 : vector<1x4xf32> to vector<1x1x1x4xf32>
    tpu.vector_store %arg8[%c0_7, %c0_8, %c1, %c0_9], %10 {strides = array<i32>} : memref<1x1x2x4xf32, #tpu.memory_space<vmem>>, vector<1x1x1x4xf32>,
    return
  }
  func.func @transform_0(%arg0: i32, %arg1: i32) -> (i32, i32, i32, i32, i32) {
    %c0_i32 = arith.constant 0 : i32
    %0 = arith.addi %arg1, %c0_i32 : i32
    %c0_i32_0 = arith.constant 0 : i32
    %c0_i32_1 = arith.constant 0 : i32
    %c0_i32_2 = arith.constant 0 : i32
    %c0_i32_3 = arith.constant 0 : i32
    return %arg0, %0, %c0_i32_0, %c0_i32_1, %c0_i32_2 : i32, i32, i32, i32, i32
  }
  func.func @transform_1(%arg0: i32, %arg1: i32) -> (i32, i32, i32, i32, i32) {
    %c1_i32 = arith.constant 1 : i32
    %0 = arith.addi %arg1, %c1_i32 : i32
    %c0_i32 = arith.constant 0 : i32
    %c0_i32_0 = arith.constant 0 : i32
    %c0_i32_1 = arith.constant 0 : i32
    %c0_i32_2 = arith.constant 0 : i32
    return %arg0, %0, %c0_i32, %c0_i32_0, %c0_i32_1 : i32, i32, i32, i32, i32
  }
  func.func @transform_2(%arg0: i32, %arg1: i32) -> (i32, i32, i32, i32, i32) {
    %c2_i32 = arith.constant 2 : i32
    %0 = arith.addi %arg1, %c2_i32 : i32
    %c0_i32 = arith.constant 0 : i32
    %c0_i32_0 = arith.constant 0 : i32
    %c0_i32_1 = arith.constant 0 : i32
    %c0_i32_2 = arith.constant 0 : i32
    return %arg0, %0, %c0_i32, %c0_i32_0, %c0_i32_1 : i32, i32, i32, i32, i32
  }
  func.func @transform_3(%arg0: i32, %arg1: i32) -> (i32, i32, i32) {
    %c0_i32 = arith.constant 0 : i32
    %c0_i32_0 = arith.constant 0 : i32
    %c0_i32_1 = arith.constant 0 : i32
    %c0_i32_2 = arith.constant 0 : i32
    return %c0_i32, %c0_i32_0, %c0_i32_1 : i32, i32, i32
  }
  func.func @transform_4(%arg0: i32, %arg1: i32) -> (i32, i32) {
    %c0_i32 = arith.constant 0 : i32
    %c0_i32_0 = arith.constant 0 : i32
    %c0_i32_1 = arith.constant 0 : i32
    return %c0_i32, %c0_i32_0 : i32, i32
  }
  func.func @transform_5(%arg0: i32, %arg1: i32) -> (i32, i32, i32, i32, i32) {
    %c0_i32 = arith.constant 0 : i32
    %c0_i32_0 = arith.constant 0 : i32
    %c0_i32_1 = arith.constant 0 : i32
    %c0_i32_2 = arith.constant 0 : i32
    return %arg0, %arg1, %c0_i32, %c0_i32_0, %c0_i32_1 : i32, i32, i32, i32, i32
  }
  func.func @transform_6(%arg0: i32, %arg1: i32) -> (i32, i32, i32, i32) {
    %c0_i32 = arith.constant 0 : i32
    %c0_i32_0 = arith.constant 0 : i32
    %c0_i32_1 = arith.constant 0 : i32
    return %arg0, %arg1, %c0_i32, %c0_i32_0 : i32, i32, i32, i32
  }
}

module attributes {stable_mosaic.version = 11 : i64} {
  func.func @_affine_lrelu_kernel(%arg0: i32, %arg1: memref<128x32xbf16, #tpu.memory_space<vmem>>, %arg2: memref<1x32xf32, #tpu.memory_space<vmem>>, %arg3: memref<1x32xf32, #tpu.memory_space<vmem>>, %arg4: memref<128x32xf32, #tpu.memory_space<vmem>>) attributes {dimension_semantics = [#tpu.dimension_semantics<parallel>], iteration_bounds = array<i64: 1>, scalar_prefetch = 0 : i64, scratch_operands = 0 : i64, tpu.core_type = #tpu.core_type<tc>, window_params = [{transform_indices = @transform_0, window_bounds = array<i64: 128, 32>}, {pipeline_mode = #tpu.pipeline_mode<synchronous>, transform_indices = @transform_1, window_bounds = array<i64: 1, 32>}, {pipeline_mode = #tpu.pipeline_mode<synchronous>, transform_indices = @transform_2, window_bounds = array<i64: 1, 32>}, {transform_indices = @transform_3, window_bounds = array<i64: 128, 32>}]} {
    %c0 = arith.constant 0 : index
    %c0_0 = arith.constant 0 : index
    %0 = vector.load %arg1[%c0, %c0_0] : memref<128x32xbf16, #tpu.memory_space<vmem>>, vector<128x32xbf16>
    %1 = arith.extf %0 : vector<128x32xbf16> to vector<128x32xf32>
    %c0_1 = arith.constant 0 : index
    %c0_2 = arith.constant 0 : index
    %2 = vector.load %arg2[%c0_1, %c0_2] : memref<1x32xf32, #tpu.memory_space<vmem>>, vector<1x32xf32>
    %3 = vector.broadcast %2 : vector<1x32xf32> to vector<128x32xf32>
    %4 = arith.mulf %1, %3 : vector<128x32xf32>
    %c0_3 = arith.constant 0 : index
    %c0_4 = arith.constant 0 : index
    %5 = vector.load %arg3[%c0_3, %c0_4] : memref<1x32xf32, #tpu.memory_space<vmem>>, vector<1x32xf32>
    %6 = vector.broadcast %5 : vector<1x32xf32> to vector<128x32xf32>
    %7 = arith.addf %4, %6 : vector<128x32xf32>
    %cst = arith.constant 0.000000e+00 : f32
    %8 = vector.broadcast %cst : f32 to vector<128x32xf32>
    %9 = arith.cmpf oge, %7, %8 : vector<128x32xf32>
    %cst_5 = arith.constant 0.00999999977 : f32
    %10 = vector.broadcast %cst_5 : f32 to vector<128x32xf32>
    %11 = arith.mulf %10, %7 : vector<128x32xf32>
    %12 = arith.select %9, %7, %11 : vector<128x32xi1>, vector<128x32xf32>
    %c0_6 = arith.constant 0 : index
    %c0_7 = arith.constant 0 : index
    %13 = vector.load %arg4[%c0_6, %c0_7] : memref<128x32xf32, #tpu.memory_space<vmem>>, vector<128x32xf32>
    tpu.vector_store %arg4[%c0_6, %c0_7], %12 {strides = array<i32>} : memref<128x32xf32, #tpu.memory_space<vmem>>, vector<128x32xf32>,
    return
  }
  func.func @transform_0(%arg0: i32) -> (i32, i32) {
    %c0_i32 = arith.constant 0 : i32
    %c0_i32_0 = arith.constant 0 : i32
    return %arg0, %c0_i32 : i32, i32
  }
  func.func @transform_1(%arg0: i32) -> (i32, i32) {
    %c0_i32 = arith.constant 0 : i32
    %c0_i32_0 = arith.constant 0 : i32
    %c0_i32_1 = arith.constant 0 : i32
    return %c0_i32, %c0_i32_0 : i32, i32
  }
  func.func @transform_2(%arg0: i32) -> (i32, i32) {
    %c0_i32 = arith.constant 0 : i32
    %c0_i32_0 = arith.constant 0 : i32
    %c0_i32_1 = arith.constant 0 : i32
    return %c0_i32, %c0_i32_0 : i32, i32
  }
  func.func @transform_3(%arg0: i32) -> (i32, i32) {
    %c0_i32 = arith.constant 0 : i32
    %c0_i32_0 = arith.constant 0 : i32
    return %arg0, %c0_i32 : i32, i32
  }
}

</mosaic_0001>

<llo_original>
// kernel: decode_block_forward.13
$region0: #{decode_block_forward.13}
  #allocation0 [shape = 'u32[]', space=smem, size = 0x4, offset = 0x4, fixed_abs, tag = 'smem constant byte address 0x4 - core index']
  #allocation1 [shape = 'u32[144,128]{1,0:T(1,128)}', space=vmem, size = 0x12000, scoped, tag = 'internal scratch']
  %s0 = inlined_call_operand.vmem [shape: bf16[2,5,5,5,4], index: 0, kind: input, shape index: {}]
  %s1 = inlined_call_operand.vmem [shape: bf16[2,4,4], index: 1, kind: input, shape index: {}]
  %s2 = inlined_call_operand.vmem [shape: f32[1,4], index: 2, kind: input, shape index: {}]
  %s3 = inlined_call_operand.vmem [shape: bf16[2,4,4,4,4], index: 3, kind: output, shape index: {}]
  %s4 = sld [smem:[#allocation0]]
  $region52: #{decode_block_forward.13} parent=0
    _
  %s6 = ssub.s32 1, %s4
  %s7 = scalar_select 0, %s6, %s4
  loop: start=0, step=1, limit=10
  $region2: #{decode_block_forward.13} parent=0 // loop_pre_header
    _
  $region3: #{decode_block_forward.13} parent=0 // loop_header
    %s9 = sphi 0, %s13
    %p10 = scmp.ge.s32.totalorder %s9, 10
    %s16 = sphi 0, %s28
    %s17 = sphi 0, %s24
    %s18 = sphi 0, %s16
    %s19 = sphi 0, %s17
    %s20 = sphi 0, %s18
    %s21 = sphi 0, %s19
    %s33 = sphi 0, %s35
    %s36 = sphi 0, %s33
    %s37 = sphi 0, %s36
    %s53 = sphi 0, %s37
    %s57 = sphi 0, %s57
    %s59 = sphi 0, %s57
    %s60 = sphi 0, %s59
    %s74 = sphi 0, %s60
    %s78 = sphi 0, %s78
    %s80 = sphi 0, %s78
    %s81 = sphi 0, %s80
    %s95 = sphi 0, %s81
    %s103 = sphi 0, %s105
    %s106 = sphi 0, %s103
    %s107 = sphi 0, %s106
    %s123 = sphi 0, %s107
  $region4: #{decode_block_forward.13} parent=0 // loop_header_branch
    %12 = sbr.rel (%p10) target = $region8
  $region5: #{decode_block_forward.13} parent=0 // loop_body
    %s14 = ssub.s32 %s9, 1
    %s15 = ssub.s32 %s9, 2
    %s22 = sadd.s32 1, %s17
    %p23 = scmp.ge.s32.totalorder %s22, 4
    %s24 = scalar_select %p23, 0, %s22
    %s25 = sadd.s32 1, %s16
    %s26 = scalar_select %p23, %s25, %s16
    %p27 = scmp.ge.s32.totalorder %s26, 2
    %s28 = scalar_select %p27, 0, %s26
    %s29 = ssub.s32 %s16, %s28
    %s30 = ssub.s32 %s17, %s24
    %s31 = sor.u32 %s29, %s30
    %p32 = scmp.eq.s32.totalorder %s31, 0
    %s34 = sadd.s32 %s33, 1
    %s35 = scalar_select %p32, %s33, %s34
    %p38 = pneg %p32
    %p39 = scmp.eq.s32.totalorder %s9, 7
    %p40 = por %p38, %p39
    %p41 = scmp.ne.s32.totalorder %s33, %s36
    %p42 = scmp.eq.s32.totalorder %s9, 0
    %p43 = por %p41, %p42
    %p44 = scmp.ne.s32.totalorder %s33, %s36
    %p45 = scmp.eq.s32.totalorder %s14, 7
    %p46 = por %p44, %p45
    %p47 = scmp.ne.s32.totalorder %s36, %s37
    %p48 = scmp.eq.s32.totalorder %s14, 0
    %p49 = por %p47, %p48
    %p50 = scmp.ne.s32.totalorder %s36, %s37
    %p51 = scmp.eq.s32.totalorder %s15, 7
    %p52 = por %p50, %p51
    %p54 = scmp.ne.s32.totalorder %s37, %s53
    %p55 = scmp.eq.s32.totalorder %s15, 0
    %p56 = por %p54, %p55
    %s58 = sadd.s32 %s57, 1
    %p61 = scmp.eq.s32.totalorder %s9, 7
    %p62 = scmp.ne.s32.totalorder %s57, %s59
    %p63 = scmp.eq.s32.totalorder %s9, 0
    %p64 = por %p62, %p63
    %p65 = scmp.ne.s32.totalorder %s57, %s59
    %p66 = scmp.eq.s32.totalorder %s14, 7
    %p67 = por %p65, %p66
    %p68 = scmp.ne.s32.totalorder %s59, %s60
    %p69 = scmp.eq.s32.totalorder %s14, 0
    %p70 = por %p68, %p69
    %p71 = scmp.ne.s32.totalorder %s59, %s60
    %p72 = scmp.eq.s32.totalorder %s15, 7
    %p73 = por %p71, %p72
    %p75 = scmp.ne.s32.totalorder %s60, %s74
    %p76 = scmp.eq.s32.totalorder %s15, 0
    %p77 = por %p75, %p76
    %s79 = sadd.s32 %s78, 1
    %p82 = scmp.eq.s32.totalorder %s9, 7
    %p83 = scmp.ne.s32.totalorder %s78, %s80
    %p84 = scmp.eq.s32.totalorder %s9, 0
    %p85 = por %p83, %p84
    %p86 = scmp.ne.s32.totalorder %s78, %s80
    %p87 = scmp.eq.s32.totalorder %s14, 7
    %p88 = por %p86, %p87
    %p89 = scmp.ne.s32.totalorder %s80, %s81
    %p90 = scmp.eq.s32.totalorder %s14, 0
    %p91 = por %p89, %p90
    %p92 = scmp.ne.s32.totalorder %s80, %s81
    %p93 = scmp.eq.s32.totalorder %s15, 7
    %p94 = por %p92, %p93
    %p96 = scmp.ne.s32.totalorder %s81, %s95
    %p97 = scmp.eq.s32.totalorder %s15, 0
    %p98 = por %p96, %p97
    %s99 = ssub.s32 %s16, %s28
    %s100 = ssub.s32 %s17, %s24
    %s101 = sor.u32 %s99, %s100
    %p102 = scmp.eq.s32.totalorder %s101, 0
    %s104 = sadd.s32 %s103, 1
    %s105 = scalar_select %p102, %s103, %s104
    %p108 = pneg %p102
    %p109 = scmp.eq.s32.totalorder %s9, 7
    %p110 = por %p108, %p109
    %p111 = scmp.ne.s32.totalorder %s103, %s106
    %p112 = scmp.eq.s32.totalorder %s9, 0
    %p113 = por %p111, %p112
    %p114 = scmp.ne.s32.totalorder %s103, %s106
    %p115 = scmp.eq.s32.totalorder %s14, 7
    %p116 = por %p114, %p115
    %p117 = scmp.ne.s32.totalorder %s106, %s107
    %p118 = scmp.eq.s32.totalorder %s14, 0
    %p119 = por %p117, %p118
    %p120 = scmp.ne.s32.totalorder %s106, %s107
    %p121 = scmp.eq.s32.totalorder %s15, 7
    %p122 = por %p120, %p121
    %p124 = scmp.ne.s32.totalorder %s107, %s123
    %p125 = scmp.eq.s32.totalorder %s15, 0
    %p126 = por %p124, %p125
    %p127 = scmp.le.s32.totalorder 1, %s9
    %p128 = scmp.lt.s32.totalorder %s9, 9
    %p129 = pnand %p127, %p128
    %p130 = pneg %p129
    // Predicated region
    $region9: #{decode_block_forward.13} parent=5 // pred_check
      _
    $region10: #{decode_block_forward.13} parent=5 // pred_check_branch
      %132 = sbr.rel (%p129) target = $region12
    $region11: #{decode_block_forward.13} parent=5 // pred_region
      %s133 = ssub.s32 %s9, 1
      // Predicated region
      $region13: #{decode_block_forward.13} parent=11 // pred_check
        %p134 = pneg %p70
      $region14: #{decode_block_forward.13} parent=11 // pred_check_branch
        %136 = sbr.rel (%p134) target = $region16
      $region15: #{decode_block_forward.13} parent=11 // pred_region
        _
      $region16: #{decode_block_forward.13} parent=11 // pred_fallthru
        _
      // Predicated region
      $region17: #{decode_block_forward.13} parent=11 // pred_check
        %p137 = pneg %p91
      $region18: #{decode_block_forward.13} parent=11 // pred_check_branch
        %139 = sbr.rel (%p137) target = $region20
      $region19: #{decode_block_forward.13} parent=11 // pred_region
        _
      $region20: #{decode_block_forward.13} parent=11 // pred_fallthru
        _
    $region12: #{decode_block_forward.13} parent=5 // pred_fallthru
      _
    %p140 = scmp.lt.s32.totalorder %s9, 8
    // Predicated region
    $region21: #{decode_block_forward.13} parent=5 // pred_check
      %p141 = pneg %p140
    $region22: #{decode_block_forward.13} parent=5 // pred_check_branch
      %143 = sbr.rel (%p141) target = $region24
    $region23: #{decode_block_forward.13} parent=5 // pred_region
      // Predicated region
      $region25: #{decode_block_forward.13} parent=23 // pred_check
        %p144 = pneg %p43
      $region26: #{decode_block_forward.13} parent=23 // pred_check_branch
        %146 = sbr.rel (%p144) target = $region28
      $region27: #{decode_block_forward.13} parent=23 // pred_region
        %p147 = scmp.lt.s32.totalorder %s16, 1
        %s148 = scalar_select %p147, %s16, 1
        %p149 = scmp.lt.s32.totalorder %s17, 4
        %s150 = scalar_select %p149, %s17, 4
        %s151 = smul.addr %s150, 5
        %s152 = smul.addr %s148, 25
        %s153 = sadd.s32 %s151, %s152
        %s154 = smul.addr %s153, 4
        %s155 = scalar_lea.vmem %s0, %s154
      $region28: #{decode_block_forward.13} parent=23 // pred_fallthru
        _
    $region24: #{decode_block_forward.13} parent=5 // pred_fallthru
      _
    %p156 = scmp.le.s32.totalorder 1, %s9
    %p157 = scmp.lt.s32.totalorder %s9, 9
    %p158 = pnand %p156, %p157
    %p159 = pneg %p158
    // Predicated region
    $region29: #{decode_block_forward.13} parent=5 // pred_check
      _
    $region30: #{decode_block_forward.13} parent=5 // pred_check_branch
      %161 = sbr.rel (%p158) target = $region32
    $region31: #{decode_block_forward.13} parent=5 // pred_region
      %s162 = ssub.s32 %s9, 1
      %p163 = scmp.lt.s32.totalorder %s18, 1
      %s164 = scalar_select %p163, %s18, 1
      %p165 = scmp.lt.s32.totalorder %s19, 4
      %s166 = scalar_select %p165, %s19, 4
      %s167 = smul.addr %s166, 5
      %s168 = smul.addr %s164, 25
      %s169 = sadd.s32 %s167, %s168
      %s170 = smul.addr %s169, 4
      %s171 = scalar_lea.vmem %s0, %s170
      %p172 = pneg %p49
      %p173 = pneg %p46
      %p174 = pneg %p70
      %p175 = pneg %p67
      %p176 = pneg %p91
      %p177 = pneg %p88
      %p178 = pneg %p119
      %p179 = pneg %p116
      %p180 = scmp.lt.s32.totalorder %s18, 1
      %s181 = scalar_select %p180, %s18, 1
      %p182 = scmp.lt.s32.totalorder %s19, 3
      %s183 = scalar_select %p182, %s19, 3
      %s184 = smul.addr %s183, 4
      %s185 = smul.addr %s181, 16
      %s186 = sadd.s32 %s184, %s185
      %s187 = smul.addr %s186, 2
      %s188 = scalar_lea.vmem %s3, %s187
      %p189 = scmp.lt.s32.totalorder %s18, 1
      %s190 = scalar_select %p189, %s18, 1
      %p191 = scmp.lt.s32.totalorder %s19, 4
      %s192 = scalar_select %p191, %s19, 4
      %s193 = smul.addr %s192, 5
      %s194 = smul.addr %s190, 25
      %s195 = sadd.s32 %s193, %s194
      %s196 = smul.addr %s195, 4
      %s197 = scalar_lea.vmem %s0, %s196
      %p198 = scmp.lt.s32.totalorder %s18, 1
      %s199 = scalar_select %p198, %s18, 1
      %p200 = scmp.lt.s32.totalorder %s19, 3
      %s201 = scalar_select %p200, %s19, 3
      %s202 = smul.addr %s201, 4
      %s203 = smul.addr %s199, 16
      %s204 = sadd.s32 %s202, %s203
      %s205 = smul.addr %s204, 2
      %s206 = scalar_lea.vmem %s3, %s205
      %v208 = vld [vmem:[%s2] sm:$0x1]
      loop: start=0, step=1, limit=4
      $region33: #{decode_block_forward.13} parent=31 // loop_pre_header
        _
      $region34: #{decode_block_forward.13} parent=31 // loop_header
        %s210 = sphi 0, %s214
        %p211 = scmp.ge.s32.totalorder %s210, 4
      $region35: #{decode_block_forward.13} parent=31 // loop_header_branch
        %213 = sbr.rel (%p211) target = $region39
      $region36: #{decode_block_forward.13} parent=31 // loop_body
        %s215 = smul.addr %s210, 4
        %s216 = scalar_lea.vmem %s197, %s215
        %v217 = vld [vmem:[%s216] sm:$0x7]
        %v218 = vld [vmem:[%s1] sm:$0x3]
        %s219 = scalar_lea.vmem %s1, 2
        %v220 = vld [vmem:[%s219] sm:$0x3]
        %v222 = vunpack.c.l.b16 %v217
        %v223 = vpack.c.b16 %v222, %v222
        %v225 = vshrl.u32 %v223, 16
        %v227 = vshll.u32 %v223, 16
        %v229 = vrot.slane %v227, 1
        %v230 = vor.u32 %v225, %v229
        %vm231 = vcmask 31744
        %v233 = vsel %vm231, %v230, 0
        %vm235 = vcmask 1041408
        %v237 = vsel %vm235, %v220, 0
        %239 = vmatprep.subr.bf16.mxu0 0
        %240 = vmatpush1.bf16.msra.mxu0 0
        %241 = vmatprep.subr.bf16.mxu0 0
        %242 = vmatpush1.bf16.msra.mxu0 0
        %243 = vmatprep.subr.bf16.mxu0 0
        %244 = vmatpush1.bf16.msra.mxu0 0
        %245 = vmatprep.subr.bf16.mxu0 0
        %246 = vmatpush1.bf16.msra.mxu0 0
        %247 = vmatprep.subr.bf16.mxu0 0
        %248 = vmatpush1.bf16.msra.mxu0 0
        %249 = vmatprep.subr.bf16.mxu0 0
        %250 = vmatpush1.bf16.msra.mxu0 0
        %251 = vmatprep.subr.bf16.mxu0 0
        %252 = vmatpush1.bf16.msra.mxu0 0
        %253 = vmatprep.subr.bf16.mxu0 0
        %254 = vmatpush1.bf16.msra.mxu0 %v237
        %255 = vmatprep.subr.bf16.mxu0 0
        %256 = vmatpush2.bf16.msra.mxu0 0
        %257 = vmatprep.subr.bf16.mxu0 0
        %258 = vmatpush2.bf16.msra.mxu0 0
        %259 = vmatprep.subr.bf16.mxu0 0
        %260 = vmatpush2.bf16.msra.mxu0 0
        %261 = vmatprep.subr.bf16.mxu0 0
        %262 = vmatpush2.bf16.msra.mxu0 0
        %263 = vmatprep.subr.bf16.mxu0 0
        %264 = vmatpush2.bf16.msra.mxu0 0
        %265 = vmatprep.subr.bf16.mxu0 0
        %266 = vmatpush2.bf16.msra.mxu0 0
        %267 = vmatprep.subr.bf16.mxu0 0
        %268 = vmatpush2.bf16.msra.mxu0 0
        %269 = vmatprep.subr.bf16.mxu0 0
        %270 = vmatpush2.bf16.msra.mxu0 0
        %271 = vmatprep.mubr.bf16.mxu0 0
        %272 = vmatmul.mubr.bf16.gmra.mxu0 %v233
        %v273 = vpop.f32.mrf.mxu0
        %v274 = vadd.f32 0.0, %v273
        %v275 = vpop.f32.mrf.mxu0
        %v276 = vpop.f32.mrf.mxu0
        %v277 = vpop.f32.mrf.mxu0
        %278 = vdwg.mxu0
        %v280 = vsel %vm231, %v217, 0
        %v283 = vsel %vm235, %v218, 0
        %285 = vmatprep.subr.bf16.mxu0 0
        %286 = vmatpush1.bf16.msra.mxu0 0
        %287 = vmatprep.subr.bf16.mxu0 0
        %288 = vmatpush1.bf16.msra.mxu0 0
        %289 = vmatprep.subr.bf16.mxu0 0
        %290 = vmatpush1.bf16.msra.mxu0 0
        %291 = vmatprep.subr.bf16.mxu0 0
        %292 = vmatpush1.bf16.msra.mxu0 0
        %293 = vmatprep.subr.bf16.mxu0 0
        %294 = vmatpush1.bf16.msra.mxu0 0
        %295 = vmatprep.subr.bf16.mxu0 0
        %296 = vmatpush1.bf16.msra.mxu0 0
        %297 = vmatprep.subr.bf16.mxu0 0
        %298 = vmatpush1.bf16.msra.mxu0 0
        %299 = vmatprep.subr.bf16.mxu0 0
        %300 = vmatpush1.bf16.msra.mxu0 %v283
        %301 = vmatprep.subr.bf16.mxu0 0
        %302 = vmatpush2.bf16.msra.mxu0 0
        %303 = vmatprep.subr.bf16.mxu0 0
        %304 = vmatpush2.bf16.msra.mxu0 0
        %305 = vmatprep.subr.bf16.mxu0 0
        %306 = vmatpush2.bf16.msra.mxu0 0
        %307 = vmatprep.subr.bf16.mxu0 0
        %308 = vmatpush2.bf16.msra.mxu0 0
        %309 = vmatprep.subr.bf16.mxu0 0
        %310 = vmatpush2.bf16.msra.mxu0 0
        %311 = vmatprep.subr.bf16.mxu0 0
        %312 = vmatpush2.bf16.msra.mxu0 0
        %313 = vmatprep.subr.bf16.mxu0 0
        %314 = vmatpush2.bf16.msra.mxu0 0
        %315 = vmatprep.subr.bf16.mxu0 0
        %316 = vmatpush2.bf16.msra.mxu0 0
        %317 = vmatprep.mubr.bf16.mxu0 0
        %318 = vmatmul.mubr.bf16.gmra.mxu0 %v280
        %v319 = vpop.f32.mrf.mxu0
        %v320 = vadd.f32 %v274, %v319
        %v321 = vpop.f32.mrf.mxu0
        %v322 = vpop.f32.mrf.mxu0
        %v323 = vpop.f32.mrf.mxu0
        %324 = vdwg.mxu0
        %v326 = vlaneseq
        %v327 = vshrl.u32 %v326, 7
        %v328 = vsub.s32 0, %v327
        %v329 = vrot.slane %v208, %v328
        %v331 = vadd.f32 %v320, %v329
        %v332 = vpack.c.bf16 %v331, %v331
        %s333 = smul.addr %s210, 2
        %s334 = scalar_lea.vmem %s206, %s333
        %vm335 = vcmask 25600
        %336 = vst.msk [vmem:[%s334] sm:$0x3] %vm335, %v332
      $region37: #{decode_block_forward.13} parent=31 // loop_footer
        %s214 = sadd.s32 1, %s210
      $region38: #{decode_block_forward.13} parent=31 // loop_footer_branch
        %209 = sbr.rel target = $region34
      $region39: #{decode_block_forward.13} parent=31 // loop_exit
        _
      %p337 = scmp.lt.s32.totalorder %s18, 1
      %s338 = scalar_select %p337, %s18, 1
      %p339 = scmp.lt.s32.totalorder %s19, 3
      %s340 = scalar_select %p339, %s19, 3
      %s341 = smul.addr %s340, 4
      %s342 = smul.addr %s338, 16
      %s343 = sadd.s32 %s341, %s342
      %s344 = smul.addr %s343, 2
      %s345 = scalar_lea.vmem %s3, %s344
      // Predicated region
      $region40: #{decode_block_forward.13} parent=31 // pred_check
        %p346 = pneg %p116
      $region41: #{decode_block_forward.13} parent=31 // pred_check_branch
        %348 = sbr.rel (%p346) target = $region43
      $region42: #{decode_block_forward.13} parent=31 // pred_region
        _
      $region43: #{decode_block_forward.13} parent=31 // pred_fallthru
        _
    $region32: #{decode_block_forward.13} parent=5 // pred_fallthru
      _
    %p349 = scmp.le.s32.totalorder 2, %s9
    // Predicated region
    $region44: #{decode_block_forward.13} parent=5 // pred_check
      %p350 = pneg %p349
    $region45: #{decode_block_forward.13} parent=5 // pred_check_branch
      %352 = sbr.rel (%p350) target = $region47
    $region46: #{decode_block_forward.13} parent=5 // pred_region
      %s353 = ssub.s32 %s9, 2
      // Predicated region
      $region48: #{decode_block_forward.13} parent=46 // pred_check
        %p354 = pneg %p122
      $region49: #{decode_block_forward.13} parent=46 // pred_check_branch
        %356 = sbr.rel (%p354) target = $region51
      $region50: #{decode_block_forward.13} parent=46 // pred_region
        %p357 = scmp.lt.s32.totalorder %s20, 1
        %s358 = scalar_select %p357, %s20, 1
        %p359 = scmp.lt.s32.totalorder %s21, 3
        %s360 = scalar_select %p359, %s21, 3
        %s361 = smul.addr %s360, 4
        %s362 = smul.addr %s358, 16
        %s363 = sadd.s32 %s361, %s362
        %s364 = smul.addr %s363, 2
        %s365 = scalar_lea.vmem %s3, %s364
      $region51: #{decode_block_forward.13} parent=46 // pred_fallthru
        _
    $region47: #{decode_block_forward.13} parent=5 // pred_fallthru
      _
  $region6: #{decode_block_forward.13} parent=0 // loop_footer
    %s13 = sadd.s32 1, %s9
  $region7: #{decode_block_forward.13} parent=0 // loop_footer_branch
    %8 = sbr.rel target = $region3
  $region8: #{decode_block_forward.13} parent=0 // loop_exit
    _

// kernel: decode_block_forward.12
$region0: #{decode_block_forward.12}
  #allocation0 [shape = 'u32[]', space=smem, size = 0x4, offset = 0x4, fixed_abs, tag = 'smem constant byte address 0x4 - core index']
  #allocation1 [shape = 'u32[144,128]{1,0:T(1,128)}', space=vmem, size = 0x12000, scoped, tag = 'internal scratch']
  %s0 = inlined_call_operand.vmem [shape: bf16[2,5,5,5,4], index: 0, kind: input, shape index: {}]
  %s1 = inlined_call_operand.vmem [shape: bf16[1,4,4], index: 1, kind: input, shape index: {}]
  %s2 = inlined_call_operand.vmem [shape: f32[1,4], index: 2, kind: input, shape index: {}]
  %s3 = inlined_call_operand.vmem [shape: bf16[2,4,4,4,4], index: 3, kind: output, shape index: {}]
  %s4 = sld [smem:[#allocation0]]
  $region52: #{decode_block_forward.12} parent=0
    _
  %s6 = ssub.s32 1, %s4
  %s7 = scalar_select 0, %s6, %s4
  loop: start=0, step=1, limit=10
  $region2: #{decode_block_forward.12} parent=0 // loop_pre_header
    _
  $region3: #{decode_block_forward.12} parent=0 // loop_header
    %s9 = sphi 0, %s13
    %p10 = scmp.ge.s32.totalorder %s9, 10
    %s16 = sphi 0, %s28
    %s17 = sphi 0, %s24
    %s18 = sphi 0, %s16
    %s19 = sphi 0, %s17
    %s20 = sphi 0, %s18
    %s21 = sphi 0, %s19
    %s33 = sphi 0, %s35
    %s36 = sphi 0, %s33
    %s37 = sphi 0, %s36
    %s53 = sphi 0, %s37
    %s57 = sphi 0, %s57
    %s59 = sphi 0, %s57
    %s60 = sphi 0, %s59
    %s74 = sphi 0, %s60
    %s78 = sphi 0, %s78
    %s80 = sphi 0, %s78
    %s81 = sphi 0, %s80
    %s95 = sphi 0, %s81
    %s103 = sphi 0, %s105
    %s106 = sphi 0, %s103
    %s107 = sphi 0, %s106
    %s123 = sphi 0, %s107
  $region4: #{decode_block_forward.12} parent=0 // loop_header_branch
    %12 = sbr.rel (%p10) target = $region8
  $region5: #{decode_block_forward.12} parent=0 // loop_body
    %s14 = ssub.s32 %s9, 1
    %s15 = ssub.s32 %s9, 2
    %s22 = sadd.s32 1, %s17
    %p23 = scmp.ge.s32.totalorder %s22, 4
    %s24 = scalar_select %p23, 0, %s22
    %s25 = sadd.s32 1, %s16
    %s26 = scalar_select %p23, %s25, %s16
    %p27 = scmp.ge.s32.totalorder %s26, 2
    %s28 = scalar_select %p27, 0, %s26
    %s29 = ssub.s32 %s16, %s28
    %s30 = ssub.s32 %s17, %s24
    %s31 = sor.u32 %s29, %s30
    %p32 = scmp.eq.s32.totalorder %s31, 0
    %s34 = sadd.s32 %s33, 1
    %s35 = scalar_select %p32, %s33, %s34
    %p38 = pneg %p32
    %p39 = scmp.eq.s32.totalorder %s9, 7
    %p40 = por %p38, %p39
    %p41 = scmp.ne.s32.totalorder %s33, %s36
    %p42 = scmp.eq.s32.totalorder %s9, 0
    %p43 = por %p41, %p42
    %p44 = scmp.ne.s32.totalorder %s33, %s36
    %p45 = scmp.eq.s32.totalorder %s14, 7
    %p46 = por %p44, %p45
    %p47 = scmp.ne.s32.totalorder %s36, %s37
    %p48 = scmp.eq.s32.totalorder %s14, 0
    %p49 = por %p47, %p48
    %p50 = scmp.ne.s32.totalorder %s36, %s37
    %p51 = scmp.eq.s32.totalorder %s15, 7
    %p52 = por %p50, %p51
    %p54 = scmp.ne.s32.totalorder %s37, %s53
    %p55 = scmp.eq.s32.totalorder %s15, 0
    %p56 = por %p54, %p55
    %s58 = sadd.s32 %s57, 1
    %p61 = scmp.eq.s32.totalorder %s9, 7
    %p62 = scmp.ne.s32.totalorder %s57, %s59
    %p63 = scmp.eq.s32.totalorder %s9, 0
    %p64 = por %p62, %p63
    %p65 = scmp.ne.s32.totalorder %s57, %s59
    %p66 = scmp.eq.s32.totalorder %s14, 7
    %p67 = por %p65, %p66
    %p68 = scmp.ne.s32.totalorder %s59, %s60
    %p69 = scmp.eq.s32.totalorder %s14, 0
    %p70 = por %p68, %p69
    %p71 = scmp.ne.s32.totalorder %s59, %s60
    %p72 = scmp.eq.s32.totalorder %s15, 7
    %p73 = por %p71, %p72
    %p75 = scmp.ne.s32.totalorder %s60, %s74
    %p76 = scmp.eq.s32.totalorder %s15, 0
    %p77 = por %p75, %p76
    %s79 = sadd.s32 %s78, 1
    %p82 = scmp.eq.s32.totalorder %s9, 7
    %p83 = scmp.ne.s32.totalorder %s78, %s80
    %p84 = scmp.eq.s32.totalorder %s9, 0
    %p85 = por %p83, %p84
    %p86 = scmp.ne.s32.totalorder %s78, %s80
    %p87 = scmp.eq.s32.totalorder %s14, 7
    %p88 = por %p86, %p87
    %p89 = scmp.ne.s32.totalorder %s80, %s81
    %p90 = scmp.eq.s32.totalorder %s14, 0
    %p91 = por %p89, %p90
    %p92 = scmp.ne.s32.totalorder %s80, %s81
    %p93 = scmp.eq.s32.totalorder %s15, 7
    %p94 = por %p92, %p93
    %p96 = scmp.ne.s32.totalorder %s81, %s95
    %p97 = scmp.eq.s32.totalorder %s15, 0
    %p98 = por %p96, %p97
    %s99 = ssub.s32 %s16, %s28
    %s100 = ssub.s32 %s17, %s24
    %s101 = sor.u32 %s99, %s100
    %p102 = scmp.eq.s32.totalorder %s101, 0
    %s104 = sadd.s32 %s103, 1
    %s105 = scalar_select %p102, %s103, %s104
    %p108 = pneg %p102
    %p109 = scmp.eq.s32.totalorder %s9, 7
    %p110 = por %p108, %p109
    %p111 = scmp.ne.s32.totalorder %s103, %s106
    %p112 = scmp.eq.s32.totalorder %s9, 0
    %p113 = por %p111, %p112
    %p114 = scmp.ne.s32.totalorder %s103, %s106
    %p115 = scmp.eq.s32.totalorder %s14, 7
    %p116 = por %p114, %p115
    %p117 = scmp.ne.s32.totalorder %s106, %s107
    %p118 = scmp.eq.s32.totalorder %s14, 0
    %p119 = por %p117, %p118
    %p120 = scmp.ne.s32.totalorder %s106, %s107
    %p121 = scmp.eq.s32.totalorder %s15, 7
    %p122 = por %p120, %p121
    %p124 = scmp.ne.s32.totalorder %s107, %s123
    %p125 = scmp.eq.s32.totalorder %s15, 0
    %p126 = por %p124, %p125
    %p127 = scmp.le.s32.totalorder 1, %s9
    %p128 = scmp.lt.s32.totalorder %s9, 9
    %p129 = pnand %p127, %p128
    %p130 = pneg %p129
    // Predicated region
    $region9: #{decode_block_forward.12} parent=5 // pred_check
      _
    $region10: #{decode_block_forward.12} parent=5 // pred_check_branch
      %132 = sbr.rel (%p129) target = $region12
    $region11: #{decode_block_forward.12} parent=5 // pred_region
      %s133 = ssub.s32 %s9, 1
      // Predicated region
      $region13: #{decode_block_forward.12} parent=11 // pred_check
        %p134 = pneg %p70
      $region14: #{decode_block_forward.12} parent=11 // pred_check_branch
        %136 = sbr.rel (%p134) target = $region16
      $region15: #{decode_block_forward.12} parent=11 // pred_region
        _
      $region16: #{decode_block_forward.12} parent=11 // pred_fallthru
        _
      // Predicated region
      $region17: #{decode_block_forward.12} parent=11 // pred_check
        %p137 = pneg %p91
      $region18: #{decode_block_forward.12} parent=11 // pred_check_branch
        %139 = sbr.rel (%p137) target = $region20
      $region19: #{decode_block_forward.12} parent=11 // pred_region
        _
      $region20: #{decode_block_forward.12} parent=11 // pred_fallthru
        _
    $region12: #{decode_block_forward.12} parent=5 // pred_fallthru
      _
    %p140 = scmp.lt.s32.totalorder %s9, 8
    // Predicated region
    $region21: #{decode_block_forward.12} parent=5 // pred_check
      %p141 = pneg %p140
    $region22: #{decode_block_forward.12} parent=5 // pred_check_branch
      %143 = sbr.rel (%p141) target = $region24
    $region23: #{decode_block_forward.12} parent=5 // pred_region
      // Predicated region
      $region25: #{decode_block_forward.12} parent=23 // pred_check
        %p144 = pneg %p43
      $region26: #{decode_block_forward.12} parent=23 // pred_check_branch
        %146 = sbr.rel (%p144) target = $region28
      $region27: #{decode_block_forward.12} parent=23 // pred_region
        %p147 = scmp.lt.s32.totalorder %s16, 1
        %s148 = scalar_select %p147, %s16, 1
        %p149 = scmp.lt.s32.totalorder %s17, 4
        %s150 = scalar_select %p149, %s17, 4
        %s151 = smul.addr %s150, 5
        %s152 = smul.addr %s148, 25
        %s153 = sadd.s32 %s151, %s152
        %s154 = smul.addr %s153, 4
        %s155 = scalar_lea.vmem %s0, %s154
      $region28: #{decode_block_forward.12} parent=23 // pred_fallthru
        _
    $region24: #{decode_block_forward.12} parent=5 // pred_fallthru
      _
    %p156 = scmp.le.s32.totalorder 1, %s9
    %p157 = scmp.lt.s32.totalorder %s9, 9
    %p158 = pnand %p156, %p157
    %p159 = pneg %p158
    // Predicated region
    $region29: #{decode_block_forward.12} parent=5 // pred_check
      _
    $region30: #{decode_block_forward.12} parent=5 // pred_check_branch
      %161 = sbr.rel (%p158) target = $region32
    $region31: #{decode_block_forward.12} parent=5 // pred_region
      %s162 = ssub.s32 %s9, 1
      %p163 = scmp.lt.s32.totalorder %s18, 1
      %s164 = scalar_select %p163, %s18, 1
      %p165 = scmp.lt.s32.totalorder %s19, 4
      %s166 = scalar_select %p165, %s19, 4
      %s167 = smul.addr %s166, 5
      %s168 = smul.addr %s164, 25
      %s169 = sadd.s32 %s167, %s168
      %s170 = smul.addr %s169, 4
      %s171 = scalar_lea.vmem %s0, %s170
      %p172 = pneg %p49
      %p173 = pneg %p46
      %p174 = pneg %p70
      %p175 = pneg %p67
      %p176 = pneg %p91
      %p177 = pneg %p88
      %p178 = pneg %p119
      %p179 = pneg %p116
      %p180 = scmp.lt.s32.totalorder %s18, 1
      %s181 = scalar_select %p180, %s18, 1
      %p182 = scmp.lt.s32.totalorder %s19, 3
      %s183 = scalar_select %p182, %s19, 3
      %s184 = smul.addr %s183, 4
      %s185 = smul.addr %s181, 16
      %s186 = sadd.s32 %s184, %s185
      %s187 = smul.addr %s186, 2
      %s188 = scalar_lea.vmem %s3, %s187
      %p189 = scmp.lt.s32.totalorder %s18, 1
      %s190 = scalar_select %p189, %s18, 1
      %p191 = scmp.lt.s32.totalorder %s19, 4
      %s192 = scalar_select %p191, %s19, 4
      %s193 = smul.addr %s192, 5
      %s194 = smul.addr %s190, 25
      %s195 = sadd.s32 %s193, %s194
      %s196 = smul.addr %s195, 4
      %s197 = scalar_lea.vmem %s0, %s196
      %p198 = scmp.lt.s32.totalorder %s18, 1
      %s199 = scalar_select %p198, %s18, 1
      %p200 = scmp.lt.s32.totalorder %s19, 3
      %s201 = scalar_select %p200, %s19, 3
      %s202 = smul.addr %s201, 4
      %s203 = smul.addr %s199, 16
      %s204 = sadd.s32 %s202, %s203
      %s205 = smul.addr %s204, 2
      %s206 = scalar_lea.vmem %s3, %s205
      %v208 = vld [vmem:[%s2] sm:$0x1]
      loop: start=0, step=1, limit=4
      $region33: #{decode_block_forward.12} parent=31 // loop_pre_header
        _
      $region34: #{decode_block_forward.12} parent=31 // loop_header
        %s210 = sphi 0, %s214
        %p211 = scmp.ge.s32.totalorder %s210, 4
      $region35: #{decode_block_forward.12} parent=31 // loop_header_branch
        %213 = sbr.rel (%p211) target = $region39
      $region36: #{decode_block_forward.12} parent=31 // loop_body
        %s215 = smul.addr %s210, 4
        %s216 = scalar_lea.vmem %s197, %s215
        %v217 = vld [vmem:[%s216] sm:$0x7]
        %v218 = vld [vmem:[%s1] sm:$0x3]
        %v220 = vlaneseq
        %v221 = vshrl.u32 %v220, 7
        %v222 = vsub.s32 0, %v221
        %v223 = vrot.slane %v208, %v222
        %vm225 = vcmask 31744
        %v227 = vsel %vm225, %v217, 0
        %vm229 = vcmask 1041408
        %v231 = vsel %vm229, %v218, 0
        %233 = vmatprep.subr.bf16.mxu0 0
        %234 = vmatpush1.bf16.msra.mxu0 0
        %235 = vmatprep.subr.bf16.mxu0 0
        %236 = vmatpush1.bf16.msra.mxu0 0
        %237 = vmatprep.subr.bf16.mxu0 0
        %238 = vmatpush1.bf16.msra.mxu0 0
        %239 = vmatprep.subr.bf16.mxu0 0
        %240 = vmatpush1.bf16.msra.mxu0 0
        %241 = vmatprep.subr.bf16.mxu0 0
        %242 = vmatpush1.bf16.msra.mxu0 0
        %243 = vmatprep.subr.bf16.mxu0 0
        %244 = vmatpush1.bf16.msra.mxu0 0
        %245 = vmatprep.subr.bf16.mxu0 0
        %246 = vmatpush1.bf16.msra.mxu0 0
        %247 = vmatprep.subr.bf16.mxu0 0
        %248 = vmatpush1.bf16.msra.mxu0 %v231
        %249 = vmatprep.subr.bf16.mxu0 0
        %250 = vmatpush2.bf16.msra.mxu0 0
        %251 = vmatprep.subr.bf16.mxu0 0
        %252 = vmatpush2.bf16.msra.mxu0 0
        %253 = vmatprep.subr.bf16.mxu0 0
        %254 = vmatpush2.bf16.msra.mxu0 0
        %255 = vmatprep.subr.bf16.mxu0 0
        %256 = vmatpush2.bf16.msra.mxu0 0
        %257 = vmatprep.subr.bf16.mxu0 0
        %258 = vmatpush2.bf16.msra.mxu0 0
        %259 = vmatprep.subr.bf16.mxu0 0
        %260 = vmatpush2.bf16.msra.mxu0 0
        %261 = vmatprep.subr.bf16.mxu0 0
        %262 = vmatpush2.bf16.msra.mxu0 0
        %263 = vmatprep.subr.bf16.mxu0 0
        %264 = vmatpush2.bf16.msra.mxu0 0
        %265 = vmatprep.mubr.bf16.mxu0 0
        %266 = vmatmul.mubr.bf16.gmra.mxu0 %v227
        %v267 = vpop.f32.mrf.mxu0
        %v268 = vadd.f32 %v223, %v267
        %v269 = vpop.f32.mrf.mxu0
        %v270 = vpop.f32.mrf.mxu0
        %v271 = vpop.f32.mrf.mxu0
        %272 = vdwg.mxu0
        %v273 = vpack.c.bf16 %v268, %v268
        %s274 = smul.addr %s210, 2
        %s275 = scalar_lea.vmem %s206, %s274
        %vm276 = vcmask 25600
        %277 = vst.msk [vmem:[%s275] sm:$0x3] %vm276, %v273
      $region37: #{decode_block_forward.12} parent=31 // loop_footer
        %s214 = sadd.s32 1, %s210
      $region38: #{decode_block_forward.12} parent=31 // loop_footer_branch
        %209 = sbr.rel target = $region34
      $region39: #{decode_block_forward.12} parent=31 // loop_exit
        _
      %p278 = scmp.lt.s32.totalorder %s18, 1
      %s279 = scalar_select %p278, %s18, 1
      %p280 = scmp.lt.s32.totalorder %s19, 3
      %s281 = scalar_select %p280, %s19, 3
      %s282 = smul.addr %s281, 4
      %s283 = smul.addr %s279, 16
      %s284 = sadd.s32 %s282, %s283
      %s285 = smul.addr %s284, 2
      %s286 = scalar_lea.vmem %s3, %s285
      // Predicated region
      $region40: #{decode_block_forward.12} parent=31 // pred_check
        %p287 = pneg %p116
      $region41: #{decode_block_forward.12} parent=31 // pred_check_branch
        %289 = sbr.rel (%p287) target = $region43
      $region42: #{decode_block_forward.12} parent=31 // pred_region
        _
      $region43: #{decode_block_forward.12} parent=31 // pred_fallthru
        _
    $region32: #{decode_block_forward.12} parent=5 // pred_fallthru
      _
    %p290 = scmp.le.s32.totalorder 2, %s9
    // Predicated region
    $region44: #{decode_block_forward.12} parent=5 // pred_check
      %p291 = pneg %p290
    $region45: #{decode_block_forward.12} parent=5 // pred_check_branch
      %293 = sbr.rel (%p291) target = $region47
    $region46: #{decode_block_forward.12} parent=5 // pred_region
      %s294 = ssub.s32 %s9, 2
      // Predicated region
      $region48: #{decode_block_forward.12} parent=46 // pred_check
        %p295 = pneg %p122
      $region49: #{decode_block_forward.12} parent=46 // pred_check_branch
        %297 = sbr.rel (%p295) target = $region51
      $region50: #{decode_block_forward.12} parent=46 // pred_region
        %p298 = scmp.lt.s32.totalorder %s20, 1
        %s299 = scalar_select %p298, %s20, 1
        %p300 = scmp.lt.s32.totalorder %s21, 3
        %s301 = scalar_select %p300, %s21, 3
        %s302 = smul.addr %s301, 4
        %s303 = smul.addr %s299, 16
        %s304 = sadd.s32 %s302, %s303
        %s305 = smul.addr %s304, 2
        %s306 = scalar_lea.vmem %s3, %s305
      $region51: #{decode_block_forward.12} parent=46 // pred_fallthru
        _
    $region47: #{decode_block_forward.12} parent=5 // pred_fallthru
      _
  $region6: #{decode_block_forward.12} parent=0 // loop_footer
    %s13 = sadd.s32 1, %s9
  $region7: #{decode_block_forward.12} parent=0 // loop_footer_branch
    %8 = sbr.rel target = $region3
  $region8: #{decode_block_forward.12} parent=0 // loop_exit
    _

// kernel: decode_block_forward.14
$region0: #{decode_block_forward.14}
  #allocation0 [shape = 'u32[]', space=smem, size = 0x4, offset = 0x4, fixed_abs, tag = 'smem constant byte address 0x4 - core index']
  #allocation1 [shape = 'u32[144,128]{1,0:T(1,128)}', space=vmem, size = 0x12000, scoped, tag = 'internal scratch']
  %s0 = inlined_call_operand.vmem [shape: bf16[2,5,5,5,4], index: 0, kind: input, shape index: {}]
  %s1 = inlined_call_operand.vmem [shape: bf16[2,4,4], index: 1, kind: input, shape index: {}]
  %s2 = inlined_call_operand.vmem [shape: f32[1,4], index: 2, kind: input, shape index: {}]
  %s3 = inlined_call_operand.vmem [shape: bf16[2,4,4,4,4], index: 3, kind: output, shape index: {}]
  %s4 = sld [smem:[#allocation0]]
  $region52: #{decode_block_forward.14} parent=0
    _
  %s6 = ssub.s32 1, %s4
  %s7 = scalar_select 0, %s6, %s4
  loop: start=0, step=1, limit=10
  $region2: #{decode_block_forward.14} parent=0 // loop_pre_header
    _
  $region3: #{decode_block_forward.14} parent=0 // loop_header
    %s9 = sphi 0, %s13
    %p10 = scmp.ge.s32.totalorder %s9, 10
    %s16 = sphi 0, %s28
    %s17 = sphi 0, %s24
    %s18 = sphi 0, %s16
    %s19 = sphi 0, %s17
    %s20 = sphi 0, %s18
    %s21 = sphi 0, %s19
    %s33 = sphi 0, %s35
    %s36 = sphi 0, %s33
    %s37 = sphi 0, %s36
    %s53 = sphi 0, %s37
    %s57 = sphi 0, %s57
    %s59 = sphi 0, %s57
    %s60 = sphi 0, %s59
    %s74 = sphi 0, %s60
    %s78 = sphi 0, %s78
    %s80 = sphi 0, %s78
    %s81 = sphi 0, %s80
    %s95 = sphi 0, %s81
    %s103 = sphi 0, %s105
    %s106 = sphi 0, %s103
    %s107 = sphi 0, %s106
    %s123 = sphi 0, %s107
  $region4: #{decode_block_forward.14} parent=0 // loop_header_branch
    %12 = sbr.rel (%p10) target = $region8
  $region5: #{decode_block_forward.14} parent=0 // loop_body
    %s14 = ssub.s32 %s9, 1
    %s15 = ssub.s32 %s9, 2
    %s22 = sadd.s32 1, %s17
    %p23 = scmp.ge.s32.totalorder %s22, 4
    %s24 = scalar_select %p23, 0, %s22
    %s25 = sadd.s32 1, %s16
    %s26 = scalar_select %p23, %s25, %s16
    %p27 = scmp.ge.s32.totalorder %s26, 2
    %s28 = scalar_select %p27, 0, %s26
    %s29 = ssub.s32 %s16, %s28
    %s30 = ssub.s32 %s17, %s24
    %s31 = sor.u32 %s29, %s30
    %p32 = scmp.eq.s32.totalorder %s31, 0
    %s34 = sadd.s32 %s33, 1
    %s35 = scalar_select %p32, %s33, %s34
    %p38 = pneg %p32
    %p39 = scmp.eq.s32.totalorder %s9, 7
    %p40 = por %p38, %p39
    %p41 = scmp.ne.s32.totalorder %s33, %s36
    %p42 = scmp.eq.s32.totalorder %s9, 0
    %p43 = por %p41, %p42
    %p44 = scmp.ne.s32.totalorder %s33, %s36
    %p45 = scmp.eq.s32.totalorder %s14, 7
    %p46 = por %p44, %p45
    %p47 = scmp.ne.s32.totalorder %s36, %s37
    %p48 = scmp.eq.s32.totalorder %s14, 0
    %p49 = por %p47, %p48
    %p50 = scmp.ne.s32.totalorder %s36, %s37
    %p51 = scmp.eq.s32.totalorder %s15, 7
    %p52 = por %p50, %p51
    %p54 = scmp.ne.s32.totalorder %s37, %s53
    %p55 = scmp.eq.s32.totalorder %s15, 0
    %p56 = por %p54, %p55
    %s58 = sadd.s32 %s57, 1
    %p61 = scmp.eq.s32.totalorder %s9, 7
    %p62 = scmp.ne.s32.totalorder %s57, %s59
    %p63 = scmp.eq.s32.totalorder %s9, 0
    %p64 = por %p62, %p63
    %p65 = scmp.ne.s32.totalorder %s57, %s59
    %p66 = scmp.eq.s32.totalorder %s14, 7
    %p67 = por %p65, %p66
    %p68 = scmp.ne.s32.totalorder %s59, %s60
    %p69 = scmp.eq.s32.totalorder %s14, 0
    %p70 = por %p68, %p69
    %p71 = scmp.ne.s32.totalorder %s59, %s60
    %p72 = scmp.eq.s32.totalorder %s15, 7
    %p73 = por %p71, %p72
    %p75 = scmp.ne.s32.totalorder %s60, %s74
    %p76 = scmp.eq.s32.totalorder %s15, 0
    %p77 = por %p75, %p76
    %s79 = sadd.s32 %s78, 1
    %p82 = scmp.eq.s32.totalorder %s9, 7
    %p83 = scmp.ne.s32.totalorder %s78, %s80
    %p84 = scmp.eq.s32.totalorder %s9, 0
    %p85 = por %p83, %p84
    %p86 = scmp.ne.s32.totalorder %s78, %s80
    %p87 = scmp.eq.s32.totalorder %s14, 7
    %p88 = por %p86, %p87
    %p89 = scmp.ne.s32.totalorder %s80, %s81
    %p90 = scmp.eq.s32.totalorder %s14, 0
    %p91 = por %p89, %p90
    %p92 = scmp.ne.s32.totalorder %s80, %s81
    %p93 = scmp.eq.s32.totalorder %s15, 7
    %p94 = por %p92, %p93
    %p96 = scmp.ne.s32.totalorder %s81, %s95
    %p97 = scmp.eq.s32.totalorder %s15, 0
    %p98 = por %p96, %p97
    %s99 = ssub.s32 %s16, %s28
    %s100 = ssub.s32 %s17, %s24
    %s101 = sor.u32 %s99, %s100
    %p102 = scmp.eq.s32.totalorder %s101, 0
    %s104 = sadd.s32 %s103, 1
    %s105 = scalar_select %p102, %s103, %s104
    %p108 = pneg %p102
    %p109 = scmp.eq.s32.totalorder %s9, 7
    %p110 = por %p108, %p109
    %p111 = scmp.ne.s32.totalorder %s103, %s106
    %p112 = scmp.eq.s32.totalorder %s9, 0
    %p113 = por %p111, %p112
    %p114 = scmp.ne.s32.totalorder %s103, %s106
    %p115 = scmp.eq.s32.totalorder %s14, 7
    %p116 = por %p114, %p115
    %p117 = scmp.ne.s32.totalorder %s106, %s107
    %p118 = scmp.eq.s32.totalorder %s14, 0
    %p119 = por %p117, %p118
    %p120 = scmp.ne.s32.totalorder %s106, %s107
    %p121 = scmp.eq.s32.totalorder %s15, 7
    %p122 = por %p120, %p121
    %p124 = scmp.ne.s32.totalorder %s107, %s123
    %p125 = scmp.eq.s32.totalorder %s15, 0
    %p126 = por %p124, %p125
    %p127 = scmp.le.s32.totalorder 1, %s9
    %p128 = scmp.lt.s32.totalorder %s9, 9
    %p129 = pnand %p127, %p128
    %p130 = pneg %p129
    // Predicated region
    $region9: #{decode_block_forward.14} parent=5 // pred_check
      _
    $region10: #{decode_block_forward.14} parent=5 // pred_check_branch
      %132 = sbr.rel (%p129) target = $region12
    $region11: #{decode_block_forward.14} parent=5 // pred_region
      %s133 = ssub.s32 %s9, 1
      // Predicated region
      $region13: #{decode_block_forward.14} parent=11 // pred_check
        %p134 = pneg %p70
      $region14: #{decode_block_forward.14} parent=11 // pred_check_branch
        %136 = sbr.rel (%p134) target = $region16
      $region15: #{decode_block_forward.14} parent=11 // pred_region
        _
      $region16: #{decode_block_forward.14} parent=11 // pred_fallthru
        _
      // Predicated region
      $region17: #{decode_block_forward.14} parent=11 // pred_check
        %p137 = pneg %p91
      $region18: #{decode_block_forward.14} parent=11 // pred_check_branch
        %139 = sbr.rel (%p137) target = $region20
      $region19: #{decode_block_forward.14} parent=11 // pred_region
        _
      $region20: #{decode_block_forward.14} parent=11 // pred_fallthru
        _
    $region12: #{decode_block_forward.14} parent=5 // pred_fallthru
      _
    %p140 = scmp.lt.s32.totalorder %s9, 8
    // Predicated region
    $region21: #{decode_block_forward.14} parent=5 // pred_check
      %p141 = pneg %p140
    $region22: #{decode_block_forward.14} parent=5 // pred_check_branch
      %143 = sbr.rel (%p141) target = $region24
    $region23: #{decode_block_forward.14} parent=5 // pred_region
      // Predicated region
      $region25: #{decode_block_forward.14} parent=23 // pred_check
        %p144 = pneg %p43
      $region26: #{decode_block_forward.14} parent=23 // pred_check_branch
        %146 = sbr.rel (%p144) target = $region28
      $region27: #{decode_block_forward.14} parent=23 // pred_region
        %p147 = scmp.lt.s32.totalorder %s16, 1
        %s148 = scalar_select %p147, %s16, 1
        %p149 = scmp.lt.s32.totalorder %s17, 4
        %s150 = scalar_select %p149, %s17, 4
        %s151 = smul.addr %s150, 5
        %s152 = smul.addr %s148, 25
        %s153 = sadd.s32 %s151, %s152
        %s154 = smul.addr %s153, 4
        %s155 = scalar_lea.vmem %s0, %s154
      $region28: #{decode_block_forward.14} parent=23 // pred_fallthru
        _
    $region24: #{decode_block_forward.14} parent=5 // pred_fallthru
      _
    %p156 = scmp.le.s32.totalorder 1, %s9
    %p157 = scmp.lt.s32.totalorder %s9, 9
    %p158 = pnand %p156, %p157
    %p159 = pneg %p158
    // Predicated region
    $region29: #{decode_block_forward.14} parent=5 // pred_check
      _
    $region30: #{decode_block_forward.14} parent=5 // pred_check_branch
      %161 = sbr.rel (%p158) target = $region32
    $region31: #{decode_block_forward.14} parent=5 // pred_region
      %s162 = ssub.s32 %s9, 1
      %p163 = scmp.lt.s32.totalorder %s18, 1
      %s164 = scalar_select %p163, %s18, 1
      %p165 = scmp.lt.s32.totalorder %s19, 4
      %s166 = scalar_select %p165, %s19, 4
      %s167 = smul.addr %s166, 5
      %s168 = smul.addr %s164, 25
      %s169 = sadd.s32 %s167, %s168
      %s170 = smul.addr %s169, 4
      %s171 = scalar_lea.vmem %s0, %s170
      %p172 = pneg %p49
      %p173 = pneg %p46
      %p174 = pneg %p70
      %p175 = pneg %p67
      %p176 = pneg %p91
      %p177 = pneg %p88
      %p178 = pneg %p119
      %p179 = pneg %p116
      %p180 = scmp.lt.s32.totalorder %s18, 1
      %s181 = scalar_select %p180, %s18, 1
      %p182 = scmp.lt.s32.totalorder %s19, 3
      %s183 = scalar_select %p182, %s19, 3
      %s184 = smul.addr %s183, 4
      %s185 = smul.addr %s181, 16
      %s186 = sadd.s32 %s184, %s185
      %s187 = smul.addr %s186, 2
      %s188 = scalar_lea.vmem %s3, %s187
      %p189 = scmp.lt.s32.totalorder %s18, 1
      %s190 = scalar_select %p189, %s18, 1
      %p191 = scmp.lt.s32.totalorder %s19, 4
      %s192 = scalar_select %p191, %s19, 4
      %s193 = smul.addr %s192, 5
      %s194 = smul.addr %s190, 25
      %s195 = sadd.s32 %s193, %s194
      %s196 = smul.addr %s195, 4
      %s197 = scalar_lea.vmem %s0, %s196
      %p198 = scmp.lt.s32.totalorder %s18, 1
      %s199 = scalar_select %p198, %s18, 1
      %p200 = scmp.lt.s32.totalorder %s19, 3
      %s201 = scalar_select %p200, %s19, 3
      %s202 = smul.addr %s201, 4
      %s203 = smul.addr %s199, 16
      %s204 = sadd.s32 %s202, %s203
      %s205 = smul.addr %s204, 2
      %s206 = scalar_lea.vmem %s3, %s205
      %v208 = vld [vmem:[%s2] sm:$0x1]
      loop: start=0, step=1, limit=4
      $region33: #{decode_block_forward.14} parent=31 // loop_pre_header
        _
      $region34: #{decode_block_forward.14} parent=31 // loop_header
        %s210 = sphi 0, %s214
        %p211 = scmp.ge.s32.totalorder %s210, 4
      $region35: #{decode_block_forward.14} parent=31 // loop_header_branch
        %213 = sbr.rel (%p211) target = $region39
      $region36: #{decode_block_forward.14} parent=31 // loop_body
        %s215 = smul.addr %s210, 4
        %s216 = scalar_lea.vmem %s197, %s215
        %v217 = vld [vmem:[%s216] sm:$0x7]
        %v218 = vld [vmem:[%s1] sm:$0x3]
        %s219 = sadd.s32 %s210, 1
        %s220 = smul.addr %s219, 4
        %s221 = scalar_lea.vmem %s197, %s220
        %v222 = vld [vmem:[%s221] sm:$0x7]
        %s223 = scalar_lea.vmem %s1, 2
        %v224 = vld [vmem:[%s223] sm:$0x3]
        %vm225 = vcmask 31744
        %v227 = vsel %vm225, %v222, 0
        %vm229 = vcmask 1041408
        %v231 = vsel %vm229, %v224, 0
        %233 = vmatprep.subr.bf16.mxu0 0
        %234 = vmatpush1.bf16.msra.mxu0 0
        %235 = vmatprep.subr.bf16.mxu0 0
        %236 = vmatpush1.bf16.msra.mxu0 0
        %237 = vmatprep.subr.bf16.mxu0 0
        %238 = vmatpush1.bf16.msra.mxu0 0
        %239 = vmatprep.subr.bf16.mxu0 0
        %240 = vmatpush1.bf16.msra.mxu0 0
        %241 = vmatprep.subr.bf16.mxu0 0
        %242 = vmatpush1.bf16.msra.mxu0 0
        %243 = vmatprep.subr.bf16.mxu0 0
        %244 = vmatpush1.bf16.msra.mxu0 0
        %245 = vmatprep.subr.bf16.mxu0 0
        %246 = vmatpush1.bf16.msra.mxu0 0
        %247 = vmatprep.subr.bf16.mxu0 0
        %248 = vmatpush1.bf16.msra.mxu0 %v231
        %249 = vmatprep.subr.bf16.mxu0 0
        %250 = vmatpush2.bf16.msra.mxu0 0
        %251 = vmatprep.subr.bf16.mxu0 0
        %252 = vmatpush2.bf16.msra.mxu0 0
        %253 = vmatprep.subr.bf16.mxu0 0
        %254 = vmatpush2.bf16.msra.mxu0 0
        %255 = vmatprep.subr.bf16.mxu0 0
        %256 = vmatpush2.bf16.msra.mxu0 0
        %257 = vmatprep.subr.bf16.mxu0 0
        %258 = vmatpush2.bf16.msra.mxu0 0
        %259 = vmatprep.subr.bf16.mxu0 0
        %260 = vmatpush2.bf16.msra.mxu0 0
        %261 = vmatprep.subr.bf16.mxu0 0
        %262 = vmatpush2.bf16.msra.mxu0 0
        %263 = vmatprep.subr.bf16.mxu0 0
        %264 = vmatpush2.bf16.msra.mxu0 0
        %265 = vmatprep.mubr.bf16.mxu0 0
        %266 = vmatmul.mubr.bf16.gmra.mxu0 %v227
        %v267 = vpop.f32.mrf.mxu0
        %v268 = vadd.f32 0.0, %v267
        %v269 = vpop.f32.mrf.mxu0
        %v270 = vpop.f32.mrf.mxu0
        %v271 = vpop.f32.mrf.mxu0
        %272 = vdwg.mxu0
        %v274 = vsel %vm225, %v217, 0
        %v277 = vsel %vm229, %v218, 0
        %279 = vmatprep.subr.bf16.mxu0 0
        %280 = vmatpush1.bf16.msra.mxu0 0
        %281 = vmatprep.subr.bf16.mxu0 0
        %282 = vmatpush1.bf16.msra.mxu0 0
        %283 = vmatprep.subr.bf16.mxu0 0
        %284 = vmatpush1.bf16.msra.mxu0 0
        %285 = vmatprep.subr.bf16.mxu0 0
        %286 = vmatpush1.bf16.msra.mxu0 0
        %287 = vmatprep.subr.bf16.mxu0 0
        %288 = vmatpush1.bf16.msra.mxu0 0
        %289 = vmatprep.subr.bf16.mxu0 0
        %290 = vmatpush1.bf16.msra.mxu0 0
        %291 = vmatprep.subr.bf16.mxu0 0
        %292 = vmatpush1.bf16.msra.mxu0 0
        %293 = vmatprep.subr.bf16.mxu0 0
        %294 = vmatpush1.bf16.msra.mxu0 %v277
        %295 = vmatprep.subr.bf16.mxu0 0
        %296 = vmatpush2.bf16.msra.mxu0 0
        %297 = vmatprep.subr.bf16.mxu0 0
        %298 = vmatpush2.bf16.msra.mxu0 0
        %299 = vmatprep.subr.bf16.mxu0 0
        %300 = vmatpush2.bf16.msra.mxu0 0
        %301 = vmatprep.subr.bf16.mxu0 0
        %302 = vmatpush2.bf16.msra.mxu0 0
        %303 = vmatprep.subr.bf16.mxu0 0
        %304 = vmatpush2.bf16.msra.mxu0 0
        %305 = vmatprep.subr.bf16.mxu0 0
        %306 = vmatpush2.bf16.msra.mxu0 0
        %307 = vmatprep.subr.bf16.mxu0 0
        %308 = vmatpush2.bf16.msra.mxu0 0
        %309 = vmatprep.subr.bf16.mxu0 0
        %310 = vmatpush2.bf16.msra.mxu0 0
        %311 = vmatprep.mubr.bf16.mxu0 0
        %312 = vmatmul.mubr.bf16.gmra.mxu0 %v274
        %v313 = vpop.f32.mrf.mxu0
        %v314 = vadd.f32 %v268, %v313
        %v315 = vpop.f32.mrf.mxu0
        %v316 = vpop.f32.mrf.mxu0
        %v317 = vpop.f32.mrf.mxu0
        %318 = vdwg.mxu0
        %v320 = vlaneseq
        %v321 = vshrl.u32 %v320, 7
        %v322 = vsub.s32 0, %v321
        %v323 = vrot.slane %v208, %v322
        %v325 = vadd.f32 %v314, %v323
        %v326 = vpack.c.bf16 %v325, %v325
        %s327 = smul.addr %s210, 2
        %s328 = scalar_lea.vmem %s206, %s327
        %vm329 = vcmask 25600
        %330 = vst.msk [vmem:[%s328] sm:$0x3] %vm329, %v326
      $region37: #{decode_block_forward.14} parent=31 // loop_footer
        %s214 = sadd.s32 1, %s210
      $region38: #{decode_block_forward.14} parent=31 // loop_footer_branch
        %209 = sbr.rel target = $region34
      $region39: #{decode_block_forward.14} parent=31 // loop_exit
        _
      %p331 = scmp.lt.s32.totalorder %s18, 1
      %s332 = scalar_select %p331, %s18, 1
      %p333 = scmp.lt.s32.totalorder %s19, 3
      %s334 = scalar_select %p333, %s19, 3
      %s335 = smul.addr %s334, 4
      %s336 = smul.addr %s332, 16
      %s337 = sadd.s32 %s335, %s336
      %s338 = smul.addr %s337, 2
      %s339 = scalar_lea.vmem %s3, %s338
      // Predicated region
      $region40: #{decode_block_forward.14} parent=31 // pred_check
        %p340 = pneg %p116
      $region41: #{decode_block_forward.14} parent=31 // pred_check_branch
        %342 = sbr.rel (%p340) target = $region43
      $region42: #{decode_block_forward.14} parent=31 // pred_region
        _
      $region43: #{decode_block_forward.14} parent=31 // pred_fallthru
        _
    $region32: #{decode_block_forward.14} parent=5 // pred_fallthru
      _
    %p343 = scmp.le.s32.totalorder 2, %s9
    // Predicated region
    $region44: #{decode_block_forward.14} parent=5 // pred_check
      %p344 = pneg %p343
    $region45: #{decode_block_forward.14} parent=5 // pred_check_branch
      %346 = sbr.rel (%p344) target = $region47
    $region46: #{decode_block_forward.14} parent=5 // pred_region
      %s347 = ssub.s32 %s9, 2
      // Predicated region
      $region48: #{decode_block_forward.14} parent=46 // pred_check
        %p348 = pneg %p122
      $region49: #{decode_block_forward.14} parent=46 // pred_check_branch
        %350 = sbr.rel (%p348) target = $region51
      $region50: #{decode_block_forward.14} parent=46 // pred_region
        %p351 = scmp.lt.s32.totalorder %s20, 1
        %s352 = scalar_select %p351, %s20, 1
        %p353 = scmp.lt.s32.totalorder %s21, 3
        %s354 = scalar_select %p353, %s21, 3
        %s355 = smul.addr %s354, 4
        %s356 = smul.addr %s352, 16
        %s357 = sadd.s32 %s355, %s356
        %s358 = smul.addr %s357, 2
        %s359 = scalar_lea.vmem %s3, %s358
      $region51: #{decode_block_forward.14} parent=46 // pred_fallthru
        _
    $region47: #{decode_block_forward.14} parent=5 // pred_fallthru
      _
  $region6: #{decode_block_forward.14} parent=0 // loop_footer
    %s13 = sadd.s32 1, %s9
  $region7: #{decode_block_forward.14} parent=0 // loop_footer_branch
    %8 = sbr.rel target = $region3
  $region8: #{decode_block_forward.14} parent=0 // loop_exit
    _

// kernel: decode_block_forward.15
$region0: #{decode_block_forward.15}
  #allocation0 [shape = 'u32[]', space=smem, size = 0x4, offset = 0x4, fixed_abs, tag = 'smem constant byte address 0x4 - core index']
  #allocation1 [shape = 'u32[144,128]{1,0:T(1,128)}', space=vmem, size = 0x12000, scoped, tag = 'internal scratch']
  %s0 = inlined_call_operand.vmem [shape: bf16[2,5,5,5,4], index: 0, kind: input, shape index: {}]
  %s1 = inlined_call_operand.vmem [shape: bf16[4,4,4], index: 1, kind: input, shape index: {}]
  %s2 = inlined_call_operand.vmem [shape: f32[1,4], index: 2, kind: input, shape index: {}]
  %s3 = inlined_call_operand.vmem [shape: bf16[2,4,4,4,4], index: 3, kind: output, shape index: {}]
  %s4 = sld [smem:[#allocation0]]
  $region52: #{decode_block_forward.15} parent=0
    _
  %s6 = ssub.s32 1, %s4
  %s7 = scalar_select 0, %s6, %s4
  loop: start=0, step=1, limit=10
  $region2: #{decode_block_forward.15} parent=0 // loop_pre_header
    _
  $region3: #{decode_block_forward.15} parent=0 // loop_header
    %s9 = sphi 0, %s13
    %p10 = scmp.ge.s32.totalorder %s9, 10
    %s16 = sphi 0, %s28
    %s17 = sphi 0, %s24
    %s18 = sphi 0, %s16
    %s19 = sphi 0, %s17
    %s20 = sphi 0, %s18
    %s21 = sphi 0, %s19
    %s33 = sphi 0, %s35
    %s36 = sphi 0, %s33
    %s37 = sphi 0, %s36
    %s53 = sphi 0, %s37
    %s57 = sphi 0, %s57
    %s59 = sphi 0, %s57
    %s60 = sphi 0, %s59
    %s74 = sphi 0, %s60
    %s78 = sphi 0, %s78
    %s80 = sphi 0, %s78
    %s81 = sphi 0, %s80
    %s95 = sphi 0, %s81
    %s103 = sphi 0, %s105
    %s106 = sphi 0, %s103
    %s107 = sphi 0, %s106
    %s123 = sphi 0, %s107
  $region4: #{decode_block_forward.15} parent=0 // loop_header_branch
    %12 = sbr.rel (%p10) target = $region8
  $region5: #{decode_block_forward.15} parent=0 // loop_body
    %s14 = ssub.s32 %s9, 1
    %s15 = ssub.s32 %s9, 2
    %s22 = sadd.s32 1, %s17
    %p23 = scmp.ge.s32.totalorder %s22, 4
    %s24 = scalar_select %p23, 0, %s22
    %s25 = sadd.s32 1, %s16
    %s26 = scalar_select %p23, %s25, %s16
    %p27 = scmp.ge.s32.totalorder %s26, 2
    %s28 = scalar_select %p27, 0, %s26
    %s29 = ssub.s32 %s16, %s28
    %s30 = ssub.s32 %s17, %s24
    %s31 = sor.u32 %s29, %s30
    %p32 = scmp.eq.s32.totalorder %s31, 0
    %s34 = sadd.s32 %s33, 1
    %s35 = scalar_select %p32, %s33, %s34
    %p38 = pneg %p32
    %p39 = scmp.eq.s32.totalorder %s9, 7
    %p40 = por %p38, %p39
    %p41 = scmp.ne.s32.totalorder %s33, %s36
    %p42 = scmp.eq.s32.totalorder %s9, 0
    %p43 = por %p41, %p42
    %p44 = scmp.ne.s32.totalorder %s33, %s36
    %p45 = scmp.eq.s32.totalorder %s14, 7
    %p46 = por %p44, %p45
    %p47 = scmp.ne.s32.totalorder %s36, %s37
    %p48 = scmp.eq.s32.totalorder %s14, 0
    %p49 = por %p47, %p48
    %p50 = scmp.ne.s32.totalorder %s36, %s37
    %p51 = scmp.eq.s32.totalorder %s15, 7
    %p52 = por %p50, %p51
    %p54 = scmp.ne.s32.totalorder %s37, %s53
    %p55 = scmp.eq.s32.totalorder %s15, 0
    %p56 = por %p54, %p55
    %s58 = sadd.s32 %s57, 1
    %p61 = scmp.eq.s32.totalorder %s9, 7
    %p62 = scmp.ne.s32.totalorder %s57, %s59
    %p63 = scmp.eq.s32.totalorder %s9, 0
    %p64 = por %p62, %p63
    %p65 = scmp.ne.s32.totalorder %s57, %s59
    %p66 = scmp.eq.s32.totalorder %s14, 7
    %p67 = por %p65, %p66
    %p68 = scmp.ne.s32.totalorder %s59, %s60
    %p69 = scmp.eq.s32.totalorder %s14, 0
    %p70 = por %p68, %p69
    %p71 = scmp.ne.s32.totalorder %s59, %s60
    %p72 = scmp.eq.s32.totalorder %s15, 7
    %p73 = por %p71, %p72
    %p75 = scmp.ne.s32.totalorder %s60, %s74
    %p76 = scmp.eq.s32.totalorder %s15, 0
    %p77 = por %p75, %p76
    %s79 = sadd.s32 %s78, 1
    %p82 = scmp.eq.s32.totalorder %s9, 7
    %p83 = scmp.ne.s32.totalorder %s78, %s80
    %p84 = scmp.eq.s32.totalorder %s9, 0
    %p85 = por %p83, %p84
    %p86 = scmp.ne.s32.totalorder %s78, %s80
    %p87 = scmp.eq.s32.totalorder %s14, 7
    %p88 = por %p86, %p87
    %p89 = scmp.ne.s32.totalorder %s80, %s81
    %p90 = scmp.eq.s32.totalorder %s14, 0
    %p91 = por %p89, %p90
    %p92 = scmp.ne.s32.totalorder %s80, %s81
    %p93 = scmp.eq.s32.totalorder %s15, 7
    %p94 = por %p92, %p93
    %p96 = scmp.ne.s32.totalorder %s81, %s95
    %p97 = scmp.eq.s32.totalorder %s15, 0
    %p98 = por %p96, %p97
    %s99 = ssub.s32 %s16, %s28
    %s100 = ssub.s32 %s17, %s24
    %s101 = sor.u32 %s99, %s100
    %p102 = scmp.eq.s32.totalorder %s101, 0
    %s104 = sadd.s32 %s103, 1
    %s105 = scalar_select %p102, %s103, %s104
    %p108 = pneg %p102
    %p109 = scmp.eq.s32.totalorder %s9, 7
    %p110 = por %p108, %p109
    %p111 = scmp.ne.s32.totalorder %s103, %s106
    %p112 = scmp.eq.s32.totalorder %s9, 0
    %p113 = por %p111, %p112
    %p114 = scmp.ne.s32.totalorder %s103, %s106
    %p115 = scmp.eq.s32.totalorder %s14, 7
    %p116 = por %p114, %p115
    %p117 = scmp.ne.s32.totalorder %s106, %s107
    %p118 = scmp.eq.s32.totalorder %s14, 0
    %p119 = por %p117, %p118
    %p120 = scmp.ne.s32.totalorder %s106, %s107
    %p121 = scmp.eq.s32.totalorder %s15, 7
    %p122 = por %p120, %p121
    %p124 = scmp.ne.s32.totalorder %s107, %s123
    %p125 = scmp.eq.s32.totalorder %s15, 0
    %p126 = por %p124, %p125
    %p127 = scmp.le.s32.totalorder 1, %s9
    %p128 = scmp.lt.s32.totalorder %s9, 9
    %p129 = pnand %p127, %p128
    %p130 = pneg %p129
    // Predicated region
    $region9: #{decode_block_forward.15} parent=5 // pred_check
      _
    $region10: #{decode_block_forward.15} parent=5 // pred_check_branch
      %132 = sbr.rel (%p129) target = $region12
    $region11: #{decode_block_forward.15} parent=5 // pred_region
      %s133 = ssub.s32 %s9, 1
      // Predicated region
      $region13: #{decode_block_forward.15} parent=11 // pred_check
        %p134 = pneg %p70
      $region14: #{decode_block_forward.15} parent=11 // pred_check_branch
        %136 = sbr.rel (%p134) target = $region16
      $region15: #{decode_block_forward.15} parent=11 // pred_region
        _
      $region16: #{decode_block_forward.15} parent=11 // pred_fallthru
        _
      // Predicated region
      $region17: #{decode_block_forward.15} parent=11 // pred_check
        %p137 = pneg %p91
      $region18: #{decode_block_forward.15} parent=11 // pred_check_branch
        %139 = sbr.rel (%p137) target = $region20
      $region19: #{decode_block_forward.15} parent=11 // pred_region
        _
      $region20: #{decode_block_forward.15} parent=11 // pred_fallthru
        _
    $region12: #{decode_block_forward.15} parent=5 // pred_fallthru
      _
    %p140 = scmp.lt.s32.totalorder %s9, 8
    // Predicated region
    $region21: #{decode_block_forward.15} parent=5 // pred_check
      %p141 = pneg %p140
    $region22: #{decode_block_forward.15} parent=5 // pred_check_branch
      %143 = sbr.rel (%p141) target = $region24
    $region23: #{decode_block_forward.15} parent=5 // pred_region
      // Predicated region
      $region25: #{decode_block_forward.15} parent=23 // pred_check
        %p144 = pneg %p43
      $region26: #{decode_block_forward.15} parent=23 // pred_check_branch
        %146 = sbr.rel (%p144) target = $region28
      $region27: #{decode_block_forward.15} parent=23 // pred_region
        %p147 = scmp.lt.s32.totalorder %s16, 1
        %s148 = scalar_select %p147, %s16, 1
        %p149 = scmp.lt.s32.totalorder %s17, 4
        %s150 = scalar_select %p149, %s17, 4
        %s151 = smul.addr %s150, 5
        %s152 = smul.addr %s148, 25
        %s153 = sadd.s32 %s151, %s152
        %s154 = smul.addr %s153, 4
        %s155 = scalar_lea.vmem %s0, %s154
      $region28: #{decode_block_forward.15} parent=23 // pred_fallthru
        _
    $region24: #{decode_block_forward.15} parent=5 // pred_fallthru
      _
    %p156 = scmp.le.s32.totalorder 1, %s9
    %p157 = scmp.lt.s32.totalorder %s9, 9
    %p158 = pnand %p156, %p157
    %p159 = pneg %p158
    // Predicated region
    $region29: #{decode_block_forward.15} parent=5 // pred_check
      _
    $region30: #{decode_block_forward.15} parent=5 // pred_check_branch
      %161 = sbr.rel (%p158) target = $region32
    $region31: #{decode_block_forward.15} parent=5 // pred_region
      %s162 = ssub.s32 %s9, 1
      %p163 = scmp.lt.s32.totalorder %s18, 1
      %s164 = scalar_select %p163, %s18, 1
      %p165 = scmp.lt.s32.totalorder %s19, 4
      %s166 = scalar_select %p165, %s19, 4
      %s167 = smul.addr %s166, 5
      %s168 = smul.addr %s164, 25
      %s169 = sadd.s32 %s167, %s168
      %s170 = smul.addr %s169, 4
      %s171 = scalar_lea.vmem %s0, %s170
      %p172 = pneg %p49
      %p173 = pneg %p46
      %p174 = pneg %p70
      %p175 = pneg %p67
      %p176 = pneg %p91
      %p177 = pneg %p88
      %p178 = pneg %p119
      %p179 = pneg %p116
      %p180 = scmp.lt.s32.totalorder %s18, 1
      %s181 = scalar_select %p180, %s18, 1
      %p182 = scmp.lt.s32.totalorder %s19, 3
      %s183 = scalar_select %p182, %s19, 3
      %s184 = smul.addr %s183, 4
      %s185 = smul.addr %s181, 16
      %s186 = sadd.s32 %s184, %s185
      %s187 = smul.addr %s186, 2
      %s188 = scalar_lea.vmem %s3, %s187
      %p189 = scmp.lt.s32.totalorder %s18, 1
      %s190 = scalar_select %p189, %s18, 1
      %p191 = scmp.lt.s32.totalorder %s19, 4
      %s192 = scalar_select %p191, %s19, 4
      %s193 = smul.addr %s192, 5
      %s194 = smul.addr %s190, 25
      %s195 = sadd.s32 %s193, %s194
      %s196 = smul.addr %s195, 4
      %s197 = scalar_lea.vmem %s0, %s196
      %p198 = scmp.lt.s32.totalorder %s18, 1
      %s199 = scalar_select %p198, %s18, 1
      %p200 = scmp.lt.s32.totalorder %s19, 3
      %s201 = scalar_select %p200, %s19, 3
      %s202 = smul.addr %s201, 4
      %s203 = smul.addr %s199, 16
      %s204 = sadd.s32 %s202, %s203
      %s205 = smul.addr %s204, 2
      %s206 = scalar_lea.vmem %s3, %s205
      %v208 = vld [vmem:[%s2] sm:$0x1]
      loop: start=0, step=1, limit=4
      $region33: #{decode_block_forward.15} parent=31 // loop_pre_header
        _
      $region34: #{decode_block_forward.15} parent=31 // loop_header
        %s210 = sphi 0, %s214
        %p211 = scmp.ge.s32.totalorder %s210, 4
      $region35: #{decode_block_forward.15} parent=31 // loop_header_branch
        %213 = sbr.rel (%p211) target = $region39
      $region36: #{decode_block_forward.15} parent=31 // loop_body
        %s215 = smul.addr %s210, 4
        %s216 = scalar_lea.vmem %s197, %s215
        %v217 = vld [vmem:[%s216] sm:$0x7]
        %v218 = vld [vmem:[%s1] sm:$0x3]
        %s219 = scalar_lea.vmem %s1, 2
        %v220 = vld [vmem:[%s219] sm:$0x3]
        %v222 = vunpack.c.l.b16 %v217
        %v223 = vpack.c.b16 %v222, %v222
        %v225 = vshrl.u32 %v223, 16
        %v227 = vshll.u32 %v223, 16
        %v229 = vrot.slane %v227, 1
        %v230 = vor.u32 %v225, %v229
        %vm231 = vcmask 31744
        %v233 = vsel %vm231, %v230, 0
        %vm235 = vcmask 1041408
        %v237 = vsel %vm235, %v220, 0
        %239 = vmatprep.subr.bf16.mxu0 0
        %240 = vmatpush1.bf16.msra.mxu0 0
        %241 = vmatprep.subr.bf16.mxu0 0
        %242 = vmatpush1.bf16.msra.mxu0 0
        %243 = vmatprep.subr.bf16.mxu0 0
        %244 = vmatpush1.bf16.msra.mxu0 0
        %245 = vmatprep.subr.bf16.mxu0 0
        %246 = vmatpush1.bf16.msra.mxu0 0
        %247 = vmatprep.subr.bf16.mxu0 0
        %248 = vmatpush1.bf16.msra.mxu0 0
        %249 = vmatprep.subr.bf16.mxu0 0
        %250 = vmatpush1.bf16.msra.mxu0 0
        %251 = vmatprep.subr.bf16.mxu0 0
        %252 = vmatpush1.bf16.msra.mxu0 0
        %253 = vmatprep.subr.bf16.mxu0 0
        %254 = vmatpush1.bf16.msra.mxu0 %v237
        %255 = vmatprep.subr.bf16.mxu0 0
        %256 = vmatpush2.bf16.msra.mxu0 0
        %257 = vmatprep.subr.bf16.mxu0 0
        %258 = vmatpush2.bf16.msra.mxu0 0
        %259 = vmatprep.subr.bf16.mxu0 0
        %260 = vmatpush2.bf16.msra.mxu0 0
        %261 = vmatprep.subr.bf16.mxu0 0
        %262 = vmatpush2.bf16.msra.mxu0 0
        %263 = vmatprep.subr.bf16.mxu0 0
        %264 = vmatpush2.bf16.msra.mxu0 0
        %265 = vmatprep.subr.bf16.mxu0 0
        %266 = vmatpush2.bf16.msra.mxu0 0
        %267 = vmatprep.subr.bf16.mxu0 0
        %268 = vmatpush2.bf16.msra.mxu0 0
        %269 = vmatprep.subr.bf16.mxu0 0
        %270 = vmatpush2.bf16.msra.mxu0 0
        %271 = vmatprep.mubr.bf16.mxu0 0
        %272 = vmatmul.mubr.bf16.gmra.mxu0 %v233
        %v273 = vpop.f32.mrf.mxu0
        %v274 = vadd.f32 0.0, %v273
        %v275 = vpop.f32.mrf.mxu0
        %v276 = vpop.f32.mrf.mxu0
        %v277 = vpop.f32.mrf.mxu0
        %278 = vdwg.mxu0
        %v280 = vsel %vm231, %v217, 0
        %v283 = vsel %vm235, %v218, 0
        %285 = vmatprep.subr.bf16.mxu0 0
        %286 = vmatpush1.bf16.msra.mxu0 0
        %287 = vmatprep.subr.bf16.mxu0 0
        %288 = vmatpush1.bf16.msra.mxu0 0
        %289 = vmatprep.subr.bf16.mxu0 0
        %290 = vmatpush1.bf16.msra.mxu0 0
        %291 = vmatprep.subr.bf16.mxu0 0
        %292 = vmatpush1.bf16.msra.mxu0 0
        %293 = vmatprep.subr.bf16.mxu0 0
        %294 = vmatpush1.bf16.msra.mxu0 0
        %295 = vmatprep.subr.bf16.mxu0 0
        %296 = vmatpush1.bf16.msra.mxu0 0
        %297 = vmatprep.subr.bf16.mxu0 0
        %298 = vmatpush1.bf16.msra.mxu0 0
        %299 = vmatprep.subr.bf16.mxu0 0
        %300 = vmatpush1.bf16.msra.mxu0 %v283
        %301 = vmatprep.subr.bf16.mxu0 0
        %302 = vmatpush2.bf16.msra.mxu0 0
        %303 = vmatprep.subr.bf16.mxu0 0
        %304 = vmatpush2.bf16.msra.mxu0 0
        %305 = vmatprep.subr.bf16.mxu0 0
        %306 = vmatpush2.bf16.msra.mxu0 0
        %307 = vmatprep.subr.bf16.mxu0 0
        %308 = vmatpush2.bf16.msra.mxu0 0
        %309 = vmatprep.subr.bf16.mxu0 0
        %310 = vmatpush2.bf16.msra.mxu0 0
        %311 = vmatprep.subr.bf16.mxu0 0
        %312 = vmatpush2.bf16.msra.mxu0 0
        %313 = vmatprep.subr.bf16.mxu0 0
        %314 = vmatpush2.bf16.msra.mxu0 0
        %315 = vmatprep.subr.bf16.mxu0 0
        %316 = vmatpush2.bf16.msra.mxu0 0
        %317 = vmatprep.mubr.bf16.mxu0 0
        %318 = vmatmul.mubr.bf16.gmra.mxu0 %v280
        %v319 = vpop.f32.mrf.mxu0
        %v320 = vadd.f32 %v274, %v319
        %v321 = vpop.f32.mrf.mxu0
        %v322 = vpop.f32.mrf.mxu0
        %v323 = vpop.f32.mrf.mxu0
        %324 = vdwg.mxu0
        %s325 = sadd.s32 %s210, 1
        %s326 = smul.addr %s325, 4
        %s327 = scalar_lea.vmem %s197, %s326
        %v328 = vld [vmem:[%s327] sm:$0x7]
        %s329 = scalar_lea.vmem %s1, 4
        %v330 = vld [vmem:[%s329] sm:$0x3]
        %v332 = vsel %vm231, %v328, 0
        %v335 = vsel %vm235, %v330, 0
        %337 = vmatprep.subr.bf16.mxu0 0
        %338 = vmatpush1.bf16.msra.mxu0 0
        %339 = vmatprep.subr.bf16.mxu0 0
        %340 = vmatpush1.bf16.msra.mxu0 0
        %341 = vmatprep.subr.bf16.mxu0 0
        %342 = vmatpush1.bf16.msra.mxu0 0
        %343 = vmatprep.subr.bf16.mxu0 0
        %344 = vmatpush1.bf16.msra.mxu0 0
        %345 = vmatprep.subr.bf16.mxu0 0
        %346 = vmatpush1.bf16.msra.mxu0 0
        %347 = vmatprep.subr.bf16.mxu0 0
        %348 = vmatpush1.bf16.msra.mxu0 0
        %349 = vmatprep.subr.bf16.mxu0 0
        %350 = vmatpush1.bf16.msra.mxu0 0
        %351 = vmatprep.subr.bf16.mxu0 0
        %352 = vmatpush1.bf16.msra.mxu0 %v335
        %353 = vmatprep.subr.bf16.mxu0 0
        %354 = vmatpush2.bf16.msra.mxu0 0
        %355 = vmatprep.subr.bf16.mxu0 0
        %356 = vmatpush2.bf16.msra.mxu0 0
        %357 = vmatprep.subr.bf16.mxu0 0
        %358 = vmatpush2.bf16.msra.mxu0 0
        %359 = vmatprep.subr.bf16.mxu0 0
        %360 = vmatpush2.bf16.msra.mxu0 0
        %361 = vmatprep.subr.bf16.mxu0 0
        %362 = vmatpush2.bf16.msra.mxu0 0
        %363 = vmatprep.subr.bf16.mxu0 0
        %364 = vmatpush2.bf16.msra.mxu0 0
        %365 = vmatprep.subr.bf16.mxu0 0
        %366 = vmatpush2.bf16.msra.mxu0 0
        %367 = vmatprep.subr.bf16.mxu0 0
        %368 = vmatpush2.bf16.msra.mxu0 0
        %369 = vmatprep.mubr.bf16.mxu0 0
        %370 = vmatmul.mubr.bf16.gmra.mxu0 %v332
        %v371 = vpop.f32.mrf.mxu0
        %v372 = vadd.f32 0.0, %v371
        %v373 = vpop.f32.mrf.mxu0
        %v374 = vpop.f32.mrf.mxu0
        %v375 = vpop.f32.mrf.mxu0
        %376 = vdwg.mxu0
        %v377 = vadd.f32 %v320, %v372
        %s378 = scalar_lea.vmem %s1, 6
        %v379 = vld [vmem:[%s378] sm:$0x3]
        %v381 = vunpack.c.l.b16 %v328
        %v382 = vpack.c.b16 %v381, %v381
        %v384 = vshrl.u32 %v382, 16
        %v386 = vshll.u32 %v382, 16
        %v388 = vrot.slane %v386, 1
        %v389 = vor.u32 %v384, %v388
        %v391 = vsel %vm231, %v389, 0
        %v394 = vsel %vm235, %v379, 0
        %396 = vmatprep.subr.bf16.mxu0 0
        %397 = vmatpush1.bf16.msra.mxu0 0
        %398 = vmatprep.subr.bf16.mxu0 0
        %399 = vmatpush1.bf16.msra.mxu0 0
        %400 = vmatprep.subr.bf16.mxu0 0
        %401 = vmatpush1.bf16.msra.mxu0 0
        %402 = vmatprep.subr.bf16.mxu0 0
        %403 = vmatpush1.bf16.msra.mxu0 0
        %404 = vmatprep.subr.bf16.mxu0 0
        %405 = vmatpush1.bf16.msra.mxu0 0
        %406 = vmatprep.subr.bf16.mxu0 0
        %407 = vmatpush1.bf16.msra.mxu0 0
        %408 = vmatprep.subr.bf16.mxu0 0
        %409 = vmatpush1.bf16.msra.mxu0 0
        %410 = vmatprep.subr.bf16.mxu0 0
        %411 = vmatpush1.bf16.msra.mxu0 %v394
        %412 = vmatprep.subr.bf16.mxu0 0
        %413 = vmatpush2.bf16.msra.mxu0 0
        %414 = vmatprep.subr.bf16.mxu0 0
        %415 = vmatpush2.bf16.msra.mxu0 0
        %416 = vmatprep.subr.bf16.mxu0 0
        %417 = vmatpush2.bf16.msra.mxu0 0
        %418 = vmatprep.subr.bf16.mxu0 0
        %419 = vmatpush2.bf16.msra.mxu0 0
        %420 = vmatprep.subr.bf16.mxu0 0
        %421 = vmatpush2.bf16.msra.mxu0 0
        %422 = vmatprep.subr.bf16.mxu0 0
        %423 = vmatpush2.bf16.msra.mxu0 0
        %424 = vmatprep.subr.bf16.mxu0 0
        %425 = vmatpush2.bf16.msra.mxu0 0
        %426 = vmatprep.subr.bf16.mxu0 0
        %427 = vmatpush2.bf16.msra.mxu0 0
        %428 = vmatprep.mubr.bf16.mxu0 0
        %429 = vmatmul.mubr.bf16.gmra.mxu0 %v391
        %v430 = vpop.f32.mrf.mxu0
        %v431 = vadd.f32 0.0, %v430
        %v432 = vpop.f32.mrf.mxu0
        %v433 = vpop.f32.mrf.mxu0
        %v434 = vpop.f32.mrf.mxu0
        %435 = vdwg.mxu0
        %v436 = vadd.f32 %v377, %v431
        %v438 = vlaneseq
        %v439 = vshrl.u32 %v438, 7
        %v440 = vsub.s32 0, %v439
        %v441 = vrot.slane %v208, %v440
        %v443 = vadd.f32 %v436, %v441
        %v444 = vpack.c.bf16 %v443, %v443
        %s445 = smul.addr %s210, 2
        %s446 = scalar_lea.vmem %s206, %s445
        %vm447 = vcmask 25600
        %448 = vst.msk [vmem:[%s446] sm:$0x3] %vm447, %v444
      $region37: #{decode_block_forward.15} parent=31 // loop_footer
        %s214 = sadd.s32 1, %s210
      $region38: #{decode_block_forward.15} parent=31 // loop_footer_branch
        %209 = sbr.rel target = $region34
      $region39: #{decode_block_forward.15} parent=31 // loop_exit
        _
      %p449 = scmp.lt.s32.totalorder %s18, 1
      %s450 = scalar_select %p449, %s18, 1
      %p451 = scmp.lt.s32.totalorder %s19, 3
      %s452 = scalar_select %p451, %s19, 3
      %s453 = smul.addr %s452, 4
      %s454 = smul.addr %s450, 16
      %s455 = sadd.s32 %s453, %s454
      %s456 = smul.addr %s455, 2
      %s457 = scalar_lea.vmem %s3, %s456
      // Predicated region
      $region40: #{decode_block_forward.15} parent=31 // pred_check
        %p458 = pneg %p116
      $region41: #{decode_block_forward.15} parent=31 // pred_check_branch
        %460 = sbr.rel (%p458) target = $region43
      $region42: #{decode_block_forward.15} parent=31 // pred_region
        _
      $region43: #{decode_block_forward.15} parent=31 // pred_fallthru
        _
    $region32: #{decode_block_forward.15} parent=5 // pred_fallthru
      _
    %p461 = scmp.le.s32.totalorder 2, %s9
    // Predicated region
    $region44: #{decode_block_forward.15} parent=5 // pred_check
      %p462 = pneg %p461
    $region45: #{decode_block_forward.15} parent=5 // pred_check_branch
      %464 = sbr.rel (%p462) target = $region47
    $region46: #{decode_block_forward.15} parent=5 // pred_region
      %s465 = ssub.s32 %s9, 2
      // Predicated region
      $region48: #{decode_block_forward.15} parent=46 // pred_check
        %p466 = pneg %p122
      $region49: #{decode_block_forward.15} parent=46 // pred_check_branch
        %468 = sbr.rel (%p466) target = $region51
      $region50: #{decode_block_forward.15} parent=46 // pred_region
        %p469 = scmp.lt.s32.totalorder %s20, 1
        %s470 = scalar_select %p469, %s20, 1
        %p471 = scmp.lt.s32.totalorder %s21, 3
        %s472 = scalar_select %p471, %s21, 3
        %s473 = smul.addr %s472, 4
        %s474 = smul.addr %s470, 16
        %s475 = sadd.s32 %s473, %s474
        %s476 = smul.addr %s475, 2
        %s477 = scalar_lea.vmem %s3, %s476
      $region51: #{decode_block_forward.15} parent=46 // pred_fallthru
        _
    $region47: #{decode_block_forward.15} parent=5 // pred_fallthru
      _
  $region6: #{decode_block_forward.15} parent=0 // loop_footer
    %s13 = sadd.s32 1, %s9
  $region7: #{decode_block_forward.15} parent=0 // loop_footer_branch
    %8 = sbr.rel target = $region3
  $region8: #{decode_block_forward.15} parent=0 // loop_exit
    _

// kernel: decode_block_forward.16
$region0: #{decode_block_forward.16}
  #allocation0 [shape = 'u32[]', space=smem, size = 0x4, offset = 0x4, fixed_abs, tag = 'smem constant byte address 0x4 - core index']
  #allocation1 [shape = 'u32[144,128]{1,0:T(1,128)}', space=vmem, size = 0x12000, scoped, tag = 'internal scratch']
  %s0 = inlined_call_operand.vmem [shape: bf16[2,5,5,5,4], index: 0, kind: input, shape index: {}, may-alias: {0,1}]
  %s1 = inlined_call_operand.vmem [shape: bf16[2,5,5,5,4], index: 1, kind: input, shape index: {}, may-alias: {0,1}]
  %s2 = inlined_call_operand.vmem [shape: bf16[2,4,4], index: 2, kind: input, shape index: {}]
  %s3 = inlined_call_operand.vmem [shape: f32[1,4], index: 3, kind: input, shape index: {}]
  %s4 = inlined_call_operand.vmem [shape: bf16[2,4,4,4,4], index: 4, kind: output, shape index: {}]
  %s5 = sld [smem:[#allocation0]]
  $region56: #{decode_block_forward.16} parent=0
    _
  %s7 = ssub.s32 1, %s5
  %s8 = scalar_select 0, %s7, %s5
  loop: start=0, step=1, limit=10
  $region2: #{decode_block_forward.16} parent=0 // loop_pre_header
    _
  $region3: #{decode_block_forward.16} parent=0 // loop_header
    %s10 = sphi 0, %s14
    %p11 = scmp.ge.s32.totalorder %s10, 10
    %s17 = sphi 0, %s29
    %s18 = sphi 0, %s25
    %s19 = sphi 0, %s17
    %s20 = sphi 0, %s18
    %s21 = sphi 0, %s19
    %s22 = sphi 0, %s20
    %s34 = sphi 0, %s36
    %s37 = sphi 0, %s34
    %s38 = sphi 0, %s37
    %s54 = sphi 0, %s38
    %s64 = sphi 0, %s66
    %s67 = sphi 0, %s64
    %s68 = sphi 0, %s67
    %s84 = sphi 0, %s68
    %s88 = sphi 0, %s88
    %s90 = sphi 0, %s88
    %s91 = sphi 0, %s90
    %s105 = sphi 0, %s91
    %s109 = sphi 0, %s109
    %s111 = sphi 0, %s109
    %s112 = sphi 0, %s111
    %s126 = sphi 0, %s112
    %s134 = sphi 0, %s136
    %s137 = sphi 0, %s134
    %s138 = sphi 0, %s137
    %s154 = sphi 0, %s138
  $region4: #{decode_block_forward.16} parent=0 // loop_header_branch
    %13 = sbr.rel (%p11) target = $region8
  $region5: #{decode_block_forward.16} parent=0 // loop_body
    %s15 = ssub.s32 %s10, 1
    %s16 = ssub.s32 %s10, 2
    %s23 = sadd.s32 1, %s18
    %p24 = scmp.ge.s32.totalorder %s23, 4
    %s25 = scalar_select %p24, 0, %s23
    %s26 = sadd.s32 1, %s17
    %s27 = scalar_select %p24, %s26, %s17
    %p28 = scmp.ge.s32.totalorder %s27, 2
    %s29 = scalar_select %p28, 0, %s27
    %s30 = ssub.s32 %s17, %s29
    %s31 = ssub.s32 %s18, %s25
    %s32 = sor.u32 %s30, %s31
    %p33 = scmp.eq.s32.totalorder %s32, 0
    %s35 = sadd.s32 %s34, 1
    %s36 = scalar_select %p33, %s34, %s35
    %p39 = pneg %p33
    %p40 = scmp.eq.s32.totalorder %s10, 7
    %p41 = por %p39, %p40
    %p42 = scmp.ne.s32.totalorder %s34, %s37
    %p43 = scmp.eq.s32.totalorder %s10, 0
    %p44 = por %p42, %p43
    %p45 = scmp.ne.s32.totalorder %s34, %s37
    %p46 = scmp.eq.s32.totalorder %s15, 7
    %p47 = por %p45, %p46
    %p48 = scmp.ne.s32.totalorder %s37, %s38
    %p49 = scmp.eq.s32.totalorder %s15, 0
    %p50 = por %p48, %p49
    %p51 = scmp.ne.s32.totalorder %s37, %s38
    %p52 = scmp.eq.s32.totalorder %s16, 7
    %p53 = por %p51, %p52
    %p55 = scmp.ne.s32.totalorder %s38, %s54
    %p56 = scmp.eq.s32.totalorder %s16, 0
    %p57 = por %p55, %p56
    %s58 = sadd.s32 %s18, 1
    %s59 = sadd.s32 %s25, 1
    %s60 = ssub.s32 %s17, %s29
    %s61 = ssub.s32 %s58, %s59
    %s62 = sor.u32 %s60, %s61
    %p63 = scmp.eq.s32.totalorder %s62, 0
    %s65 = sadd.s32 %s64, 1
    %s66 = scalar_select %p63, %s64, %s65
    %p69 = pneg %p63
    %p70 = scmp.eq.s32.totalorder %s10, 7
    %p71 = por %p69, %p70
    %p72 = scmp.ne.s32.totalorder %s64, %s67
    %p73 = scmp.eq.s32.totalorder %s10, 0
    %p74 = por %p72, %p73
    %p75 = scmp.ne.s32.totalorder %s64, %s67
    %p76 = scmp.eq.s32.totalorder %s15, 7
    %p77 = por %p75, %p76
    %p78 = scmp.ne.s32.totalorder %s67, %s68
    %p79 = scmp.eq.s32.totalorder %s15, 0
    %p80 = por %p78, %p79
    %p81 = scmp.ne.s32.totalorder %s67, %s68
    %p82 = scmp.eq.s32.totalorder %s16, 7
    %p83 = por %p81, %p82
    %p85 = scmp.ne.s32.totalorder %s68, %s84
    %p86 = scmp.eq.s32.totalorder %s16, 0
    %p87 = por %p85, %p86
    %s89 = sadd.s32 %s88, 1
    %p92 = scmp.eq.s32.totalorder %s10, 7
    %p93 = scmp.ne.s32.totalorder %s88, %s90
    %p94 = scmp.eq.s32.totalorder %s10, 0
    %p95 = por %p93, %p94
    %p96 = scmp.ne.s32.totalorder %s88, %s90
    %p97 = scmp.eq.s32.totalorder %s15, 7
    %p98 = por %p96, %p97
    %p99 = scmp.ne.s32.totalorder %s90, %s91
    %p100 = scmp.eq.s32.totalorder %s15, 0
    %p101 = por %p99, %p100
    %p102 = scmp.ne.s32.totalorder %s90, %s91
    %p103 = scmp.eq.s32.totalorder %s16, 7
    %p104 = por %p102, %p103
    %p106 = scmp.ne.s32.totalorder %s91, %s105
    %p107 = scmp.eq.s32.totalorder %s16, 0
    %p108 = por %p106, %p107
    %s110 = sadd.s32 %s109, 1
    %p113 = scmp.eq.s32.totalorder %s10, 7
    %p114 = scmp.ne.s32.totalorder %s109, %s111
    %p115 = scmp.eq.s32.totalorder %s10, 0
    %p116 = por %p114, %p115
    %p117 = scmp.ne.s32.totalorder %s109, %s111
    %p118 = scmp.eq.s32.totalorder %s15, 7
    %p119 = por %p117, %p118
    %p120 = scmp.ne.s32.totalorder %s111, %s112
    %p121 = scmp.eq.s32.totalorder %s15, 0
    %p122 = por %p120, %p121
    %p123 = scmp.ne.s32.totalorder %s111, %s112
    %p124 = scmp.eq.s32.totalorder %s16, 7
    %p125 = por %p123, %p124
    %p127 = scmp.ne.s32.totalorder %s112, %s126
    %p128 = scmp.eq.s32.totalorder %s16, 0
    %p129 = por %p127, %p128
    %s130 = ssub.s32 %s17, %s29
    %s131 = ssub.s32 %s18, %s25
    %s132 = sor.u32 %s130, %s131
    %p133 = scmp.eq.s32.totalorder %s132, 0
    %s135 = sadd.s32 %s134, 1
    %s136 = scalar_select %p133, %s134, %s135
    %p139 = pneg %p133
    %p140 = scmp.eq.s32.totalorder %s10, 7
    %p141 = por %p139, %p140
    %p142 = scmp.ne.s32.totalorder %s134, %s137
    %p143 = scmp.eq.s32.totalorder %s10, 0
    %p144 = por %p142, %p143
    %p145 = scmp.ne.s32.totalorder %s134, %s137
    %p146 = scmp.eq.s32.totalorder %s15, 7
    %p147 = por %p145, %p146
    %p148 = scmp.ne.s32.totalorder %s137, %s138
    %p149 = scmp.eq.s32.totalorder %s15, 0
    %p150 = por %p148, %p149
    %p151 = scmp.ne.s32.totalorder %s137, %s138
    %p152 = scmp.eq.s32.totalorder %s16, 7
    %p153 = por %p151, %p152
    %p155 = scmp.ne.s32.totalorder %s138, %s154
    %p156 = scmp.eq.s32.totalorder %s16, 0
    %p157 = por %p155, %p156
    %p158 = scmp.le.s32.totalorder 1, %s10
    %p159 = scmp.lt.s32.totalorder %s10, 9
    %p160 = pnand %p158, %p159
    %p161 = pneg %p160
    // Predicated region
    $region9: #{decode_block_forward.16} parent=5 // pred_check
      _
    $region10: #{decode_block_forward.16} parent=5 // pred_check_branch
      %163 = sbr.rel (%p160) target = $region12
    $region11: #{decode_block_forward.16} parent=5 // pred_region
      %s164 = ssub.s32 %s10, 1
      // Predicated region
      $region13: #{decode_block_forward.16} parent=11 // pred_check
        %p165 = pneg %p101
      $region14: #{decode_block_forward.16} parent=11 // pred_check_branch
        %167 = sbr.rel (%p165) target = $region16
      $region15: #{decode_block_forward.16} parent=11 // pred_region
        _
      $region16: #{decode_block_forward.16} parent=11 // pred_fallthru
        _
      // Predicated region
      $region17: #{decode_block_forward.16} parent=11 // pred_check
        %p168 = pneg %p122
      $region18: #{decode_block_forward.16} parent=11 // pred_check_branch
        %170 = sbr.rel (%p168) target = $region20
      $region19: #{decode_block_forward.16} parent=11 // pred_region
        _
      $region20: #{decode_block_forward.16} parent=11 // pred_fallthru
        _
    $region12: #{decode_block_forward.16} parent=5 // pred_fallthru
      _
    %p171 = scmp.lt.s32.totalorder %s10, 8
    // Predicated region
    $region21: #{decode_block_forward.16} parent=5 // pred_check
      %p172 = pneg %p171
    $region22: #{decode_block_forward.16} parent=5 // pred_check_branch
      %174 = sbr.rel (%p172) target = $region24
    $region23: #{decode_block_forward.16} parent=5 // pred_region
      // Predicated region
      $region25: #{decode_block_forward.16} parent=23 // pred_check
        %p175 = pneg %p44
      $region26: #{decode_block_forward.16} parent=23 // pred_check_branch
        %177 = sbr.rel (%p175) target = $region28
      $region27: #{decode_block_forward.16} parent=23 // pred_region
        %p178 = scmp.lt.s32.totalorder %s17, 1
        %s179 = scalar_select %p178, %s17, 1
        %p180 = scmp.lt.s32.totalorder %s18, 4
        %s181 = scalar_select %p180, %s18, 4
        %s182 = smul.addr %s181, 5
        %s183 = smul.addr %s179, 25
        %s184 = sadd.s32 %s182, %s183
        %s185 = smul.addr %s184, 4
        %s186 = scalar_lea.vmem %s0, %s185
      $region28: #{decode_block_forward.16} parent=23 // pred_fallthru
        _
      // Predicated region
      $region29: #{decode_block_forward.16} parent=23 // pred_check
        %p187 = pneg %p74
      $region30: #{decode_block_forward.16} parent=23 // pred_check_branch
        %189 = sbr.rel (%p187) target = $region32
      $region31: #{decode_block_forward.16} parent=23 // pred_region
        %s190 = sadd.s32 %s18, 1
        %p191 = scmp.lt.s32.totalorder %s17, 1
        %s192 = scalar_select %p191, %s17, 1
        %p193 = scmp.lt.s32.totalorder %s190, 4
        %s194 = scalar_select %p193, %s190, 4
        %s195 = smul.addr %s194, 5
        %s196 = smul.addr %s192, 25
        %s197 = sadd.s32 %s195, %s196
        %s198 = smul.addr %s197, 4
        %s199 = scalar_lea.vmem %s1, %s198
        %s200 = sadd.s32 %s18, 1
      $region32: #{decode_block_forward.16} parent=23 // pred_fallthru
        _
    $region24: #{decode_block_forward.16} parent=5 // pred_fallthru
      _
    %p201 = scmp.le.s32.totalorder 1, %s10
    %p202 = scmp.lt.s32.totalorder %s10, 9
    %p203 = pnand %p201, %p202
    %p204 = pneg %p203
    // Predicated region
    $region33: #{decode_block_forward.16} parent=5 // pred_check
      _
    $region34: #{decode_block_forward.16} parent=5 // pred_check_branch
      %206 = sbr.rel (%p203) target = $region36
    $region35: #{decode_block_forward.16} parent=5 // pred_region
      %s207 = ssub.s32 %s10, 1
      %p208 = scmp.lt.s32.totalorder %s19, 1
      %s209 = scalar_select %p208, %s19, 1
      %p210 = scmp.lt.s32.totalorder %s20, 4
      %s211 = scalar_select %p210, %s20, 4
      %s212 = smul.addr %s211, 5
      %s213 = smul.addr %s209, 25
      %s214 = sadd.s32 %s212, %s213
      %s215 = smul.addr %s214, 4
      %s216 = scalar_lea.vmem %s0, %s215
      %p217 = pneg %p50
      %p218 = pneg %p47
      %s219 = sadd.s32 %s20, 1
      %p220 = scmp.lt.s32.totalorder %s19, 1
      %s221 = scalar_select %p220, %s19, 1
      %p222 = scmp.lt.s32.totalorder %s219, 4
      %s223 = scalar_select %p222, %s219, 4
      %s224 = smul.addr %s223, 5
      %s225 = smul.addr %s221, 25
      %s226 = sadd.s32 %s224, %s225
      %s227 = smul.addr %s226, 4
      %s228 = scalar_lea.vmem %s1, %s227
      %p229 = pneg %p80
      %p230 = pneg %p77
      %p231 = pneg %p101
      %p232 = pneg %p98
      %p233 = pneg %p122
      %p234 = pneg %p119
      %p235 = pneg %p150
      %p236 = pneg %p147
      %p237 = scmp.lt.s32.totalorder %s19, 1
      %s238 = scalar_select %p237, %s19, 1
      %p239 = scmp.lt.s32.totalorder %s20, 3
      %s240 = scalar_select %p239, %s20, 3
      %s241 = smul.addr %s240, 4
      %s242 = smul.addr %s238, 16
      %s243 = sadd.s32 %s241, %s242
      %s244 = smul.addr %s243, 2
      %s245 = scalar_lea.vmem %s4, %s244
      %p246 = scmp.lt.s32.totalorder %s19, 1
      %s247 = scalar_select %p246, %s19, 1
      %p248 = scmp.lt.s32.totalorder %s20, 4
      %s249 = scalar_select %p248, %s20, 4
      %s250 = smul.addr %s249, 5
      %s251 = smul.addr %s247, 25
      %s252 = sadd.s32 %s250, %s251
      %s253 = smul.addr %s252, 4
      %s254 = scalar_lea.vmem %s0, %s253
      %s255 = sadd.s32 %s20, 1
      %p256 = scmp.lt.s32.totalorder %s19, 1
      %s257 = scalar_select %p256, %s19, 1
      %p258 = scmp.lt.s32.totalorder %s255, 4
      %s259 = scalar_select %p258, %s255, 4
      %s260 = smul.addr %s259, 5
      %s261 = smul.addr %s257, 25
      %s262 = sadd.s32 %s260, %s261
      %s263 = smul.addr %s262, 4
      %s264 = scalar_lea.vmem %s1, %s263
      %s265 = sadd.s32 %s20, 1
      %p266 = scmp.lt.s32.totalorder %s19, 1
      %s267 = scalar_select %p266, %s19, 1
      %p268 = scmp.lt.s32.totalorder %s20, 3
      %s269 = scalar_select %p268, %s20, 3
      %s270 = smul.addr %s269, 4
      %s271 = smul.addr %s267, 16
      %s272 = sadd.s32 %s270, %s271
      %s273 = smul.addr %s272, 2
      %s274 = scalar_lea.vmem %s4, %s273
      %v276 = vld [vmem:[%s3] sm:$0x1]
      loop: start=0, step=1, limit=4
      $region37: #{decode_block_forward.16} parent=35 // loop_pre_header
        _
      $region38: #{decode_block_forward.16} parent=35 // loop_header
        %s278 = sphi 0, %s282
        %p279 = scmp.ge.s32.totalorder %s278, 4
      $region39: #{decode_block_forward.16} parent=35 // loop_header_branch
        %281 = sbr.rel (%p279) target = $region43
      $region40: #{decode_block_forward.16} parent=35 // loop_body
        %s283 = smul.addr %s278, 4
        %s284 = scalar_lea.vmem %s254, %s283
        %v285 = vld [vmem:[%s284] sm:$0x7]
        %v286 = vld [vmem:[%s2] sm:$0x3]
        %s287 = smul.addr %s278, 4
        %s288 = scalar_lea.vmem %s264, %s287
        %v289 = vld [vmem:[%s288] sm:$0x7]
        %s290 = scalar_lea.vmem %s2, 2
        %v291 = vld [vmem:[%s290] sm:$0x3]
        %vm292 = vcmask 31744
        %v294 = vsel %vm292, %v289, 0
        %vm296 = vcmask 1041408
        %v298 = vsel %vm296, %v291, 0
        %300 = vmatprep.subr.bf16.mxu0 0
        %301 = vmatpush1.bf16.msra.mxu0 0
        %302 = vmatprep.subr.bf16.mxu0 0
        %303 = vmatpush1.bf16.msra.mxu0 0
        %304 = vmatprep.subr.bf16.mxu0 0
        %305 = vmatpush1.bf16.msra.mxu0 0
        %306 = vmatprep.subr.bf16.mxu0 0
        %307 = vmatpush1.bf16.msra.mxu0 0
        %308 = vmatprep.subr.bf16.mxu0 0
        %309 = vmatpush1.bf16.msra.mxu0 0
        %310 = vmatprep.subr.bf16.mxu0 0
        %311 = vmatpush1.bf16.msra.mxu0 0
        %312 = vmatprep.subr.bf16.mxu0 0
        %313 = vmatpush1.bf16.msra.mxu0 0
        %314 = vmatprep.subr.bf16.mxu0 0
        %315 = vmatpush1.bf16.msra.mxu0 %v298
        %316 = vmatprep.subr.bf16.mxu0 0
        %317 = vmatpush2.bf16.msra.mxu0 0
        %318 = vmatprep.subr.bf16.mxu0 0
        %319 = vmatpush2.bf16.msra.mxu0 0
        %320 = vmatprep.subr.bf16.mxu0 0
        %321 = vmatpush2.bf16.msra.mxu0 0
        %322 = vmatprep.subr.bf16.mxu0 0
        %323 = vmatpush2.bf16.msra.mxu0 0
        %324 = vmatprep.subr.bf16.mxu0 0
        %325 = vmatpush2.bf16.msra.mxu0 0
        %326 = vmatprep.subr.bf16.mxu0 0
        %327 = vmatpush2.bf16.msra.mxu0 0
        %328 = vmatprep.subr.bf16.mxu0 0
        %329 = vmatpush2.bf16.msra.mxu0 0
        %330 = vmatprep.subr.bf16.mxu0 0
        %331 = vmatpush2.bf16.msra.mxu0 0
        %332 = vmatprep.mubr.bf16.mxu0 0
        %333 = vmatmul.mubr.bf16.gmra.mxu0 %v294
        %v334 = vpop.f32.mrf.mxu0
        %v335 = vadd.f32 0.0, %v334
        %v336 = vpop.f32.mrf.mxu0
        %v337 = vpop.f32.mrf.mxu0
        %v338 = vpop.f32.mrf.mxu0
        %339 = vdwg.mxu0
        %v341 = vsel %vm292, %v285, 0
        %v344 = vsel %vm296, %v286, 0
        %346 = vmatprep.subr.bf16.mxu0 0
        %347 = vmatpush1.bf16.msra.mxu0 0
        %348 = vmatprep.subr.bf16.mxu0 0
        %349 = vmatpush1.bf16.msra.mxu0 0
        %350 = vmatprep.subr.bf16.mxu0 0
        %351 = vmatpush1.bf16.msra.mxu0 0
        %352 = vmatprep.subr.bf16.mxu0 0
        %353 = vmatpush1.bf16.msra.mxu0 0
        %354 = vmatprep.subr.bf16.mxu0 0
        %355 = vmatpush1.bf16.msra.mxu0 0
        %356 = vmatprep.subr.bf16.mxu0 0
        %357 = vmatpush1.bf16.msra.mxu0 0
        %358 = vmatprep.subr.bf16.mxu0 0
        %359 = vmatpush1.bf16.msra.mxu0 0
        %360 = vmatprep.subr.bf16.mxu0 0
        %361 = vmatpush1.bf16.msra.mxu0 %v344
        %362 = vmatprep.subr.bf16.mxu0 0
        %363 = vmatpush2.bf16.msra.mxu0 0
        %364 = vmatprep.subr.bf16.mxu0 0
        %365 = vmatpush2.bf16.msra.mxu0 0
        %366 = vmatprep.subr.bf16.mxu0 0
        %367 = vmatpush2.bf16.msra.mxu0 0
        %368 = vmatprep.subr.bf16.mxu0 0
        %369 = vmatpush2.bf16.msra.mxu0 0
        %370 = vmatprep.subr.bf16.mxu0 0
        %371 = vmatpush2.bf16.msra.mxu0 0
        %372 = vmatprep.subr.bf16.mxu0 0
        %373 = vmatpush2.bf16.msra.mxu0 0
        %374 = vmatprep.subr.bf16.mxu0 0
        %375 = vmatpush2.bf16.msra.mxu0 0
        %376 = vmatprep.subr.bf16.mxu0 0
        %377 = vmatpush2.bf16.msra.mxu0 0
        %378 = vmatprep.mubr.bf16.mxu0 0
        %379 = vmatmul.mubr.bf16.gmra.mxu0 %v341
        %v380 = vpop.f32.mrf.mxu0
        %v381 = vadd.f32 %v335, %v380
        %v382 = vpop.f32.mrf.mxu0
        %v383 = vpop.f32.mrf.mxu0
        %v384 = vpop.f32.mrf.mxu0
        %385 = vdwg.mxu0
        %v387 = vlaneseq
        %v388 = vshrl.u32 %v387, 7
        %v389 = vsub.s32 0, %v388
        %v390 = vrot.slane %v276, %v389
        %v392 = vadd.f32 %v381, %v390
        %v393 = vpack.c.bf16 %v392, %v392
        %s394 = smul.addr %s278, 2
        %s395 = scalar_lea.vmem %s274, %s394
        %vm396 = vcmask 25600
        %397 = vst.msk [vmem:[%s395] sm:$0x3] %vm396, %v393
      $region41: #{decode_block_forward.16} parent=35 // loop_footer
        %s282 = sadd.s32 1, %s278
      $region42: #{decode_block_forward.16} parent=35 // loop_footer_branch
        %277 = sbr.rel target = $region38
      $region43: #{decode_block_forward.16} parent=35 // loop_exit
        _
      %p398 = scmp.lt.s32.totalorder %s19, 1
      %s399 = scalar_select %p398, %s19, 1
      %p400 = scmp.lt.s32.totalorder %s20, 3
      %s401 = scalar_select %p400, %s20, 3
      %s402 = smul.addr %s401, 4
      %s403 = smul.addr %s399, 16
      %s404 = sadd.s32 %s402, %s403
      %s405 = smul.addr %s404, 2
      %s406 = scalar_lea.vmem %s4, %s405
      // Predicated region
      $region44: #{decode_block_forward.16} parent=35 // pred_check
        %p407 = pneg %p147
      $region45: #{decode_block_forward.16} parent=35 // pred_check_branch
        %409 = sbr.rel (%p407) target = $region47
      $region46: #{decode_block_forward.16} parent=35 // pred_region
        _
      $region47: #{decode_block_forward.16} parent=35 // pred_fallthru
        _
    $region36: #{decode_block_forward.16} parent=5 // pred_fallthru
      _
    %p410 = scmp.le.s32.totalorder 2, %s10
    // Predicated region
    $region48: #{decode_block_forward.16} parent=5 // pred_check
      %p411 = pneg %p410
    $region49: #{decode_block_forward.16} parent=5 // pred_check_branch
      %413 = sbr.rel (%p411) target = $region51
    $region50: #{decode_block_forward.16} parent=5 // pred_region
      %s414 = ssub.s32 %s10, 2
      // Predicated region
      $region52: #{decode_block_forward.16} parent=50 // pred_check
        %p415 = pneg %p153
      $region53: #{decode_block_forward.16} parent=50 // pred_check_branch
        %417 = sbr.rel (%p415) target = $region55
      $region54: #{decode_block_forward.16} parent=50 // pred_region
        %p418 = scmp.lt.s32.totalorder %s21, 1
        %s419 = scalar_select %p418, %s21, 1
        %p420 = scmp.lt.s32.totalorder %s22, 3
        %s421 = scalar_select %p420, %s22, 3
        %s422 = smul.addr %s421, 4
        %s423 = smul.addr %s419, 16
        %s424 = sadd.s32 %s422, %s423
        %s425 = smul.addr %s424, 2
        %s426 = scalar_lea.vmem %s4, %s425
      $region55: #{decode_block_forward.16} parent=50 // pred_fallthru
        _
    $region51: #{decode_block_forward.16} parent=5 // pred_fallthru
      _
  $region6: #{decode_block_forward.16} parent=0 // loop_footer
    %s14 = sadd.s32 1, %s10
  $region7: #{decode_block_forward.16} parent=0 // loop_footer_branch
    %9 = sbr.rel target = $region3
  $region8: #{decode_block_forward.16} parent=0 // loop_exit
    _

// kernel: decode_block_forward.17
$region0: #{decode_block_forward.17}
  #allocation0 [shape = 'u32[]', space=smem, size = 0x4, offset = 0x4, fixed_abs, tag = 'smem constant byte address 0x4 - core index']
  #allocation1 [shape = 'u32[144,128]{1,0:T(1,128)}', space=vmem, size = 0x12000, scoped, tag = 'internal scratch']
  %s0 = inlined_call_operand.vmem [shape: bf16[2,5,5,5,4], index: 0, kind: input, shape index: {}, may-alias: {0,1}]
  %s1 = inlined_call_operand.vmem [shape: bf16[2,5,5,5,4], index: 1, kind: input, shape index: {}, may-alias: {0,1}]
  %s2 = inlined_call_operand.vmem [shape: bf16[4,4,4], index: 2, kind: input, shape index: {}]
  %s3 = inlined_call_operand.vmem [shape: f32[1,4], index: 3, kind: input, shape index: {}]
  %s4 = inlined_call_operand.vmem [shape: bf16[2,4,4,4,4], index: 4, kind: output, shape index: {}]
  %s5 = sld [smem:[#allocation0]]
  $region56: #{decode_block_forward.17} parent=0
    _
  %s7 = ssub.s32 1, %s5
  %s8 = scalar_select 0, %s7, %s5
  loop: start=0, step=1, limit=10
  $region2: #{decode_block_forward.17} parent=0 // loop_pre_header
    _
  $region3: #{decode_block_forward.17} parent=0 // loop_header
    %s10 = sphi 0, %s14
    %p11 = scmp.ge.s32.totalorder %s10, 10
    %s17 = sphi 0, %s29
    %s18 = sphi 0, %s25
    %s19 = sphi 0, %s17
    %s20 = sphi 0, %s18
    %s21 = sphi 0, %s19
    %s22 = sphi 0, %s20
    %s34 = sphi 0, %s36
    %s37 = sphi 0, %s34
    %s38 = sphi 0, %s37
    %s54 = sphi 0, %s38
    %s64 = sphi 0, %s66
    %s67 = sphi 0, %s64
    %s68 = sphi 0, %s67
    %s84 = sphi 0, %s68
    %s88 = sphi 0, %s88
    %s90 = sphi 0, %s88
    %s91 = sphi 0, %s90
    %s105 = sphi 0, %s91
    %s109 = sphi 0, %s109
    %s111 = sphi 0, %s109
    %s112 = sphi 0, %s111
    %s126 = sphi 0, %s112
    %s134 = sphi 0, %s136
    %s137 = sphi 0, %s134
    %s138 = sphi 0, %s137
    %s154 = sphi 0, %s138
  $region4: #{decode_block_forward.17} parent=0 // loop_header_branch
    %13 = sbr.rel (%p11) target = $region8
  $region5: #{decode_block_forward.17} parent=0 // loop_body
    %s15 = ssub.s32 %s10, 1
    %s16 = ssub.s32 %s10, 2
    %s23 = sadd.s32 1, %s18
    %p24 = scmp.ge.s32.totalorder %s23, 4
    %s25 = scalar_select %p24, 0, %s23
    %s26 = sadd.s32 1, %s17
    %s27 = scalar_select %p24, %s26, %s17
    %p28 = scmp.ge.s32.totalorder %s27, 2
    %s29 = scalar_select %p28, 0, %s27
    %s30 = ssub.s32 %s17, %s29
    %s31 = ssub.s32 %s18, %s25
    %s32 = sor.u32 %s30, %s31
    %p33 = scmp.eq.s32.totalorder %s32, 0
    %s35 = sadd.s32 %s34, 1
    %s36 = scalar_select %p33, %s34, %s35
    %p39 = pneg %p33
    %p40 = scmp.eq.s32.totalorder %s10, 7
    %p41 = por %p39, %p40
    %p42 = scmp.ne.s32.totalorder %s34, %s37
    %p43 = scmp.eq.s32.totalorder %s10, 0
    %p44 = por %p42, %p43
    %p45 = scmp.ne.s32.totalorder %s34, %s37
    %p46 = scmp.eq.s32.totalorder %s15, 7
    %p47 = por %p45, %p46
    %p48 = scmp.ne.s32.totalorder %s37, %s38
    %p49 = scmp.eq.s32.totalorder %s15, 0
    %p50 = por %p48, %p49
    %p51 = scmp.ne.s32.totalorder %s37, %s38
    %p52 = scmp.eq.s32.totalorder %s16, 7
    %p53 = por %p51, %p52
    %p55 = scmp.ne.s32.totalorder %s38, %s54
    %p56 = scmp.eq.s32.totalorder %s16, 0
    %p57 = por %p55, %p56
    %s58 = sadd.s32 %s18, 1
    %s59 = sadd.s32 %s25, 1
    %s60 = ssub.s32 %s17, %s29
    %s61 = ssub.s32 %s58, %s59
    %s62 = sor.u32 %s60, %s61
    %p63 = scmp.eq.s32.totalorder %s62, 0
    %s65 = sadd.s32 %s64, 1
    %s66 = scalar_select %p63, %s64, %s65
    %p69 = pneg %p63
    %p70 = scmp.eq.s32.totalorder %s10, 7
    %p71 = por %p69, %p70
    %p72 = scmp.ne.s32.totalorder %s64, %s67
    %p73 = scmp.eq.s32.totalorder %s10, 0
    %p74 = por %p72, %p73
    %p75 = scmp.ne.s32.totalorder %s64, %s67
    %p76 = scmp.eq.s32.totalorder %s15, 7
    %p77 = por %p75, %p76
    %p78 = scmp.ne.s32.totalorder %s67, %s68
    %p79 = scmp.eq.s32.totalorder %s15, 0
    %p80 = por %p78, %p79
    %p81 = scmp.ne.s32.totalorder %s67, %s68
    %p82 = scmp.eq.s32.totalorder %s16, 7
    %p83 = por %p81, %p82
    %p85 = scmp.ne.s32.totalorder %s68, %s84
    %p86 = scmp.eq.s32.totalorder %s16, 0
    %p87 = por %p85, %p86
    %s89 = sadd.s32 %s88, 1
    %p92 = scmp.eq.s32.totalorder %s10, 7
    %p93 = scmp.ne.s32.totalorder %s88, %s90
    %p94 = scmp.eq.s32.totalorder %s10, 0
    %p95 = por %p93, %p94
    %p96 = scmp.ne.s32.totalorder %s88, %s90
    %p97 = scmp.eq.s32.totalorder %s15, 7
    %p98 = por %p96, %p97
    %p99 = scmp.ne.s32.totalorder %s90, %s91
    %p100 = scmp.eq.s32.totalorder %s15, 0
    %p101 = por %p99, %p100
    %p102 = scmp.ne.s32.totalorder %s90, %s91
    %p103 = scmp.eq.s32.totalorder %s16, 7
    %p104 = por %p102, %p103
    %p106 = scmp.ne.s32.totalorder %s91, %s105
    %p107 = scmp.eq.s32.totalorder %s16, 0
    %p108 = por %p106, %p107
    %s110 = sadd.s32 %s109, 1
    %p113 = scmp.eq.s32.totalorder %s10, 7
    %p114 = scmp.ne.s32.totalorder %s109, %s111
    %p115 = scmp.eq.s32.totalorder %s10, 0
    %p116 = por %p114, %p115
    %p117 = scmp.ne.s32.totalorder %s109, %s111
    %p118 = scmp.eq.s32.totalorder %s15, 7
    %p119 = por %p117, %p118
    %p120 = scmp.ne.s32.totalorder %s111, %s112
    %p121 = scmp.eq.s32.totalorder %s15, 0
    %p122 = por %p120, %p121
    %p123 = scmp.ne.s32.totalorder %s111, %s112
    %p124 = scmp.eq.s32.totalorder %s16, 7
    %p125 = por %p123, %p124
    %p127 = scmp.ne.s32.totalorder %s112, %s126
    %p128 = scmp.eq.s32.totalorder %s16, 0
    %p129 = por %p127, %p128
    %s130 = ssub.s32 %s17, %s29
    %s131 = ssub.s32 %s18, %s25
    %s132 = sor.u32 %s130, %s131
    %p133 = scmp.eq.s32.totalorder %s132, 0
    %s135 = sadd.s32 %s134, 1
    %s136 = scalar_select %p133, %s134, %s135
    %p139 = pneg %p133
    %p140 = scmp.eq.s32.totalorder %s10, 7
    %p141 = por %p139, %p140
    %p142 = scmp.ne.s32.totalorder %s134, %s137
    %p143 = scmp.eq.s32.totalorder %s10, 0
    %p144 = por %p142, %p143
    %p145 = scmp.ne.s32.totalorder %s134, %s137
    %p146 = scmp.eq.s32.totalorder %s15, 7
    %p147 = por %p145, %p146
    %p148 = scmp.ne.s32.totalorder %s137, %s138
    %p149 = scmp.eq.s32.totalorder %s15, 0
    %p150 = por %p148, %p149
    %p151 = scmp.ne.s32.totalorder %s137, %s138
    %p152 = scmp.eq.s32.totalorder %s16, 7
    %p153 = por %p151, %p152
    %p155 = scmp.ne.s32.totalorder %s138, %s154
    %p156 = scmp.eq.s32.totalorder %s16, 0
    %p157 = por %p155, %p156
    %p158 = scmp.le.s32.totalorder 1, %s10
    %p159 = scmp.lt.s32.totalorder %s10, 9
    %p160 = pnand %p158, %p159
    %p161 = pneg %p160
    // Predicated region
    $region9: #{decode_block_forward.17} parent=5 // pred_check
      _
    $region10: #{decode_block_forward.17} parent=5 // pred_check_branch
      %163 = sbr.rel (%p160) target = $region12
    $region11: #{decode_block_forward.17} parent=5 // pred_region
      %s164 = ssub.s32 %s10, 1
      // Predicated region
      $region13: #{decode_block_forward.17} parent=11 // pred_check
        %p165 = pneg %p101
      $region14: #{decode_block_forward.17} parent=11 // pred_check_branch
        %167 = sbr.rel (%p165) target = $region16
      $region15: #{decode_block_forward.17} parent=11 // pred_region
        _
      $region16: #{decode_block_forward.17} parent=11 // pred_fallthru
        _
      // Predicated region
      $region17: #{decode_block_forward.17} parent=11 // pred_check
        %p168 = pneg %p122
      $region18: #{decode_block_forward.17} parent=11 // pred_check_branch
        %170 = sbr.rel (%p168) target = $region20
      $region19: #{decode_block_forward.17} parent=11 // pred_region
        _
      $region20: #{decode_block_forward.17} parent=11 // pred_fallthru
        _
    $region12: #{decode_block_forward.17} parent=5 // pred_fallthru
      _
    %p171 = scmp.lt.s32.totalorder %s10, 8
    // Predicated region
    $region21: #{decode_block_forward.17} parent=5 // pred_check
      %p172 = pneg %p171
    $region22: #{decode_block_forward.17} parent=5 // pred_check_branch
      %174 = sbr.rel (%p172) target = $region24
    $region23: #{decode_block_forward.17} parent=5 // pred_region
      // Predicated region
      $region25: #{decode_block_forward.17} parent=23 // pred_check
        %p175 = pneg %p44
      $region26: #{decode_block_forward.17} parent=23 // pred_check_branch
        %177 = sbr.rel (%p175) target = $region28
      $region27: #{decode_block_forward.17} parent=23 // pred_region
        %p178 = scmp.lt.s32.totalorder %s17, 1
        %s179 = scalar_select %p178, %s17, 1
        %p180 = scmp.lt.s32.totalorder %s18, 4
        %s181 = scalar_select %p180, %s18, 4
        %s182 = smul.addr %s181, 5
        %s183 = smul.addr %s179, 25
        %s184 = sadd.s32 %s182, %s183
        %s185 = smul.addr %s184, 4
        %s186 = scalar_lea.vmem %s0, %s185
      $region28: #{decode_block_forward.17} parent=23 // pred_fallthru
        _
      // Predicated region
      $region29: #{decode_block_forward.17} parent=23 // pred_check
        %p187 = pneg %p74
      $region30: #{decode_block_forward.17} parent=23 // pred_check_branch
        %189 = sbr.rel (%p187) target = $region32
      $region31: #{decode_block_forward.17} parent=23 // pred_region
        %s190 = sadd.s32 %s18, 1
        %p191 = scmp.lt.s32.totalorder %s17, 1
        %s192 = scalar_select %p191, %s17, 1
        %p193 = scmp.lt.s32.totalorder %s190, 4
        %s194 = scalar_select %p193, %s190, 4
        %s195 = smul.addr %s194, 5
        %s196 = smul.addr %s192, 25
        %s197 = sadd.s32 %s195, %s196
        %s198 = smul.addr %s197, 4
        %s199 = scalar_lea.vmem %s1, %s198
        %s200 = sadd.s32 %s18, 1
      $region32: #{decode_block_forward.17} parent=23 // pred_fallthru
        _
    $region24: #{decode_block_forward.17} parent=5 // pred_fallthru
      _
    %p201 = scmp.le.s32.totalorder 1, %s10
    %p202 = scmp.lt.s32.totalorder %s10, 9
    %p203 = pnand %p201, %p202
    %p204 = pneg %p203
    // Predicated region
    $region33: #{decode_block_forward.17} parent=5 // pred_check
      _
    $region34: #{decode_block_forward.17} parent=5 // pred_check_branch
      %206 = sbr.rel (%p203) target = $region36
    $region35: #{decode_block_forward.17} parent=5 // pred_region
      %s207 = ssub.s32 %s10, 1
      %p208 = scmp.lt.s32.totalorder %s19, 1
      %s209 = scalar_select %p208, %s19, 1
      %p210 = scmp.lt.s32.totalorder %s20, 4
      %s211 = scalar_select %p210, %s20, 4
      %s212 = smul.addr %s211, 5
      %s213 = smul.addr %s209, 25
      %s214 = sadd.s32 %s212, %s213
      %s215 = smul.addr %s214, 4
      %s216 = scalar_lea.vmem %s0, %s215
      %p217 = pneg %p50
      %p218 = pneg %p47
      %s219 = sadd.s32 %s20, 1
      %p220 = scmp.lt.s32.totalorder %s19, 1
      %s221 = scalar_select %p220, %s19, 1
      %p222 = scmp.lt.s32.totalorder %s219, 4
      %s223 = scalar_select %p222, %s219, 4
      %s224 = smul.addr %s223, 5
      %s225 = smul.addr %s221, 25
      %s226 = sadd.s32 %s224, %s225
      %s227 = smul.addr %s226, 4
      %s228 = scalar_lea.vmem %s1, %s227
      %p229 = pneg %p80
      %p230 = pneg %p77
      %p231 = pneg %p101
      %p232 = pneg %p98
      %p233 = pneg %p122
      %p234 = pneg %p119
      %p235 = pneg %p150
      %p236 = pneg %p147
      %p237 = scmp.lt.s32.totalorder %s19, 1
      %s238 = scalar_select %p237, %s19, 1
      %p239 = scmp.lt.s32.totalorder %s20, 3
      %s240 = scalar_select %p239, %s20, 3
      %s241 = smul.addr %s240, 4
      %s242 = smul.addr %s238, 16
      %s243 = sadd.s32 %s241, %s242
      %s244 = smul.addr %s243, 2
      %s245 = scalar_lea.vmem %s4, %s244
      %p246 = scmp.lt.s32.totalorder %s19, 1
      %s247 = scalar_select %p246, %s19, 1
      %p248 = scmp.lt.s32.totalorder %s20, 4
      %s249 = scalar_select %p248, %s20, 4
      %s250 = smul.addr %s249, 5
      %s251 = smul.addr %s247, 25
      %s252 = sadd.s32 %s250, %s251
      %s253 = smul.addr %s252, 4
      %s254 = scalar_lea.vmem %s0, %s253
      %s255 = sadd.s32 %s20, 1
      %p256 = scmp.lt.s32.totalorder %s19, 1
      %s257 = scalar_select %p256, %s19, 1
      %p258 = scmp.lt.s32.totalorder %s255, 4
      %s259 = scalar_select %p258, %s255, 4
      %s260 = smul.addr %s259, 5
      %s261 = smul.addr %s257, 25
      %s262 = sadd.s32 %s260, %s261
      %s263 = smul.addr %s262, 4
      %s264 = scalar_lea.vmem %s1, %s263
      %s265 = sadd.s32 %s20, 1
      %p266 = scmp.lt.s32.totalorder %s19, 1
      %s267 = scalar_select %p266, %s19, 1
      %p268 = scmp.lt.s32.totalorder %s20, 3
      %s269 = scalar_select %p268, %s20, 3
      %s270 = smul.addr %s269, 4
      %s271 = smul.addr %s267, 16
      %s272 = sadd.s32 %s270, %s271
      %s273 = smul.addr %s272, 2
      %s274 = scalar_lea.vmem %s4, %s273
      %v276 = vld [vmem:[%s3] sm:$0x1]
      loop: start=0, step=1, limit=4
      $region37: #{decode_block_forward.17} parent=35 // loop_pre_header
        _
      $region38: #{decode_block_forward.17} parent=35 // loop_header
        %s278 = sphi 0, %s282
        %p279 = scmp.ge.s32.totalorder %s278, 4
      $region39: #{decode_block_forward.17} parent=35 // loop_header_branch
        %281 = sbr.rel (%p279) target = $region43
      $region40: #{decode_block_forward.17} parent=35 // loop_body
        %s283 = smul.addr %s278, 4
        %s284 = scalar_lea.vmem %s254, %s283
        %v285 = vld [vmem:[%s284] sm:$0x7]
        %v286 = vld [vmem:[%s2] sm:$0x3]
        %s287 = scalar_lea.vmem %s2, 2
        %v288 = vld [vmem:[%s287] sm:$0x3]
        %v290 = vunpack.c.l.b16 %v285
        %v291 = vpack.c.b16 %v290, %v290
        %v293 = vshrl.u32 %v291, 16
        %v295 = vshll.u32 %v291, 16
        %v297 = vrot.slane %v295, 1
        %v298 = vor.u32 %v293, %v297
        %vm299 = vcmask 31744
        %v301 = vsel %vm299, %v298, 0
        %vm303 = vcmask 1041408
        %v305 = vsel %vm303, %v288, 0
        %307 = vmatprep.subr.bf16.mxu0 0
        %308 = vmatpush1.bf16.msra.mxu0 0
        %309 = vmatprep.subr.bf16.mxu0 0
        %310 = vmatpush1.bf16.msra.mxu0 0
        %311 = vmatprep.subr.bf16.mxu0 0
        %312 = vmatpush1.bf16.msra.mxu0 0
        %313 = vmatprep.subr.bf16.mxu0 0
        %314 = vmatpush1.bf16.msra.mxu0 0
        %315 = vmatprep.subr.bf16.mxu0 0
        %316 = vmatpush1.bf16.msra.mxu0 0
        %317 = vmatprep.subr.bf16.mxu0 0
        %318 = vmatpush1.bf16.msra.mxu0 0
        %319 = vmatprep.subr.bf16.mxu0 0
        %320 = vmatpush1.bf16.msra.mxu0 0
        %321 = vmatprep.subr.bf16.mxu0 0
        %322 = vmatpush1.bf16.msra.mxu0 %v305
        %323 = vmatprep.subr.bf16.mxu0 0
        %324 = vmatpush2.bf16.msra.mxu0 0
        %325 = vmatprep.subr.bf16.mxu0 0
        %326 = vmatpush2.bf16.msra.mxu0 0
        %327 = vmatprep.subr.bf16.mxu0 0
        %328 = vmatpush2.bf16.msra.mxu0 0
        %329 = vmatprep.subr.bf16.mxu0 0
        %330 = vmatpush2.bf16.msra.mxu0 0
        %331 = vmatprep.subr.bf16.mxu0 0
        %332 = vmatpush2.bf16.msra.mxu0 0
        %333 = vmatprep.subr.bf16.mxu0 0
        %334 = vmatpush2.bf16.msra.mxu0 0
        %335 = vmatprep.subr.bf16.mxu0 0
        %336 = vmatpush2.bf16.msra.mxu0 0
        %337 = vmatprep.subr.bf16.mxu0 0
        %338 = vmatpush2.bf16.msra.mxu0 0
        %339 = vmatprep.mubr.bf16.mxu0 0
        %340 = vmatmul.mubr.bf16.gmra.mxu0 %v301
        %v341 = vpop.f32.mrf.mxu0
        %v342 = vadd.f32 0.0, %v341
        %v343 = vpop.f32.mrf.mxu0
        %v344 = vpop.f32.mrf.mxu0
        %v345 = vpop.f32.mrf.mxu0
        %346 = vdwg.mxu0
        %v348 = vsel %vm299, %v285, 0
        %v351 = vsel %vm303, %v286, 0
        %353 = vmatprep.subr.bf16.mxu0 0
        %354 = vmatpush1.bf16.msra.mxu0 0
        %355 = vmatprep.subr.bf16.mxu0 0
        %356 = vmatpush1.bf16.msra.mxu0 0
        %357 = vmatprep.subr.bf16.mxu0 0
        %358 = vmatpush1.bf16.msra.mxu0 0
        %359 = vmatprep.subr.bf16.mxu0 0
        %360 = vmatpush1.bf16.msra.mxu0 0
        %361 = vmatprep.subr.bf16.mxu0 0
        %362 = vmatpush1.bf16.msra.mxu0 0
        %363 = vmatprep.subr.bf16.mxu0 0
        %364 = vmatpush1.bf16.msra.mxu0 0
        %365 = vmatprep.subr.bf16.mxu0 0
        %366 = vmatpush1.bf16.msra.mxu0 0
        %367 = vmatprep.subr.bf16.mxu0 0
        %368 = vmatpush1.bf16.msra.mxu0 %v351
        %369 = vmatprep.subr.bf16.mxu0 0
        %370 = vmatpush2.bf16.msra.mxu0 0
        %371 = vmatprep.subr.bf16.mxu0 0
        %372 = vmatpush2.bf16.msra.mxu0 0
        %373 = vmatprep.subr.bf16.mxu0 0
        %374 = vmatpush2.bf16.msra.mxu0 0
        %375 = vmatprep.subr.bf16.mxu0 0
        %376 = vmatpush2.bf16.msra.mxu0 0
        %377 = vmatprep.subr.bf16.mxu0 0
        %378 = vmatpush2.bf16.msra.mxu0 0
        %379 = vmatprep.subr.bf16.mxu0 0
        %380 = vmatpush2.bf16.msra.mxu0 0
        %381 = vmatprep.subr.bf16.mxu0 0
        %382 = vmatpush2.bf16.msra.mxu0 0
        %383 = vmatprep.subr.bf16.mxu0 0
        %384 = vmatpush2.bf16.msra.mxu0 0
        %385 = vmatprep.mubr.bf16.mxu0 0
        %386 = vmatmul.mubr.bf16.gmra.mxu0 %v348
        %v387 = vpop.f32.mrf.mxu0
        %v388 = vadd.f32 %v342, %v387
        %v389 = vpop.f32.mrf.mxu0
        %v390 = vpop.f32.mrf.mxu0
        %v391 = vpop.f32.mrf.mxu0
        %392 = vdwg.mxu0
        %s393 = smul.addr %s278, 4
        %s394 = scalar_lea.vmem %s264, %s393
        %v395 = vld [vmem:[%s394] sm:$0x7]
        %s396 = scalar_lea.vmem %s2, 4
        %v397 = vld [vmem:[%s396] sm:$0x3]
        %v399 = vsel %vm299, %v395, 0
        %v402 = vsel %vm303, %v397, 0
        %404 = vmatprep.subr.bf16.mxu0 0
        %405 = vmatpush1.bf16.msra.mxu0 0
        %406 = vmatprep.subr.bf16.mxu0 0
        %407 = vmatpush1.bf16.msra.mxu0 0
        %408 = vmatprep.subr.bf16.mxu0 0
        %409 = vmatpush1.bf16.msra.mxu0 0
        %410 = vmatprep.subr.bf16.mxu0 0
        %411 = vmatpush1.bf16.msra.mxu0 0
        %412 = vmatprep.subr.bf16.mxu0 0
        %413 = vmatpush1.bf16.msra.mxu0 0
        %414 = vmatprep.subr.bf16.mxu0 0
        %415 = vmatpush1.bf16.msra.mxu0 0
        %416 = vmatprep.subr.bf16.mxu0 0
        %417 = vmatpush1.bf16.msra.mxu0 0
        %418 = vmatprep.subr.bf16.mxu0 0
        %419 = vmatpush1.bf16.msra.mxu0 %v402
        %420 = vmatprep.subr.bf16.mxu0 0
        %421 = vmatpush2.bf16.msra.mxu0 0
        %422 = vmatprep.subr.bf16.mxu0 0
        %423 = vmatpush2.bf16.msra.mxu0 0
        %424 = vmatprep.subr.bf16.mxu0 0
        %425 = vmatpush2.bf16.msra.mxu0 0
        %426 = vmatprep.subr.bf16.mxu0 0
        %427 = vmatpush2.bf16.msra.mxu0 0
        %428 = vmatprep.subr.bf16.mxu0 0
        %429 = vmatpush2.bf16.msra.mxu0 0
        %430 = vmatprep.subr.bf16.mxu0 0
        %431 = vmatpush2.bf16.msra.mxu0 0
        %432 = vmatprep.subr.bf16.mxu0 0
        %433 = vmatpush2.bf16.msra.mxu0 0
        %434 = vmatprep.subr.bf16.mxu0 0
        %435 = vmatpush2.bf16.msra.mxu0 0
        %436 = vmatprep.mubr.bf16.mxu0 0
        %437 = vmatmul.mubr.bf16.gmra.mxu0 %v399
        %v438 = vpop.f32.mrf.mxu0
        %v439 = vadd.f32 0.0, %v438
        %v440 = vpop.f32.mrf.mxu0
        %v441 = vpop.f32.mrf.mxu0
        %v442 = vpop.f32.mrf.mxu0
        %443 = vdwg.mxu0
        %v444 = vadd.f32 %v388, %v439
        %s445 = scalar_lea.vmem %s2, 6
        %v446 = vld [vmem:[%s445] sm:$0x3]
        %v448 = vunpack.c.l.b16 %v395
        %v449 = vpack.c.b16 %v448, %v448
        %v451 = vshrl.u32 %v449, 16
        %v453 = vshll.u32 %v449, 16
        %v455 = vrot.slane %v453, 1
        %v456 = vor.u32 %v451, %v455
        %v458 = vsel %vm299, %v456, 0
        %v461 = vsel %vm303, %v446, 0
        %463 = vmatprep.subr.bf16.mxu0 0
        %464 = vmatpush1.bf16.msra.mxu0 0
        %465 = vmatprep.subr.bf16.mxu0 0
        %466 = vmatpush1.bf16.msra.mxu0 0
        %467 = vmatprep.subr.bf16.mxu0 0
        %468 = vmatpush1.bf16.msra.mxu0 0
        %469 = vmatprep.subr.bf16.mxu0 0
        %470 = vmatpush1.bf16.msra.mxu0 0
        %471 = vmatprep.subr.bf16.mxu0 0
        %472 = vmatpush1.bf16.msra.mxu0 0
        %473 = vmatprep.subr.bf16.mxu0 0
        %474 = vmatpush1.bf16.msra.mxu0 0
        %475 = vmatprep.subr.bf16.mxu0 0
        %476 = vmatpush1.bf16.msra.mxu0 0
        %477 = vmatprep.subr.bf16.mxu0 0
        %478 = vmatpush1.bf16.msra.mxu0 %v461
        %479 = vmatprep.subr.bf16.mxu0 0
        %480 = vmatpush2.bf16.msra.mxu0 0
        %481 = vmatprep.subr.bf16.mxu0 0
        %482 = vmatpush2.bf16.msra.mxu0 0
        %483 = vmatprep.subr.bf16.mxu0 0
        %484 = vmatpush2.bf16.msra.mxu0 0
        %485 = vmatprep.subr.bf16.mxu0 0
        %486 = vmatpush2.bf16.msra.mxu0 0
        %487 = vmatprep.subr.bf16.mxu0 0
        %488 = vmatpush2.bf16.msra.mxu0 0
        %489 = vmatprep.subr.bf16.mxu0 0
        %490 = vmatpush2.bf16.msra.mxu0 0
        %491 = vmatprep.subr.bf16.mxu0 0
        %492 = vmatpush2.bf16.msra.mxu0 0
        %493 = vmatprep.subr.bf16.mxu0 0
        %494 = vmatpush2.bf16.msra.mxu0 0
        %495 = vmatprep.mubr.bf16.mxu0 0
        %496 = vmatmul.mubr.bf16.gmra.mxu0 %v458
        %v497 = vpop.f32.mrf.mxu0
        %v498 = vadd.f32 0.0, %v497
        %v499 = vpop.f32.mrf.mxu0
        %v500 = vpop.f32.mrf.mxu0
        %v501 = vpop.f32.mrf.mxu0
        %502 = vdwg.mxu0
        %v503 = vadd.f32 %v444, %v498
        %v505 = vlaneseq
        %v506 = vshrl.u32 %v505, 7
        %v507 = vsub.s32 0, %v506
        %v508 = vrot.slane %v276, %v507
        %v510 = vadd.f32 %v503, %v508
        %v511 = vpack.c.bf16 %v510, %v510
        %s512 = smul.addr %s278, 2
        %s513 = scalar_lea.vmem %s274, %s512
        %vm514 = vcmask 25600
        %515 = vst.msk [vmem:[%s513] sm:$0x3] %vm514, %v511
      $region41: #{decode_block_forward.17} parent=35 // loop_footer
        %s282 = sadd.s32 1, %s278
      $region42: #{decode_block_forward.17} parent=35 // loop_footer_branch
        %277 = sbr.rel target = $region38
      $region43: #{decode_block_forward.17} parent=35 // loop_exit
        _
      %p516 = scmp.lt.s32.totalorder %s19, 1
      %s517 = scalar_select %p516, %s19, 1
      %p518 = scmp.lt.s32.totalorder %s20, 3
      %s519 = scalar_select %p518, %s20, 3
      %s520 = smul.addr %s519, 4
      %s521 = smul.addr %s517, 16
      %s522 = sadd.s32 %s520, %s521
      %s523 = smul.addr %s522, 2
      %s524 = scalar_lea.vmem %s4, %s523
      // Predicated region
      $region44: #{decode_block_forward.17} parent=35 // pred_check
        %p525 = pneg %p147
      $region45: #{decode_block_forward.17} parent=35 // pred_check_branch
        %527 = sbr.rel (%p525) target = $region47
      $region46: #{decode_block_forward.17} parent=35 // pred_region
        _
      $region47: #{decode_block_forward.17} parent=35 // pred_fallthru
        _
    $region36: #{decode_block_forward.17} parent=5 // pred_fallthru
      _
    %p528 = scmp.le.s32.totalorder 2, %s10
    // Predicated region
    $region48: #{decode_block_forward.17} parent=5 // pred_check
      %p529 = pneg %p528
    $region49: #{decode_block_forward.17} parent=5 // pred_check_branch
      %531 = sbr.rel (%p529) target = $region51
    $region50: #{decode_block_forward.17} parent=5 // pred_region
      %s532 = ssub.s32 %s10, 2
      // Predicated region
      $region52: #{decode_block_forward.17} parent=50 // pred_check
        %p533 = pneg %p153
      $region53: #{decode_block_forward.17} parent=50 // pred_check_branch
        %535 = sbr.rel (%p533) target = $region55
      $region54: #{decode_block_forward.17} parent=50 // pred_region
        %p536 = scmp.lt.s32.totalorder %s21, 1
        %s537 = scalar_select %p536, %s21, 1
        %p538 = scmp.lt.s32.totalorder %s22, 3
        %s539 = scalar_select %p538, %s22, 3
        %s540 = smul.addr %s539, 4
        %s541 = smul.addr %s537, 16
        %s542 = sadd.s32 %s540, %s541
        %s543 = smul.addr %s542, 2
        %s544 = scalar_lea.vmem %s4, %s543
      $region55: #{decode_block_forward.17} parent=50 // pred_fallthru
        _
    $region51: #{decode_block_forward.17} parent=5 // pred_fallthru
      _
  $region6: #{decode_block_forward.17} parent=0 // loop_footer
    %s14 = sadd.s32 1, %s10
  $region7: #{decode_block_forward.17} parent=0 // loop_footer_branch
    %9 = sbr.rel target = $region3
  $region8: #{decode_block_forward.17} parent=0 // loop_exit
    _

// kernel: decode_block_forward.18
$region0: #{decode_block_forward.18}
  #allocation0 [shape = 'u32[]', space=smem, size = 0x4, offset = 0x4, fixed_abs, tag = 'smem constant byte address 0x4 - core index']
  #allocation1 [shape = 'u32[144,128]{1,0:T(1,128)}', space=vmem, size = 0x12000, scoped, tag = 'internal scratch']
  %s0 = inlined_call_operand.vmem [shape: bf16[2,5,5,5,4], index: 0, kind: input, shape index: {}, may-alias: {0,1}]
  %s1 = inlined_call_operand.vmem [shape: bf16[2,5,5,5,4], index: 1, kind: input, shape index: {}, may-alias: {0,1}]
  %s2 = inlined_call_operand.vmem [shape: bf16[4,4,4], index: 2, kind: input, shape index: {}]
  %s3 = inlined_call_operand.vmem [shape: f32[1,4], index: 3, kind: input, shape index: {}]
  %s4 = inlined_call_operand.vmem [shape: bf16[2,4,4,4,4], index: 4, kind: output, shape index: {}]
  %s5 = sld [smem:[#allocation0]]
  $region56: #{decode_block_forward.18} parent=0
    _
  %s7 = ssub.s32 1, %s5
  %s8 = scalar_select 0, %s7, %s5
  loop: start=0, step=1, limit=10
  $region2: #{decode_block_forward.18} parent=0 // loop_pre_header
    _
  $region3: #{decode_block_forward.18} parent=0 // loop_header
    %s10 = sphi 0, %s14
    %p11 = scmp.ge.s32.totalorder %s10, 10
    %s17 = sphi 0, %s29
    %s18 = sphi 0, %s25
    %s19 = sphi 0, %s17
    %s20 = sphi 0, %s18
    %s21 = sphi 0, %s19
    %s22 = sphi 0, %s20
    %s34 = sphi 0, %s36
    %s37 = sphi 0, %s34
    %s38 = sphi 0, %s37
    %s54 = sphi 0, %s38
    %s64 = sphi 0, %s66
    %s67 = sphi 0, %s64
    %s68 = sphi 0, %s67
    %s84 = sphi 0, %s68
    %s88 = sphi 0, %s88
    %s90 = sphi 0, %s88
    %s91 = sphi 0, %s90
    %s105 = sphi 0, %s91
    %s109 = sphi 0, %s109
    %s111 = sphi 0, %s109
    %s112 = sphi 0, %s111
    %s126 = sphi 0, %s112
    %s134 = sphi 0, %s136
    %s137 = sphi 0, %s134
    %s138 = sphi 0, %s137
    %s154 = sphi 0, %s138
  $region4: #{decode_block_forward.18} parent=0 // loop_header_branch
    %13 = sbr.rel (%p11) target = $region8
  $region5: #{decode_block_forward.18} parent=0 // loop_body
    %s15 = ssub.s32 %s10, 1
    %s16 = ssub.s32 %s10, 2
    %s23 = sadd.s32 1, %s18
    %p24 = scmp.ge.s32.totalorder %s23, 4
    %s25 = scalar_select %p24, 0, %s23
    %s26 = sadd.s32 1, %s17
    %s27 = scalar_select %p24, %s26, %s17
    %p28 = scmp.ge.s32.totalorder %s27, 2
    %s29 = scalar_select %p28, 0, %s27
    %s30 = ssub.s32 %s17, %s29
    %s31 = ssub.s32 %s18, %s25
    %s32 = sor.u32 %s30, %s31
    %p33 = scmp.eq.s32.totalorder %s32, 0
    %s35 = sadd.s32 %s34, 1
    %s36 = scalar_select %p33, %s34, %s35
    %p39 = pneg %p33
    %p40 = scmp.eq.s32.totalorder %s10, 7
    %p41 = por %p39, %p40
    %p42 = scmp.ne.s32.totalorder %s34, %s37
    %p43 = scmp.eq.s32.totalorder %s10, 0
    %p44 = por %p42, %p43
    %p45 = scmp.ne.s32.totalorder %s34, %s37
    %p46 = scmp.eq.s32.totalorder %s15, 7
    %p47 = por %p45, %p46
    %p48 = scmp.ne.s32.totalorder %s37, %s38
    %p49 = scmp.eq.s32.totalorder %s15, 0
    %p50 = por %p48, %p49
    %p51 = scmp.ne.s32.totalorder %s37, %s38
    %p52 = scmp.eq.s32.totalorder %s16, 7
    %p53 = por %p51, %p52
    %p55 = scmp.ne.s32.totalorder %s38, %s54
    %p56 = scmp.eq.s32.totalorder %s16, 0
    %p57 = por %p55, %p56
    %s58 = sadd.s32 %s18, 1
    %s59 = sadd.s32 %s25, 1
    %s60 = ssub.s32 %s17, %s29
    %s61 = ssub.s32 %s58, %s59
    %s62 = sor.u32 %s60, %s61
    %p63 = scmp.eq.s32.totalorder %s62, 0
    %s65 = sadd.s32 %s64, 1
    %s66 = scalar_select %p63, %s64, %s65
    %p69 = pneg %p63
    %p70 = scmp.eq.s32.totalorder %s10, 7
    %p71 = por %p69, %p70
    %p72 = scmp.ne.s32.totalorder %s64, %s67
    %p73 = scmp.eq.s32.totalorder %s10, 0
    %p74 = por %p72, %p73
    %p75 = scmp.ne.s32.totalorder %s64, %s67
    %p76 = scmp.eq.s32.totalorder %s15, 7
    %p77 = por %p75, %p76
    %p78 = scmp.ne.s32.totalorder %s67, %s68
    %p79 = scmp.eq.s32.totalorder %s15, 0
    %p80 = por %p78, %p79
    %p81 = scmp.ne.s32.totalorder %s67, %s68
    %p82 = scmp.eq.s32.totalorder %s16, 7
    %p83 = por %p81, %p82
    %p85 = scmp.ne.s32.totalorder %s68, %s84
    %p86 = scmp.eq.s32.totalorder %s16, 0
    %p87 = por %p85, %p86
    %s89 = sadd.s32 %s88, 1
    %p92 = scmp.eq.s32.totalorder %s10, 7
    %p93 = scmp.ne.s32.totalorder %s88, %s90
    %p94 = scmp.eq.s32.totalorder %s10, 0
    %p95 = por %p93, %p94
    %p96 = scmp.ne.s32.totalorder %s88, %s90
    %p97 = scmp.eq.s32.totalorder %s15, 7
    %p98 = por %p96, %p97
    %p99 = scmp.ne.s32.totalorder %s90, %s91
    %p100 = scmp.eq.s32.totalorder %s15, 0
    %p101 = por %p99, %p100
    %p102 = scmp.ne.s32.totalorder %s90, %s91
    %p103 = scmp.eq.s32.totalorder %s16, 7
    %p104 = por %p102, %p103
    %p106 = scmp.ne.s32.totalorder %s91, %s105
    %p107 = scmp.eq.s32.totalorder %s16, 0
    %p108 = por %p106, %p107
    %s110 = sadd.s32 %s109, 1
    %p113 = scmp.eq.s32.totalorder %s10, 7
    %p114 = scmp.ne.s32.totalorder %s109, %s111
    %p115 = scmp.eq.s32.totalorder %s10, 0
    %p116 = por %p114, %p115
    %p117 = scmp.ne.s32.totalorder %s109, %s111
    %p118 = scmp.eq.s32.totalorder %s15, 7
    %p119 = por %p117, %p118
    %p120 = scmp.ne.s32.totalorder %s111, %s112
    %p121 = scmp.eq.s32.totalorder %s15, 0
    %p122 = por %p120, %p121
    %p123 = scmp.ne.s32.totalorder %s111, %s112
    %p124 = scmp.eq.s32.totalorder %s16, 7
    %p125 = por %p123, %p124
    %p127 = scmp.ne.s32.totalorder %s112, %s126
    %p128 = scmp.eq.s32.totalorder %s16, 0
    %p129 = por %p127, %p128
    %s130 = ssub.s32 %s17, %s29
    %s131 = ssub.s32 %s18, %s25
    %s132 = sor.u32 %s130, %s131
    %p133 = scmp.eq.s32.totalorder %s132, 0
    %s135 = sadd.s32 %s134, 1
    %s136 = scalar_select %p133, %s134, %s135
    %p139 = pneg %p133
    %p140 = scmp.eq.s32.totalorder %s10, 7
    %p141 = por %p139, %p140
    %p142 = scmp.ne.s32.totalorder %s134, %s137
    %p143 = scmp.eq.s32.totalorder %s10, 0
    %p144 = por %p142, %p143
    %p145 = scmp.ne.s32.totalorder %s134, %s137
    %p146 = scmp.eq.s32.totalorder %s15, 7
    %p147 = por %p145, %p146
    %p148 = scmp.ne.s32.totalorder %s137, %s138
    %p149 = scmp.eq.s32.totalorder %s15, 0
    %p150 = por %p148, %p149
    %p151 = scmp.ne.s32.totalorder %s137, %s138
    %p152 = scmp.eq.s32.totalorder %s16, 7
    %p153 = por %p151, %p152
    %p155 = scmp.ne.s32.totalorder %s138, %s154
    %p156 = scmp.eq.s32.totalorder %s16, 0
    %p157 = por %p155, %p156
    %p158 = scmp.le.s32.totalorder 1, %s10
    %p159 = scmp.lt.s32.totalorder %s10, 9
    %p160 = pnand %p158, %p159
    %p161 = pneg %p160
    // Predicated region
    $region9: #{decode_block_forward.18} parent=5 // pred_check
      _
    $region10: #{decode_block_forward.18} parent=5 // pred_check_branch
      %163 = sbr.rel (%p160) target = $region12
    $region11: #{decode_block_forward.18} parent=5 // pred_region
      %s164 = ssub.s32 %s10, 1
      // Predicated region
      $region13: #{decode_block_forward.18} parent=11 // pred_check
        %p165 = pneg %p101
      $region14: #{decode_block_forward.18} parent=11 // pred_check_branch
        %167 = sbr.rel (%p165) target = $region16
      $region15: #{decode_block_forward.18} parent=11 // pred_region
        _
      $region16: #{decode_block_forward.18} parent=11 // pred_fallthru
        _
      // Predicated region
      $region17: #{decode_block_forward.18} parent=11 // pred_check
        %p168 = pneg %p122
      $region18: #{decode_block_forward.18} parent=11 // pred_check_branch
        %170 = sbr.rel (%p168) target = $region20
      $region19: #{decode_block_forward.18} parent=11 // pred_region
        _
      $region20: #{decode_block_forward.18} parent=11 // pred_fallthru
        _
    $region12: #{decode_block_forward.18} parent=5 // pred_fallthru
      _
    %p171 = scmp.lt.s32.totalorder %s10, 8
    // Predicated region
    $region21: #{decode_block_forward.18} parent=5 // pred_check
      %p172 = pneg %p171
    $region22: #{decode_block_forward.18} parent=5 // pred_check_branch
      %174 = sbr.rel (%p172) target = $region24
    $region23: #{decode_block_forward.18} parent=5 // pred_region
      // Predicated region
      $region25: #{decode_block_forward.18} parent=23 // pred_check
        %p175 = pneg %p44
      $region26: #{decode_block_forward.18} parent=23 // pred_check_branch
        %177 = sbr.rel (%p175) target = $region28
      $region27: #{decode_block_forward.18} parent=23 // pred_region
        %p178 = scmp.lt.s32.totalorder %s17, 1
        %s179 = scalar_select %p178, %s17, 1
        %p180 = scmp.lt.s32.totalorder %s18, 4
        %s181 = scalar_select %p180, %s18, 4
        %s182 = smul.addr %s181, 5
        %s183 = smul.addr %s179, 25
        %s184 = sadd.s32 %s182, %s183
        %s185 = smul.addr %s184, 4
        %s186 = scalar_lea.vmem %s0, %s185
      $region28: #{decode_block_forward.18} parent=23 // pred_fallthru
        _
      // Predicated region
      $region29: #{decode_block_forward.18} parent=23 // pred_check
        %p187 = pneg %p74
      $region30: #{decode_block_forward.18} parent=23 // pred_check_branch
        %189 = sbr.rel (%p187) target = $region32
      $region31: #{decode_block_forward.18} parent=23 // pred_region
        %s190 = sadd.s32 %s18, 1
        %p191 = scmp.lt.s32.totalorder %s17, 1
        %s192 = scalar_select %p191, %s17, 1
        %p193 = scmp.lt.s32.totalorder %s190, 4
        %s194 = scalar_select %p193, %s190, 4
        %s195 = smul.addr %s194, 5
        %s196 = smul.addr %s192, 25
        %s197 = sadd.s32 %s195, %s196
        %s198 = smul.addr %s197, 4
        %s199 = scalar_lea.vmem %s1, %s198
        %s200 = sadd.s32 %s18, 1
      $region32: #{decode_block_forward.18} parent=23 // pred_fallthru
        _
    $region24: #{decode_block_forward.18} parent=5 // pred_fallthru
      _
    %p201 = scmp.le.s32.totalorder 1, %s10
    %p202 = scmp.lt.s32.totalorder %s10, 9
    %p203 = pnand %p201, %p202
    %p204 = pneg %p203
    // Predicated region
    $region33: #{decode_block_forward.18} parent=5 // pred_check
      _
    $region34: #{decode_block_forward.18} parent=5 // pred_check_branch
      %206 = sbr.rel (%p203) target = $region36
    $region35: #{decode_block_forward.18} parent=5 // pred_region
      %s207 = ssub.s32 %s10, 1
      %p208 = scmp.lt.s32.totalorder %s19, 1
      %s209 = scalar_select %p208, %s19, 1
      %p210 = scmp.lt.s32.totalorder %s20, 4
      %s211 = scalar_select %p210, %s20, 4
      %s212 = smul.addr %s211, 5
      %s213 = smul.addr %s209, 25
      %s214 = sadd.s32 %s212, %s213
      %s215 = smul.addr %s214, 4
      %s216 = scalar_lea.vmem %s0, %s215
      %p217 = pneg %p50
      %p218 = pneg %p47
      %s219 = sadd.s32 %s20, 1
      %p220 = scmp.lt.s32.totalorder %s19, 1
      %s221 = scalar_select %p220, %s19, 1
      %p222 = scmp.lt.s32.totalorder %s219, 4
      %s223 = scalar_select %p222, %s219, 4
      %s224 = smul.addr %s223, 5
      %s225 = smul.addr %s221, 25
      %s226 = sadd.s32 %s224, %s225
      %s227 = smul.addr %s226, 4
      %s228 = scalar_lea.vmem %s1, %s227
      %p229 = pneg %p80
      %p230 = pneg %p77
      %p231 = pneg %p101
      %p232 = pneg %p98
      %p233 = pneg %p122
      %p234 = pneg %p119
      %p235 = pneg %p150
      %p236 = pneg %p147
      %p237 = scmp.lt.s32.totalorder %s19, 1
      %s238 = scalar_select %p237, %s19, 1
      %p239 = scmp.lt.s32.totalorder %s20, 3
      %s240 = scalar_select %p239, %s20, 3
      %s241 = smul.addr %s240, 4
      %s242 = smul.addr %s238, 16
      %s243 = sadd.s32 %s241, %s242
      %s244 = smul.addr %s243, 2
      %s245 = scalar_lea.vmem %s4, %s244
      %p246 = scmp.lt.s32.totalorder %s19, 1
      %s247 = scalar_select %p246, %s19, 1
      %p248 = scmp.lt.s32.totalorder %s20, 4
      %s249 = scalar_select %p248, %s20, 4
      %s250 = smul.addr %s249, 5
      %s251 = smul.addr %s247, 25
      %s252 = sadd.s32 %s250, %s251
      %s253 = smul.addr %s252, 4
      %s254 = scalar_lea.vmem %s0, %s253
      %s255 = sadd.s32 %s20, 1
      %p256 = scmp.lt.s32.totalorder %s19, 1
      %s257 = scalar_select %p256, %s19, 1
      %p258 = scmp.lt.s32.totalorder %s255, 4
      %s259 = scalar_select %p258, %s255, 4
      %s260 = smul.addr %s259, 5
      %s261 = smul.addr %s257, 25
      %s262 = sadd.s32 %s260, %s261
      %s263 = smul.addr %s262, 4
      %s264 = scalar_lea.vmem %s1, %s263
      %s265 = sadd.s32 %s20, 1
      %p266 = scmp.lt.s32.totalorder %s19, 1
      %s267 = scalar_select %p266, %s19, 1
      %p268 = scmp.lt.s32.totalorder %s20, 3
      %s269 = scalar_select %p268, %s20, 3
      %s270 = smul.addr %s269, 4
      %s271 = smul.addr %s267, 16
      %s272 = sadd.s32 %s270, %s271
      %s273 = smul.addr %s272, 2
      %s274 = scalar_lea.vmem %s4, %s273
      %v276 = vld [vmem:[%s3] sm:$0x1]
      loop: start=0, step=1, limit=4
      $region37: #{decode_block_forward.18} parent=35 // loop_pre_header
        _
      $region38: #{decode_block_forward.18} parent=35 // loop_header
        %s278 = sphi 0, %s282
        %p279 = scmp.ge.s32.totalorder %s278, 4
      $region39: #{decode_block_forward.18} parent=35 // loop_header_branch
        %281 = sbr.rel (%p279) target = $region43
      $region40: #{decode_block_forward.18} parent=35 // loop_body
        %s283 = smul.addr %s278, 4
        %s284 = scalar_lea.vmem %s254, %s283
        %v285 = vld [vmem:[%s284] sm:$0x7]
        %v286 = vld [vmem:[%s2] sm:$0x3]
        %s287 = sadd.s32 %s278, 1
        %s288 = smul.addr %s287, 4
        %s289 = scalar_lea.vmem %s254, %s288
        %v290 = vld [vmem:[%s289] sm:$0x7]
        %s291 = scalar_lea.vmem %s2, 2
        %v292 = vld [vmem:[%s291] sm:$0x3]
        %vm293 = vcmask 31744
        %v295 = vsel %vm293, %v290, 0
        %vm297 = vcmask 1041408
        %v299 = vsel %vm297, %v292, 0
        %301 = vmatprep.subr.bf16.mxu0 0
        %302 = vmatpush1.bf16.msra.mxu0 0
        %303 = vmatprep.subr.bf16.mxu0 0
        %304 = vmatpush1.bf16.msra.mxu0 0
        %305 = vmatprep.subr.bf16.mxu0 0
        %306 = vmatpush1.bf16.msra.mxu0 0
        %307 = vmatprep.subr.bf16.mxu0 0
        %308 = vmatpush1.bf16.msra.mxu0 0
        %309 = vmatprep.subr.bf16.mxu0 0
        %310 = vmatpush1.bf16.msra.mxu0 0
        %311 = vmatprep.subr.bf16.mxu0 0
        %312 = vmatpush1.bf16.msra.mxu0 0
        %313 = vmatprep.subr.bf16.mxu0 0
        %314 = vmatpush1.bf16.msra.mxu0 0
        %315 = vmatprep.subr.bf16.mxu0 0
        %316 = vmatpush1.bf16.msra.mxu0 %v299
        %317 = vmatprep.subr.bf16.mxu0 0
        %318 = vmatpush2.bf16.msra.mxu0 0
        %319 = vmatprep.subr.bf16.mxu0 0
        %320 = vmatpush2.bf16.msra.mxu0 0
        %321 = vmatprep.subr.bf16.mxu0 0
        %322 = vmatpush2.bf16.msra.mxu0 0
        %323 = vmatprep.subr.bf16.mxu0 0
        %324 = vmatpush2.bf16.msra.mxu0 0
        %325 = vmatprep.subr.bf16.mxu0 0
        %326 = vmatpush2.bf16.msra.mxu0 0
        %327 = vmatprep.subr.bf16.mxu0 0
        %328 = vmatpush2.bf16.msra.mxu0 0
        %329 = vmatprep.subr.bf16.mxu0 0
        %330 = vmatpush2.bf16.msra.mxu0 0
        %331 = vmatprep.subr.bf16.mxu0 0
        %332 = vmatpush2.bf16.msra.mxu0 0
        %333 = vmatprep.mubr.bf16.mxu0 0
        %334 = vmatmul.mubr.bf16.gmra.mxu0 %v295
        %v335 = vpop.f32.mrf.mxu0
        %v336 = vadd.f32 0.0, %v335
        %v337 = vpop.f32.mrf.mxu0
        %v338 = vpop.f32.mrf.mxu0
        %v339 = vpop.f32.mrf.mxu0
        %340 = vdwg.mxu0
        %v342 = vsel %vm293, %v285, 0
        %v345 = vsel %vm297, %v286, 0
        %347 = vmatprep.subr.bf16.mxu0 0
        %348 = vmatpush1.bf16.msra.mxu0 0
        %349 = vmatprep.subr.bf16.mxu0 0
        %350 = vmatpush1.bf16.msra.mxu0 0
        %351 = vmatprep.subr.bf16.mxu0 0
        %352 = vmatpush1.bf16.msra.mxu0 0
        %353 = vmatprep.subr.bf16.mxu0 0
        %354 = vmatpush1.bf16.msra.mxu0 0
        %355 = vmatprep.subr.bf16.mxu0 0
        %356 = vmatpush1.bf16.msra.mxu0 0
        %357 = vmatprep.subr.bf16.mxu0 0
        %358 = vmatpush1.bf16.msra.mxu0 0
        %359 = vmatprep.subr.bf16.mxu0 0
        %360 = vmatpush1.bf16.msra.mxu0 0
        %361 = vmatprep.subr.bf16.mxu0 0
        %362 = vmatpush1.bf16.msra.mxu0 %v345
        %363 = vmatprep.subr.bf16.mxu0 0
        %364 = vmatpush2.bf16.msra.mxu0 0
        %365 = vmatprep.subr.bf16.mxu0 0
        %366 = vmatpush2.bf16.msra.mxu0 0
        %367 = vmatprep.subr.bf16.mxu0 0
        %368 = vmatpush2.bf16.msra.mxu0 0
        %369 = vmatprep.subr.bf16.mxu0 0
        %370 = vmatpush2.bf16.msra.mxu0 0
        %371 = vmatprep.subr.bf16.mxu0 0
        %372 = vmatpush2.bf16.msra.mxu0 0
        %373 = vmatprep.subr.bf16.mxu0 0
        %374 = vmatpush2.bf16.msra.mxu0 0
        %375 = vmatprep.subr.bf16.mxu0 0
        %376 = vmatpush2.bf16.msra.mxu0 0
        %377 = vmatprep.subr.bf16.mxu0 0
        %378 = vmatpush2.bf16.msra.mxu0 0
        %379 = vmatprep.mubr.bf16.mxu0 0
        %380 = vmatmul.mubr.bf16.gmra.mxu0 %v342
        %v381 = vpop.f32.mrf.mxu0
        %v382 = vadd.f32 %v336, %v381
        %v383 = vpop.f32.mrf.mxu0
        %v384 = vpop.f32.mrf.mxu0
        %v385 = vpop.f32.mrf.mxu0
        %386 = vdwg.mxu0
        %s387 = smul.addr %s278, 4
        %s388 = scalar_lea.vmem %s264, %s387
        %v389 = vld [vmem:[%s388] sm:$0x7]
        %s390 = scalar_lea.vmem %s2, 4
        %v391 = vld [vmem:[%s390] sm:$0x3]
        %v393 = vsel %vm293, %v389, 0
        %v396 = vsel %vm297, %v391, 0
        %398 = vmatprep.subr.bf16.mxu0 0
        %399 = vmatpush1.bf16.msra.mxu0 0
        %400 = vmatprep.subr.bf16.mxu0 0
        %401 = vmatpush1.bf16.msra.mxu0 0
        %402 = vmatprep.subr.bf16.mxu0 0
        %403 = vmatpush1.bf16.msra.mxu0 0
        %404 = vmatprep.subr.bf16.mxu0 0
        %405 = vmatpush1.bf16.msra.mxu0 0
        %406 = vmatprep.subr.bf16.mxu0 0
        %407 = vmatpush1.bf16.msra.mxu0 0
        %408 = vmatprep.subr.bf16.mxu0 0
        %409 = vmatpush1.bf16.msra.mxu0 0
        %410 = vmatprep.subr.bf16.mxu0 0
        %411 = vmatpush1.bf16.msra.mxu0 0
        %412 = vmatprep.subr.bf16.mxu0 0
        %413 = vmatpush1.bf16.msra.mxu0 %v396
        %414 = vmatprep.subr.bf16.mxu0 0
        %415 = vmatpush2.bf16.msra.mxu0 0
        %416 = vmatprep.subr.bf16.mxu0 0
        %417 = vmatpush2.bf16.msra.mxu0 0
        %418 = vmatprep.subr.bf16.mxu0 0
        %419 = vmatpush2.bf16.msra.mxu0 0
        %420 = vmatprep.subr.bf16.mxu0 0
        %421 = vmatpush2.bf16.msra.mxu0 0
        %422 = vmatprep.subr.bf16.mxu0 0
        %423 = vmatpush2.bf16.msra.mxu0 0
        %424 = vmatprep.subr.bf16.mxu0 0
        %425 = vmatpush2.bf16.msra.mxu0 0
        %426 = vmatprep.subr.bf16.mxu0 0
        %427 = vmatpush2.bf16.msra.mxu0 0
        %428 = vmatprep.subr.bf16.mxu0 0
        %429 = vmatpush2.bf16.msra.mxu0 0
        %430 = vmatprep.mubr.bf16.mxu0 0
        %431 = vmatmul.mubr.bf16.gmra.mxu0 %v393
        %v432 = vpop.f32.mrf.mxu0
        %v433 = vadd.f32 0.0, %v432
        %v434 = vpop.f32.mrf.mxu0
        %v435 = vpop.f32.mrf.mxu0
        %v436 = vpop.f32.mrf.mxu0
        %437 = vdwg.mxu0
        %v438 = vadd.f32 %v382, %v433
        %s439 = smul.addr %s287, 4
        %s440 = scalar_lea.vmem %s264, %s439
        %v441 = vld [vmem:[%s440] sm:$0x7]
        %s442 = scalar_lea.vmem %s2, 6
        %v443 = vld [vmem:[%s442] sm:$0x3]
        %v445 = vsel %vm293, %v441, 0
        %v448 = vsel %vm297, %v443, 0
        %450 = vmatprep.subr.bf16.mxu0 0
        %451 = vmatpush1.bf16.msra.mxu0 0
        %452 = vmatprep.subr.bf16.mxu0 0
        %453 = vmatpush1.bf16.msra.mxu0 0
        %454 = vmatprep.subr.bf16.mxu0 0
        %455 = vmatpush1.bf16.msra.mxu0 0
        %456 = vmatprep.subr.bf16.mxu0 0
        %457 = vmatpush1.bf16.msra.mxu0 0
        %458 = vmatprep.subr.bf16.mxu0 0
        %459 = vmatpush1.bf16.msra.mxu0 0
        %460 = vmatprep.subr.bf16.mxu0 0
        %461 = vmatpush1.bf16.msra.mxu0 0
        %462 = vmatprep.subr.bf16.mxu0 0
        %463 = vmatpush1.bf16.msra.mxu0 0
        %464 = vmatprep.subr.bf16.mxu0 0
        %465 = vmatpush1.bf16.msra.mxu0 %v448
        %466 = vmatprep.subr.bf16.mxu0 0
        %467 = vmatpush2.bf16.msra.mxu0 0
        %468 = vmatprep.subr.bf16.mxu0 0
        %469 = vmatpush2.bf16.msra.mxu0 0
        %470 = vmatprep.subr.bf16.mxu0 0
        %471 = vmatpush2.bf16.msra.mxu0 0
        %472 = vmatprep.subr.bf16.mxu0 0
        %473 = vmatpush2.bf16.msra.mxu0 0
        %474 = vmatprep.subr.bf16.mxu0 0
        %475 = vmatpush2.bf16.msra.mxu0 0
        %476 = vmatprep.subr.bf16.mxu0 0
        %477 = vmatpush2.bf16.msra.mxu0 0
        %478 = vmatprep.subr.bf16.mxu0 0
        %479 = vmatpush2.bf16.msra.mxu0 0
        %480 = vmatprep.subr.bf16.mxu0 0
        %481 = vmatpush2.bf16.msra.mxu0 0
        %482 = vmatprep.mubr.bf16.mxu0 0
        %483 = vmatmul.mubr.bf16.gmra.mxu0 %v445
        %v484 = vpop.f32.mrf.mxu0
        %v485 = vadd.f32 0.0, %v484
        %v486 = vpop.f32.mrf.mxu0
        %v487 = vpop.f32.mrf.mxu0
        %v488 = vpop.f32.mrf.mxu0
        %489 = vdwg.mxu0
        %v490 = vadd.f32 %v438, %v485
        %v492 = vlaneseq
        %v493 = vshrl.u32 %v492, 7
        %v494 = vsub.s32 0, %v493
        %v495 = vrot.slane %v276, %v494
        %v497 = vadd.f32 %v490, %v495
        %v498 = vpack.c.bf16 %v497, %v497
        %s499 = smul.addr %s278, 2
        %s500 = scalar_lea.vmem %s274, %s499
        %vm501 = vcmask 25600
        %502 = vst.msk [vmem:[%s500] sm:$0x3] %vm501, %v498
      $region41: #{decode_block_forward.18} parent=35 // loop_footer
        %s282 = sadd.s32 1, %s278
      $region42: #{decode_block_forward.18} parent=35 // loop_footer_branch
        %277 = sbr.rel target = $region38
      $region43: #{decode_block_forward.18} parent=35 // loop_exit
        _
      %p503 = scmp.lt.s32.totalorder %s19, 1
      %s504 = scalar_select %p503, %s19, 1
      %p505 = scmp.lt.s32.totalorder %s20, 3
      %s506 = scalar_select %p505, %s20, 3
      %s507 = smul.addr %s506, 4
      %s508 = smul.addr %s504, 16
      %s509 = sadd.s32 %s507, %s508
      %s510 = smul.addr %s509, 2
      %s511 = scalar_lea.vmem %s4, %s510
      // Predicated region
      $region44: #{decode_block_forward.18} parent=35 // pred_check
        %p512 = pneg %p147
      $region45: #{decode_block_forward.18} parent=35 // pred_check_branch
        %514 = sbr.rel (%p512) target = $region47
      $region46: #{decode_block_forward.18} parent=35 // pred_region
        _
      $region47: #{decode_block_forward.18} parent=35 // pred_fallthru
        _
    $region36: #{decode_block_forward.18} parent=5 // pred_fallthru
      _
    %p515 = scmp.le.s32.totalorder 2, %s10
    // Predicated region
    $region48: #{decode_block_forward.18} parent=5 // pred_check
      %p516 = pneg %p515
    $region49: #{decode_block_forward.18} parent=5 // pred_check_branch
      %518 = sbr.rel (%p516) target = $region51
    $region50: #{decode_block_forward.18} parent=5 // pred_region
      %s519 = ssub.s32 %s10, 2
      // Predicated region
      $region52: #{decode_block_forward.18} parent=50 // pred_check
        %p520 = pneg %p153
      $region53: #{decode_block_forward.18} parent=50 // pred_check_branch
        %522 = sbr.rel (%p520) target = $region55
      $region54: #{decode_block_forward.18} parent=50 // pred_region
        %p523 = scmp.lt.s32.totalorder %s21, 1
        %s524 = scalar_select %p523, %s21, 1
        %p525 = scmp.lt.s32.totalorder %s22, 3
        %s526 = scalar_select %p525, %s22, 3
        %s527 = smul.addr %s526, 4
        %s528 = smul.addr %s524, 16
        %s529 = sadd.s32 %s527, %s528
        %s530 = smul.addr %s529, 2
        %s531 = scalar_lea.vmem %s4, %s530
      $region55: #{decode_block_forward.18} parent=50 // pred_fallthru
        _
    $region51: #{decode_block_forward.18} parent=5 // pred_fallthru
      _
  $region6: #{decode_block_forward.18} parent=0 // loop_footer
    %s14 = sadd.s32 1, %s10
  $region7: #{decode_block_forward.18} parent=0 // loop_footer_branch
    %9 = sbr.rel target = $region3
  $region8: #{decode_block_forward.18} parent=0 // loop_exit
    _

// kernel: decode_block_forward.19
$region0: #{decode_block_forward.19}
  #allocation0 [shape = 'u32[]', space=smem, size = 0x4, offset = 0x4, fixed_abs, tag = 'smem constant byte address 0x4 - core index']
  #allocation1 [shape = 'u32[144,128]{1,0:T(1,128)}', space=vmem, size = 0x12000, scoped, tag = 'internal scratch']
  %s0 = inlined_call_operand.vmem [shape: bf16[2,5,5,5,4], index: 0, kind: input, shape index: {}, may-alias: {0,1}]
  %s1 = inlined_call_operand.vmem [shape: bf16[2,5,5,5,4], index: 1, kind: input, shape index: {}, may-alias: {0,1}]
  %s2 = inlined_call_operand.vmem [shape: bf16[8,4,4], index: 2, kind: input, shape index: {}]
  %s3 = inlined_call_operand.vmem [shape: f32[1,4], index: 3, kind: input, shape index: {}]
  %s4 = inlined_call_operand.vmem [shape: bf16[2,4,4,4,4], index: 4, kind: output, shape index: {}]
  %s5 = sld [smem:[#allocation0]]
  $region56: #{decode_block_forward.19} parent=0
    _
  %s7 = ssub.s32 1, %s5
  %s8 = scalar_select 0, %s7, %s5
  loop: start=0, step=1, limit=10
  $region2: #{decode_block_forward.19} parent=0 // loop_pre_header
    _
  $region3: #{decode_block_forward.19} parent=0 // loop_header
    %s10 = sphi 0, %s14
    %p11 = scmp.ge.s32.totalorder %s10, 10
    %s17 = sphi 0, %s29
    %s18 = sphi 0, %s25
    %s19 = sphi 0, %s17
    %s20 = sphi 0, %s18
    %s21 = sphi 0, %s19
    %s22 = sphi 0, %s20
    %s34 = sphi 0, %s36
    %s37 = sphi 0, %s34
    %s38 = sphi 0, %s37
    %s54 = sphi 0, %s38
    %s64 = sphi 0, %s66
    %s67 = sphi 0, %s64
    %s68 = sphi 0, %s67
    %s84 = sphi 0, %s68
    %s88 = sphi 0, %s88
    %s90 = sphi 0, %s88
    %s91 = sphi 0, %s90
    %s105 = sphi 0, %s91
    %s109 = sphi 0, %s109
    %s111 = sphi 0, %s109
    %s112 = sphi 0, %s111
    %s126 = sphi 0, %s112
    %s134 = sphi 0, %s136
    %s137 = sphi 0, %s134
    %s138 = sphi 0, %s137
    %s154 = sphi 0, %s138
  $region4: #{decode_block_forward.19} parent=0 // loop_header_branch
    %13 = sbr.rel (%p11) target = $region8
  $region5: #{decode_block_forward.19} parent=0 // loop_body
    %s15 = ssub.s32 %s10, 1
    %s16 = ssub.s32 %s10, 2
    %s23 = sadd.s32 1, %s18
    %p24 = scmp.ge.s32.totalorder %s23, 4
    %s25 = scalar_select %p24, 0, %s23
    %s26 = sadd.s32 1, %s17
    %s27 = scalar_select %p24, %s26, %s17
    %p28 = scmp.ge.s32.totalorder %s27, 2
    %s29 = scalar_select %p28, 0, %s27
    %s30 = ssub.s32 %s17, %s29
    %s31 = ssub.s32 %s18, %s25
    %s32 = sor.u32 %s30, %s31
    %p33 = scmp.eq.s32.totalorder %s32, 0
    %s35 = sadd.s32 %s34, 1
    %s36 = scalar_select %p33, %s34, %s35
    %p39 = pneg %p33
    %p40 = scmp.eq.s32.totalorder %s10, 7
    %p41 = por %p39, %p40
    %p42 = scmp.ne.s32.totalorder %s34, %s37
    %p43 = scmp.eq.s32.totalorder %s10, 0
    %p44 = por %p42, %p43
    %p45 = scmp.ne.s32.totalorder %s34, %s37
    %p46 = scmp.eq.s32.totalorder %s15, 7
    %p47 = por %p45, %p46
    %p48 = scmp.ne.s32.totalorder %s37, %s38
    %p49 = scmp.eq.s32.totalorder %s15, 0
    %p50 = por %p48, %p49
    %p51 = scmp.ne.s32.totalorder %s37, %s38
    %p52 = scmp.eq.s32.totalorder %s16, 7
    %p53 = por %p51, %p52
    %p55 = scmp.ne.s32.totalorder %s38, %s54
    %p56 = scmp.eq.s32.totalorder %s16, 0
    %p57 = por %p55, %p56
    %s58 = sadd.s32 %s18, 1
    %s59 = sadd.s32 %s25, 1
    %s60 = ssub.s32 %s17, %s29
    %s61 = ssub.s32 %s58, %s59
    %s62 = sor.u32 %s60, %s61
    %p63 = scmp.eq.s32.totalorder %s62, 0
    %s65 = sadd.s32 %s64, 1
    %s66 = scalar_select %p63, %s64, %s65
    %p69 = pneg %p63
    %p70 = scmp.eq.s32.totalorder %s10, 7
    %p71 = por %p69, %p70
    %p72 = scmp.ne.s32.totalorder %s64, %s67
    %p73 = scmp.eq.s32.totalorder %s10, 0
    %p74 = por %p72, %p73
    %p75 = scmp.ne.s32.totalorder %s64, %s67
    %p76 = scmp.eq.s32.totalorder %s15, 7
    %p77 = por %p75, %p76
    %p78 = scmp.ne.s32.totalorder %s67, %s68
    %p79 = scmp.eq.s32.totalorder %s15, 0
    %p80 = por %p78, %p79
    %p81 = scmp.ne.s32.totalorder %s67, %s68
    %p82 = scmp.eq.s32.totalorder %s16, 7
    %p83 = por %p81, %p82
    %p85 = scmp.ne.s32.totalorder %s68, %s84
    %p86 = scmp.eq.s32.totalorder %s16, 0
    %p87 = por %p85, %p86
    %s89 = sadd.s32 %s88, 1
    %p92 = scmp.eq.s32.totalorder %s10, 7
    %p93 = scmp.ne.s32.totalorder %s88, %s90
    %p94 = scmp.eq.s32.totalorder %s10, 0
    %p95 = por %p93, %p94
    %p96 = scmp.ne.s32.totalorder %s88, %s90
    %p97 = scmp.eq.s32.totalorder %s15, 7
    %p98 = por %p96, %p97
    %p99 = scmp.ne.s32.totalorder %s90, %s91
    %p100 = scmp.eq.s32.totalorder %s15, 0
    %p101 = por %p99, %p100
    %p102 = scmp.ne.s32.totalorder %s90, %s91
    %p103 = scmp.eq.s32.totalorder %s16, 7
    %p104 = por %p102, %p103
    %p106 = scmp.ne.s32.totalorder %s91, %s105
    %p107 = scmp.eq.s32.totalorder %s16, 0
    %p108 = por %p106, %p107
    %s110 = sadd.s32 %s109, 1
    %p113 = scmp.eq.s32.totalorder %s10, 7
    %p114 = scmp.ne.s32.totalorder %s109, %s111
    %p115 = scmp.eq.s32.totalorder %s10, 0
    %p116 = por %p114, %p115
    %p117 = scmp.ne.s32.totalorder %s109, %s111
    %p118 = scmp.eq.s32.totalorder %s15, 7
    %p119 = por %p117, %p118
    %p120 = scmp.ne.s32.totalorder %s111, %s112
    %p121 = scmp.eq.s32.totalorder %s15, 0
    %p122 = por %p120, %p121
    %p123 = scmp.ne.s32.totalorder %s111, %s112
    %p124 = scmp.eq.s32.totalorder %s16, 7
    %p125 = por %p123, %p124
    %p127 = scmp.ne.s32.totalorder %s112, %s126
    %p128 = scmp.eq.s32.totalorder %s16, 0
    %p129 = por %p127, %p128
    %s130 = ssub.s32 %s17, %s29
    %s131 = ssub.s32 %s18, %s25
    %s132 = sor.u32 %s130, %s131
    %p133 = scmp.eq.s32.totalorder %s132, 0
    %s135 = sadd.s32 %s134, 1
    %s136 = scalar_select %p133, %s134, %s135
    %p139 = pneg %p133
    %p140 = scmp.eq.s32.totalorder %s10, 7
    %p141 = por %p139, %p140
    %p142 = scmp.ne.s32.totalorder %s134, %s137
    %p143 = scmp.eq.s32.totalorder %s10, 0
    %p144 = por %p142, %p143
    %p145 = scmp.ne.s32.totalorder %s134, %s137
    %p146 = scmp.eq.s32.totalorder %s15, 7
    %p147 = por %p145, %p146
    %p148 = scmp.ne.s32.totalorder %s137, %s138
    %p149 = scmp.eq.s32.totalorder %s15, 0
    %p150 = por %p148, %p149
    %p151 = scmp.ne.s32.totalorder %s137, %s138
    %p152 = scmp.eq.s32.totalorder %s16, 7
    %p153 = por %p151, %p152
    %p155 = scmp.ne.s32.totalorder %s138, %s154
    %p156 = scmp.eq.s32.totalorder %s16, 0
    %p157 = por %p155, %p156
    %p158 = scmp.le.s32.totalorder 1, %s10
    %p159 = scmp.lt.s32.totalorder %s10, 9
    %p160 = pnand %p158, %p159
    %p161 = pneg %p160
    // Predicated region
    $region9: #{decode_block_forward.19} parent=5 // pred_check
      _
    $region10: #{decode_block_forward.19} parent=5 // pred_check_branch
      %163 = sbr.rel (%p160) target = $region12
    $region11: #{decode_block_forward.19} parent=5 // pred_region
      %s164 = ssub.s32 %s10, 1
      // Predicated region
      $region13: #{decode_block_forward.19} parent=11 // pred_check
        %p165 = pneg %p101
      $region14: #{decode_block_forward.19} parent=11 // pred_check_branch
        %167 = sbr.rel (%p165) target = $region16
      $region15: #{decode_block_forward.19} parent=11 // pred_region
        _
      $region16: #{decode_block_forward.19} parent=11 // pred_fallthru
        _
      // Predicated region
      $region17: #{decode_block_forward.19} parent=11 // pred_check
        %p168 = pneg %p122
      $region18: #{decode_block_forward.19} parent=11 // pred_check_branch
        %170 = sbr.rel (%p168) target = $region20
      $region19: #{decode_block_forward.19} parent=11 // pred_region
        _
      $region20: #{decode_block_forward.19} parent=11 // pred_fallthru
        _
    $region12: #{decode_block_forward.19} parent=5 // pred_fallthru
      _
    %p171 = scmp.lt.s32.totalorder %s10, 8
    // Predicated region
    $region21: #{decode_block_forward.19} parent=5 // pred_check
      %p172 = pneg %p171
    $region22: #{decode_block_forward.19} parent=5 // pred_check_branch
      %174 = sbr.rel (%p172) target = $region24
    $region23: #{decode_block_forward.19} parent=5 // pred_region
      // Predicated region
      $region25: #{decode_block_forward.19} parent=23 // pred_check
        %p175 = pneg %p44
      $region26: #{decode_block_forward.19} parent=23 // pred_check_branch
        %177 = sbr.rel (%p175) target = $region28
      $region27: #{decode_block_forward.19} parent=23 // pred_region
        %p178 = scmp.lt.s32.totalorder %s17, 1
        %s179 = scalar_select %p178, %s17, 1
        %p180 = scmp.lt.s32.totalorder %s18, 4
        %s181 = scalar_select %p180, %s18, 4
        %s182 = smul.addr %s181, 5
        %s183 = smul.addr %s179, 25
        %s184 = sadd.s32 %s182, %s183
        %s185 = smul.addr %s184, 4
        %s186 = scalar_lea.vmem %s0, %s185
      $region28: #{decode_block_forward.19} parent=23 // pred_fallthru
        _
      // Predicated region
      $region29: #{decode_block_forward.19} parent=23 // pred_check
        %p187 = pneg %p74
      $region30: #{decode_block_forward.19} parent=23 // pred_check_branch
        %189 = sbr.rel (%p187) target = $region32
      $region31: #{decode_block_forward.19} parent=23 // pred_region
        %s190 = sadd.s32 %s18, 1
        %p191 = scmp.lt.s32.totalorder %s17, 1
        %s192 = scalar_select %p191, %s17, 1
        %p193 = scmp.lt.s32.totalorder %s190, 4
        %s194 = scalar_select %p193, %s190, 4
        %s195 = smul.addr %s194, 5
        %s196 = smul.addr %s192, 25
        %s197 = sadd.s32 %s195, %s196
        %s198 = smul.addr %s197, 4
        %s199 = scalar_lea.vmem %s1, %s198
        %s200 = sadd.s32 %s18, 1
      $region32: #{decode_block_forward.19} parent=23 // pred_fallthru
        _
    $region24: #{decode_block_forward.19} parent=5 // pred_fallthru
      _
    %p201 = scmp.le.s32.totalorder 1, %s10
    %p202 = scmp.lt.s32.totalorder %s10, 9
    %p203 = pnand %p201, %p202
    %p204 = pneg %p203
    // Predicated region
    $region33: #{decode_block_forward.19} parent=5 // pred_check
      _
    $region34: #{decode_block_forward.19} parent=5 // pred_check_branch
      %206 = sbr.rel (%p203) target = $region36
    $region35: #{decode_block_forward.19} parent=5 // pred_region
      %s207 = ssub.s32 %s10, 1
      %p208 = scmp.lt.s32.totalorder %s19, 1
      %s209 = scalar_select %p208, %s19, 1
      %p210 = scmp.lt.s32.totalorder %s20, 4
      %s211 = scalar_select %p210, %s20, 4
      %s212 = smul.addr %s211, 5
      %s213 = smul.addr %s209, 25
      %s214 = sadd.s32 %s212, %s213
      %s215 = smul.addr %s214, 4
      %s216 = scalar_lea.vmem %s0, %s215
      %p217 = pneg %p50
      %p218 = pneg %p47
      %s219 = sadd.s32 %s20, 1
      %p220 = scmp.lt.s32.totalorder %s19, 1
      %s221 = scalar_select %p220, %s19, 1
      %p222 = scmp.lt.s32.totalorder %s219, 4
      %s223 = scalar_select %p222, %s219, 4
      %s224 = smul.addr %s223, 5
      %s225 = smul.addr %s221, 25
      %s226 = sadd.s32 %s224, %s225
      %s227 = smul.addr %s226, 4
      %s228 = scalar_lea.vmem %s1, %s227
      %p229 = pneg %p80
      %p230 = pneg %p77
      %p231 = pneg %p101
      %p232 = pneg %p98
      %p233 = pneg %p122
      %p234 = pneg %p119
      %p235 = pneg %p150
      %p236 = pneg %p147
      %p237 = scmp.lt.s32.totalorder %s19, 1
      %s238 = scalar_select %p237, %s19, 1
      %p239 = scmp.lt.s32.totalorder %s20, 3
      %s240 = scalar_select %p239, %s20, 3
      %s241 = smul.addr %s240, 4
      %s242 = smul.addr %s238, 16
      %s243 = sadd.s32 %s241, %s242
      %s244 = smul.addr %s243, 2
      %s245 = scalar_lea.vmem %s4, %s244
      %p246 = scmp.lt.s32.totalorder %s19, 1
      %s247 = scalar_select %p246, %s19, 1
      %p248 = scmp.lt.s32.totalorder %s20, 4
      %s249 = scalar_select %p248, %s20, 4
      %s250 = smul.addr %s249, 5
      %s251 = smul.addr %s247, 25
      %s252 = sadd.s32 %s250, %s251
      %s253 = smul.addr %s252, 4
      %s254 = scalar_lea.vmem %s0, %s253
      %s255 = sadd.s32 %s20, 1
      %p256 = scmp.lt.s32.totalorder %s19, 1
      %s257 = scalar_select %p256, %s19, 1
      %p258 = scmp.lt.s32.totalorder %s255, 4
      %s259 = scalar_select %p258, %s255, 4
      %s260 = smul.addr %s259, 5
      %s261 = smul.addr %s257, 25
      %s262 = sadd.s32 %s260, %s261
      %s263 = smul.addr %s262, 4
      %s264 = scalar_lea.vmem %s1, %s263
      %s265 = sadd.s32 %s20, 1
      %p266 = scmp.lt.s32.totalorder %s19, 1
      %s267 = scalar_select %p266, %s19, 1
      %p268 = scmp.lt.s32.totalorder %s20, 3
      %s269 = scalar_select %p268, %s20, 3
      %s270 = smul.addr %s269, 4
      %s271 = smul.addr %s267, 16
      %s272 = sadd.s32 %s270, %s271
      %s273 = smul.addr %s272, 2
      %s274 = scalar_lea.vmem %s4, %s273
      %v276 = vld [vmem:[%s3] sm:$0x1]
      loop: start=0, step=1, limit=4
      $region37: #{decode_block_forward.19} parent=35 // loop_pre_header
        _
      $region38: #{decode_block_forward.19} parent=35 // loop_header
        %s278 = sphi 0, %s282
        %p279 = scmp.ge.s32.totalorder %s278, 4
      $region39: #{decode_block_forward.19} parent=35 // loop_header_branch
        %281 = sbr.rel (%p279) target = $region43
      $region40: #{decode_block_forward.19} parent=35 // loop_body
        %s283 = smul.addr %s278, 4
        %s284 = scalar_lea.vmem %s254, %s283
        %v285 = vld [vmem:[%s284] sm:$0x7]
        %v286 = vld [vmem:[%s2] sm:$0x3]
        %s287 = scalar_lea.vmem %s2, 2
        %v288 = vld [vmem:[%s287] sm:$0x3]
        %v290 = vunpack.c.l.b16 %v285
        %v291 = vpack.c.b16 %v290, %v290
        %v293 = vshrl.u32 %v291, 16
        %v295 = vshll.u32 %v291, 16
        %v297 = vrot.slane %v295, 1
        %v298 = vor.u32 %v293, %v297
        %vm299 = vcmask 31744
        %v301 = vsel %vm299, %v298, 0
        %vm303 = vcmask 1041408
        %v305 = vsel %vm303, %v288, 0
        %307 = vmatprep.subr.bf16.mxu0 0
        %308 = vmatpush1.bf16.msra.mxu0 0
        %309 = vmatprep.subr.bf16.mxu0 0
        %310 = vmatpush1.bf16.msra.mxu0 0
        %311 = vmatprep.subr.bf16.mxu0 0
        %312 = vmatpush1.bf16.msra.mxu0 0
        %313 = vmatprep.subr.bf16.mxu0 0
        %314 = vmatpush1.bf16.msra.mxu0 0
        %315 = vmatprep.subr.bf16.mxu0 0
        %316 = vmatpush1.bf16.msra.mxu0 0
        %317 = vmatprep.subr.bf16.mxu0 0
        %318 = vmatpush1.bf16.msra.mxu0 0
        %319 = vmatprep.subr.bf16.mxu0 0
        %320 = vmatpush1.bf16.msra.mxu0 0
        %321 = vmatprep.subr.bf16.mxu0 0
        %322 = vmatpush1.bf16.msra.mxu0 %v305
        %323 = vmatprep.subr.bf16.mxu0 0
        %324 = vmatpush2.bf16.msra.mxu0 0
        %325 = vmatprep.subr.bf16.mxu0 0
        %326 = vmatpush2.bf16.msra.mxu0 0
        %327 = vmatprep.subr.bf16.mxu0 0
        %328 = vmatpush2.bf16.msra.mxu0 0
        %329 = vmatprep.subr.bf16.mxu0 0
        %330 = vmatpush2.bf16.msra.mxu0 0
        %331 = vmatprep.subr.bf16.mxu0 0
        %332 = vmatpush2.bf16.msra.mxu0 0
        %333 = vmatprep.subr.bf16.mxu0 0
        %334 = vmatpush2.bf16.msra.mxu0 0
        %335 = vmatprep.subr.bf16.mxu0 0
        %336 = vmatpush2.bf16.msra.mxu0 0
        %337 = vmatprep.subr.bf16.mxu0 0
        %338 = vmatpush2.bf16.msra.mxu0 0
        %339 = vmatprep.mubr.bf16.mxu0 0
        %340 = vmatmul.mubr.bf16.gmra.mxu0 %v301
        %v341 = vpop.f32.mrf.mxu0
        %v342 = vadd.f32 0.0, %v341
        %v343 = vpop.f32.mrf.mxu0
        %v344 = vpop.f32.mrf.mxu0
        %v345 = vpop.f32.mrf.mxu0
        %346 = vdwg.mxu0
        %v348 = vsel %vm299, %v285, 0
        %v351 = vsel %vm303, %v286, 0
        %353 = vmatprep.subr.bf16.mxu0 0
        %354 = vmatpush1.bf16.msra.mxu0 0
        %355 = vmatprep.subr.bf16.mxu0 0
        %356 = vmatpush1.bf16.msra.mxu0 0
        %357 = vmatprep.subr.bf16.mxu0 0
        %358 = vmatpush1.bf16.msra.mxu0 0
        %359 = vmatprep.subr.bf16.mxu0 0
        %360 = vmatpush1.bf16.msra.mxu0 0
        %361 = vmatprep.subr.bf16.mxu0 0
        %362 = vmatpush1.bf16.msra.mxu0 0
        %363 = vmatprep.subr.bf16.mxu0 0
        %364 = vmatpush1.bf16.msra.mxu0 0
        %365 = vmatprep.subr.bf16.mxu0 0
        %366 = vmatpush1.bf16.msra.mxu0 0
        %367 = vmatprep.subr.bf16.mxu0 0
        %368 = vmatpush1.bf16.msra.mxu0 %v351
        %369 = vmatprep.subr.bf16.mxu0 0
        %370 = vmatpush2.bf16.msra.mxu0 0
        %371 = vmatprep.subr.bf16.mxu0 0
        %372 = vmatpush2.bf16.msra.mxu0 0
        %373 = vmatprep.subr.bf16.mxu0 0
        %374 = vmatpush2.bf16.msra.mxu0 0
        %375 = vmatprep.subr.bf16.mxu0 0
        %376 = vmatpush2.bf16.msra.mxu0 0
        %377 = vmatprep.subr.bf16.mxu0 0
        %378 = vmatpush2.bf16.msra.mxu0 0
        %379 = vmatprep.subr.bf16.mxu0 0
        %380 = vmatpush2.bf16.msra.mxu0 0
        %381 = vmatprep.subr.bf16.mxu0 0
        %382 = vmatpush2.bf16.msra.mxu0 0
        %383 = vmatprep.subr.bf16.mxu0 0
        %384 = vmatpush2.bf16.msra.mxu0 0
        %385 = vmatprep.mubr.bf16.mxu0 0
        %386 = vmatmul.mubr.bf16.gmra.mxu0 %v348
        %v387 = vpop.f32.mrf.mxu0
        %v388 = vadd.f32 %v342, %v387
        %v389 = vpop.f32.mrf.mxu0
        %v390 = vpop.f32.mrf.mxu0
        %v391 = vpop.f32.mrf.mxu0
        %392 = vdwg.mxu0
        %s393 = sadd.s32 %s278, 1
        %s394 = smul.addr %s393, 4
        %s395 = scalar_lea.vmem %s254, %s394
        %v396 = vld [vmem:[%s395] sm:$0x7]
        %s397 = scalar_lea.vmem %s2, 4
        %v398 = vld [vmem:[%s397] sm:$0x3]
        %v400 = vsel %vm299, %v396, 0
        %v403 = vsel %vm303, %v398, 0
        %405 = vmatprep.subr.bf16.mxu0 0
        %406 = vmatpush1.bf16.msra.mxu0 0
        %407 = vmatprep.subr.bf16.mxu0 0
        %408 = vmatpush1.bf16.msra.mxu0 0
        %409 = vmatprep.subr.bf16.mxu0 0
        %410 = vmatpush1.bf16.msra.mxu0 0
        %411 = vmatprep.subr.bf16.mxu0 0
        %412 = vmatpush1.bf16.msra.mxu0 0
        %413 = vmatprep.subr.bf16.mxu0 0
        %414 = vmatpush1.bf16.msra.mxu0 0
        %415 = vmatprep.subr.bf16.mxu0 0
        %416 = vmatpush1.bf16.msra.mxu0 0
        %417 = vmatprep.subr.bf16.mxu0 0
        %418 = vmatpush1.bf16.msra.mxu0 0
        %419 = vmatprep.subr.bf16.mxu0 0
        %420 = vmatpush1.bf16.msra.mxu0 %v403
        %421 = vmatprep.subr.bf16.mxu0 0
        %422 = vmatpush2.bf16.msra.mxu0 0
        %423 = vmatprep.subr.bf16.mxu0 0
        %424 = vmatpush2.bf16.msra.mxu0 0
        %425 = vmatprep.subr.bf16.mxu0 0
        %426 = vmatpush2.bf16.msra.mxu0 0
        %427 = vmatprep.subr.bf16.mxu0 0
        %428 = vmatpush2.bf16.msra.mxu0 0
        %429 = vmatprep.subr.bf16.mxu0 0
        %430 = vmatpush2.bf16.msra.mxu0 0
        %431 = vmatprep.subr.bf16.mxu0 0
        %432 = vmatpush2.bf16.msra.mxu0 0
        %433 = vmatprep.subr.bf16.mxu0 0
        %434 = vmatpush2.bf16.msra.mxu0 0
        %435 = vmatprep.subr.bf16.mxu0 0
        %436 = vmatpush2.bf16.msra.mxu0 0
        %437 = vmatprep.mubr.bf16.mxu0 0
        %438 = vmatmul.mubr.bf16.gmra.mxu0 %v400
        %v439 = vpop.f32.mrf.mxu0
        %v440 = vadd.f32 0.0, %v439
        %v441 = vpop.f32.mrf.mxu0
        %v442 = vpop.f32.mrf.mxu0
        %v443 = vpop.f32.mrf.mxu0
        %444 = vdwg.mxu0
        %v445 = vadd.f32 %v388, %v440
        %s446 = scalar_lea.vmem %s2, 6
        %v447 = vld [vmem:[%s446] sm:$0x3]
        %v449 = vunpack.c.l.b16 %v396
        %v450 = vpack.c.b16 %v449, %v449
        %v452 = vshrl.u32 %v450, 16
        %v454 = vshll.u32 %v450, 16
        %v456 = vrot.slane %v454, 1
        %v457 = vor.u32 %v452, %v456
        %v459 = vsel %vm299, %v457, 0
        %v462 = vsel %vm303, %v447, 0
        %464 = vmatprep.subr.bf16.mxu0 0
        %465 = vmatpush1.bf16.msra.mxu0 0
        %466 = vmatprep.subr.bf16.mxu0 0
        %467 = vmatpush1.bf16.msra.mxu0 0
        %468 = vmatprep.subr.bf16.mxu0 0
        %469 = vmatpush1.bf16.msra.mxu0 0
        %470 = vmatprep.subr.bf16.mxu0 0
        %471 = vmatpush1.bf16.msra.mxu0 0
        %472 = vmatprep.subr.bf16.mxu0 0
        %473 = vmatpush1.bf16.msra.mxu0 0
        %474 = vmatprep.subr.bf16.mxu0 0
        %475 = vmatpush1.bf16.msra.mxu0 0
        %476 = vmatprep.subr.bf16.mxu0 0
        %477 = vmatpush1.bf16.msra.mxu0 0
        %478 = vmatprep.subr.bf16.mxu0 0
        %479 = vmatpush1.bf16.msra.mxu0 %v462
        %480 = vmatprep.subr.bf16.mxu0 0
        %481 = vmatpush2.bf16.msra.mxu0 0
        %482 = vmatprep.subr.bf16.mxu0 0
        %483 = vmatpush2.bf16.msra.mxu0 0
        %484 = vmatprep.subr.bf16.mxu0 0
        %485 = vmatpush2.bf16.msra.mxu0 0
        %486 = vmatprep.subr.bf16.mxu0 0
        %487 = vmatpush2.bf16.msra.mxu0 0
        %488 = vmatprep.subr.bf16.mxu0 0
        %489 = vmatpush2.bf16.msra.mxu0 0
        %490 = vmatprep.subr.bf16.mxu0 0
        %491 = vmatpush2.bf16.msra.mxu0 0
        %492 = vmatprep.subr.bf16.mxu0 0
        %493 = vmatpush2.bf16.msra.mxu0 0
        %494 = vmatprep.subr.bf16.mxu0 0
        %495 = vmatpush2.bf16.msra.mxu0 0
        %496 = vmatprep.mubr.bf16.mxu0 0
        %497 = vmatmul.mubr.bf16.gmra.mxu0 %v459
        %v498 = vpop.f32.mrf.mxu0
        %v499 = vadd.f32 0.0, %v498
        %v500 = vpop.f32.mrf.mxu0
        %v501 = vpop.f32.mrf.mxu0
        %v502 = vpop.f32.mrf.mxu0
        %503 = vdwg.mxu0
        %v504 = vadd.f32 %v445, %v499
        %s505 = smul.addr %s278, 4
        %s506 = scalar_lea.vmem %s264, %s505
        %v507 = vld [vmem:[%s506] sm:$0x7]
        %s508 = scalar_lea.vmem %s2, 8
        %v509 = vld [vmem:[%s508] sm:$0x3]
        %v511 = vsel %vm299, %v507, 0
        %v514 = vsel %vm303, %v509, 0
        %516 = vmatprep.subr.bf16.mxu0 0
        %517 = vmatpush1.bf16.msra.mxu0 0
        %518 = vmatprep.subr.bf16.mxu0 0
        %519 = vmatpush1.bf16.msra.mxu0 0
        %520 = vmatprep.subr.bf16.mxu0 0
        %521 = vmatpush1.bf16.msra.mxu0 0
        %522 = vmatprep.subr.bf16.mxu0 0
        %523 = vmatpush1.bf16.msra.mxu0 0
        %524 = vmatprep.subr.bf16.mxu0 0
        %525 = vmatpush1.bf16.msra.mxu0 0
        %526 = vmatprep.subr.bf16.mxu0 0
        %527 = vmatpush1.bf16.msra.mxu0 0
        %528 = vmatprep.subr.bf16.mxu0 0
        %529 = vmatpush1.bf16.msra.mxu0 0
        %530 = vmatprep.subr.bf16.mxu0 0
        %531 = vmatpush1.bf16.msra.mxu0 %v514
        %532 = vmatprep.subr.bf16.mxu0 0
        %533 = vmatpush2.bf16.msra.mxu0 0
        %534 = vmatprep.subr.bf16.mxu0 0
        %535 = vmatpush2.bf16.msra.mxu0 0
        %536 = vmatprep.subr.bf16.mxu0 0
        %537 = vmatpush2.bf16.msra.mxu0 0
        %538 = vmatprep.subr.bf16.mxu0 0
        %539 = vmatpush2.bf16.msra.mxu0 0
        %540 = vmatprep.subr.bf16.mxu0 0
        %541 = vmatpush2.bf16.msra.mxu0 0
        %542 = vmatprep.subr.bf16.mxu0 0
        %543 = vmatpush2.bf16.msra.mxu0 0
        %544 = vmatprep.subr.bf16.mxu0 0
        %545 = vmatpush2.bf16.msra.mxu0 0
        %546 = vmatprep.subr.bf16.mxu0 0
        %547 = vmatpush2.bf16.msra.mxu0 0
        %548 = vmatprep.mubr.bf16.mxu0 0
        %549 = vmatmul.mubr.bf16.gmra.mxu0 %v511
        %v550 = vpop.f32.mrf.mxu0
        %v551 = vadd.f32 0.0, %v550
        %v552 = vpop.f32.mrf.mxu0
        %v553 = vpop.f32.mrf.mxu0
        %v554 = vpop.f32.mrf.mxu0
        %555 = vdwg.mxu0
        %v556 = vadd.f32 %v504, %v551
        %s557 = scalar_lea.vmem %s2, 10
        %v558 = vld [vmem:[%s557] sm:$0x3]
        %v560 = vunpack.c.l.b16 %v507
        %v561 = vpack.c.b16 %v560, %v560
        %v563 = vshrl.u32 %v561, 16
        %v565 = vshll.u32 %v561, 16
        %v567 = vrot.slane %v565, 1
        %v568 = vor.u32 %v563, %v567
        %v570 = vsel %vm299, %v568, 0
        %v573 = vsel %vm303, %v558, 0
        %575 = vmatprep.subr.bf16.mxu0 0
        %576 = vmatpush1.bf16.msra.mxu0 0
        %577 = vmatprep.subr.bf16.mxu0 0
        %578 = vmatpush1.bf16.msra.mxu0 0
        %579 = vmatprep.subr.bf16.mxu0 0
        %580 = vmatpush1.bf16.msra.mxu0 0
        %581 = vmatprep.subr.bf16.mxu0 0
        %582 = vmatpush1.bf16.msra.mxu0 0
        %583 = vmatprep.subr.bf16.mxu0 0
        %584 = vmatpush1.bf16.msra.mxu0 0
        %585 = vmatprep.subr.bf16.mxu0 0
        %586 = vmatpush1.bf16.msra.mxu0 0
        %587 = vmatprep.subr.bf16.mxu0 0
        %588 = vmatpush1.bf16.msra.mxu0 0
        %589 = vmatprep.subr.bf16.mxu0 0
        %590 = vmatpush1.bf16.msra.mxu0 %v573
        %591 = vmatprep.subr.bf16.mxu0 0
        %592 = vmatpush2.bf16.msra.mxu0 0
        %593 = vmatprep.subr.bf16.mxu0 0
        %594 = vmatpush2.bf16.msra.mxu0 0
        %595 = vmatprep.subr.bf16.mxu0 0
        %596 = vmatpush2.bf16.msra.mxu0 0
        %597 = vmatprep.subr.bf16.mxu0 0
        %598 = vmatpush2.bf16.msra.mxu0 0
        %599 = vmatprep.subr.bf16.mxu0 0
        %600 = vmatpush2.bf16.msra.mxu0 0
        %601 = vmatprep.subr.bf16.mxu0 0
        %602 = vmatpush2.bf16.msra.mxu0 0
        %603 = vmatprep.subr.bf16.mxu0 0
        %604 = vmatpush2.bf16.msra.mxu0 0
        %605 = vmatprep.subr.bf16.mxu0 0
        %606 = vmatpush2.bf16.msra.mxu0 0
        %607 = vmatprep.mubr.bf16.mxu0 0
        %608 = vmatmul.mubr.bf16.gmra.mxu0 %v570
        %v609 = vpop.f32.mrf.mxu0
        %v610 = vadd.f32 0.0, %v609
        %v611 = vpop.f32.mrf.mxu0
        %v612 = vpop.f32.mrf.mxu0
        %v613 = vpop.f32.mrf.mxu0
        %614 = vdwg.mxu0
        %v615 = vadd.f32 %v556, %v610
        %s616 = smul.addr %s393, 4
        %s617 = scalar_lea.vmem %s264, %s616
        %v618 = vld [vmem:[%s617] sm:$0x7]
        %s619 = scalar_lea.vmem %s2, 12
        %v620 = vld [vmem:[%s619] sm:$0x3]
        %v622 = vsel %vm299, %v618, 0
        %v625 = vsel %vm303, %v620, 0
        %627 = vmatprep.subr.bf16.mxu0 0
        %628 = vmatpush1.bf16.msra.mxu0 0
        %629 = vmatprep.subr.bf16.mxu0 0
        %630 = vmatpush1.bf16.msra.mxu0 0
        %631 = vmatprep.subr.bf16.mxu0 0
        %632 = vmatpush1.bf16.msra.mxu0 0
        %633 = vmatprep.subr.bf16.mxu0 0
        %634 = vmatpush1.bf16.msra.mxu0 0
        %635 = vmatprep.subr.bf16.mxu0 0
        %636 = vmatpush1.bf16.msra.mxu0 0
        %637 = vmatprep.subr.bf16.mxu0 0
        %638 = vmatpush1.bf16.msra.mxu0 0
        %639 = vmatprep.subr.bf16.mxu0 0
        %640 = vmatpush1.bf16.msra.mxu0 0
        %641 = vmatprep.subr.bf16.mxu0 0
        %642 = vmatpush1.bf16.msra.mxu0 %v625
        %643 = vmatprep.subr.bf16.mxu0 0
        %644 = vmatpush2.bf16.msra.mxu0 0
        %645 = vmatprep.subr.bf16.mxu0 0
        %646 = vmatpush2.bf16.msra.mxu0 0
        %647 = vmatprep.subr.bf16.mxu0 0
        %648 = vmatpush2.bf16.msra.mxu0 0
        %649 = vmatprep.subr.bf16.mxu0 0
        %650 = vmatpush2.bf16.msra.mxu0 0
        %651 = vmatprep.subr.bf16.mxu0 0
        %652 = vmatpush2.bf16.msra.mxu0 0
        %653 = vmatprep.subr.bf16.mxu0 0
        %654 = vmatpush2.bf16.msra.mxu0 0
        %655 = vmatprep.subr.bf16.mxu0 0
        %656 = vmatpush2.bf16.msra.mxu0 0
        %657 = vmatprep.subr.bf16.mxu0 0
        %658 = vmatpush2.bf16.msra.mxu0 0
        %659 = vmatprep.mubr.bf16.mxu0 0
        %660 = vmatmul.mubr.bf16.gmra.mxu0 %v622
        %v661 = vpop.f32.mrf.mxu0
        %v662 = vadd.f32 0.0, %v661
        %v663 = vpop.f32.mrf.mxu0
        %v664 = vpop.f32.mrf.mxu0
        %v665 = vpop.f32.mrf.mxu0
        %666 = vdwg.mxu0
        %v667 = vadd.f32 %v615, %v662
        %s668 = scalar_lea.vmem %s2, 14
        %v669 = vld [vmem:[%s668] sm:$0x3]
        %v671 = vunpack.c.l.b16 %v618
        %v672 = vpack.c.b16 %v671, %v671
        %v674 = vshrl.u32 %v672, 16
        %v676 = vshll.u32 %v672, 16
        %v678 = vrot.slane %v676, 1
        %v679 = vor.u32 %v674, %v678
        %v681 = vsel %vm299, %v679, 0
        %v684 = vsel %vm303, %v669, 0
        %686 = vmatprep.subr.bf16.mxu0 0
        %687 = vmatpush1.bf16.msra.mxu0 0
        %688 = vmatprep.subr.bf16.mxu0 0
        %689 = vmatpush1.bf16.msra.mxu0 0
        %690 = vmatprep.subr.bf16.mxu0 0
        %691 = vmatpush1.bf16.msra.mxu0 0
        %692 = vmatprep.subr.bf16.mxu0 0
        %693 = vmatpush1.bf16.msra.mxu0 0
        %694 = vmatprep.subr.bf16.mxu0 0
        %695 = vmatpush1.bf16.msra.mxu0 0
        %696 = vmatprep.subr.bf16.mxu0 0
        %697 = vmatpush1.bf16.msra.mxu0 0
        %698 = vmatprep.subr.bf16.mxu0 0
        %699 = vmatpush1.bf16.msra.mxu0 0
        %700 = vmatprep.subr.bf16.mxu0 0
        %701 = vmatpush1.bf16.msra.mxu0 %v684
        %702 = vmatprep.subr.bf16.mxu0 0
        %703 = vmatpush2.bf16.msra.mxu0 0
        %704 = vmatprep.subr.bf16.mxu0 0
        %705 = vmatpush2.bf16.msra.mxu0 0
        %706 = vmatprep.subr.bf16.mxu0 0
        %707 = vmatpush2.bf16.msra.mxu0 0
        %708 = vmatprep.subr.bf16.mxu0 0
        %709 = vmatpush2.bf16.msra.mxu0 0
        %710 = vmatprep.subr.bf16.mxu0 0
        %711 = vmatpush2.bf16.msra.mxu0 0
        %712 = vmatprep.subr.bf16.mxu0 0
        %713 = vmatpush2.bf16.msra.mxu0 0
        %714 = vmatprep.subr.bf16.mxu0 0
        %715 = vmatpush2.bf16.msra.mxu0 0
        %716 = vmatprep.subr.bf16.mxu0 0
        %717 = vmatpush2.bf16.msra.mxu0 0
        %718 = vmatprep.mubr.bf16.mxu0 0
        %719 = vmatmul.mubr.bf16.gmra.mxu0 %v681
        %v720 = vpop.f32.mrf.mxu0
        %v721 = vadd.f32 0.0, %v720
        %v722 = vpop.f32.mrf.mxu0
        %v723 = vpop.f32.mrf.mxu0
        %v724 = vpop.f32.mrf.mxu0
        %725 = vdwg.mxu0
        %v726 = vadd.f32 %v667, %v721
        %v728 = vlaneseq
        %v729 = vshrl.u32 %v728, 7
        %v730 = vsub.s32 0, %v729
        %v731 = vrot.slane %v276, %v730
        %v733 = vadd.f32 %v726, %v731
        %v734 = vpack.c.bf16 %v733, %v733
        %s735 = smul.addr %s278, 2
        %s736 = scalar_lea.vmem %s274, %s735
        %vm737 = vcmask 25600
        %738 = vst.msk [vmem:[%s736] sm:$0x3] %vm737, %v734
      $region41: #{decode_block_forward.19} parent=35 // loop_footer
        %s282 = sadd.s32 1, %s278
      $region42: #{decode_block_forward.19} parent=35 // loop_footer_branch
        %277 = sbr.rel target = $region38
      $region43: #{decode_block_forward.19} parent=35 // loop_exit
        _
      %p739 = scmp.lt.s32.totalorder %s19, 1
      %s740 = scalar_select %p739, %s19, 1
      %p741 = scmp.lt.s32.totalorder %s20, 3
      %s742 = scalar_select %p741, %s20, 3
      %s743 = smul.addr %s742, 4
      %s744 = smul.addr %s740, 16
      %s745 = sadd.s32 %s743, %s744
      %s746 = smul.addr %s745, 2
      %s747 = scalar_lea.vmem %s4, %s746
      // Predicated region
      $region44: #{decode_block_forward.19} parent=35 // pred_check
        %p748 = pneg %p147
      $region45: #{decode_block_forward.19} parent=35 // pred_check_branch
        %750 = sbr.rel (%p748) target = $region47
      $region46: #{decode_block_forward.19} parent=35 // pred_region
        _
      $region47: #{decode_block_forward.19} parent=35 // pred_fallthru
        _
    $region36: #{decode_block_forward.19} parent=5 // pred_fallthru
      _
    %p751 = scmp.le.s32.totalorder 2, %s10
    // Predicated region
    $region48: #{decode_block_forward.19} parent=5 // pred_check
      %p752 = pneg %p751
    $region49: #{decode_block_forward.19} parent=5 // pred_check_branch
      %754 = sbr.rel (%p752) target = $region51
    $region50: #{decode_block_forward.19} parent=5 // pred_region
      %s755 = ssub.s32 %s10, 2
      // Predicated region
      $region52: #{decode_block_forward.19} parent=50 // pred_check
        %p756 = pneg %p153
      $region53: #{decode_block_forward.19} parent=50 // pred_check_branch
        %758 = sbr.rel (%p756) target = $region55
      $region54: #{decode_block_forward.19} parent=50 // pred_region
        %p759 = scmp.lt.s32.totalorder %s21, 1
        %s760 = scalar_select %p759, %s21, 1
        %p761 = scmp.lt.s32.totalorder %s22, 3
        %s762 = scalar_select %p761, %s22, 3
        %s763 = smul.addr %s762, 4
        %s764 = smul.addr %s760, 16
        %s765 = sadd.s32 %s763, %s764
        %s766 = smul.addr %s765, 2
        %s767 = scalar_lea.vmem %s4, %s766
      $region55: #{decode_block_forward.19} parent=50 // pred_fallthru
        _
    $region51: #{decode_block_forward.19} parent=5 // pred_fallthru
      _
  $region6: #{decode_block_forward.19} parent=0 // loop_footer
    %s14 = sadd.s32 1, %s10
  $region7: #{decode_block_forward.19} parent=0 // loop_footer_branch
    %9 = sbr.rel target = $region3
  $region8: #{decode_block_forward.19} parent=0 // loop_exit
    _

// kernel: tile.23
$region0: #{tile.23}
  #allocation0 [shape = 's32[1]{0}', space=sflag, size = 0x4, scoped, tag = 'scoped memory for tile.23']
  %s0 = inlined_call_operand.vmem [shape: f32[8], index: 0, kind: input, shape index: {}]
  %s1 = inlined_call_operand.vmem [shape: f32[8,8], index: 1, kind: output, shape index: {}]
  // Predicated region
  $region2: #{tile.23} parent=0 // pred_check
    _
  $region3: #{tile.23} parent=0 // pred_check_branch
    %3 = sbr.rel (0) target = $region5
  $region4: #{tile.23} parent=0 // pred_region
    _
  $region5: #{tile.23} parent=0 // pred_fallthru
    _
  %v4 = vld [vmem:[%s0] ss:$0 sm:$0xff]
  %5 = vst [vmem:[%s1] sm:$0xff] %v4

// kernel: tile.24
$region0: #{tile.24}
  %s0 = inlined_call_operand.vmem [shape: f32[8,8], index: 0, kind: input, shape index: {}]
  %s1 = inlined_call_operand.vmem [shape: f32[1,64], index: 1, kind: output, shape index: {}]
  $region1: #{tile.24} parent=0
    #allocation0 [shape = 'u8[4096]{0}', space=vmem, size = 0x1000, scoped, tag = 'scoped mem for output reshape']
    %v2 = vld [vmem:[%s0] sm:$0x1]
    %vm3 = vcmask 64512
    %4 = vst.msk [vmem:[#allocation0] sm:$0x1] %vm3, %v2
    %s5 = scalar_lea.vmem %s0, 7
    %v6 = vld [vmem:[%s5] sm:$0x1]
    %7 = vrot.lane.b32.xlu0 %v6, 56
    %v8 = vpop.permute.xlu0 %7
    %vm9 = vcmask 523712
    %10 = vst.msk [vmem:[#allocation0] sm:$0x1] %vm9, %v8
    %s11 = scalar_lea.vmem %s0, 6
    %v12 = vld [vmem:[%s11] sm:$0x1]
    %13 = vrot.lane.b32.xlu0 %v12, 48
    %v14 = vpop.permute.xlu0 %13
    %vm15 = vcmask 458112
    %16 = vst.msk [vmem:[#allocation0] sm:$0x1] %vm15, %v14
    %s17 = scalar_lea.vmem %s0, 5
    %v18 = vld [vmem:[%s17] sm:$0x1]
    %19 = vrot.lane.b32.xlu0 %v18, 40
    %v20 = vpop.permute.xlu0 %19
    %vm21 = vcmask 392512
    %22 = vst.msk [vmem:[#allocation0] sm:$0x1] %vm21, %v20
    %s23 = scalar_lea.vmem %s0, 4
    %v24 = vld [vmem:[%s23] sm:$0x1]
    %25 = vrot.lane.b32.xlu0 %v24, 32
    %v26 = vpop.permute.xlu0 %25
    %vm27 = vcmask 326912
    %28 = vst.msk [vmem:[#allocation0] sm:$0x1] %vm27, %v26
    %s29 = scalar_lea.vmem %s0, 3
    %v30 = vld [vmem:[%s29] sm:$0x1]
    %31 = vrot.lane.b32.xlu0 %v30, 24
    %v32 = vpop.permute.xlu0 %31
    %vm33 = vcmask 261312
    %34 = vst.msk [vmem:[#allocation0] sm:$0x1] %vm33, %v32
    %s35 = scalar_lea.vmem %s0, 2
    %v36 = vld [vmem:[%s35] sm:$0x1]
    %37 = vrot.lane.b32.xlu0 %v36, 16
    %v38 = vpop.permute.xlu0 %37
    %vm39 = vcmask 195712
    %40 = vst.msk [vmem:[#allocation0] sm:$0x1] %vm39, %v38
    %s41 = scalar_lea.vmem %s0, 1
    %v42 = vld [vmem:[%s41] sm:$0x1]
    %43 = vrot.lane.b32.xlu0 %v42, 8
    %v44 = vpop.permute.xlu0 %43
    %vm45 = vcmask 130112
    %46 = vst.msk [vmem:[#allocation0] sm:$0x1] %vm45, %v44
    %s48 = sshll.u32 1, 1
    %s49 = ssub.s32 %s48, 1
    %v51 = vld [vmem:[#allocation0] sm:%s49]
    %s52 = sshll.u32 1, 1
    %s53 = ssub.s32 %s52, 1
    %54 = vst [vmem:[%s1] sm:%s53] %v51

// kernel: decode_block_forward.20
$region0: #{decode_block_forward.20}
  #allocation0 [shape = 'u32[]', space=smem, size = 0x4, offset = 0x4, fixed_abs, tag = 'smem constant byte address 0x4 - core index']
  #allocation1 [shape = 'u32[144,128]{1,0:T(1,128)}', space=vmem, size = 0x12000, scoped, tag = 'internal scratch']
  %s0 = inlined_call_operand.vmem [shape: bf16[2,10,10,10,4], index: 0, kind: input, shape index: {}, may-alias: {0,1,2}]
  %s1 = inlined_call_operand.vmem [shape: bf16[2,10,10,10,4], index: 1, kind: input, shape index: {}, may-alias: {0,1,2}]
  %s2 = inlined_call_operand.vmem [shape: bf16[2,10,10,10,4], index: 2, kind: input, shape index: {}, may-alias: {0,1,2}]
  %s3 = inlined_call_operand.vmem [shape: bf16[27,4,8], index: 3, kind: input, shape index: {}]
  %s4 = inlined_call_operand.vmem [shape: f32[1,8], index: 4, kind: input, shape index: {}]
  %s5 = inlined_call_operand.vmem [shape: bf16[2,8,8,8,8], index: 5, kind: output, shape index: {0}]
  %s6 = inlined_call_operand.vmem [shape: f32[2,8,2,8], index: 6, kind: output, shape index: {1}]
  %7 = xla_tuple %s5, %s6
  %s8 = sld [smem:[#allocation0]]
  $region68: #{decode_block_forward.20} parent=0
    _
  %s10 = ssub.s32 1, %s8
  %s11 = scalar_select 0, %s10, %s8
  loop: start=0, step=1, limit=18
  $region2: #{decode_block_forward.20} parent=0 // loop_pre_header
    _
  $region3: #{decode_block_forward.20} parent=0 // loop_header
    %s13 = sphi 0, %s17
    %p14 = scmp.ge.s32.totalorder %s13, 18
    %s20 = sphi 0, %s32
    %s21 = sphi 0, %s28
    %s22 = sphi 0, %s20
    %s23 = sphi 0, %s21
    %s24 = sphi 0, %s22
    %s25 = sphi 0, %s23
    %s37 = sphi 0, %s39
    %s40 = sphi 0, %s37
    %s41 = sphi 0, %s40
    %s57 = sphi 0, %s41
    %s67 = sphi 0, %s69
    %s70 = sphi 0, %s67
    %s71 = sphi 0, %s70
    %s87 = sphi 0, %s71
    %s97 = sphi 0, %s99
    %s100 = sphi 0, %s97
    %s101 = sphi 0, %s100
    %s117 = sphi 0, %s101
    %s121 = sphi 0, %s121
    %s123 = sphi 0, %s121
    %s124 = sphi 0, %s123
    %s138 = sphi 0, %s124
    %s142 = sphi 0, %s142
    %s144 = sphi 0, %s142
    %s145 = sphi 0, %s144
    %s159 = sphi 0, %s145
    %s167 = sphi 0, %s169
    %s170 = sphi 0, %s167
    %s171 = sphi 0, %s170
    %s187 = sphi 0, %s171
    %s195 = sphi 0, %s197
    %s198 = sphi 0, %s195
    %s199 = sphi 0, %s198
    %s215 = sphi 0, %s199
  $region4: #{decode_block_forward.20} parent=0 // loop_header_branch
    %16 = sbr.rel (%p14) target = $region8
  $region5: #{decode_block_forward.20} parent=0 // loop_body
    %s18 = ssub.s32 %s13, 1
    %s19 = ssub.s32 %s13, 2
    %s26 = sadd.s32 1, %s21
    %p27 = scmp.ge.s32.totalorder %s26, 8
    %s28 = scalar_select %p27, 0, %s26
    %s29 = sadd.s32 1, %s20
    %s30 = scalar_select %p27, %s29, %s20
    %p31 = scmp.ge.s32.totalorder %s30, 2
    %s32 = scalar_select %p31, 0, %s30
    %s33 = ssub.s32 %s20, %s32
    %s34 = ssub.s32 %s21, %s28
    %s35 = sor.u32 %s33, %s34
    %p36 = scmp.eq.s32.totalorder %s35, 0
    %s38 = sadd.s32 %s37, 1
    %s39 = scalar_select %p36, %s37, %s38
    %p42 = pneg %p36
    %p43 = scmp.eq.s32.totalorder %s13, 15
    %p44 = por %p42, %p43
    %p45 = scmp.ne.s32.totalorder %s37, %s40
    %p46 = scmp.eq.s32.totalorder %s13, 0
    %p47 = por %p45, %p46
    %p48 = scmp.ne.s32.totalorder %s37, %s40
    %p49 = scmp.eq.s32.totalorder %s18, 15
    %p50 = por %p48, %p49
    %p51 = scmp.ne.s32.totalorder %s40, %s41
    %p52 = scmp.eq.s32.totalorder %s18, 0
    %p53 = por %p51, %p52
    %p54 = scmp.ne.s32.totalorder %s40, %s41
    %p55 = scmp.eq.s32.totalorder %s19, 15
    %p56 = por %p54, %p55
    %p58 = scmp.ne.s32.totalorder %s41, %s57
    %p59 = scmp.eq.s32.totalorder %s19, 0
    %p60 = por %p58, %p59
    %s61 = sadd.s32 %s21, 1
    %s62 = sadd.s32 %s28, 1
    %s63 = ssub.s32 %s20, %s32
    %s64 = ssub.s32 %s61, %s62
    %s65 = sor.u32 %s63, %s64
    %p66 = scmp.eq.s32.totalorder %s65, 0
    %s68 = sadd.s32 %s67, 1
    %s69 = scalar_select %p66, %s67, %s68
    %p72 = pneg %p66
    %p73 = scmp.eq.s32.totalorder %s13, 15
    %p74 = por %p72, %p73
    %p75 = scmp.ne.s32.totalorder %s67, %s70
    %p76 = scmp.eq.s32.totalorder %s13, 0
    %p77 = por %p75, %p76
    %p78 = scmp.ne.s32.totalorder %s67, %s70
    %p79 = scmp.eq.s32.totalorder %s18, 15
    %p80 = por %p78, %p79
    %p81 = scmp.ne.s32.totalorder %s70, %s71
    %p82 = scmp.eq.s32.totalorder %s18, 0
    %p83 = por %p81, %p82
    %p84 = scmp.ne.s32.totalorder %s70, %s71
    %p85 = scmp.eq.s32.totalorder %s19, 15
    %p86 = por %p84, %p85
    %p88 = scmp.ne.s32.totalorder %s71, %s87
    %p89 = scmp.eq.s32.totalorder %s19, 0
    %p90 = por %p88, %p89
    %s91 = sadd.s32 %s21, 2
    %s92 = sadd.s32 %s28, 2
    %s93 = ssub.s32 %s20, %s32
    %s94 = ssub.s32 %s91, %s92
    %s95 = sor.u32 %s93, %s94
    %p96 = scmp.eq.s32.totalorder %s95, 0
    %s98 = sadd.s32 %s97, 1
    %s99 = scalar_select %p96, %s97, %s98
    %p102 = pneg %p96
    %p103 = scmp.eq.s32.totalorder %s13, 15
    %p104 = por %p102, %p103
    %p105 = scmp.ne.s32.totalorder %s97, %s100
    %p106 = scmp.eq.s32.totalorder %s13, 0
    %p107 = por %p105, %p106
    %p108 = scmp.ne.s32.totalorder %s97, %s100
    %p109 = scmp.eq.s32.totalorder %s18, 15
    %p110 = por %p108, %p109
    %p111 = scmp.ne.s32.totalorder %s100, %s101
    %p112 = scmp.eq.s32.totalorder %s18, 0
    %p113 = por %p111, %p112
    %p114 = scmp.ne.s32.totalorder %s100, %s101
    %p115 = scmp.eq.s32.totalorder %s19, 15
    %p116 = por %p114, %p115
    %p118 = scmp.ne.s32.totalorder %s101, %s117
    %p119 = scmp.eq.s32.totalorder %s19, 0
    %p120 = por %p118, %p119
    %s122 = sadd.s32 %s121, 1
    %p125 = scmp.eq.s32.totalorder %s13, 15
    %p126 = scmp.ne.s32.totalorder %s121, %s123
    %p127 = scmp.eq.s32.totalorder %s13, 0
    %p128 = por %p126, %p127
    %p129 = scmp.ne.s32.totalorder %s121, %s123
    %p130 = scmp.eq.s32.totalorder %s18, 15
    %p131 = por %p129, %p130
    %p132 = scmp.ne.s32.totalorder %s123, %s124
    %p133 = scmp.eq.s32.totalorder %s18, 0
    %p134 = por %p132, %p133
    %p135 = scmp.ne.s32.totalorder %s123, %s124
    %p136 = scmp.eq.s32.totalorder %s19, 15
    %p137 = por %p135, %p136
    %p139 = scmp.ne.s32.totalorder %s124, %s138
    %p140 = scmp.eq.s32.totalorder %s19, 0
    %p141 = por %p139, %p140
    %s143 = sadd.s32 %s142, 1
    %p146 = scmp.eq.s32.totalorder %s13, 15
    %p147 = scmp.ne.s32.totalorder %s142, %s144
    %p148 = scmp.eq.s32.totalorder %s13, 0
    %p149 = por %p147, %p148
    %p150 = scmp.ne.s32.totalorder %s142, %s144
    %p151 = scmp.eq.s32.totalorder %s18, 15
    %p152 = por %p150, %p151
    %p153 = scmp.ne.s32.totalorder %s144, %s145
    %p154 = scmp.eq.s32.totalorder %s18, 0
    %p155 = por %p153, %p154
    %p156 = scmp.ne.s32.totalorder %s144, %s145
    %p157 = scmp.eq.s32.totalorder %s19, 15
    %p158 = por %p156, %p157
    %p160 = scmp.ne.s32.totalorder %s145, %s159
    %p161 = scmp.eq.s32.totalorder %s19, 0
    %p162 = por %p160, %p161
    %s163 = ssub.s32 %s20, %s32
    %s164 = ssub.s32 %s21, %s28
    %s165 = sor.u32 %s163, %s164
    %p166 = scmp.eq.s32.totalorder %s165, 0
    %s168 = sadd.s32 %s167, 1
    %s169 = scalar_select %p166, %s167, %s168
    %p172 = pneg %p166
    %p173 = scmp.eq.s32.totalorder %s13, 15
    %p174 = por %p172, %p173
    %p175 = scmp.ne.s32.totalorder %s167, %s170
    %p176 = scmp.eq.s32.totalorder %s13, 0
    %p177 = por %p175, %p176
    %p178 = scmp.ne.s32.totalorder %s167, %s170
    %p179 = scmp.eq.s32.totalorder %s18, 15
    %p180 = por %p178, %p179
    %p181 = scmp.ne.s32.totalorder %s170, %s171
    %p182 = scmp.eq.s32.totalorder %s18, 0
    %p183 = por %p181, %p182
    %p184 = scmp.ne.s32.totalorder %s170, %s171
    %p185 = scmp.eq.s32.totalorder %s19, 15
    %p186 = por %p184, %p185
    %p188 = scmp.ne.s32.totalorder %s171, %s187
    %p189 = scmp.eq.s32.totalorder %s19, 0
    %p190 = por %p188, %p189
    %s191 = ssub.s32 %s20, %s32
    %s192 = ssub.s32 %s21, %s28
    %s193 = sor.u32 %s191, %s192
    %p194 = scmp.eq.s32.totalorder %s193, 0
    %s196 = sadd.s32 %s195, 1
    %s197 = scalar_select %p194, %s195, %s196
    %p200 = pneg %p194
    %p201 = scmp.eq.s32.totalorder %s13, 15
    %p202 = por %p200, %p201
    %p203 = scmp.ne.s32.totalorder %s195, %s198
    %p204 = scmp.eq.s32.totalorder %s13, 0
    %p205 = por %p203, %p204
    %p206 = scmp.ne.s32.totalorder %s195, %s198
    %p207 = scmp.eq.s32.totalorder %s18, 15
    %p208 = por %p206, %p207
    %p209 = scmp.ne.s32.totalorder %s198, %s199
    %p210 = scmp.eq.s32.totalorder %s18, 0
    %p211 = por %p209, %p210
    %p212 = scmp.ne.s32.totalorder %s198, %s199
    %p213 = scmp.eq.s32.totalorder %s19, 15
    %p214 = por %p212, %p213
    %p216 = scmp.ne.s32.totalorder %s199, %s215
    %p217 = scmp.eq.s32.totalorder %s19, 0
    %p218 = por %p216, %p217
    %p219 = scmp.le.s32.totalorder 1, %s13
    %p220 = scmp.lt.s32.totalorder %s13, 17
    %p221 = pnand %p219, %p220
    %p222 = pneg %p221
    // Predicated region
    $region9: #{decode_block_forward.20} parent=5 // pred_check
      _
    $region10: #{decode_block_forward.20} parent=5 // pred_check_branch
      %224 = sbr.rel (%p221) target = $region12
    $region11: #{decode_block_forward.20} parent=5 // pred_region
      %s225 = ssub.s32 %s13, 1
      // Predicated region
      $region13: #{decode_block_forward.20} parent=11 // pred_check
        %p226 = pneg %p134
      $region14: #{decode_block_forward.20} parent=11 // pred_check_branch
        %228 = sbr.rel (%p226) target = $region16
      $region15: #{decode_block_forward.20} parent=11 // pred_region
        _
      $region16: #{decode_block_forward.20} parent=11 // pred_fallthru
        _
      // Predicated region
      $region17: #{decode_block_forward.20} parent=11 // pred_check
        %p229 = pneg %p155
      $region18: #{decode_block_forward.20} parent=11 // pred_check_branch
        %231 = sbr.rel (%p229) target = $region20
      $region19: #{decode_block_forward.20} parent=11 // pred_region
        _
      $region20: #{decode_block_forward.20} parent=11 // pred_fallthru
        _
    $region12: #{decode_block_forward.20} parent=5 // pred_fallthru
      _
    %p232 = scmp.lt.s32.totalorder %s13, 16
    // Predicated region
    $region21: #{decode_block_forward.20} parent=5 // pred_check
      %p233 = pneg %p232
    $region22: #{decode_block_forward.20} parent=5 // pred_check_branch
      %235 = sbr.rel (%p233) target = $region24
    $region23: #{decode_block_forward.20} parent=5 // pred_region
      // Predicated region
      $region25: #{decode_block_forward.20} parent=23 // pred_check
        %p236 = pneg %p47
      $region26: #{decode_block_forward.20} parent=23 // pred_check_branch
        %238 = sbr.rel (%p236) target = $region28
      $region27: #{decode_block_forward.20} parent=23 // pred_region
        %p239 = scmp.lt.s32.totalorder %s20, 1
        %s240 = scalar_select %p239, %s20, 1
        %p241 = scmp.lt.s32.totalorder %s21, 9
        %s242 = scalar_select %p241, %s21, 9
        %s243 = smul.addr %s242, 20
        %s244 = smul.addr %s240, 200
        %s245 = sadd.s32 %s243, %s244
        %s246 = smul.addr %s245, 4
        %s247 = scalar_lea.vmem %s0, %s246
      $region28: #{decode_block_forward.20} parent=23 // pred_fallthru
        _
      // Predicated region
      $region29: #{decode_block_forward.20} parent=23 // pred_check
        %p248 = pneg %p77
      $region30: #{decode_block_forward.20} parent=23 // pred_check_branch
        %250 = sbr.rel (%p248) target = $region32
      $region31: #{decode_block_forward.20} parent=23 // pred_region
        %s251 = sadd.s32 %s21, 1
        %p252 = scmp.lt.s32.totalorder %s20, 1
        %s253 = scalar_select %p252, %s20, 1
        %p254 = scmp.lt.s32.totalorder %s251, 9
        %s255 = scalar_select %p254, %s251, 9
        %s256 = smul.addr %s255, 20
        %s257 = smul.addr %s253, 200
        %s258 = sadd.s32 %s256, %s257
        %s259 = smul.addr %s258, 4
        %s260 = scalar_lea.vmem %s1, %s259
        %s261 = sadd.s32 %s21, 1
      $region32: #{decode_block_forward.20} parent=23 // pred_fallthru
        _
      // Predicated region
      $region33: #{decode_block_forward.20} parent=23 // pred_check
        %p262 = pneg %p107
      $region34: #{decode_block_forward.20} parent=23 // pred_check_branch
        %264 = sbr.rel (%p262) target = $region36
      $region35: #{decode_block_forward.20} parent=23 // pred_region
        %s265 = sadd.s32 %s21, 2
        %p266 = scmp.lt.s32.totalorder %s20, 1
        %s267 = scalar_select %p266, %s20, 1
        %p268 = scmp.lt.s32.totalorder %s265, 9
        %s269 = scalar_select %p268, %s265, 9
        %s270 = smul.addr %s269, 20
        %s271 = smul.addr %s267, 200
        %s272 = sadd.s32 %s270, %s271
        %s273 = smul.addr %s272, 4
        %s274 = scalar_lea.vmem %s2, %s273
        %s275 = sadd.s32 %s21, 2
      $region36: #{decode_block_forward.20} parent=23 // pred_fallthru
        _
    $region24: #{decode_block_forward.20} parent=5 // pred_fallthru
      _
    %p276 = scmp.le.s32.totalorder 1, %s13
    %p277 = scmp.lt.s32.totalorder %s13, 17
    %p278 = pnand %p276, %p277
    %p279 = pneg %p278
    // Predicated region
    $region37: #{decode_block_forward.20} parent=5 // pred_check
      _
    $region38: #{decode_block_forward.20} parent=5 // pred_check_branch
      %281 = sbr.rel (%p278) target = $region40
    $region39: #{decode_block_forward.20} parent=5 // pred_region
      %s282 = ssub.s32 %s13, 1
      %p283 = scmp.lt.s32.totalorder %s22, 1
      %s284 = scalar_select %p283, %s22, 1
      %p285 = scmp.lt.s32.totalorder %s23, 9
      %s286 = scalar_select %p285, %s23, 9
      %s287 = smul.addr %s286, 20
      %s288 = smul.addr %s284, 200
      %s289 = sadd.s32 %s287, %s288
      %s290 = smul.addr %s289, 4
      %s291 = scalar_lea.vmem %s0, %s290
      %p292 = pneg %p53
      %p293 = pneg %p50
      %s294 = sadd.s32 %s23, 1
      %p295 = scmp.lt.s32.totalorder %s22, 1
      %s296 = scalar_select %p295, %s22, 1
      %p297 = scmp.lt.s32.totalorder %s294, 9
      %s298 = scalar_select %p297, %s294, 9
      %s299 = smul.addr %s298, 20
      %s300 = smul.addr %s296, 200
      %s301 = sadd.s32 %s299, %s300
      %s302 = smul.addr %s301, 4
      %s303 = scalar_lea.vmem %s1, %s302
      %p304 = pneg %p83
      %p305 = pneg %p80
      %s306 = sadd.s32 %s23, 2
      %p307 = scmp.lt.s32.totalorder %s22, 1
      %s308 = scalar_select %p307, %s22, 1
      %p309 = scmp.lt.s32.totalorder %s306, 9
      %s310 = scalar_select %p309, %s306, 9
      %s311 = smul.addr %s310, 20
      %s312 = smul.addr %s308, 200
      %s313 = sadd.s32 %s311, %s312
      %s314 = smul.addr %s313, 4
      %s315 = scalar_lea.vmem %s2, %s314
      %p316 = pneg %p113
      %p317 = pneg %p110
      %p318 = pneg %p134
      %p319 = pneg %p131
      %p320 = pneg %p155
      %p321 = pneg %p152
      %p322 = pneg %p183
      %p323 = pneg %p180
      %p324 = scmp.lt.s32.totalorder %s22, 1
      %s325 = scalar_select %p324, %s22, 1
      %p326 = scmp.lt.s32.totalorder %s23, 7
      %s327 = scalar_select %p326, %s23, 7
      %s328 = smul.addr %s327, 8
      %s329 = smul.addr %s325, 64
      %s330 = sadd.s32 %s328, %s329
      %s331 = smul.addr %s330, 4
      %s332 = scalar_lea.vmem %s5, %s331
      %p333 = pneg %p211
      %p334 = pneg %p208
      %p335 = scmp.lt.s32.totalorder %s22, 1
      %s336 = scalar_select %p335, %s22, 1
      %p337 = scmp.lt.s32.totalorder %s23, 7
      %s338 = scalar_select %p337, %s23, 7
      %s339 = smul.addr %s336, 8
      %s340 = sadd.s32 %s338, %s339
      %s341 = smul.addr %s340, 2
      %s342 = scalar_lea.vmem %s6, %s341
      %p343 = scmp.lt.s32.totalorder %s22, 1
      %s344 = scalar_select %p343, %s22, 1
      %p345 = scmp.lt.s32.totalorder %s23, 9
      %s346 = scalar_select %p345, %s23, 9
      %s347 = smul.addr %s346, 20
      %s348 = smul.addr %s344, 200
      %s349 = sadd.s32 %s347, %s348
      %s350 = smul.addr %s349, 4
      %s351 = scalar_lea.vmem %s0, %s350
      %s352 = sadd.s32 %s23, 1
      %p353 = scmp.lt.s32.totalorder %s22, 1
      %s354 = scalar_select %p353, %s22, 1
      %p355 = scmp.lt.s32.totalorder %s352, 9
      %s356 = scalar_select %p355, %s352, 9
      %s357 = smul.addr %s356, 20
      %s358 = smul.addr %s354, 200
      %s359 = sadd.s32 %s357, %s358
      %s360 = smul.addr %s359, 4
      %s361 = scalar_lea.vmem %s1, %s360
      %s362 = sadd.s32 %s23, 1
      %s363 = sadd.s32 %s23, 2
      %p364 = scmp.lt.s32.totalorder %s22, 1
      %s365 = scalar_select %p364, %s22, 1
      %p366 = scmp.lt.s32.totalorder %s363, 9
      %s367 = scalar_select %p366, %s363, 9
      %s368 = smul.addr %s367, 20
      %s369 = smul.addr %s365, 200
      %s370 = sadd.s32 %s368, %s369
      %s371 = smul.addr %s370, 4
      %s372 = scalar_lea.vmem %s2, %s371
      %s373 = sadd.s32 %s23, 2
      %p374 = scmp.lt.s32.totalorder %s22, 1
      %s375 = scalar_select %p374, %s22, 1
      %p376 = scmp.lt.s32.totalorder %s23, 7
      %s377 = scalar_select %p376, %s23, 7
      %s378 = smul.addr %s377, 8
      %s379 = smul.addr %s375, 64
      %s380 = sadd.s32 %s378, %s379
      %s381 = smul.addr %s380, 4
      %s382 = scalar_lea.vmem %s5, %s381
      %p383 = scmp.lt.s32.totalorder %s22, 1
      %s384 = scalar_select %p383, %s22, 1
      %p385 = scmp.lt.s32.totalorder %s23, 7
      %s386 = scalar_select %p385, %s23, 7
      %s387 = smul.addr %s384, 8
      %s388 = sadd.s32 %s386, %s387
      %s389 = smul.addr %s388, 2
      %s390 = scalar_lea.vmem %s6, %s389
      %v392 = vld [vmem:[%s4] sm:$0x1]
      loop: start=0, step=1, limit=8
      $region41: #{decode_block_forward.20} parent=39 // loop_pre_header
        _
      $region42: #{decode_block_forward.20} parent=39 // loop_header
        %s394 = sphi 0, %s398
        %p395 = scmp.ge.s32.totalorder %s394, 8
        %v399 = vphi 0.0, %v1901
        %v400 = vphi 0.0, %v1910
      $region43: #{decode_block_forward.20} parent=39 // loop_header_branch
        %397 = sbr.rel (%p395) target = $region47
      $region44: #{decode_block_forward.20} parent=39 // loop_body
        %s401 = smul.u32 %s394, 2
        %s402 = smul.addr %s401, 4
        %s403 = scalar_lea.vmem %s351, %s402
        %v404 = vld [vmem:[%s403] sm:$0xf]
        %v405 = vld [vmem:[%s403 + $0x4] sm:$0x1]
        %v406 = vld [vmem:[%s3] sm:$0x3]
        %s407 = scalar_lea.vmem %s3, 2
        %v408 = vld [vmem:[%s407] sm:$0x3]
        %v411 = vunpack.c.l.b16 %v404
        %v412 = vunpack.c.l.b16 %v405
        %v413 = vpack.c.b16 %v412, %v411
        %v415 = vshrl.u32 %v413, 16
        %v417 = vshll.u32 %v413, 16
        %v419 = vrot.slane %v417, 1
        %v420 = vor.u32 %v415, %v419
        %vm421 = vcmask 31744
        %v423 = vsel %vm421, %v420, 0
        %vm425 = vcmask 1041408
        %v427 = vsel %vm425, %v408, 0
        %429 = vmatprep.subr.bf16.mxu0 0
        %430 = vmatpush1.bf16.msra.mxu0 0
        %431 = vmatprep.subr.bf16.mxu0 0
        %432 = vmatpush1.bf16.msra.mxu0 0
        %433 = vmatprep.subr.bf16.mxu0 0
        %434 = vmatpush1.bf16.msra.mxu0 0
        %435 = vmatprep.subr.bf16.mxu0 0
        %436 = vmatpush1.bf16.msra.mxu0 0
        %437 = vmatprep.subr.bf16.mxu0 0
        %438 = vmatpush1.bf16.msra.mxu0 0
        %439 = vmatprep.subr.bf16.mxu0 0
        %440 = vmatpush1.bf16.msra.mxu0 0
        %441 = vmatprep.subr.bf16.mxu0 0
        %442 = vmatpush1.bf16.msra.mxu0 0
        %443 = vmatprep.subr.bf16.mxu0 0
        %444 = vmatpush1.bf16.msra.mxu0 %v427
        %445 = vmatprep.subr.bf16.mxu0 0
        %446 = vmatpush2.bf16.msra.mxu0 0
        %447 = vmatprep.subr.bf16.mxu0 0
        %448 = vmatpush2.bf16.msra.mxu0 0
        %449 = vmatprep.subr.bf16.mxu0 0
        %450 = vmatpush2.bf16.msra.mxu0 0
        %451 = vmatprep.subr.bf16.mxu0 0
        %452 = vmatpush2.bf16.msra.mxu0 0
        %453 = vmatprep.subr.bf16.mxu0 0
        %454 = vmatpush2.bf16.msra.mxu0 0
        %455 = vmatprep.subr.bf16.mxu0 0
        %456 = vmatpush2.bf16.msra.mxu0 0
        %457 = vmatprep.subr.bf16.mxu0 0
        %458 = vmatpush2.bf16.msra.mxu0 0
        %459 = vmatprep.subr.bf16.mxu0 0
        %460 = vmatpush2.bf16.msra.mxu0 0
        %461 = vmatprep.mubr.bf16.mxu0 0
        %462 = vmatmul.mubr.bf16.gmra.mxu0 %v423
        %v463 = vpop.f32.mrf.mxu0
        %v464 = vadd.f32 0.0, %v463
        %v465 = vpop.f32.mrf.mxu0
        %v466 = vpop.f32.mrf.mxu0
        %v467 = vpop.f32.mrf.mxu0
        %468 = vdwg.mxu0
        %v470 = vsel %vm421, %v404, 0
        %v473 = vsel %vm425, %v406, 0
        %475 = vmatprep.subr.bf16.mxu0 0
        %476 = vmatpush1.bf16.msra.mxu0 0
        %477 = vmatprep.subr.bf16.mxu0 0
        %478 = vmatpush1.bf16.msra.mxu0 0
        %479 = vmatprep.subr.bf16.mxu0 0
        %480 = vmatpush1.bf16.msra.mxu0 0
        %481 = vmatprep.subr.bf16.mxu0 0
        %482 = vmatpush1.bf16.msra.mxu0 0
        %483 = vmatprep.subr.bf16.mxu0 0
        %484 = vmatpush1.bf16.msra.mxu0 0
        %485 = vmatprep.subr.bf16.mxu0 0
        %486 = vmatpush1.bf16.msra.mxu0 0
        %487 = vmatprep.subr.bf16.mxu0 0
        %488 = vmatpush1.bf16.msra.mxu0 0
        %489 = vmatprep.subr.bf16.mxu0 0
        %490 = vmatpush1.bf16.msra.mxu0 %v473
        %491 = vmatprep.subr.bf16.mxu0 0
        %492 = vmatpush2.bf16.msra.mxu0 0
        %493 = vmatprep.subr.bf16.mxu0 0
        %494 = vmatpush2.bf16.msra.mxu0 0
        %495 = vmatprep.subr.bf16.mxu0 0
        %496 = vmatpush2.bf16.msra.mxu0 0
        %497 = vmatprep.subr.bf16.mxu0 0
        %498 = vmatpush2.bf16.msra.mxu0 0
        %499 = vmatprep.subr.bf16.mxu0 0
        %500 = vmatpush2.bf16.msra.mxu0 0
        %501 = vmatprep.subr.bf16.mxu0 0
        %502 = vmatpush2.bf16.msra.mxu0 0
        %503 = vmatprep.subr.bf16.mxu0 0
        %504 = vmatpush2.bf16.msra.mxu0 0
        %505 = vmatprep.subr.bf16.mxu0 0
        %506 = vmatpush2.bf16.msra.mxu0 0
        %507 = vmatprep.mubr.bf16.mxu0 0
        %508 = vmatmul.mubr.bf16.gmra.mxu0 %v470
        %v509 = vpop.f32.mrf.mxu0
        %v510 = vadd.f32 %v464, %v509
        %v511 = vpop.f32.mrf.mxu0
        %v512 = vpop.f32.mrf.mxu0
        %v513 = vpop.f32.mrf.mxu0
        %514 = vdwg.mxu0
        %s515 = scalar_lea.vmem %s3, 4
        %v516 = vld [vmem:[%s515] sm:$0x3]
        %v517 = vrot.slane %v413, 1
        %v519 = vsel %vm421, %v517, 0
        %v522 = vsel %vm425, %v516, 0
        %524 = vmatprep.subr.bf16.mxu0 0
        %525 = vmatpush1.bf16.msra.mxu0 0
        %526 = vmatprep.subr.bf16.mxu0 0
        %527 = vmatpush1.bf16.msra.mxu0 0
        %528 = vmatprep.subr.bf16.mxu0 0
        %529 = vmatpush1.bf16.msra.mxu0 0
        %530 = vmatprep.subr.bf16.mxu0 0
        %531 = vmatpush1.bf16.msra.mxu0 0
        %532 = vmatprep.subr.bf16.mxu0 0
        %533 = vmatpush1.bf16.msra.mxu0 0
        %534 = vmatprep.subr.bf16.mxu0 0
        %535 = vmatpush1.bf16.msra.mxu0 0
        %536 = vmatprep.subr.bf16.mxu0 0
        %537 = vmatpush1.bf16.msra.mxu0 0
        %538 = vmatprep.subr.bf16.mxu0 0
        %539 = vmatpush1.bf16.msra.mxu0 %v522
        %540 = vmatprep.subr.bf16.mxu0 0
        %541 = vmatpush2.bf16.msra.mxu0 0
        %542 = vmatprep.subr.bf16.mxu0 0
        %543 = vmatpush2.bf16.msra.mxu0 0
        %544 = vmatprep.subr.bf16.mxu0 0
        %545 = vmatpush2.bf16.msra.mxu0 0
        %546 = vmatprep.subr.bf16.mxu0 0
        %547 = vmatpush2.bf16.msra.mxu0 0
        %548 = vmatprep.subr.bf16.mxu0 0
        %549 = vmatpush2.bf16.msra.mxu0 0
        %550 = vmatprep.subr.bf16.mxu0 0
        %551 = vmatpush2.bf16.msra.mxu0 0
        %552 = vmatprep.subr.bf16.mxu0 0
        %553 = vmatpush2.bf16.msra.mxu0 0
        %554 = vmatprep.subr.bf16.mxu0 0
        %555 = vmatpush2.bf16.msra.mxu0 0
        %556 = vmatprep.mubr.bf16.mxu0 0
        %557 = vmatmul.mubr.bf16.gmra.mxu0 %v519
        %v558 = vpop.f32.mrf.mxu0
        %v559 = vadd.f32 0.0, %v558
        %v560 = vpop.f32.mrf.mxu0
        %v561 = vpop.f32.mrf.mxu0
        %v562 = vpop.f32.mrf.mxu0
        %563 = vdwg.mxu0
        %v564 = vadd.f32 %v510, %v559
        %s565 = sadd.s32 %s394, 1
        %s566 = smul.u32 %s565, 2
        %s567 = smul.addr %s566, 4
        %s568 = scalar_lea.vmem %s351, %s567
        %v569 = vld [vmem:[%s568] sm:$0xf]
        %v570 = vld [vmem:[%s568 + $0x4] sm:$0x1]
        %s571 = scalar_lea.vmem %s3, 6
        %v572 = vld [vmem:[%s571] sm:$0x3]
        %v574 = vsel %vm421, %v569, 0
        %v577 = vsel %vm425, %v572, 0
        %579 = vmatprep.subr.bf16.mxu0 0
        %580 = vmatpush1.bf16.msra.mxu0 0
        %581 = vmatprep.subr.bf16.mxu0 0
        %582 = vmatpush1.bf16.msra.mxu0 0
        %583 = vmatprep.subr.bf16.mxu0 0
        %584 = vmatpush1.bf16.msra.mxu0 0
        %585 = vmatprep.subr.bf16.mxu0 0
        %586 = vmatpush1.bf16.msra.mxu0 0
        %587 = vmatprep.subr.bf16.mxu0 0
        %588 = vmatpush1.bf16.msra.mxu0 0
        %589 = vmatprep.subr.bf16.mxu0 0
        %590 = vmatpush1.bf16.msra.mxu0 0
        %591 = vmatprep.subr.bf16.mxu0 0
        %592 = vmatpush1.bf16.msra.mxu0 0
        %593 = vmatprep.subr.bf16.mxu0 0
        %594 = vmatpush1.bf16.msra.mxu0 %v577
        %595 = vmatprep.subr.bf16.mxu0 0
        %596 = vmatpush2.bf16.msra.mxu0 0
        %597 = vmatprep.subr.bf16.mxu0 0
        %598 = vmatpush2.bf16.msra.mxu0 0
        %599 = vmatprep.subr.bf16.mxu0 0
        %600 = vmatpush2.bf16.msra.mxu0 0
        %601 = vmatprep.subr.bf16.mxu0 0
        %602 = vmatpush2.bf16.msra.mxu0 0
        %603 = vmatprep.subr.bf16.mxu0 0
        %604 = vmatpush2.bf16.msra.mxu0 0
        %605 = vmatprep.subr.bf16.mxu0 0
        %606 = vmatpush2.bf16.msra.mxu0 0
        %607 = vmatprep.subr.bf16.mxu0 0
        %608 = vmatpush2.bf16.msra.mxu0 0
        %609 = vmatprep.subr.bf16.mxu0 0
        %610 = vmatpush2.bf16.msra.mxu0 0
        %611 = vmatprep.mubr.bf16.mxu0 0
        %612 = vmatmul.mubr.bf16.gmra.mxu0 %v574
        %v613 = vpop.f32.mrf.mxu0
        %v614 = vadd.f32 0.0, %v613
        %v615 = vpop.f32.mrf.mxu0
        %v616 = vpop.f32.mrf.mxu0
        %v617 = vpop.f32.mrf.mxu0
        %618 = vdwg.mxu0
        %v619 = vadd.f32 %v564, %v614
        %s620 = scalar_lea.vmem %s3, 8
        %v621 = vld [vmem:[%s620] sm:$0x3]
        %v624 = vunpack.c.l.b16 %v569
        %v625 = vunpack.c.l.b16 %v570
        %v626 = vpack.c.b16 %v625, %v624
        %v628 = vshrl.u32 %v626, 16
        %v630 = vshll.u32 %v626, 16
        %v632 = vrot.slane %v630, 1
        %v633 = vor.u32 %v628, %v632
        %v635 = vsel %vm421, %v633, 0
        %v638 = vsel %vm425, %v621, 0
        %640 = vmatprep.subr.bf16.mxu0 0
        %641 = vmatpush1.bf16.msra.mxu0 0
        %642 = vmatprep.subr.bf16.mxu0 0
        %643 = vmatpush1.bf16.msra.mxu0 0
        %644 = vmatprep.subr.bf16.mxu0 0
        %645 = vmatpush1.bf16.msra.mxu0 0
        %646 = vmatprep.subr.bf16.mxu0 0
        %647 = vmatpush1.bf16.msra.mxu0 0
        %648 = vmatprep.subr.bf16.mxu0 0
        %649 = vmatpush1.bf16.msra.mxu0 0
        %650 = vmatprep.subr.bf16.mxu0 0
        %651 = vmatpush1.bf16.msra.mxu0 0
        %652 = vmatprep.subr.bf16.mxu0 0
        %653 = vmatpush1.bf16.msra.mxu0 0
        %654 = vmatprep.subr.bf16.mxu0 0
        %655 = vmatpush1.bf16.msra.mxu0 %v638
        %656 = vmatprep.subr.bf16.mxu0 0
        %657 = vmatpush2.bf16.msra.mxu0 0
        %658 = vmatprep.subr.bf16.mxu0 0
        %659 = vmatpush2.bf16.msra.mxu0 0
        %660 = vmatprep.subr.bf16.mxu0 0
        %661 = vmatpush2.bf16.msra.mxu0 0
        %662 = vmatprep.subr.bf16.mxu0 0
        %663 = vmatpush2.bf16.msra.mxu0 0
        %664 = vmatprep.subr.bf16.mxu0 0
        %665 = vmatpush2.bf16.msra.mxu0 0
        %666 = vmatprep.subr.bf16.mxu0 0
        %667 = vmatpush2.bf16.msra.mxu0 0
        %668 = vmatprep.subr.bf16.mxu0 0
        %669 = vmatpush2.bf16.msra.mxu0 0
        %670 = vmatprep.subr.bf16.mxu0 0
        %671 = vmatpush2.bf16.msra.mxu0 0
        %672 = vmatprep.mubr.bf16.mxu0 0
        %673 = vmatmul.mubr.bf16.gmra.mxu0 %v635
        %v674 = vpop.f32.mrf.mxu0
        %v675 = vadd.f32 0.0, %v674
        %v676 = vpop.f32.mrf.mxu0
        %v677 = vpop.f32.mrf.mxu0
        %v678 = vpop.f32.mrf.mxu0
        %679 = vdwg.mxu0
        %v680 = vadd.f32 %v619, %v675
        %s681 = scalar_lea.vmem %s3, 10
        %v682 = vld [vmem:[%s681] sm:$0x3]
        %v683 = vrot.slane %v626, 1
        %v685 = vsel %vm421, %v683, 0
        %v688 = vsel %vm425, %v682, 0
        %690 = vmatprep.subr.bf16.mxu0 0
        %691 = vmatpush1.bf16.msra.mxu0 0
        %692 = vmatprep.subr.bf16.mxu0 0
        %693 = vmatpush1.bf16.msra.mxu0 0
        %694 = vmatprep.subr.bf16.mxu0 0
        %695 = vmatpush1.bf16.msra.mxu0 0
        %696 = vmatprep.subr.bf16.mxu0 0
        %697 = vmatpush1.bf16.msra.mxu0 0
        %698 = vmatprep.subr.bf16.mxu0 0
        %699 = vmatpush1.bf16.msra.mxu0 0
        %700 = vmatprep.subr.bf16.mxu0 0
        %701 = vmatpush1.bf16.msra.mxu0 0
        %702 = vmatprep.subr.bf16.mxu0 0
        %703 = vmatpush1.bf16.msra.mxu0 0
        %704 = vmatprep.subr.bf16.mxu0 0
        %705 = vmatpush1.bf16.msra.mxu0 %v688
        %706 = vmatprep.subr.bf16.mxu0 0
        %707 = vmatpush2.bf16.msra.mxu0 0
        %708 = vmatprep.subr.bf16.mxu0 0
        %709 = vmatpush2.bf16.msra.mxu0 0
        %710 = vmatprep.subr.bf16.mxu0 0
        %711 = vmatpush2.bf16.msra.mxu0 0
        %712 = vmatprep.subr.bf16.mxu0 0
        %713 = vmatpush2.bf16.msra.mxu0 0
        %714 = vmatprep.subr.bf16.mxu0 0
        %715 = vmatpush2.bf16.msra.mxu0 0
        %716 = vmatprep.subr.bf16.mxu0 0
        %717 = vmatpush2.bf16.msra.mxu0 0
        %718 = vmatprep.subr.bf16.mxu0 0
        %719 = vmatpush2.bf16.msra.mxu0 0
        %720 = vmatprep.subr.bf16.mxu0 0
        %721 = vmatpush2.bf16.msra.mxu0 0
        %722 = vmatprep.mubr.bf16.mxu0 0
        %723 = vmatmul.mubr.bf16.gmra.mxu0 %v685
        %v724 = vpop.f32.mrf.mxu0
        %v725 = vadd.f32 0.0, %v724
        %v726 = vpop.f32.mrf.mxu0
        %v727 = vpop.f32.mrf.mxu0
        %v728 = vpop.f32.mrf.mxu0
        %729 = vdwg.mxu0
        %v730 = vadd.f32 %v680, %v725
        %s731 = sadd.s32 %s394, 2
        %s732 = smul.u32 %s731, 2
        %s733 = smul.addr %s732, 4
        %s734 = scalar_lea.vmem %s351, %s733
        %v735 = vld [vmem:[%s734] sm:$0xf]
        %v736 = vld [vmem:[%s734 + $0x4] sm:$0x1]
        %s737 = scalar_lea.vmem %s3, 12
        %v738 = vld [vmem:[%s737] sm:$0x3]
        %v740 = vsel %vm421, %v735, 0
        %v743 = vsel %vm425, %v738, 0
        %745 = vmatprep.subr.bf16.mxu0 0
        %746 = vmatpush1.bf16.msra.mxu0 0
        %747 = vmatprep.subr.bf16.mxu0 0
        %748 = vmatpush1.bf16.msra.mxu0 0
        %749 = vmatprep.subr.bf16.mxu0 0
        %750 = vmatpush1.bf16.msra.mxu0 0
        %751 = vmatprep.subr.bf16.mxu0 0
        %752 = vmatpush1.bf16.msra.mxu0 0
        %753 = vmatprep.subr.bf16.mxu0 0
        %754 = vmatpush1.bf16.msra.mxu0 0
        %755 = vmatprep.subr.bf16.mxu0 0
        %756 = vmatpush1.bf16.msra.mxu0 0
        %757 = vmatprep.subr.bf16.mxu0 0
        %758 = vmatpush1.bf16.msra.mxu0 0
        %759 = vmatprep.subr.bf16.mxu0 0
        %760 = vmatpush1.bf16.msra.mxu0 %v743
        %761 = vmatprep.subr.bf16.mxu0 0
        %762 = vmatpush2.bf16.msra.mxu0 0
        %763 = vmatprep.subr.bf16.mxu0 0
        %764 = vmatpush2.bf16.msra.mxu0 0
        %765 = vmatprep.subr.bf16.mxu0 0
        %766 = vmatpush2.bf16.msra.mxu0 0
        %767 = vmatprep.subr.bf16.mxu0 0
        %768 = vmatpush2.bf16.msra.mxu0 0
        %769 = vmatprep.subr.bf16.mxu0 0
        %770 = vmatpush2.bf16.msra.mxu0 0
        %771 = vmatprep.subr.bf16.mxu0 0
        %772 = vmatpush2.bf16.msra.mxu0 0
        %773 = vmatprep.subr.bf16.mxu0 0
        %774 = vmatpush2.bf16.msra.mxu0 0
        %775 = vmatprep.subr.bf16.mxu0 0
        %776 = vmatpush2.bf16.msra.mxu0 0
        %777 = vmatprep.mubr.bf16.mxu0 0
        %778 = vmatmul.mubr.bf16.gmra.mxu0 %v740
        %v779 = vpop.f32.mrf.mxu0
        %v780 = vadd.f32 0.0, %v779
        %v781 = vpop.f32.mrf.mxu0
        %v782 = vpop.f32.mrf.mxu0
        %v783 = vpop.f32.mrf.mxu0
        %784 = vdwg.mxu0
        %v785 = vadd.f32 %v730, %v780
        %s786 = scalar_lea.vmem %s3, 14
        %v787 = vld [vmem:[%s786] sm:$0x3]
        %v790 = vunpack.c.l.b16 %v735
        %v791 = vunpack.c.l.b16 %v736
        %v792 = vpack.c.b16 %v791, %v790
        %v794 = vshrl.u32 %v792, 16
        %v796 = vshll.u32 %v792, 16
        %v798 = vrot.slane %v796, 1
        %v799 = vor.u32 %v794, %v798
        %v801 = vsel %vm421, %v799, 0
        %v804 = vsel %vm425, %v787, 0
        %806 = vmatprep.subr.bf16.mxu0 0
        %807 = vmatpush1.bf16.msra.mxu0 0
        %808 = vmatprep.subr.bf16.mxu0 0
        %809 = vmatpush1.bf16.msra.mxu0 0
        %810 = vmatprep.subr.bf16.mxu0 0
        %811 = vmatpush1.bf16.msra.mxu0 0
        %812 = vmatprep.subr.bf16.mxu0 0
        %813 = vmatpush1.bf16.msra.mxu0 0
        %814 = vmatprep.subr.bf16.mxu0 0
        %815 = vmatpush1.bf16.msra.mxu0 0
        %816 = vmatprep.subr.bf16.mxu0 0
        %817 = vmatpush1.bf16.msra.mxu0 0
        %818 = vmatprep.subr.bf16.mxu0 0
        %819 = vmatpush1.bf16.msra.mxu0 0
        %820 = vmatprep.subr.bf16.mxu0 0
        %821 = vmatpush1.bf16.msra.mxu0 %v804
        %822 = vmatprep.subr.bf16.mxu0 0
        %823 = vmatpush2.bf16.msra.mxu0 0
        %824 = vmatprep.subr.bf16.mxu0 0
        %825 = vmatpush2.bf16.msra.mxu0 0
        %826 = vmatprep.subr.bf16.mxu0 0
        %827 = vmatpush2.bf16.msra.mxu0 0
        %828 = vmatprep.subr.bf16.mxu0 0
        %829 = vmatpush2.bf16.msra.mxu0 0
        %830 = vmatprep.subr.bf16.mxu0 0
        %831 = vmatpush2.bf16.msra.mxu0 0
        %832 = vmatprep.subr.bf16.mxu0 0
        %833 = vmatpush2.bf16.msra.mxu0 0
        %834 = vmatprep.subr.bf16.mxu0 0
        %835 = vmatpush2.bf16.msra.mxu0 0
        %836 = vmatprep.subr.bf16.mxu0 0
        %837 = vmatpush2.bf16.msra.mxu0 0
        %838 = vmatprep.mubr.bf16.mxu0 0
        %839 = vmatmul.mubr.bf16.gmra.mxu0 %v801
        %v840 = vpop.f32.mrf.mxu0
        %v841 = vadd.f32 0.0, %v840
        %v842 = vpop.f32.mrf.mxu0
        %v843 = vpop.f32.mrf.mxu0
        %v844 = vpop.f32.mrf.mxu0
        %845 = vdwg.mxu0
        %v846 = vadd.f32 %v785, %v841
        %s847 = scalar_lea.vmem %s3, 16
        %v848 = vld [vmem:[%s847] sm:$0x3]
        %v849 = vrot.slane %v792, 1
        %v851 = vsel %vm421, %v849, 0
        %v854 = vsel %vm425, %v848, 0
        %856 = vmatprep.subr.bf16.mxu0 0
        %857 = vmatpush1.bf16.msra.mxu0 0
        %858 = vmatprep.subr.bf16.mxu0 0
        %859 = vmatpush1.bf16.msra.mxu0 0
        %860 = vmatprep.subr.bf16.mxu0 0
        %861 = vmatpush1.bf16.msra.mxu0 0
        %862 = vmatprep.subr.bf16.mxu0 0
        %863 = vmatpush1.bf16.msra.mxu0 0
        %864 = vmatprep.subr.bf16.mxu0 0
        %865 = vmatpush1.bf16.msra.mxu0 0
        %866 = vmatprep.subr.bf16.mxu0 0
        %867 = vmatpush1.bf16.msra.mxu0 0
        %868 = vmatprep.subr.bf16.mxu0 0
        %869 = vmatpush1.bf16.msra.mxu0 0
        %870 = vmatprep.subr.bf16.mxu0 0
        %871 = vmatpush1.bf16.msra.mxu0 %v854
        %872 = vmatprep.subr.bf16.mxu0 0
        %873 = vmatpush2.bf16.msra.mxu0 0
        %874 = vmatprep.subr.bf16.mxu0 0
        %875 = vmatpush2.bf16.msra.mxu0 0
        %876 = vmatprep.subr.bf16.mxu0 0
        %877 = vmatpush2.bf16.msra.mxu0 0
        %878 = vmatprep.subr.bf16.mxu0 0
        %879 = vmatpush2.bf16.msra.mxu0 0
        %880 = vmatprep.subr.bf16.mxu0 0
        %881 = vmatpush2.bf16.msra.mxu0 0
        %882 = vmatprep.subr.bf16.mxu0 0
        %883 = vmatpush2.bf16.msra.mxu0 0
        %884 = vmatprep.subr.bf16.mxu0 0
        %885 = vmatpush2.bf16.msra.mxu0 0
        %886 = vmatprep.subr.bf16.mxu0 0
        %887 = vmatpush2.bf16.msra.mxu0 0
        %888 = vmatprep.mubr.bf16.mxu0 0
        %889 = vmatmul.mubr.bf16.gmra.mxu0 %v851
        %v890 = vpop.f32.mrf.mxu0
        %v891 = vadd.f32 0.0, %v890
        %v892 = vpop.f32.mrf.mxu0
        %v893 = vpop.f32.mrf.mxu0
        %v894 = vpop.f32.mrf.mxu0
        %895 = vdwg.mxu0
        %v896 = vadd.f32 %v846, %v891
        %s897 = smul.addr %s401, 4
        %s898 = scalar_lea.vmem %s361, %s897
        %v899 = vld [vmem:[%s898] sm:$0xf]
        %v900 = vld [vmem:[%s898 + $0x4] sm:$0x1]
        %s901 = scalar_lea.vmem %s3, 18
        %v902 = vld [vmem:[%s901] sm:$0x3]
        %v904 = vsel %vm421, %v899, 0
        %v907 = vsel %vm425, %v902, 0
        %909 = vmatprep.subr.bf16.mxu0 0
        %910 = vmatpush1.bf16.msra.mxu0 0
        %911 = vmatprep.subr.bf16.mxu0 0
        %912 = vmatpush1.bf16.msra.mxu0 0
        %913 = vmatprep.subr.bf16.mxu0 0
        %914 = vmatpush1.bf16.msra.mxu0 0
        %915 = vmatprep.subr.bf16.mxu0 0
        %916 = vmatpush1.bf16.msra.mxu0 0
        %917 = vmatprep.subr.bf16.mxu0 0
        %918 = vmatpush1.bf16.msra.mxu0 0
        %919 = vmatprep.subr.bf16.mxu0 0
        %920 = vmatpush1.bf16.msra.mxu0 0
        %921 = vmatprep.subr.bf16.mxu0 0
        %922 = vmatpush1.bf16.msra.mxu0 0
        %923 = vmatprep.subr.bf16.mxu0 0
        %924 = vmatpush1.bf16.msra.mxu0 %v907
        %925 = vmatprep.subr.bf16.mxu0 0
        %926 = vmatpush2.bf16.msra.mxu0 0
        %927 = vmatprep.subr.bf16.mxu0 0
        %928 = vmatpush2.bf16.msra.mxu0 0
        %929 = vmatprep.subr.bf16.mxu0 0
        %930 = vmatpush2.bf16.msra.mxu0 0
        %931 = vmatprep.subr.bf16.mxu0 0
        %932 = vmatpush2.bf16.msra.mxu0 0
        %933 = vmatprep.subr.bf16.mxu0 0
        %934 = vmatpush2.bf16.msra.mxu0 0
        %935 = vmatprep.subr.bf16.mxu0 0
        %936 = vmatpush2.bf16.msra.mxu0 0
        %937 = vmatprep.subr.bf16.mxu0 0
        %938 = vmatpush2.bf16.msra.mxu0 0
        %939 = vmatprep.subr.bf16.mxu0 0
        %940 = vmatpush2.bf16.msra.mxu0 0
        %941 = vmatprep.mubr.bf16.mxu0 0
        %942 = vmatmul.mubr.bf16.gmra.mxu0 %v904
        %v943 = vpop.f32.mrf.mxu0
        %v944 = vadd.f32 0.0, %v943
        %v945 = vpop.f32.mrf.mxu0
        %v946 = vpop.f32.mrf.mxu0
        %v947 = vpop.f32.mrf.mxu0
        %948 = vdwg.mxu0
        %v949 = vadd.f32 %v896, %v944
        %s950 = scalar_lea.vmem %s3, 20
        %v951 = vld [vmem:[%s950] sm:$0x3]
        %v954 = vunpack.c.l.b16 %v899
        %v955 = vunpack.c.l.b16 %v900
        %v956 = vpack.c.b16 %v955, %v954
        %v958 = vshrl.u32 %v956, 16
        %v960 = vshll.u32 %v956, 16
        %v962 = vrot.slane %v960, 1
        %v963 = vor.u32 %v958, %v962
        %v965 = vsel %vm421, %v963, 0
        %v968 = vsel %vm425, %v951, 0
        %970 = vmatprep.subr.bf16.mxu0 0
        %971 = vmatpush1.bf16.msra.mxu0 0
        %972 = vmatprep.subr.bf16.mxu0 0
        %973 = vmatpush1.bf16.msra.mxu0 0
        %974 = vmatprep.subr.bf16.mxu0 0
        %975 = vmatpush1.bf16.msra.mxu0 0
        %976 = vmatprep.subr.bf16.mxu0 0
        %977 = vmatpush1.bf16.msra.mxu0 0
        %978 = vmatprep.subr.bf16.mxu0 0
        %979 = vmatpush1.bf16.msra.mxu0 0
        %980 = vmatprep.subr.bf16.mxu0 0
        %981 = vmatpush1.bf16.msra.mxu0 0
        %982 = vmatprep.subr.bf16.mxu0 0
        %983 = vmatpush1.bf16.msra.mxu0 0
        %984 = vmatprep.subr.bf16.mxu0 0
        %985 = vmatpush1.bf16.msra.mxu0 %v968
        %986 = vmatprep.subr.bf16.mxu0 0
        %987 = vmatpush2.bf16.msra.mxu0 0
        %988 = vmatprep.subr.bf16.mxu0 0
        %989 = vmatpush2.bf16.msra.mxu0 0
        %990 = vmatprep.subr.bf16.mxu0 0
        %991 = vmatpush2.bf16.msra.mxu0 0
        %992 = vmatprep.subr.bf16.mxu0 0
        %993 = vmatpush2.bf16.msra.mxu0 0
        %994 = vmatprep.subr.bf16.mxu0 0
        %995 = vmatpush2.bf16.msra.mxu0 0
        %996 = vmatprep.subr.bf16.mxu0 0
        %997 = vmatpush2.bf16.msra.mxu0 0
        %998 = vmatprep.subr.bf16.mxu0 0
        %999 = vmatpush2.bf16.msra.mxu0 0
        %1000 = vmatprep.subr.bf16.mxu0 0
        %1001 = vmatpush2.bf16.msra.mxu0 0
        %1002 = vmatprep.mubr.bf16.mxu0 0
        %1003 = vmatmul.mubr.bf16.gmra.mxu0 %v965
        %v1004 = vpop.f32.mrf.mxu0
        %v1005 = vadd.f32 0.0, %v1004
        %v1006 = vpop.f32.mrf.mxu0
        %v1007 = vpop.f32.mrf.mxu0
        %v1008 = vpop.f32.mrf.mxu0
        %1009 = vdwg.mxu0
        %v1010 = vadd.f32 %v949, %v1005
        %s1011 = scalar_lea.vmem %s3, 22
        %v1012 = vld [vmem:[%s1011] sm:$0x3]
        %v1013 = vrot.slane %v956, 1
        %v1015 = vsel %vm421, %v1013, 0
        %v1018 = vsel %vm425, %v1012, 0
        %1020 = vmatprep.subr.bf16.mxu0 0
        %1021 = vmatpush1.bf16.msra.mxu0 0
        %1022 = vmatprep.subr.bf16.mxu0 0
        %1023 = vmatpush1.bf16.msra.mxu0 0
        %1024 = vmatprep.subr.bf16.mxu0 0
        %1025 = vmatpush1.bf16.msra.mxu0 0
        %1026 = vmatprep.subr.bf16.mxu0 0
        %1027 = vmatpush1.bf16.msra.mxu0 0
        %1028 = vmatprep.subr.bf16.mxu0 0
        %1029 = vmatpush1.bf16.msra.mxu0 0
        %1030 = vmatprep.subr.bf16.mxu0 0
        %1031 = vmatpush1.bf16.msra.mxu0 0
        %1032 = vmatprep.subr.bf16.mxu0 0
        %1033 = vmatpush1.bf16.msra.mxu0 0
        %1034 = vmatprep.subr.bf16.mxu0 0
        %1035 = vmatpush1.bf16.msra.mxu0 %v1018
        %1036 = vmatprep.subr.bf16.mxu0 0
        %1037 = vmatpush2.bf16.msra.mxu0 0
        %1038 = vmatprep.subr.bf16.mxu0 0
        %1039 = vmatpush2.bf16.msra.mxu0 0
        %1040 = vmatprep.subr.bf16.mxu0 0
        %1041 = vmatpush2.bf16.msra.mxu0 0
        %1042 = vmatprep.subr.bf16.mxu0 0
        %1043 = vmatpush2.bf16.msra.mxu0 0
        %1044 = vmatprep.subr.bf16.mxu0 0
        %1045 = vmatpush2.bf16.msra.mxu0 0
        %1046 = vmatprep.subr.bf16.mxu0 0
        %1047 = vmatpush2.bf16.msra.mxu0 0
        %1048 = vmatprep.subr.bf16.mxu0 0
        %1049 = vmatpush2.bf16.msra.mxu0 0
        %1050 = vmatprep.subr.bf16.mxu0 0
        %1051 = vmatpush2.bf16.msra.mxu0 0
        %1052 = vmatprep.mubr.bf16.mxu0 0
        %1053 = vmatmul.mubr.bf16.gmra.mxu0 %v1015
        %v1054 = vpop.f32.mrf.mxu0
        %v1055 = vadd.f32 0.0, %v1054
        %v1056 = vpop.f32.mrf.mxu0
        %v1057 = vpop.f32.mrf.mxu0
        %v1058 = vpop.f32.mrf.mxu0
        %1059 = vdwg.mxu0
        %v1060 = vadd.f32 %v1010, %v1055
        %s1061 = smul.addr %s566, 4
        %s1062 = scalar_lea.vmem %s361, %s1061
        %v1063 = vld [vmem:[%s1062] sm:$0xf]
        %v1064 = vld [vmem:[%s1062 + $0x4] sm:$0x1]
        %s1065 = scalar_lea.vmem %s3, 24
        %v1066 = vld [vmem:[%s1065] sm:$0x3]
        %v1068 = vsel %vm421, %v1063, 0
        %v1071 = vsel %vm425, %v1066, 0
        %1073 = vmatprep.subr.bf16.mxu0 0
        %1074 = vmatpush1.bf16.msra.mxu0 0
        %1075 = vmatprep.subr.bf16.mxu0 0
        %1076 = vmatpush1.bf16.msra.mxu0 0
        %1077 = vmatprep.subr.bf16.mxu0 0
        %1078 = vmatpush1.bf16.msra.mxu0 0
        %1079 = vmatprep.subr.bf16.mxu0 0
        %1080 = vmatpush1.bf16.msra.mxu0 0
        %1081 = vmatprep.subr.bf16.mxu0 0
        %1082 = vmatpush1.bf16.msra.mxu0 0
        %1083 = vmatprep.subr.bf16.mxu0 0
        %1084 = vmatpush1.bf16.msra.mxu0 0
        %1085 = vmatprep.subr.bf16.mxu0 0
        %1086 = vmatpush1.bf16.msra.mxu0 0
        %1087 = vmatprep.subr.bf16.mxu0 0
        %1088 = vmatpush1.bf16.msra.mxu0 %v1071
        %1089 = vmatprep.subr.bf16.mxu0 0
        %1090 = vmatpush2.bf16.msra.mxu0 0
        %1091 = vmatprep.subr.bf16.mxu0 0
        %1092 = vmatpush2.bf16.msra.mxu0 0
        %1093 = vmatprep.subr.bf16.mxu0 0
        %1094 = vmatpush2.bf16.msra.mxu0 0
        %1095 = vmatprep.subr.bf16.mxu0 0
        %1096 = vmatpush2.bf16.msra.mxu0 0
        %1097 = vmatprep.subr.bf16.mxu0 0
        %1098 = vmatpush2.bf16.msra.mxu0 0
        %1099 = vmatprep.subr.bf16.mxu0 0
        %1100 = vmatpush2.bf16.msra.mxu0 0
        %1101 = vmatprep.subr.bf16.mxu0 0
        %1102 = vmatpush2.bf16.msra.mxu0 0
        %1103 = vmatprep.subr.bf16.mxu0 0
        %1104 = vmatpush2.bf16.msra.mxu0 0
        %1105 = vmatprep.mubr.bf16.mxu0 0
        %1106 = vmatmul.mubr.bf16.gmra.mxu0 %v1068
        %v1107 = vpop.f32.mrf.mxu0
        %v1108 = vadd.f32 0.0, %v1107
        %v1109 = vpop.f32.mrf.mxu0
        %v1110 = vpop.f32.mrf.mxu0
        %v1111 = vpop.f32.mrf.mxu0
        %1112 = vdwg.mxu0
        %v1113 = vadd.f32 %v1060, %v1108
        %s1114 = scalar_lea.vmem %s3, 26
        %v1115 = vld [vmem:[%s1114] sm:$0x3]
        %v1118 = vunpack.c.l.b16 %v1063
        %v1119 = vunpack.c.l.b16 %v1064
        %v1120 = vpack.c.b16 %v1119, %v1118
        %v1122 = vshrl.u32 %v1120, 16
        %v1124 = vshll.u32 %v1120, 16
        %v1126 = vrot.slane %v1124, 1
        %v1127 = vor.u32 %v1122, %v1126
        %v1129 = vsel %vm421, %v1127, 0
        %v1132 = vsel %vm425, %v1115, 0
        %1134 = vmatprep.subr.bf16.mxu0 0
        %1135 = vmatpush1.bf16.msra.mxu0 0
        %1136 = vmatprep.subr.bf16.mxu0 0
        %1137 = vmatpush1.bf16.msra.mxu0 0
        %1138 = vmatprep.subr.bf16.mxu0 0
        %1139 = vmatpush1.bf16.msra.mxu0 0
        %1140 = vmatprep.subr.bf16.mxu0 0
        %1141 = vmatpush1.bf16.msra.mxu0 0
        %1142 = vmatprep.subr.bf16.mxu0 0
        %1143 = vmatpush1.bf16.msra.mxu0 0
        %1144 = vmatprep.subr.bf16.mxu0 0
        %1145 = vmatpush1.bf16.msra.mxu0 0
        %1146 = vmatprep.subr.bf16.mxu0 0
        %1147 = vmatpush1.bf16.msra.mxu0 0
        %1148 = vmatprep.subr.bf16.mxu0 0
        %1149 = vmatpush1.bf16.msra.mxu0 %v1132
        %1150 = vmatprep.subr.bf16.mxu0 0
        %1151 = vmatpush2.bf16.msra.mxu0 0
        %1152 = vmatprep.subr.bf16.mxu0 0
        %1153 = vmatpush2.bf16.msra.mxu0 0
        %1154 = vmatprep.subr.bf16.mxu0 0
        %1155 = vmatpush2.bf16.msra.mxu0 0
        %1156 = vmatprep.subr.bf16.mxu0 0
        %1157 = vmatpush2.bf16.msra.mxu0 0
        %1158 = vmatprep.subr.bf16.mxu0 0
        %1159 = vmatpush2.bf16.msra.mxu0 0
        %1160 = vmatprep.subr.bf16.mxu0 0
        %1161 = vmatpush2.bf16.msra.mxu0 0
        %1162 = vmatprep.subr.bf16.mxu0 0
        %1163 = vmatpush2.bf16.msra.mxu0 0
        %1164 = vmatprep.subr.bf16.mxu0 0
        %1165 = vmatpush2.bf16.msra.mxu0 0
        %1166 = vmatprep.mubr.bf16.mxu0 0
        %1167 = vmatmul.mubr.bf16.gmra.mxu0 %v1129
        %v1168 = vpop.f32.mrf.mxu0
        %v1169 = vadd.f32 0.0, %v1168
        %v1170 = vpop.f32.mrf.mxu0
        %v1171 = vpop.f32.mrf.mxu0
        %v1172 = vpop.f32.mrf.mxu0
        %1173 = vdwg.mxu0
        %v1174 = vadd.f32 %v1113, %v1169
        %s1175 = scalar_lea.vmem %s3, 28
        %v1176 = vld [vmem:[%s1175] sm:$0x3]
        %v1177 = vrot.slane %v1120, 1
        %v1179 = vsel %vm421, %v1177, 0
        %v1182 = vsel %vm425, %v1176, 0
        %1184 = vmatprep.subr.bf16.mxu0 0
        %1185 = vmatpush1.bf16.msra.mxu0 0
        %1186 = vmatprep.subr.bf16.mxu0 0
        %1187 = vmatpush1.bf16.msra.mxu0 0
        %1188 = vmatprep.subr.bf16.mxu0 0
        %1189 = vmatpush1.bf16.msra.mxu0 0
        %1190 = vmatprep.subr.bf16.mxu0 0
        %1191 = vmatpush1.bf16.msra.mxu0 0
        %1192 = vmatprep.subr.bf16.mxu0 0
        %1193 = vmatpush1.bf16.msra.mxu0 0
        %1194 = vmatprep.subr.bf16.mxu0 0
        %1195 = vmatpush1.bf16.msra.mxu0 0
        %1196 = vmatprep.subr.bf16.mxu0 0
        %1197 = vmatpush1.bf16.msra.mxu0 0
        %1198 = vmatprep.subr.bf16.mxu0 0
        %1199 = vmatpush1.bf16.msra.mxu0 %v1182
        %1200 = vmatprep.subr.bf16.mxu0 0
        %1201 = vmatpush2.bf16.msra.mxu0 0
        %1202 = vmatprep.subr.bf16.mxu0 0
        %1203 = vmatpush2.bf16.msra.mxu0 0
        %1204 = vmatprep.subr.bf16.mxu0 0
        %1205 = vmatpush2.bf16.msra.mxu0 0
        %1206 = vmatprep.subr.bf16.mxu0 0
        %1207 = vmatpush2.bf16.msra.mxu0 0
        %1208 = vmatprep.subr.bf16.mxu0 0
        %1209 = vmatpush2.bf16.msra.mxu0 0
        %1210 = vmatprep.subr.bf16.mxu0 0
        %1211 = vmatpush2.bf16.msra.mxu0 0
        %1212 = vmatprep.subr.bf16.mxu0 0
        %1213 = vmatpush2.bf16.msra.mxu0 0
        %1214 = vmatprep.subr.bf16.mxu0 0
        %1215 = vmatpush2.bf16.msra.mxu0 0
        %1216 = vmatprep.mubr.bf16.mxu0 0
        %1217 = vmatmul.mubr.bf16.gmra.mxu0 %v1179
        %v1218 = vpop.f32.mrf.mxu0
        %v1219 = vadd.f32 0.0, %v1218
        %v1220 = vpop.f32.mrf.mxu0
        %v1221 = vpop.f32.mrf.mxu0
        %v1222 = vpop.f32.mrf.mxu0
        %1223 = vdwg.mxu0
        %v1224 = vadd.f32 %v1174, %v1219
        %s1225 = smul.addr %s732, 4
        %s1226 = scalar_lea.vmem %s361, %s1225
        %v1227 = vld [vmem:[%s1226] sm:$0xf]
        %v1228 = vld [vmem:[%s1226 + $0x4] sm:$0x1]
        %s1229 = scalar_lea.vmem %s3, 30
        %v1230 = vld [vmem:[%s1229] sm:$0x3]
        %v1232 = vsel %vm421, %v1227, 0
        %v1235 = vsel %vm425, %v1230, 0
        %1237 = vmatprep.subr.bf16.mxu0 0
        %1238 = vmatpush1.bf16.msra.mxu0 0
        %1239 = vmatprep.subr.bf16.mxu0 0
        %1240 = vmatpush1.bf16.msra.mxu0 0
        %1241 = vmatprep.subr.bf16.mxu0 0
        %1242 = vmatpush1.bf16.msra.mxu0 0
        %1243 = vmatprep.subr.bf16.mxu0 0
        %1244 = vmatpush1.bf16.msra.mxu0 0
        %1245 = vmatprep.subr.bf16.mxu0 0
        %1246 = vmatpush1.bf16.msra.mxu0 0
        %1247 = vmatprep.subr.bf16.mxu0 0
        %1248 = vmatpush1.bf16.msra.mxu0 0
        %1249 = vmatprep.subr.bf16.mxu0 0
        %1250 = vmatpush1.bf16.msra.mxu0 0
        %1251 = vmatprep.subr.bf16.mxu0 0
        %1252 = vmatpush1.bf16.msra.mxu0 %v1235
        %1253 = vmatprep.subr.bf16.mxu0 0
        %1254 = vmatpush2.bf16.msra.mxu0 0
        %1255 = vmatprep.subr.bf16.mxu0 0
        %1256 = vmatpush2.bf16.msra.mxu0 0
        %1257 = vmatprep.subr.bf16.mxu0 0
        %1258 = vmatpush2.bf16.msra.mxu0 0
        %1259 = vmatprep.subr.bf16.mxu0 0
        %1260 = vmatpush2.bf16.msra.mxu0 0
        %1261 = vmatprep.subr.bf16.mxu0 0
        %1262 = vmatpush2.bf16.msra.mxu0 0
        %1263 = vmatprep.subr.bf16.mxu0 0
        %1264 = vmatpush2.bf16.msra.mxu0 0
        %1265 = vmatprep.subr.bf16.mxu0 0
        %1266 = vmatpush2.bf16.msra.mxu0 0
        %1267 = vmatprep.subr.bf16.mxu0 0
        %1268 = vmatpush2.bf16.msra.mxu0 0
        %1269 = vmatprep.mubr.bf16.mxu0 0
        %1270 = vmatmul.mubr.bf16.gmra.mxu0 %v1232
        %v1271 = vpop.f32.mrf.mxu0
        %v1272 = vadd.f32 0.0, %v1271
        %v1273 = vpop.f32.mrf.mxu0
        %v1274 = vpop.f32.mrf.mxu0
        %v1275 = vpop.f32.mrf.mxu0
        %1276 = vdwg.mxu0
        %v1277 = vadd.f32 %v1224, %v1272
        %s1278 = scalar_lea.vmem %s3, 32
        %v1279 = vld [vmem:[%s1278] sm:$0x3]
        %v1282 = vunpack.c.l.b16 %v1227
        %v1283 = vunpack.c.l.b16 %v1228
        %v1284 = vpack.c.b16 %v1283, %v1282
        %v1286 = vshrl.u32 %v1284, 16
        %v1288 = vshll.u32 %v1284, 16
        %v1290 = vrot.slane %v1288, 1
        %v1291 = vor.u32 %v1286, %v1290
        %v1293 = vsel %vm421, %v1291, 0
        %v1296 = vsel %vm425, %v1279, 0
        %1298 = vmatprep.subr.bf16.mxu0 0
        %1299 = vmatpush1.bf16.msra.mxu0 0
        %1300 = vmatprep.subr.bf16.mxu0 0
        %1301 = vmatpush1.bf16.msra.mxu0 0
        %1302 = vmatprep.subr.bf16.mxu0 0
        %1303 = vmatpush1.bf16.msra.mxu0 0
        %1304 = vmatprep.subr.bf16.mxu0 0
        %1305 = vmatpush1.bf16.msra.mxu0 0
        %1306 = vmatprep.subr.bf16.mxu0 0
        %1307 = vmatpush1.bf16.msra.mxu0 0
        %1308 = vmatprep.subr.bf16.mxu0 0
        %1309 = vmatpush1.bf16.msra.mxu0 0
        %1310 = vmatprep.subr.bf16.mxu0 0
        %1311 = vmatpush1.bf16.msra.mxu0 0
        %1312 = vmatprep.subr.bf16.mxu0 0
        %1313 = vmatpush1.bf16.msra.mxu0 %v1296
        %1314 = vmatprep.subr.bf16.mxu0 0
        %1315 = vmatpush2.bf16.msra.mxu0 0
        %1316 = vmatprep.subr.bf16.mxu0 0
        %1317 = vmatpush2.bf16.msra.mxu0 0
        %1318 = vmatprep.subr.bf16.mxu0 0
        %1319 = vmatpush2.bf16.msra.mxu0 0
        %1320 = vmatprep.subr.bf16.mxu0 0
        %1321 = vmatpush2.bf16.msra.mxu0 0
        %1322 = vmatprep.subr.bf16.mxu0 0
        %1323 = vmatpush2.bf16.msra.mxu0 0
        %1324 = vmatprep.subr.bf16.mxu0 0
        %1325 = vmatpush2.bf16.msra.mxu0 0
        %1326 = vmatprep.subr.bf16.mxu0 0
        %1327 = vmatpush2.bf16.msra.mxu0 0
        %1328 = vmatprep.subr.bf16.mxu0 0
        %1329 = vmatpush2.bf16.msra.mxu0 0
        %1330 = vmatprep.mubr.bf16.mxu0 0
        %1331 = vmatmul.mubr.bf16.gmra.mxu0 %v1293
        %v1332 = vpop.f32.mrf.mxu0
        %v1333 = vadd.f32 0.0, %v1332
        %v1334 = vpop.f32.mrf.mxu0
        %v1335 = vpop.f32.mrf.mxu0
        %v1336 = vpop.f32.mrf.mxu0
        %1337 = vdwg.mxu0
        %v1338 = vadd.f32 %v1277, %v1333
        %s1339 = scalar_lea.vmem %s3, 34
        %v1340 = vld [vmem:[%s1339] sm:$0x3]
        %v1341 = vrot.slane %v1284, 1
        %v1343 = vsel %vm421, %v1341, 0
        %v1346 = vsel %vm425, %v1340, 0
        %1348 = vmatprep.subr.bf16.mxu0 0
        %1349 = vmatpush1.bf16.msra.mxu0 0
        %1350 = vmatprep.subr.bf16.mxu0 0
        %1351 = vmatpush1.bf16.msra.mxu0 0
        %1352 = vmatprep.subr.bf16.mxu0 0
        %1353 = vmatpush1.bf16.msra.mxu0 0
        %1354 = vmatprep.subr.bf16.mxu0 0
        %1355 = vmatpush1.bf16.msra.mxu0 0
        %1356 = vmatprep.subr.bf16.mxu0 0
        %1357 = vmatpush1.bf16.msra.mxu0 0
        %1358 = vmatprep.subr.bf16.mxu0 0
        %1359 = vmatpush1.bf16.msra.mxu0 0
        %1360 = vmatprep.subr.bf16.mxu0 0
        %1361 = vmatpush1.bf16.msra.mxu0 0
        %1362 = vmatprep.subr.bf16.mxu0 0
        %1363 = vmatpush1.bf16.msra.mxu0 %v1346
        %1364 = vmatprep.subr.bf16.mxu0 0
        %1365 = vmatpush2.bf16.msra.mxu0 0
        %1366 = vmatprep.subr.bf16.mxu0 0
        %1367 = vmatpush2.bf16.msra.mxu0 0
        %1368 = vmatprep.subr.bf16.mxu0 0
        %1369 = vmatpush2.bf16.msra.mxu0 0
        %1370 = vmatprep.subr.bf16.mxu0 0
        %1371 = vmatpush2.bf16.msra.mxu0 0
        %1372 = vmatprep.subr.bf16.mxu0 0
        %1373 = vmatpush2.bf16.msra.mxu0 0
        %1374 = vmatprep.subr.bf16.mxu0 0
        %1375 = vmatpush2.bf16.msra.mxu0 0
        %1376 = vmatprep.subr.bf16.mxu0 0
        %1377 = vmatpush2.bf16.msra.mxu0 0
        %1378 = vmatprep.subr.bf16.mxu0 0
        %1379 = vmatpush2.bf16.msra.mxu0 0
        %1380 = vmatprep.mubr.bf16.mxu0 0
        %1381 = vmatmul.mubr.bf16.gmra.mxu0 %v1343
        %v1382 = vpop.f32.mrf.mxu0
        %v1383 = vadd.f32 0.0, %v1382
        %v1384 = vpop.f32.mrf.mxu0
        %v1385 = vpop.f32.mrf.mxu0
        %v1386 = vpop.f32.mrf.mxu0
        %1387 = vdwg.mxu0
        %v1388 = vadd.f32 %v1338, %v1383
        %s1389 = smul.addr %s401, 4
        %s1390 = scalar_lea.vmem %s372, %s1389
        %v1391 = vld [vmem:[%s1390] sm:$0xf]
        %v1392 = vld [vmem:[%s1390 + $0x4] sm:$0x1]
        %s1393 = scalar_lea.vmem %s3, 36
        %v1394 = vld [vmem:[%s1393] sm:$0x3]
        %v1396 = vsel %vm421, %v1391, 0
        %v1399 = vsel %vm425, %v1394, 0
        %1401 = vmatprep.subr.bf16.mxu0 0
        %1402 = vmatpush1.bf16.msra.mxu0 0
        %1403 = vmatprep.subr.bf16.mxu0 0
        %1404 = vmatpush1.bf16.msra.mxu0 0
        %1405 = vmatprep.subr.bf16.mxu0 0
        %1406 = vmatpush1.bf16.msra.mxu0 0
        %1407 = vmatprep.subr.bf16.mxu0 0
        %1408 = vmatpush1.bf16.msra.mxu0 0
        %1409 = vmatprep.subr.bf16.mxu0 0
        %1410 = vmatpush1.bf16.msra.mxu0 0
        %1411 = vmatprep.subr.bf16.mxu0 0
        %1412 = vmatpush1.bf16.msra.mxu0 0
        %1413 = vmatprep.subr.bf16.mxu0 0
        %1414 = vmatpush1.bf16.msra.mxu0 0
        %1415 = vmatprep.subr.bf16.mxu0 0
        %1416 = vmatpush1.bf16.msra.mxu0 %v1399
        %1417 = vmatprep.subr.bf16.mxu0 0
        %1418 = vmatpush2.bf16.msra.mxu0 0
        %1419 = vmatprep.subr.bf16.mxu0 0
        %1420 = vmatpush2.bf16.msra.mxu0 0
        %1421 = vmatprep.subr.bf16.mxu0 0
        %1422 = vmatpush2.bf16.msra.mxu0 0
        %1423 = vmatprep.subr.bf16.mxu0 0
        %1424 = vmatpush2.bf16.msra.mxu0 0
        %1425 = vmatprep.subr.bf16.mxu0 0
        %1426 = vmatpush2.bf16.msra.mxu0 0
        %1427 = vmatprep.subr.bf16.mxu0 0
        %1428 = vmatpush2.bf16.msra.mxu0 0
        %1429 = vmatprep.subr.bf16.mxu0 0
        %1430 = vmatpush2.bf16.msra.mxu0 0
        %1431 = vmatprep.subr.bf16.mxu0 0
        %1432 = vmatpush2.bf16.msra.mxu0 0
        %1433 = vmatprep.mubr.bf16.mxu0 0
        %1434 = vmatmul.mubr.bf16.gmra.mxu0 %v1396
        %v1435 = vpop.f32.mrf.mxu0
        %v1436 = vadd.f32 0.0, %v1435
        %v1437 = vpop.f32.mrf.mxu0
        %v1438 = vpop.f32.mrf.mxu0
        %v1439 = vpop.f32.mrf.mxu0
        %1440 = vdwg.mxu0
        %v1441 = vadd.f32 %v1388, %v1436
        %s1442 = scalar_lea.vmem %s3, 38
        %v1443 = vld [vmem:[%s1442] sm:$0x3]
        %v1446 = vunpack.c.l.b16 %v1391
        %v1447 = vunpack.c.l.b16 %v1392
        %v1448 = vpack.c.b16 %v1447, %v1446
        %v1450 = vshrl.u32 %v1448, 16
        %v1452 = vshll.u32 %v1448, 16
        %v1454 = vrot.slane %v1452, 1
        %v1455 = vor.u32 %v1450, %v1454
        %v1457 = vsel %vm421, %v1455, 0
        %v1460 = vsel %vm425, %v1443, 0
        %1462 = vmatprep.subr.bf16.mxu0 0
        %1463 = vmatpush1.bf16.msra.mxu0 0
        %1464 = vmatprep.subr.bf16.mxu0 0
        %1465 = vmatpush1.bf16.msra.mxu0 0
        %1466 = vmatprep.subr.bf16.mxu0 0
        %1467 = vmatpush1.bf16.msra.mxu0 0
        %1468 = vmatprep.subr.bf16.mxu0 0
        %1469 = vmatpush1.bf16.msra.mxu0 0
        %1470 = vmatprep.subr.bf16.mxu0 0
        %1471 = vmatpush1.bf16.msra.mxu0 0
        %1472 = vmatprep.subr.bf16.mxu0 0
        %1473 = vmatpush1.bf16.msra.mxu0 0
        %1474 = vmatprep.subr.bf16.mxu0 0
        %1475 = vmatpush1.bf16.msra.mxu0 0
        %1476 = vmatprep.subr.bf16.mxu0 0
        %1477 = vmatpush1.bf16.msra.mxu0 %v1460
        %1478 = vmatprep.subr.bf16.mxu0 0
        %1479 = vmatpush2.bf16.msra.mxu0 0
        %1480 = vmatprep.subr.bf16.mxu0 0
        %1481 = vmatpush2.bf16.msra.mxu0 0
        %1482 = vmatprep.subr.bf16.mxu0 0
        %1483 = vmatpush2.bf16.msra.mxu0 0
        %1484 = vmatprep.subr.bf16.mxu0 0
        %1485 = vmatpush2.bf16.msra.mxu0 0
        %1486 = vmatprep.subr.bf16.mxu0 0
        %1487 = vmatpush2.bf16.msra.mxu0 0
        %1488 = vmatprep.subr.bf16.mxu0 0
        %1489 = vmatpush2.bf16.msra.mxu0 0
        %1490 = vmatprep.subr.bf16.mxu0 0
        %1491 = vmatpush2.bf16.msra.mxu0 0
        %1492 = vmatprep.subr.bf16.mxu0 0
        %1493 = vmatpush2.bf16.msra.mxu0 0
        %1494 = vmatprep.mubr.bf16.mxu0 0
        %1495 = vmatmul.mubr.bf16.gmra.mxu0 %v1457
        %v1496 = vpop.f32.mrf.mxu0
        %v1497 = vadd.f32 0.0, %v1496
        %v1498 = vpop.f32.mrf.mxu0
        %v1499 = vpop.f32.mrf.mxu0
        %v1500 = vpop.f32.mrf.mxu0
        %1501 = vdwg.mxu0
        %v1502 = vadd.f32 %v1441, %v1497
        %s1503 = scalar_lea.vmem %s3, 40
        %v1504 = vld [vmem:[%s1503] sm:$0x3]
        %v1505 = vrot.slane %v1448, 1
        %v1507 = vsel %vm421, %v1505, 0
        %v1510 = vsel %vm425, %v1504, 0
        %1512 = vmatprep.subr.bf16.mxu0 0
        %1513 = vmatpush1.bf16.msra.mxu0 0
        %1514 = vmatprep.subr.bf16.mxu0 0
        %1515 = vmatpush1.bf16.msra.mxu0 0
        %1516 = vmatprep.subr.bf16.mxu0 0
        %1517 = vmatpush1.bf16.msra.mxu0 0
        %1518 = vmatprep.subr.bf16.mxu0 0
        %1519 = vmatpush1.bf16.msra.mxu0 0
        %1520 = vmatprep.subr.bf16.mxu0 0
        %1521 = vmatpush1.bf16.msra.mxu0 0
        %1522 = vmatprep.subr.bf16.mxu0 0
        %1523 = vmatpush1.bf16.msra.mxu0 0
        %1524 = vmatprep.subr.bf16.mxu0 0
        %1525 = vmatpush1.bf16.msra.mxu0 0
        %1526 = vmatprep.subr.bf16.mxu0 0
        %1527 = vmatpush1.bf16.msra.mxu0 %v1510
        %1528 = vmatprep.subr.bf16.mxu0 0
        %1529 = vmatpush2.bf16.msra.mxu0 0
        %1530 = vmatprep.subr.bf16.mxu0 0
        %1531 = vmatpush2.bf16.msra.mxu0 0
        %1532 = vmatprep.subr.bf16.mxu0 0
        %1533 = vmatpush2.bf16.msra.mxu0 0
        %1534 = vmatprep.subr.bf16.mxu0 0
        %1535 = vmatpush2.bf16.msra.mxu0 0
        %1536 = vmatprep.subr.bf16.mxu0 0
        %1537 = vmatpush2.bf16.msra.mxu0 0
        %1538 = vmatprep.subr.bf16.mxu0 0
        %1539 = vmatpush2.bf16.msra.mxu0 0
        %1540 = vmatprep.subr.bf16.mxu0 0
        %1541 = vmatpush2.bf16.msra.mxu0 0
        %1542 = vmatprep.subr.bf16.mxu0 0
        %1543 = vmatpush2.bf16.msra.mxu0 0
        %1544 = vmatprep.mubr.bf16.mxu0 0
        %1545 = vmatmul.mubr.bf16.gmra.mxu0 %v1507
        %v1546 = vpop.f32.mrf.mxu0
        %v1547 = vadd.f32 0.0, %v1546
        %v1548 = vpop.f32.mrf.mxu0
        %v1549 = vpop.f32.mrf.mxu0
        %v1550 = vpop.f32.mrf.mxu0
        %1551 = vdwg.mxu0
        %v1552 = vadd.f32 %v1502, %v1547
        %s1553 = smul.addr %s566, 4
        %s1554 = scalar_lea.vmem %s372, %s1553
        %v1555 = vld [vmem:[%s1554] sm:$0xf]
        %v1556 = vld [vmem:[%s1554 + $0x4] sm:$0x1]
        %s1557 = scalar_lea.vmem %s3, 42
        %v1558 = vld [vmem:[%s1557] sm:$0x3]
        %v1560 = vsel %vm421, %v1555, 0
        %v1563 = vsel %vm425, %v1558, 0
        %1565 = vmatprep.subr.bf16.mxu0 0
        %1566 = vmatpush1.bf16.msra.mxu0 0
        %1567 = vmatprep.subr.bf16.mxu0 0
        %1568 = vmatpush1.bf16.msra.mxu0 0
        %1569 = vmatprep.subr.bf16.mxu0 0
        %1570 = vmatpush1.bf16.msra.mxu0 0
        %1571 = vmatprep.subr.bf16.mxu0 0
        %1572 = vmatpush1.bf16.msra.mxu0 0
        %1573 = vmatprep.subr.bf16.mxu0 0
        %1574 = vmatpush1.bf16.msra.mxu0 0
        %1575 = vmatprep.subr.bf16.mxu0 0
        %1576 = vmatpush1.bf16.msra.mxu0 0
        %1577 = vmatprep.subr.bf16.mxu0 0
        %1578 = vmatpush1.bf16.msra.mxu0 0
        %1579 = vmatprep.subr.bf16.mxu0 0
        %1580 = vmatpush1.bf16.msra.mxu0 %v1563
        %1581 = vmatprep.subr.bf16.mxu0 0
        %1582 = vmatpush2.bf16.msra.mxu0 0
        %1583 = vmatprep.subr.bf16.mxu0 0
        %1584 = vmatpush2.bf16.msra.mxu0 0
        %1585 = vmatprep.subr.bf16.mxu0 0
        %1586 = vmatpush2.bf16.msra.mxu0 0
        %1587 = vmatprep.subr.bf16.mxu0 0
        %1588 = vmatpush2.bf16.msra.mxu0 0
        %1589 = vmatprep.subr.bf16.mxu0 0
        %1590 = vmatpush2.bf16.msra.mxu0 0
        %1591 = vmatprep.subr.bf16.mxu0 0
        %1592 = vmatpush2.bf16.msra.mxu0 0
        %1593 = vmatprep.subr.bf16.mxu0 0
        %1594 = vmatpush2.bf16.msra.mxu0 0
        %1595 = vmatprep.subr.bf16.mxu0 0
        %1596 = vmatpush2.bf16.msra.mxu0 0
        %1597 = vmatprep.mubr.bf16.mxu0 0
        %1598 = vmatmul.mubr.bf16.gmra.mxu0 %v1560
        %v1599 = vpop.f32.mrf.mxu0
        %v1600 = vadd.f32 0.0, %v1599
        %v1601 = vpop.f32.mrf.mxu0
        %v1602 = vpop.f32.mrf.mxu0
        %v1603 = vpop.f32.mrf.mxu0
        %1604 = vdwg.mxu0
        %v1605 = vadd.f32 %v1552, %v1600
        %s1606 = scalar_lea.vmem %s3, 44
        %v1607 = vld [vmem:[%s1606] sm:$0x3]
        %v1610 = vunpack.c.l.b16 %v1555
        %v1611 = vunpack.c.l.b16 %v1556
        %v1612 = vpack.c.b16 %v1611, %v1610
        %v1614 = vshrl.u32 %v1612, 16
        %v1616 = vshll.u32 %v1612, 16
        %v1618 = vrot.slane %v1616, 1
        %v1619 = vor.u32 %v1614, %v1618
        %v1621 = vsel %vm421, %v1619, 0
        %v1624 = vsel %vm425, %v1607, 0
        %1626 = vmatprep.subr.bf16.mxu0 0
        %1627 = vmatpush1.bf16.msra.mxu0 0
        %1628 = vmatprep.subr.bf16.mxu0 0
        %1629 = vmatpush1.bf16.msra.mxu0 0
        %1630 = vmatprep.subr.bf16.mxu0 0
        %1631 = vmatpush1.bf16.msra.mxu0 0
        %1632 = vmatprep.subr.bf16.mxu0 0
        %1633 = vmatpush1.bf16.msra.mxu0 0
        %1634 = vmatprep.subr.bf16.mxu0 0
        %1635 = vmatpush1.bf16.msra.mxu0 0
        %1636 = vmatprep.subr.bf16.mxu0 0
        %1637 = vmatpush1.bf16.msra.mxu0 0
        %1638 = vmatprep.subr.bf16.mxu0 0
        %1639 = vmatpush1.bf16.msra.mxu0 0
        %1640 = vmatprep.subr.bf16.mxu0 0
        %1641 = vmatpush1.bf16.msra.mxu0 %v1624
        %1642 = vmatprep.subr.bf16.mxu0 0
        %1643 = vmatpush2.bf16.msra.mxu0 0
        %1644 = vmatprep.subr.bf16.mxu0 0
        %1645 = vmatpush2.bf16.msra.mxu0 0
        %1646 = vmatprep.subr.bf16.mxu0 0
        %1647 = vmatpush2.bf16.msra.mxu0 0
        %1648 = vmatprep.subr.bf16.mxu0 0
        %1649 = vmatpush2.bf16.msra.mxu0 0
        %1650 = vmatprep.subr.bf16.mxu0 0
        %1651 = vmatpush2.bf16.msra.mxu0 0
        %1652 = vmatprep.subr.bf16.mxu0 0
        %1653 = vmatpush2.bf16.msra.mxu0 0
        %1654 = vmatprep.subr.bf16.mxu0 0
        %1655 = vmatpush2.bf16.msra.mxu0 0
        %1656 = vmatprep.subr.bf16.mxu0 0
        %1657 = vmatpush2.bf16.msra.mxu0 0
        %1658 = vmatprep.mubr.bf16.mxu0 0
        %1659 = vmatmul.mubr.bf16.gmra.mxu0 %v1621
        %v1660 = vpop.f32.mrf.mxu0
        %v1661 = vadd.f32 0.0, %v1660
        %v1662 = vpop.f32.mrf.mxu0
        %v1663 = vpop.f32.mrf.mxu0
        %v1664 = vpop.f32.mrf.mxu0
        %1665 = vdwg.mxu0
        %v1666 = vadd.f32 %v1605, %v1661
        %s1667 = scalar_lea.vmem %s3, 46
        %v1668 = vld [vmem:[%s1667] sm:$0x3]
        %v1669 = vrot.slane %v1612, 1
        %v1671 = vsel %vm421, %v1669, 0
        %v1674 = vsel %vm425, %v1668, 0
        %1676 = vmatprep.subr.bf16.mxu0 0
        %1677 = vmatpush1.bf16.msra.mxu0 0
        %1678 = vmatprep.subr.bf16.mxu0 0
        %1679 = vmatpush1.bf16.msra.mxu0 0
        %1680 = vmatprep.subr.bf16.mxu0 0
        %1681 = vmatpush1.bf16.msra.mxu0 0
        %1682 = vmatprep.subr.bf16.mxu0 0
        %1683 = vmatpush1.bf16.msra.mxu0 0
        %1684 = vmatprep.subr.bf16.mxu0 0
        %1685 = vmatpush1.bf16.msra.mxu0 0
        %1686 = vmatprep.subr.bf16.mxu0 0
        %1687 = vmatpush1.bf16.msra.mxu0 0
        %1688 = vmatprep.subr.bf16.mxu0 0
        %1689 = vmatpush1.bf16.msra.mxu0 0
        %1690 = vmatprep.subr.bf16.mxu0 0
        %1691 = vmatpush1.bf16.msra.mxu0 %v1674
        %1692 = vmatprep.subr.bf16.mxu0 0
        %1693 = vmatpush2.bf16.msra.mxu0 0
        %1694 = vmatprep.subr.bf16.mxu0 0
        %1695 = vmatpush2.bf16.msra.mxu0 0
        %1696 = vmatprep.subr.bf16.mxu0 0
        %1697 = vmatpush2.bf16.msra.mxu0 0
        %1698 = vmatprep.subr.bf16.mxu0 0
        %1699 = vmatpush2.bf16.msra.mxu0 0
        %1700 = vmatprep.subr.bf16.mxu0 0
        %1701 = vmatpush2.bf16.msra.mxu0 0
        %1702 = vmatprep.subr.bf16.mxu0 0
        %1703 = vmatpush2.bf16.msra.mxu0 0
        %1704 = vmatprep.subr.bf16.mxu0 0
        %1705 = vmatpush2.bf16.msra.mxu0 0
        %1706 = vmatprep.subr.bf16.mxu0 0
        %1707 = vmatpush2.bf16.msra.mxu0 0
        %1708 = vmatprep.mubr.bf16.mxu0 0
        %1709 = vmatmul.mubr.bf16.gmra.mxu0 %v1671
        %v1710 = vpop.f32.mrf.mxu0
        %v1711 = vadd.f32 0.0, %v1710
        %v1712 = vpop.f32.mrf.mxu0
        %v1713 = vpop.f32.mrf.mxu0
        %v1714 = vpop.f32.mrf.mxu0
        %1715 = vdwg.mxu0
        %v1716 = vadd.f32 %v1666, %v1711
        %s1717 = smul.addr %s732, 4
        %s1718 = scalar_lea.vmem %s372, %s1717
        %v1719 = vld [vmem:[%s1718] sm:$0xf]
        %v1720 = vld [vmem:[%s1718 + $0x4] sm:$0x1]
        %s1721 = scalar_lea.vmem %s3, 48
        %v1722 = vld [vmem:[%s1721] sm:$0x3]
        %v1724 = vsel %vm421, %v1719, 0
        %v1727 = vsel %vm425, %v1722, 0
        %1729 = vmatprep.subr.bf16.mxu0 0
        %1730 = vmatpush1.bf16.msra.mxu0 0
        %1731 = vmatprep.subr.bf16.mxu0 0
        %1732 = vmatpush1.bf16.msra.mxu0 0
        %1733 = vmatprep.subr.bf16.mxu0 0
        %1734 = vmatpush1.bf16.msra.mxu0 0
        %1735 = vmatprep.subr.bf16.mxu0 0
        %1736 = vmatpush1.bf16.msra.mxu0 0
        %1737 = vmatprep.subr.bf16.mxu0 0
        %1738 = vmatpush1.bf16.msra.mxu0 0
        %1739 = vmatprep.subr.bf16.mxu0 0
        %1740 = vmatpush1.bf16.msra.mxu0 0
        %1741 = vmatprep.subr.bf16.mxu0 0
        %1742 = vmatpush1.bf16.msra.mxu0 0
        %1743 = vmatprep.subr.bf16.mxu0 0
        %1744 = vmatpush1.bf16.msra.mxu0 %v1727
        %1745 = vmatprep.subr.bf16.mxu0 0
        %1746 = vmatpush2.bf16.msra.mxu0 0
        %1747 = vmatprep.subr.bf16.mxu0 0
        %1748 = vmatpush2.bf16.msra.mxu0 0
        %1749 = vmatprep.subr.bf16.mxu0 0
        %1750 = vmatpush2.bf16.msra.mxu0 0
        %1751 = vmatprep.subr.bf16.mxu0 0
        %1752 = vmatpush2.bf16.msra.mxu0 0
        %1753 = vmatprep.subr.bf16.mxu0 0
        %1754 = vmatpush2.bf16.msra.mxu0 0
        %1755 = vmatprep.subr.bf16.mxu0 0
        %1756 = vmatpush2.bf16.msra.mxu0 0
        %1757 = vmatprep.subr.bf16.mxu0 0
        %1758 = vmatpush2.bf16.msra.mxu0 0
        %1759 = vmatprep.subr.bf16.mxu0 0
        %1760 = vmatpush2.bf16.msra.mxu0 0
        %1761 = vmatprep.mubr.bf16.mxu0 0
        %1762 = vmatmul.mubr.bf16.gmra.mxu0 %v1724
        %v1763 = vpop.f32.mrf.mxu0
        %v1764 = vadd.f32 0.0, %v1763
        %v1765 = vpop.f32.mrf.mxu0
        %v1766 = vpop.f32.mrf.mxu0
        %v1767 = vpop.f32.mrf.mxu0
        %1768 = vdwg.mxu0
        %v1769 = vadd.f32 %v1716, %v1764
        %s1770 = scalar_lea.vmem %s3, 50
        %v1771 = vld [vmem:[%s1770] sm:$0x3]
        %v1774 = vunpack.c.l.b16 %v1719
        %v1775 = vunpack.c.l.b16 %v1720
        %v1776 = vpack.c.b16 %v1775, %v1774
        %v1778 = vshrl.u32 %v1776, 16
        %v1780 = vshll.u32 %v1776, 16
        %v1782 = vrot.slane %v1780, 1
        %v1783 = vor.u32 %v1778, %v1782
        %v1785 = vsel %vm421, %v1783, 0
        %v1788 = vsel %vm425, %v1771, 0
        %1790 = vmatprep.subr.bf16.mxu0 0
        %1791 = vmatpush1.bf16.msra.mxu0 0
        %1792 = vmatprep.subr.bf16.mxu0 0
        %1793 = vmatpush1.bf16.msra.mxu0 0
        %1794 = vmatprep.subr.bf16.mxu0 0
        %1795 = vmatpush1.bf16.msra.mxu0 0
        %1796 = vmatprep.subr.bf16.mxu0 0
        %1797 = vmatpush1.bf16.msra.mxu0 0
        %1798 = vmatprep.subr.bf16.mxu0 0
        %1799 = vmatpush1.bf16.msra.mxu0 0
        %1800 = vmatprep.subr.bf16.mxu0 0
        %1801 = vmatpush1.bf16.msra.mxu0 0
        %1802 = vmatprep.subr.bf16.mxu0 0
        %1803 = vmatpush1.bf16.msra.mxu0 0
        %1804 = vmatprep.subr.bf16.mxu0 0
        %1805 = vmatpush1.bf16.msra.mxu0 %v1788
        %1806 = vmatprep.subr.bf16.mxu0 0
        %1807 = vmatpush2.bf16.msra.mxu0 0
        %1808 = vmatprep.subr.bf16.mxu0 0
        %1809 = vmatpush2.bf16.msra.mxu0 0
        %1810 = vmatprep.subr.bf16.mxu0 0
        %1811 = vmatpush2.bf16.msra.mxu0 0
        %1812 = vmatprep.subr.bf16.mxu0 0
        %1813 = vmatpush2.bf16.msra.mxu0 0
        %1814 = vmatprep.subr.bf16.mxu0 0
        %1815 = vmatpush2.bf16.msra.mxu0 0
        %1816 = vmatprep.subr.bf16.mxu0 0
        %1817 = vmatpush2.bf16.msra.mxu0 0
        %1818 = vmatprep.subr.bf16.mxu0 0
        %1819 = vmatpush2.bf16.msra.mxu0 0
        %1820 = vmatprep.subr.bf16.mxu0 0
        %1821 = vmatpush2.bf16.msra.mxu0 0
        %1822 = vmatprep.mubr.bf16.mxu0 0
        %1823 = vmatmul.mubr.bf16.gmra.mxu0 %v1785
        %v1824 = vpop.f32.mrf.mxu0
        %v1825 = vadd.f32 0.0, %v1824
        %v1826 = vpop.f32.mrf.mxu0
        %v1827 = vpop.f32.mrf.mxu0
        %v1828 = vpop.f32.mrf.mxu0
        %1829 = vdwg.mxu0
        %v1830 = vadd.f32 %v1769, %v1825
        %s1831 = scalar_lea.vmem %s3, 52
        %v1832 = vld [vmem:[%s1831] sm:$0x3]
        %v1833 = vrot.slane %v1776, 1
        %v1835 = vsel %vm421, %v1833, 0
        %v1838 = vsel %vm425, %v1832, 0
        %1840 = vmatprep.subr.bf16.mxu0 0
        %1841 = vmatpush1.bf16.msra.mxu0 0
        %1842 = vmatprep.subr.bf16.mxu0 0
        %1843 = vmatpush1.bf16.msra.mxu0 0
        %1844 = vmatprep.subr.bf16.mxu0 0
        %1845 = vmatpush1.bf16.msra.mxu0 0
        %1846 = vmatprep.subr.bf16.mxu0 0
        %1847 = vmatpush1.bf16.msra.mxu0 0
        %1848 = vmatprep.subr.bf16.mxu0 0
        %1849 = vmatpush1.bf16.msra.mxu0 0
        %1850 = vmatprep.subr.bf16.mxu0 0
        %1851 = vmatpush1.bf16.msra.mxu0 0
        %1852 = vmatprep.subr.bf16.mxu0 0
        %1853 = vmatpush1.bf16.msra.mxu0 0
        %1854 = vmatprep.subr.bf16.mxu0 0
        %1855 = vmatpush1.bf16.msra.mxu0 %v1838
        %1856 = vmatprep.subr.bf16.mxu0 0
        %1857 = vmatpush2.bf16.msra.mxu0 0
        %1858 = vmatprep.subr.bf16.mxu0 0
        %1859 = vmatpush2.bf16.msra.mxu0 0
        %1860 = vmatprep.subr.bf16.mxu0 0
        %1861 = vmatpush2.bf16.msra.mxu0 0
        %1862 = vmatprep.subr.bf16.mxu0 0
        %1863 = vmatpush2.bf16.msra.mxu0 0
        %1864 = vmatprep.subr.bf16.mxu0 0
        %1865 = vmatpush2.bf16.msra.mxu0 0
        %1866 = vmatprep.subr.bf16.mxu0 0
        %1867 = vmatpush2.bf16.msra.mxu0 0
        %1868 = vmatprep.subr.bf16.mxu0 0
        %1869 = vmatpush2.bf16.msra.mxu0 0
        %1870 = vmatprep.subr.bf16.mxu0 0
        %1871 = vmatpush2.bf16.msra.mxu0 0
        %1872 = vmatprep.mubr.bf16.mxu0 0
        %1873 = vmatmul.mubr.bf16.gmra.mxu0 %v1835
        %v1874 = vpop.f32.mrf.mxu0
        %v1875 = vadd.f32 0.0, %v1874
        %v1876 = vpop.f32.mrf.mxu0
        %v1877 = vpop.f32.mrf.mxu0
        %v1878 = vpop.f32.mrf.mxu0
        %1879 = vdwg.mxu0
        %v1880 = vadd.f32 %v1830, %v1875
        %v1882 = vlaneseq
        %v1883 = vshrl.u32 %v1882, 7
        %v1884 = vsub.s32 0, %v1883
        %v1885 = vrot.slane %v392, %v1884
        %v1887 = vadd.f32 %v1880, %v1885
        %v1888 = vpack.c.bf16 %v1887, %v1887
        %s1889 = smul.addr %s394, 4
        %s1890 = scalar_lea.vmem %s382, %s1889
        %vm1891 = vcmask 60416
        %1892 = vst.msk [vmem:[%s1890] sm:$0xf] %vm1891, %v1888
        %vm1893 = vcmask 64512
        %v1894 = vsel %vm1893, %v1887, 0.0
        %v1895 = vrot.slane %v1894, 4
        %v1896 = vadd.f32 %v1894, %v1895
        %v1897 = vrot.slane %v1896, 2
        %v1898 = vadd.f32 %v1896, %v1897
        %v1899 = vrot.slane %v1898, 1
        %v1900 = vadd.f32 %v1898, %v1899
        %v1901 = vadd.f32 %v399, %v1900
        %v1902 = vmul.f32 %v1887, %v1887
        %v1903 = vsel %vm1893, %v1902, 0.0
        %v1904 = vrot.slane %v1903, 4
        %v1905 = vadd.f32 %v1903, %v1904
        %v1906 = vrot.slane %v1905, 2
        %v1907 = vadd.f32 %v1905, %v1906
        %v1908 = vrot.slane %v1907, 1
        %v1909 = vadd.f32 %v1907, %v1908
        %v1910 = vadd.f32 %v400, %v1909
      $region45: #{decode_block_forward.20} parent=39 // loop_footer
        %s398 = sadd.s32 1, %s394
      $region46: #{decode_block_forward.20} parent=39 // loop_footer_branch
        %393 = sbr.rel target = $region42
      $region47: #{decode_block_forward.20} parent=39 // loop_exit
        _
      %vm1911 = vcmask 57344
      %1912 = vst.msk [vmem:[%s390] sm:$0x1] %vm1911, %v399
      %1913 = vst.msk [vmem:[%s390 + $0x1] sm:$0x1] %vm1911, %v400
      %p1914 = scmp.lt.s32.totalorder %s22, 1
      %s1915 = scalar_select %p1914, %s22, 1
      %p1916 = scmp.lt.s32.totalorder %s23, 7
      %s1917 = scalar_select %p1916, %s23, 7
      %s1918 = smul.addr %s1917, 8
      %s1919 = smul.addr %s1915, 64
      %s1920 = sadd.s32 %s1918, %s1919
      %s1921 = smul.addr %s1920, 4
      %s1922 = scalar_lea.vmem %s5, %s1921
      %p1923 = scmp.lt.s32.totalorder %s22, 1
      %s1924 = scalar_select %p1923, %s22, 1
      %p1925 = scmp.lt.s32.totalorder %s23, 7
      %s1926 = scalar_select %p1925, %s23, 7
      %s1927 = smul.addr %s1924, 8
      %s1928 = sadd.s32 %s1926, %s1927
      %s1929 = smul.addr %s1928, 2
      %s1930 = scalar_lea.vmem %s6, %s1929
      // Predicated region
      $region48: #{decode_block_forward.20} parent=39 // pred_check
        %p1931 = pneg %p180
      $region49: #{decode_block_forward.20} parent=39 // pred_check_branch
        %1933 = sbr.rel (%p1931) target = $region51
      $region50: #{decode_block_forward.20} parent=39 // pred_region
        _
      $region51: #{decode_block_forward.20} parent=39 // pred_fallthru
        _
      // Predicated region
      $region52: #{decode_block_forward.20} parent=39 // pred_check
        %p1934 = pneg %p208
      $region53: #{decode_block_forward.20} parent=39 // pred_check_branch
        %1936 = sbr.rel (%p1934) target = $region55
      $region54: #{decode_block_forward.20} parent=39 // pred_region
        _
      $region55: #{decode_block_forward.20} parent=39 // pred_fallthru
        _
    $region40: #{decode_block_forward.20} parent=5 // pred_fallthru
      _
    %p1937 = scmp.le.s32.totalorder 2, %s13
    // Predicated region
    $region56: #{decode_block_forward.20} parent=5 // pred_check
      %p1938 = pneg %p1937
    $region57: #{decode_block_forward.20} parent=5 // pred_check_branch
      %1940 = sbr.rel (%p1938) target = $region59
    $region58: #{decode_block_forward.20} parent=5 // pred_region
      %s1941 = ssub.s32 %s13, 2
      // Predicated region
      $region60: #{decode_block_forward.20} parent=58 // pred_check
        %p1942 = pneg %p186
      $region61: #{decode_block_forward.20} parent=58 // pred_check_branch
        %1944 = sbr.rel (%p1942) target = $region63
      $region62: #{decode_block_forward.20} parent=58 // pred_region
        %p1945 = scmp.lt.s32.totalorder %s24, 1
        %s1946 = scalar_select %p1945, %s24, 1
        %p1947 = scmp.lt.s32.totalorder %s25, 7
        %s1948 = scalar_select %p1947, %s25, 7
        %s1949 = smul.addr %s1948, 8
        %s1950 = smul.addr %s1946, 64
        %s1951 = sadd.s32 %s1949, %s1950
        %s1952 = smul.addr %s1951, 4
        %s1953 = scalar_lea.vmem %s5, %s1952
      $region63: #{decode_block_forward.20} parent=58 // pred_fallthru
        _
      // Predicated region
      $region64: #{decode_block_forward.20} parent=58 // pred_check
        %p1954 = pneg %p214
      $region65: #{decode_block_forward.20} parent=58 // pred_check_branch
        %1956 = sbr.rel (%p1954) target = $region67
      $region66: #{decode_block_forward.20} parent=58 // pred_region
        %p1957 = scmp.lt.s32.totalorder %s24, 1
        %s1958 = scalar_select %p1957, %s24, 1
        %p1959 = scmp.lt.s32.totalorder %s25, 7
        %s1960 = scalar_select %p1959, %s25, 7
        %s1961 = smul.addr %s1958, 8
        %s1962 = sadd.s32 %s1960, %s1961
        %s1963 = smul.addr %s1962, 2
        %s1964 = scalar_lea.vmem %s6, %s1963
      $region67: #{decode_block_forward.20} parent=58 // pred_fallthru
        _
    $region59: #{decode_block_forward.20} parent=5 // pred_fallthru
      _
  $region6: #{decode_block_forward.20} parent=0 // loop_footer
    %s17 = sadd.s32 1, %s13
  $region7: #{decode_block_forward.20} parent=0 // loop_footer_branch
    %12 = sbr.rel target = $region3
  $region8: #{decode_block_forward.20} parent=0 // loop_exit
    _

// kernel: decode_block_forward.21
$region0: #{decode_block_forward.21}
  #allocation0 [shape = 'u32[]', space=smem, size = 0x4, offset = 0x4, fixed_abs, tag = 'smem constant byte address 0x4 - core index']
  #allocation1 [shape = 'u32[144,128]{1,0:T(1,128)}', space=vmem, size = 0x12000, scoped, tag = 'internal scratch']
  %s0 = inlined_call_operand.vmem [shape: bf16[128,64], index: 0, kind: input, shape index: {}]
  %s1 = inlined_call_operand.vmem [shape: f32[1,64], index: 1, kind: input, shape index: {}]
  %s2 = inlined_call_operand.vmem [shape: f32[1,64], index: 2, kind: input, shape index: {}]
  %s3 = inlined_call_operand.vmem [shape: bf16[128,64], index: 3, kind: output, shape index: {}]
  %s4 = sld [smem:[#allocation0]]
  $region22: #{decode_block_forward.21} parent=0
    _
  %s6 = ssub.s32 1, %s4
  %s7 = scalar_select 0, %s6, %s4
  // Predicated region
  $region2: #{decode_block_forward.21} parent=0 // pred_check
    _
  $region3: #{decode_block_forward.21} parent=0 // pred_check_branch
    %9 = sbr.rel (0) target = $region5
  $region4: #{decode_block_forward.21} parent=0 // pred_region
    _
  $region5: #{decode_block_forward.21} parent=0 // pred_fallthru
    _
  // Predicated region
  $region6: #{decode_block_forward.21} parent=0 // pred_check
    _
  $region7: #{decode_block_forward.21} parent=0 // pred_check_branch
    %11 = sbr.rel (0) target = $region9
  $region8: #{decode_block_forward.21} parent=0 // pred_region
    _
  $region9: #{decode_block_forward.21} parent=0 // pred_fallthru
    _
  // Predicated region
  $region10: #{decode_block_forward.21} parent=0 // pred_check
    _
  $region11: #{decode_block_forward.21} parent=0 // pred_check_branch
    %13 = sbr.rel (0) target = $region13
  $region12: #{decode_block_forward.21} parent=0 // pred_region
    _
  $region13: #{decode_block_forward.21} parent=0 // pred_fallthru
    _
  %v14 = vld [vmem:[%s0] sm:$0xf]
  %v15 = vld [vmem:[%s0 + $0x4] sm:$0xf]
  %v16 = vld [vmem:[%s0 + $0x8] sm:$0xf]
  %v17 = vld [vmem:[%s0 + $0xc] sm:$0xf]
  %v18 = vld [vmem:[%s0 + $0x10] sm:$0xf]
  %v19 = vld [vmem:[%s0 + $0x14] sm:$0xf]
  %v20 = vld [vmem:[%s0 + $0x18] sm:$0xf]
  %v21 = vld [vmem:[%s0 + $0x1c] sm:$0xf]
  %v22 = vld [vmem:[%s0 + $0x20] sm:$0xf]
  %v23 = vld [vmem:[%s0 + $0x24] sm:$0xf]
  %v24 = vld [vmem:[%s0 + $0x28] sm:$0xf]
  %v25 = vld [vmem:[%s0 + $0x2c] sm:$0xf]
  %v26 = vld [vmem:[%s0 + $0x30] sm:$0xf]
  %v27 = vld [vmem:[%s0 + $0x34] sm:$0xf]
  %v28 = vld [vmem:[%s0 + $0x38] sm:$0xf]
  %v29 = vld [vmem:[%s0 + $0x3c] sm:$0xf]
  %v30 = vunpack.c.l.bf16 %v14
  %v31 = vunpack.c.l.bf16 %v15
  %v32 = vunpack.c.l.bf16 %v16
  %v33 = vunpack.c.l.bf16 %v17
  %v34 = vunpack.c.l.bf16 %v18
  %v35 = vunpack.c.l.bf16 %v19
  %v36 = vunpack.c.l.bf16 %v20
  %v37 = vunpack.c.l.bf16 %v21
  %v38 = vunpack.c.l.bf16 %v22
  %v39 = vunpack.c.l.bf16 %v23
  %v40 = vunpack.c.l.bf16 %v24
  %v41 = vunpack.c.l.bf16 %v25
  %v42 = vunpack.c.l.bf16 %v26
  %v43 = vunpack.c.l.bf16 %v27
  %v44 = vunpack.c.l.bf16 %v28
  %v45 = vunpack.c.l.bf16 %v29
  %v46 = vld [vmem:[%s1] sm:$0x1]
  %v48 = vlaneseq
  %v49 = vshrl.u32 %v48, 7
  %v50 = vsub.s32 0, %v49
  %v51 = vrot.slane %v46, %v50
  %v53 = vmul.f32 %v30, %v51
  %v54 = vmul.f32 %v31, %v51
  %v55 = vmul.f32 %v32, %v51
  %v56 = vmul.f32 %v33, %v51
  %v57 = vmul.f32 %v34, %v51
  %v58 = vmul.f32 %v35, %v51
  %v59 = vmul.f32 %v36, %v51
  %v60 = vmul.f32 %v37, %v51
  %v61 = vmul.f32 %v38, %v51
  %v62 = vmul.f32 %v39, %v51
  %v63 = vmul.f32 %v40, %v51
  %v64 = vmul.f32 %v41, %v51
  %v65 = vmul.f32 %v42, %v51
  %v66 = vmul.f32 %v43, %v51
  %v67 = vmul.f32 %v44, %v51
  %v68 = vmul.f32 %v45, %v51
  %v69 = vld [vmem:[%s2] sm:$0x1]
  %v71 = vlaneseq
  %v72 = vshrl.u32 %v71, 7
  %v73 = vsub.s32 0, %v72
  %v74 = vrot.slane %v69, %v73
  %v76 = vadd.f32 %v53, %v74
  %v77 = vadd.f32 %v54, %v74
  %v78 = vadd.f32 %v55, %v74
  %v79 = vadd.f32 %v56, %v74
  %v80 = vadd.f32 %v57, %v74
  %v81 = vadd.f32 %v58, %v74
  %v82 = vadd.f32 %v59, %v74
  %v83 = vadd.f32 %v60, %v74
  %v84 = vadd.f32 %v61, %v74
  %v85 = vadd.f32 %v62, %v74
  %v86 = vadd.f32 %v63, %v74
  %v87 = vadd.f32 %v64, %v74
  %v88 = vadd.f32 %v65, %v74
  %v89 = vadd.f32 %v66, %v74
  %v90 = vadd.f32 %v67, %v74
  %v91 = vadd.f32 %v68, %v74
  %vm92 = vcmp.ge.f32.partialorder %v76, 0.0
  %vm93 = vcmp.ge.f32.partialorder %v77, 0.0
  %vm94 = vcmp.ge.f32.partialorder %v78, 0.0
  %vm95 = vcmp.ge.f32.partialorder %v79, 0.0
  %vm96 = vcmp.ge.f32.partialorder %v80, 0.0
  %vm97 = vcmp.ge.f32.partialorder %v81, 0.0
  %vm98 = vcmp.ge.f32.partialorder %v82, 0.0
  %vm99 = vcmp.ge.f32.partialorder %v83, 0.0
  %vm100 = vcmp.ge.f32.partialorder %v84, 0.0
  %vm101 = vcmp.ge.f32.partialorder %v85, 0.0
  %vm102 = vcmp.ge.f32.partialorder %v86, 0.0
  %vm103 = vcmp.ge.f32.partialorder %v87, 0.0
  %vm104 = vcmp.ge.f32.partialorder %v88, 0.0
  %vm105 = vcmp.ge.f32.partialorder %v89, 0.0
  %vm106 = vcmp.ge.f32.partialorder %v90, 0.0
  %vm107 = vcmp.ge.f32.partialorder %v91, 0.0
  %v108 = vmul.f32 %v76, 0.01
  %v109 = vmul.f32 %v77, 0.01
  %v110 = vmul.f32 %v78, 0.01
  %v111 = vmul.f32 %v79, 0.01
  %v112 = vmul.f32 %v80, 0.01
  %v113 = vmul.f32 %v81, 0.01
  %v114 = vmul.f32 %v82, 0.01
  %v115 = vmul.f32 %v83, 0.01
  %v116 = vmul.f32 %v84, 0.01
  %v117 = vmul.f32 %v85, 0.01
  %v118 = vmul.f32 %v86, 0.01
  %v119 = vmul.f32 %v87, 0.01
  %v120 = vmul.f32 %v88, 0.01
  %v121 = vmul.f32 %v89, 0.01
  %v122 = vmul.f32 %v90, 0.01
  %v123 = vmul.f32 %v91, 0.01
  %v124 = vsel %vm92, %v76, %v108
  %v125 = vsel %vm93, %v77, %v109
  %v126 = vsel %vm94, %v78, %v110
  %v127 = vsel %vm95, %v79, %v111
  %v128 = vsel %vm96, %v80, %v112
  %v129 = vsel %vm97, %v81, %v113
  %v130 = vsel %vm98, %v82, %v114
  %v131 = vsel %vm99, %v83, %v115
  %v132 = vsel %vm100, %v84, %v116
  %v133 = vsel %vm101, %v85, %v117
  %v134 = vsel %vm102, %v86, %v118
  %v135 = vsel %vm103, %v87, %v119
  %v136 = vsel %vm104, %v88, %v120
  %v137 = vsel %vm105, %v89, %v121
  %v138 = vsel %vm106, %v90, %v122
  %v139 = vsel %vm107, %v91, %v123
  %v140 = vpack.c.bf16 %v125, %v124
  %v141 = vpack.c.bf16 %v127, %v126
  %v142 = vpack.c.bf16 %v129, %v128
  %v143 = vpack.c.bf16 %v131, %v130
  %v144 = vpack.c.bf16 %v133, %v132
  %v145 = vpack.c.bf16 %v135, %v134
  %v146 = vpack.c.bf16 %v137, %v136
  %v147 = vpack.c.bf16 %v139, %v138
  %v156 = vunpack.c.l.b16 %v140
  %v157 = vunpack.c.h.b16 %v140
  %v158 = vunpack.c.l.b16 %v141
  %v159 = vunpack.c.h.b16 %v141
  %v160 = vunpack.c.l.b16 %v142
  %v161 = vunpack.c.h.b16 %v142
  %v162 = vunpack.c.l.b16 %v143
  %v163 = vunpack.c.h.b16 %v143
  %v164 = vunpack.c.l.b16 %v144
  %v165 = vunpack.c.h.b16 %v144
  %v166 = vunpack.c.l.b16 %v145
  %v167 = vunpack.c.h.b16 %v145
  %v168 = vunpack.c.l.b16 %v146
  %v169 = vunpack.c.h.b16 %v146
  %v170 = vunpack.c.l.b16 %v147
  %v171 = vunpack.c.h.b16 %v147
  %v172 = vpack.c.b16 %v156, %v156
  %v173 = vpack.c.b16 %v157, %v157
  %v174 = vpack.c.b16 %v158, %v158
  %v175 = vpack.c.b16 %v159, %v159
  %v176 = vpack.c.b16 %v160, %v160
  %v177 = vpack.c.b16 %v161, %v161
  %v178 = vpack.c.b16 %v162, %v162
  %v179 = vpack.c.b16 %v163, %v163
  %v180 = vpack.c.b16 %v164, %v164
  %v181 = vpack.c.b16 %v165, %v165
  %v182 = vpack.c.b16 %v166, %v166
  %v183 = vpack.c.b16 %v167, %v167
  %v184 = vpack.c.b16 %v168, %v168
  %v185 = vpack.c.b16 %v169, %v169
  %v186 = vpack.c.b16 %v170, %v170
  %v187 = vpack.c.b16 %v171, %v171
  %vm204 = vcmask 519168
  %205 = vst.msk [vmem:[%s3] sm:$0xf] %vm204, %v172
  %206 = vst.msk [vmem:[%s3 + $0x4] sm:$0xf] %vm204, %v173
  %207 = vst.msk [vmem:[%s3 + $0x8] sm:$0xf] %vm204, %v174
  %208 = vst.msk [vmem:[%s3 + $0xc] sm:$0xf] %vm204, %v175
  %209 = vst.msk [vmem:[%s3 + $0x10] sm:$0xf] %vm204, %v176
  %210 = vst.msk [vmem:[%s3 + $0x14] sm:$0xf] %vm204, %v177
  %211 = vst.msk [vmem:[%s3 + $0x18] sm:$0xf] %vm204, %v178
  %212 = vst.msk [vmem:[%s3 + $0x1c] sm:$0xf] %vm204, %v179
  %213 = vst.msk [vmem:[%s3 + $0x20] sm:$0xf] %vm204, %v180
  %214 = vst.msk [vmem:[%s3 + $0x24] sm:$0xf] %vm204, %v181
  %215 = vst.msk [vmem:[%s3 + $0x28] sm:$0xf] %vm204, %v182
  %216 = vst.msk [vmem:[%s3 + $0x2c] sm:$0xf] %vm204, %v183
  %217 = vst.msk [vmem:[%s3 + $0x30] sm:$0xf] %vm204, %v184
  %218 = vst.msk [vmem:[%s3 + $0x34] sm:$0xf] %vm204, %v185
  %219 = vst.msk [vmem:[%s3 + $0x38] sm:$0xf] %vm204, %v186
  %220 = vst.msk [vmem:[%s3 + $0x3c] sm:$0xf] %vm204, %v187
  // Predicated region
  $region14: #{decode_block_forward.21} parent=0 // pred_check
    _
  $region15: #{decode_block_forward.21} parent=0 // pred_check_branch
    %222 = sbr.rel (0) target = $region17
  $region16: #{decode_block_forward.21} parent=0 // pred_region
    _
  $region17: #{decode_block_forward.21} parent=0 // pred_fallthru
    _
  // Predicated region
  $region18: #{decode_block_forward.21} parent=0 // pred_check
    _
  $region19: #{decode_block_forward.21} parent=0 // pred_check_branch
    %224 = sbr.rel (0) target = $region21
  $region20: #{decode_block_forward.21} parent=0 // pred_region
    _
  $region21: #{decode_block_forward.21} parent=0 // pred_fallthru
    _

// kernel: tile.33
$region0: #{tile.33}
  #allocation0 [shape = 's32[1]{0}', space=sflag, size = 0x4, scoped, tag = 'scoped memory for tile.33']
  %s0 = inlined_call_operand.vmem [shape: f32[4], index: 0, kind: input, shape index: {}]
  %s1 = inlined_call_operand.vmem [shape: f32[8,4], index: 1, kind: output, shape index: {}]
  // Predicated region
  $region2: #{tile.33} parent=0 // pred_check
    _
  $region3: #{tile.33} parent=0 // pred_check_branch
    %3 = sbr.rel (0) target = $region5
  $region4: #{tile.33} parent=0 // pred_region
    _
  $region5: #{tile.33} parent=0 // pred_fallthru
    _
  %v4 = vld [vmem:[%s0] ss:$0 sm:$0xff]
  %5 = vst [vmem:[%s1] sm:$0xff] %v4

// kernel: tile.34
$region0: #{tile.34}
  %s0 = inlined_call_operand.vmem [shape: f32[8,4], index: 0, kind: input, shape index: {}]
  %s1 = inlined_call_operand.vmem [shape: f32[1,32], index: 1, kind: output, shape index: {}]
  $region1: #{tile.34} parent=0
    #allocation0 [shape = 'u8[4096]{0}', space=vmem, size = 0x1000, scoped, tag = 'scoped mem for output reshape']
    %v2 = vld [vmem:[%s0] sm:$0x1]
    %vm3 = vcmask 31744
    %4 = vst.msk [vmem:[#allocation0] sm:$0x1] %vm3, %v2
    %s5 = scalar_lea.vmem %s0, 7
    %v6 = vld [vmem:[%s5] sm:$0x1]
    %7 = vrot.lane.b32.xlu0 %v6, 28
    %v8 = vpop.permute.xlu0 %7
    %vm9 = vcmask 261344
    %10 = vst.msk [vmem:[#allocation0] sm:$0x1] %vm9, %v8
    %s11 = scalar_lea.vmem %s0, 6
    %v12 = vld [vmem:[%s11] sm:$0x1]
    %13 = vrot.lane.b32.xlu0 %v12, 24
    %v14 = vpop.permute.xlu0 %13
    %vm15 = vcmask 228544
    %16 = vst.msk [vmem:[#allocation0] sm:$0x1] %vm15, %v14
    %s17 = scalar_lea.vmem %s0, 5
    %v18 = vld [vmem:[%s17] sm:$0x1]
    %19 = vrot.lane.b32.xlu0 %v18, 20
    %v20 = vpop.permute.xlu0 %19
    %vm21 = vcmask 195744
    %22 = vst.msk [vmem:[#allocation0] sm:$0x1] %vm21, %v20
    %s23 = scalar_lea.vmem %s0, 4
    %v24 = vld [vmem:[%s23] sm:$0x1]
    %25 = vrot.lane.b32.xlu0 %v24, 16
    %v26 = vpop.permute.xlu0 %25
    %vm27 = vcmask 162944
    %28 = vst.msk [vmem:[#allocation0] sm:$0x1] %vm27, %v26
    %s29 = scalar_lea.vmem %s0, 3
    %v30 = vld [vmem:[%s29] sm:$0x1]
    %31 = vrot.lane.b32.xlu0 %v30, 12
    %v32 = vpop.permute.xlu0 %31
    %vm33 = vcmask 130144
    %34 = vst.msk [vmem:[#allocation0] sm:$0x1] %vm33, %v32
    %s35 = scalar_lea.vmem %s0, 2
    %v36 = vld [vmem:[%s35] sm:$0x1]
    %37 = vrot.lane.b32.xlu0 %v36, 8
    %v38 = vpop.permute.xlu0 %37
    %vm39 = vcmask 97344
    %40 = vst.msk [vmem:[#allocation0] sm:$0x1] %vm39, %v38
    %s41 = scalar_lea.vmem %s0, 1
    %v42 = vld [vmem:[%s41] sm:$0x1]
    %43 = vrot.lane.b32.xlu0 %v42, 4
    %v44 = vpop.permute.xlu0 %43
    %vm45 = vcmask 64544
    %46 = vst.msk [vmem:[#allocation0] sm:$0x1] %vm45, %v44
    %s48 = sshll.u32 1, 1
    %s49 = ssub.s32 %s48, 1
    %v51 = vld [vmem:[#allocation0] sm:%s49]
    %s52 = sshll.u32 1, 1
    %s53 = ssub.s32 %s52, 1
    %54 = vst [vmem:[%s1] sm:%s53] %v51

// kernel: decode_block_forward.23
$region0: #{decode_block_forward.23}
  #allocation0 [shape = 'u32[]', space=smem, size = 0x4, offset = 0x4, fixed_abs, tag = 'smem constant byte address 0x4 - core index']
  #allocation1 [shape = 'u32[144,128]{1,0:T(1,128)}', space=vmem, size = 0x12000, scoped, tag = 'internal scratch']
  %s0 = inlined_call_operand.vmem [shape: bf16[128,32], index: 0, kind: input, shape index: {}]
  %s1 = inlined_call_operand.vmem [shape: f32[1,32], index: 1, kind: input, shape index: {}]
  %s2 = inlined_call_operand.vmem [shape: f32[1,32], index: 2, kind: input, shape index: {}]
  %s3 = inlined_call_operand.vmem [shape: f32[128,32], index: 3, kind: output, shape index: {}]
  %s4 = sld [smem:[#allocation0]]
  $region22: #{decode_block_forward.23} parent=0
    _
  %s6 = ssub.s32 1, %s4
  %s7 = scalar_select 0, %s6, %s4
  // Predicated region
  $region2: #{decode_block_forward.23} parent=0 // pred_check
    _
  $region3: #{decode_block_forward.23} parent=0 // pred_check_branch
    %9 = sbr.rel (0) target = $region5
  $region4: #{decode_block_forward.23} parent=0 // pred_region
    _
  $region5: #{decode_block_forward.23} parent=0 // pred_fallthru
    _
  // Predicated region
  $region6: #{decode_block_forward.23} parent=0 // pred_check
    _
  $region7: #{decode_block_forward.23} parent=0 // pred_check_branch
    %11 = sbr.rel (0) target = $region9
  $region8: #{decode_block_forward.23} parent=0 // pred_region
    _
  $region9: #{decode_block_forward.23} parent=0 // pred_fallthru
    _
  // Predicated region
  $region10: #{decode_block_forward.23} parent=0 // pred_check
    _
  $region11: #{decode_block_forward.23} parent=0 // pred_check_branch
    %13 = sbr.rel (0) target = $region13
  $region12: #{decode_block_forward.23} parent=0 // pred_region
    _
  $region13: #{decode_block_forward.23} parent=0 // pred_fallthru
    _
  %v14 = vld [vmem:[%s0] sm:$0xf]
  %v15 = vld [vmem:[%s0 + $0x4] sm:$0xf]
  %v16 = vld [vmem:[%s0 + $0x8] sm:$0xf]
  %v17 = vld [vmem:[%s0 + $0xc] sm:$0xf]
  %v18 = vld [vmem:[%s0 + $0x10] sm:$0xf]
  %v19 = vld [vmem:[%s0 + $0x14] sm:$0xf]
  %v20 = vld [vmem:[%s0 + $0x18] sm:$0xf]
  %v21 = vld [vmem:[%s0 + $0x1c] sm:$0xf]
  %v22 = vld [vmem:[%s0 + $0x20] sm:$0xf]
  %v23 = vld [vmem:[%s0 + $0x24] sm:$0xf]
  %v24 = vld [vmem:[%s0 + $0x28] sm:$0xf]
  %v25 = vld [vmem:[%s0 + $0x2c] sm:$0xf]
  %v26 = vld [vmem:[%s0 + $0x30] sm:$0xf]
  %v27 = vld [vmem:[%s0 + $0x34] sm:$0xf]
  %v28 = vld [vmem:[%s0 + $0x38] sm:$0xf]
  %v29 = vld [vmem:[%s0 + $0x3c] sm:$0xf]
  %v30 = vunpack.c.l.bf16 %v14
  %v31 = vunpack.c.l.bf16 %v15
  %v32 = vunpack.c.l.bf16 %v16
  %v33 = vunpack.c.l.bf16 %v17
  %v34 = vunpack.c.l.bf16 %v18
  %v35 = vunpack.c.l.bf16 %v19
  %v36 = vunpack.c.l.bf16 %v20
  %v37 = vunpack.c.l.bf16 %v21
  %v38 = vunpack.c.l.bf16 %v22
  %v39 = vunpack.c.l.bf16 %v23
  %v40 = vunpack.c.l.bf16 %v24
  %v41 = vunpack.c.l.bf16 %v25
  %v42 = vunpack.c.l.bf16 %v26
  %v43 = vunpack.c.l.bf16 %v27
  %v44 = vunpack.c.l.bf16 %v28
  %v45 = vunpack.c.l.bf16 %v29
  %v46 = vld [vmem:[%s1] sm:$0x1]
  %v48 = vlaneseq
  %v49 = vshrl.u32 %v48, 7
  %v50 = vsub.s32 0, %v49
  %v51 = vrot.slane %v46, %v50
  %v53 = vmul.f32 %v30, %v51
  %v54 = vmul.f32 %v31, %v51
  %v55 = vmul.f32 %v32, %v51
  %v56 = vmul.f32 %v33, %v51
  %v57 = vmul.f32 %v34, %v51
  %v58 = vmul.f32 %v35, %v51
  %v59 = vmul.f32 %v36, %v51
  %v60 = vmul.f32 %v37, %v51
  %v61 = vmul.f32 %v38, %v51
  %v62 = vmul.f32 %v39, %v51
  %v63 = vmul.f32 %v40, %v51
  %v64 = vmul.f32 %v41, %v51
  %v65 = vmul.f32 %v42, %v51
  %v66 = vmul.f32 %v43, %v51
  %v67 = vmul.f32 %v44, %v51
  %v68 = vmul.f32 %v45, %v51
  %v69 = vld [vmem:[%s2] sm:$0x1]
  %v71 = vlaneseq
  %v72 = vshrl.u32 %v71, 7
  %v73 = vsub.s32 0, %v72
  %v74 = vrot.slane %v69, %v73
  %v76 = vadd.f32 %v53, %v74
  %v77 = vadd.f32 %v54, %v74
  %v78 = vadd.f32 %v55, %v74
  %v79 = vadd.f32 %v56, %v74
  %v80 = vadd.f32 %v57, %v74
  %v81 = vadd.f32 %v58, %v74
  %v82 = vadd.f32 %v59, %v74
  %v83 = vadd.f32 %v60, %v74
  %v84 = vadd.f32 %v61, %v74
  %v85 = vadd.f32 %v62, %v74
  %v86 = vadd.f32 %v63, %v74
  %v87 = vadd.f32 %v64, %v74
  %v88 = vadd.f32 %v65, %v74
  %v89 = vadd.f32 %v66, %v74
  %v90 = vadd.f32 %v67, %v74
  %v91 = vadd.f32 %v68, %v74
  %vm92 = vcmp.ge.f32.partialorder %v76, 0.0
  %vm93 = vcmp.ge.f32.partialorder %v77, 0.0
  %vm94 = vcmp.ge.f32.partialorder %v78, 0.0
  %vm95 = vcmp.ge.f32.partialorder %v79, 0.0
  %vm96 = vcmp.ge.f32.partialorder %v80, 0.0
  %vm97 = vcmp.ge.f32.partialorder %v81, 0.0
  %vm98 = vcmp.ge.f32.partialorder %v82, 0.0
  %vm99 = vcmp.ge.f32.partialorder %v83, 0.0
  %vm100 = vcmp.ge.f32.partialorder %v84, 0.0
  %vm101 = vcmp.ge.f32.partialorder %v85, 0.0
  %vm102 = vcmp.ge.f32.partialorder %v86, 0.0
  %vm103 = vcmp.ge.f32.partialorder %v87, 0.0
  %vm104 = vcmp.ge.f32.partialorder %v88, 0.0
  %vm105 = vcmp.ge.f32.partialorder %v89, 0.0
  %vm106 = vcmp.ge.f32.partialorder %v90, 0.0
  %vm107 = vcmp.ge.f32.partialorder %v91, 0.0
  %v108 = vmul.f32 %v76, 0.01
  %v109 = vmul.f32 %v77, 0.01
  %v110 = vmul.f32 %v78, 0.01
  %v111 = vmul.f32 %v79, 0.01
  %v112 = vmul.f32 %v80, 0.01
  %v113 = vmul.f32 %v81, 0.01
  %v114 = vmul.f32 %v82, 0.01
  %v115 = vmul.f32 %v83, 0.01
  %v116 = vmul.f32 %v84, 0.01
  %v117 = vmul.f32 %v85, 0.01
  %v118 = vmul.f32 %v86, 0.01
  %v119 = vmul.f32 %v87, 0.01
  %v120 = vmul.f32 %v88, 0.01
  %v121 = vmul.f32 %v89, 0.01
  %v122 = vmul.f32 %v90, 0.01
  %v123 = vmul.f32 %v91, 0.01
  %v124 = vsel %vm92, %v76, %v108
  %v125 = vsel %vm93, %v77, %v109
  %v126 = vsel %vm94, %v78, %v110
  %v127 = vsel %vm95, %v79, %v111
  %v128 = vsel %vm96, %v80, %v112
  %v129 = vsel %vm97, %v81, %v113
  %v130 = vsel %vm98, %v82, %v114
  %v131 = vsel %vm99, %v83, %v115
  %v132 = vsel %vm100, %v84, %v116
  %v133 = vsel %vm101, %v85, %v117
  %v134 = vsel %vm102, %v86, %v118
  %v135 = vsel %vm103, %v87, %v119
  %v136 = vsel %vm104, %v88, %v120
  %v137 = vsel %vm105, %v89, %v121
  %v138 = vsel %vm106, %v90, %v122
  %v139 = vsel %vm107, %v91, %v123
  %vm140 = vcmask 261120
  %141 = vst.msk [vmem:[%s3] sm:$0xff] %vm140, %v124
  %142 = vst.msk [vmem:[%s3 + $0x8] sm:$0xff] %vm140, %v125
  %143 = vst.msk [vmem:[%s3 + $0x10] sm:$0xff] %vm140, %v126
  %144 = vst.msk [vmem:[%s3 + $0x18] sm:$0xff] %vm140, %v127
  %145 = vst.msk [vmem:[%s3 + $0x20] sm:$0xff] %vm140, %v128
  %146 = vst.msk [vmem:[%s3 + $0x28] sm:$0xff] %vm140, %v129
  %147 = vst.msk [vmem:[%s3 + $0x30] sm:$0xff] %vm140, %v130
  %148 = vst.msk [vmem:[%s3 + $0x38] sm:$0xff] %vm140, %v131
  %149 = vst.msk [vmem:[%s3 + $0x40] sm:$0xff] %vm140, %v132
  %150 = vst.msk [vmem:[%s3 + $0x48] sm:$0xff] %vm140, %v133
  %151 = vst.msk [vmem:[%s3 + $0x50] sm:$0xff] %vm140, %v134
  %152 = vst.msk [vmem:[%s3 + $0x58] sm:$0xff] %vm140, %v135
  %153 = vst.msk [vmem:[%s3 + $0x60] sm:$0xff] %vm140, %v136
  %154 = vst.msk [vmem:[%s3 + $0x68] sm:$0xff] %vm140, %v137
  %155 = vst.msk [vmem:[%s3 + $0x70] sm:$0xff] %vm140, %v138
  %156 = vst.msk [vmem:[%s3 + $0x78] sm:$0xff] %vm140, %v139
  // Predicated region
  $region14: #{decode_block_forward.23} parent=0 // pred_check
    _
  $region15: #{decode_block_forward.23} parent=0 // pred_check_branch
    %158 = sbr.rel (0) target = $region17
  $region16: #{decode_block_forward.23} parent=0 // pred_region
    _
  $region17: #{decode_block_forward.23} parent=0 // pred_fallthru
    _
  // Predicated region
  $region18: #{decode_block_forward.23} parent=0 // pred_check
    _
  $region19: #{decode_block_forward.23} parent=0 // pred_check_branch
    %160 = sbr.rel (0) target = $region21
  $region20: #{decode_block_forward.23} parent=0 // pred_region
    _
  $region21: #{decode_block_forward.23} parent=0 // pred_fallthru
    _

// kernel: decode_block_forward.22
$region0: #{decode_block_forward.22}
  #allocation0 [shape = 'u32[]', space=smem, size = 0x4, offset = 0x4, fixed_abs, tag = 'smem constant byte address 0x4 - core index']
  #allocation1 [shape = 'u32[144,128]{1,0:T(1,128)}', space=vmem, size = 0x12000, scoped, tag = 'internal scratch']
  %s0 = inlined_call_operand.vmem [shape: bf16[2,10,10,10,8], index: 0, kind: input, shape index: {}, may-alias: {0,1,2}]
  %s1 = inlined_call_operand.vmem [shape: bf16[2,10,10,10,8], index: 1, kind: input, shape index: {}, may-alias: {0,1,2}]
  %s2 = inlined_call_operand.vmem [shape: bf16[2,10,10,10,8], index: 2, kind: input, shape index: {}, may-alias: {0,1,2}]
  %s3 = inlined_call_operand.vmem [shape: bf16[27,8,4], index: 3, kind: input, shape index: {}]
  %s4 = inlined_call_operand.vmem [shape: f32[1,4], index: 4, kind: input, shape index: {}]
  %s5 = inlined_call_operand.vmem [shape: bf16[2,8,8,8,4], index: 5, kind: output, shape index: {0}]
  %s6 = inlined_call_operand.vmem [shape: f32[2,8,2,4], index: 6, kind: output, shape index: {1}]
  %7 = xla_tuple %s5, %s6
  %s8 = sld [smem:[#allocation0]]
  $region68: #{decode_block_forward.22} parent=0
    _
  %s10 = ssub.s32 1, %s8
  %s11 = scalar_select 0, %s10, %s8
  loop: start=0, step=1, limit=18
  $region2: #{decode_block_forward.22} parent=0 // loop_pre_header
    _
  $region3: #{decode_block_forward.22} parent=0 // loop_header
    %s13 = sphi 0, %s17
    %p14 = scmp.ge.s32.totalorder %s13, 18
    %s20 = sphi 0, %s32
    %s21 = sphi 0, %s28
    %s22 = sphi 0, %s20
    %s23 = sphi 0, %s21
    %s24 = sphi 0, %s22
    %s25 = sphi 0, %s23
    %s37 = sphi 0, %s39
    %s40 = sphi 0, %s37
    %s41 = sphi 0, %s40
    %s57 = sphi 0, %s41
    %s67 = sphi 0, %s69
    %s70 = sphi 0, %s67
    %s71 = sphi 0, %s70
    %s87 = sphi 0, %s71
    %s97 = sphi 0, %s99
    %s100 = sphi 0, %s97
    %s101 = sphi 0, %s100
    %s117 = sphi 0, %s101
    %s121 = sphi 0, %s121
    %s123 = sphi 0, %s121
    %s124 = sphi 0, %s123
    %s138 = sphi 0, %s124
    %s142 = sphi 0, %s142
    %s144 = sphi 0, %s142
    %s145 = sphi 0, %s144
    %s159 = sphi 0, %s145
    %s167 = sphi 0, %s169
    %s170 = sphi 0, %s167
    %s171 = sphi 0, %s170
    %s187 = sphi 0, %s171
    %s195 = sphi 0, %s197
    %s198 = sphi 0, %s195
    %s199 = sphi 0, %s198
    %s215 = sphi 0, %s199
  $region4: #{decode_block_forward.22} parent=0 // loop_header_branch
    %16 = sbr.rel (%p14) target = $region8
  $region5: #{decode_block_forward.22} parent=0 // loop_body
    %s18 = ssub.s32 %s13, 1
    %s19 = ssub.s32 %s13, 2
    %s26 = sadd.s32 1, %s21
    %p27 = scmp.ge.s32.totalorder %s26, 8
    %s28 = scalar_select %p27, 0, %s26
    %s29 = sadd.s32 1, %s20
    %s30 = scalar_select %p27, %s29, %s20
    %p31 = scmp.ge.s32.totalorder %s30, 2
    %s32 = scalar_select %p31, 0, %s30
    %s33 = ssub.s32 %s20, %s32
    %s34 = ssub.s32 %s21, %s28
    %s35 = sor.u32 %s33, %s34
    %p36 = scmp.eq.s32.totalorder %s35, 0
    %s38 = sadd.s32 %s37, 1
    %s39 = scalar_select %p36, %s37, %s38
    %p42 = pneg %p36
    %p43 = scmp.eq.s32.totalorder %s13, 15
    %p44 = por %p42, %p43
    %p45 = scmp.ne.s32.totalorder %s37, %s40
    %p46 = scmp.eq.s32.totalorder %s13, 0
    %p47 = por %p45, %p46
    %p48 = scmp.ne.s32.totalorder %s37, %s40
    %p49 = scmp.eq.s32.totalorder %s18, 15
    %p50 = por %p48, %p49
    %p51 = scmp.ne.s32.totalorder %s40, %s41
    %p52 = scmp.eq.s32.totalorder %s18, 0
    %p53 = por %p51, %p52
    %p54 = scmp.ne.s32.totalorder %s40, %s41
    %p55 = scmp.eq.s32.totalorder %s19, 15
    %p56 = por %p54, %p55
    %p58 = scmp.ne.s32.totalorder %s41, %s57
    %p59 = scmp.eq.s32.totalorder %s19, 0
    %p60 = por %p58, %p59
    %s61 = sadd.s32 %s21, 1
    %s62 = sadd.s32 %s28, 1
    %s63 = ssub.s32 %s20, %s32
    %s64 = ssub.s32 %s61, %s62
    %s65 = sor.u32 %s63, %s64
    %p66 = scmp.eq.s32.totalorder %s65, 0
    %s68 = sadd.s32 %s67, 1
    %s69 = scalar_select %p66, %s67, %s68
    %p72 = pneg %p66
    %p73 = scmp.eq.s32.totalorder %s13, 15
    %p74 = por %p72, %p73
    %p75 = scmp.ne.s32.totalorder %s67, %s70
    %p76 = scmp.eq.s32.totalorder %s13, 0
    %p77 = por %p75, %p76
    %p78 = scmp.ne.s32.totalorder %s67, %s70
    %p79 = scmp.eq.s32.totalorder %s18, 15
    %p80 = por %p78, %p79
    %p81 = scmp.ne.s32.totalorder %s70, %s71
    %p82 = scmp.eq.s32.totalorder %s18, 0
    %p83 = por %p81, %p82
    %p84 = scmp.ne.s32.totalorder %s70, %s71
    %p85 = scmp.eq.s32.totalorder %s19, 15
    %p86 = por %p84, %p85
    %p88 = scmp.ne.s32.totalorder %s71, %s87
    %p89 = scmp.eq.s32.totalorder %s19, 0
    %p90 = por %p88, %p89
    %s91 = sadd.s32 %s21, 2
    %s92 = sadd.s32 %s28, 2
    %s93 = ssub.s32 %s20, %s32
    %s94 = ssub.s32 %s91, %s92
    %s95 = sor.u32 %s93, %s94
    %p96 = scmp.eq.s32.totalorder %s95, 0
    %s98 = sadd.s32 %s97, 1
    %s99 = scalar_select %p96, %s97, %s98
    %p102 = pneg %p96
    %p103 = scmp.eq.s32.totalorder %s13, 15
    %p104 = por %p102, %p103
    %p105 = scmp.ne.s32.totalorder %s97, %s100
    %p106 = scmp.eq.s32.totalorder %s13, 0
    %p107 = por %p105, %p106
    %p108 = scmp.ne.s32.totalorder %s97, %s100
    %p109 = scmp.eq.s32.totalorder %s18, 15
    %p110 = por %p108, %p109
    %p111 = scmp.ne.s32.totalorder %s100, %s101
    %p112 = scmp.eq.s32.totalorder %s18, 0
    %p113 = por %p111, %p112
    %p114 = scmp.ne.s32.totalorder %s100, %s101
    %p115 = scmp.eq.s32.totalorder %s19, 15
    %p116 = por %p114, %p115
    %p118 = scmp.ne.s32.totalorder %s101, %s117
    %p119 = scmp.eq.s32.totalorder %s19, 0
    %p120 = por %p118, %p119
    %s122 = sadd.s32 %s121, 1
    %p125 = scmp.eq.s32.totalorder %s13, 15
    %p126 = scmp.ne.s32.totalorder %s121, %s123
    %p127 = scmp.eq.s32.totalorder %s13, 0
    %p128 = por %p126, %p127
    %p129 = scmp.ne.s32.totalorder %s121, %s123
    %p130 = scmp.eq.s32.totalorder %s18, 15
    %p131 = por %p129, %p130
    %p132 = scmp.ne.s32.totalorder %s123, %s124
    %p133 = scmp.eq.s32.totalorder %s18, 0
    %p134 = por %p132, %p133
    %p135 = scmp.ne.s32.totalorder %s123, %s124
    %p136 = scmp.eq.s32.totalorder %s19, 15
    %p137 = por %p135, %p136
    %p139 = scmp.ne.s32.totalorder %s124, %s138
    %p140 = scmp.eq.s32.totalorder %s19, 0
    %p141 = por %p139, %p140
    %s143 = sadd.s32 %s142, 1
    %p146 = scmp.eq.s32.totalorder %s13, 15
    %p147 = scmp.ne.s32.totalorder %s142, %s144
    %p148 = scmp.eq.s32.totalorder %s13, 0
    %p149 = por %p147, %p148
    %p150 = scmp.ne.s32.totalorder %s142, %s144
    %p151 = scmp.eq.s32.totalorder %s18, 15
    %p152 = por %p150, %p151
    %p153 = scmp.ne.s32.totalorder %s144, %s145
    %p154 = scmp.eq.s32.totalorder %s18, 0
    %p155 = por %p153, %p154
    %p156 = scmp.ne.s32.totalorder %s144, %s145
    %p157 = scmp.eq.s32.totalorder %s19, 15
    %p158 = por %p156, %p157
    %p160 = scmp.ne.s32.totalorder %s145, %s159
    %p161 = scmp.eq.s32.totalorder %s19, 0
    %p162 = por %p160, %p161
    %s163 = ssub.s32 %s20, %s32
    %s164 = ssub.s32 %s21, %s28
    %s165 = sor.u32 %s163, %s164
    %p166 = scmp.eq.s32.totalorder %s165, 0
    %s168 = sadd.s32 %s167, 1
    %s169 = scalar_select %p166, %s167, %s168
    %p172 = pneg %p166
    %p173 = scmp.eq.s32.totalorder %s13, 15
    %p174 = por %p172, %p173
    %p175 = scmp.ne.s32.totalorder %s167, %s170
    %p176 = scmp.eq.s32.totalorder %s13, 0
    %p177 = por %p175, %p176
    %p178 = scmp.ne.s32.totalorder %s167, %s170
    %p179 = scmp.eq.s32.totalorder %s18, 15
    %p180 = por %p178, %p179
    %p181 = scmp.ne.s32.totalorder %s170, %s171
    %p182 = scmp.eq.s32.totalorder %s18, 0
    %p183 = por %p181, %p182
    %p184 = scmp.ne.s32.totalorder %s170, %s171
    %p185 = scmp.eq.s32.totalorder %s19, 15
    %p186 = por %p184, %p185
    %p188 = scmp.ne.s32.totalorder %s171, %s187
    %p189 = scmp.eq.s32.totalorder %s19, 0
    %p190 = por %p188, %p189
    %s191 = ssub.s32 %s20, %s32
    %s192 = ssub.s32 %s21, %s28
    %s193 = sor.u32 %s191, %s192
    %p194 = scmp.eq.s32.totalorder %s193, 0
    %s196 = sadd.s32 %s195, 1
    %s197 = scalar_select %p194, %s195, %s196
    %p200 = pneg %p194
    %p201 = scmp.eq.s32.totalorder %s13, 15
    %p202 = por %p200, %p201
    %p203 = scmp.ne.s32.totalorder %s195, %s198
    %p204 = scmp.eq.s32.totalorder %s13, 0
    %p205 = por %p203, %p204
    %p206 = scmp.ne.s32.totalorder %s195, %s198
    %p207 = scmp.eq.s32.totalorder %s18, 15
    %p208 = por %p206, %p207
    %p209 = scmp.ne.s32.totalorder %s198, %s199
    %p210 = scmp.eq.s32.totalorder %s18, 0
    %p211 = por %p209, %p210
    %p212 = scmp.ne.s32.totalorder %s198, %s199
    %p213 = scmp.eq.s32.totalorder %s19, 15
    %p214 = por %p212, %p213
    %p216 = scmp.ne.s32.totalorder %s199, %s215
    %p217 = scmp.eq.s32.totalorder %s19, 0
    %p218 = por %p216, %p217
    %p219 = scmp.le.s32.totalorder 1, %s13
    %p220 = scmp.lt.s32.totalorder %s13, 17
    %p221 = pnand %p219, %p220
    %p222 = pneg %p221
    // Predicated region
    $region9: #{decode_block_forward.22} parent=5 // pred_check
      _
    $region10: #{decode_block_forward.22} parent=5 // pred_check_branch
      %224 = sbr.rel (%p221) target = $region12
    $region11: #{decode_block_forward.22} parent=5 // pred_region
      %s225 = ssub.s32 %s13, 1
      // Predicated region
      $region13: #{decode_block_forward.22} parent=11 // pred_check
        %p226 = pneg %p134
      $region14: #{decode_block_forward.22} parent=11 // pred_check_branch
        %228 = sbr.rel (%p226) target = $region16
      $region15: #{decode_block_forward.22} parent=11 // pred_region
        _
      $region16: #{decode_block_forward.22} parent=11 // pred_fallthru
        _
      // Predicated region
      $region17: #{decode_block_forward.22} parent=11 // pred_check
        %p229 = pneg %p155
      $region18: #{decode_block_forward.22} parent=11 // pred_check_branch
        %231 = sbr.rel (%p229) target = $region20
      $region19: #{decode_block_forward.22} parent=11 // pred_region
        _
      $region20: #{decode_block_forward.22} parent=11 // pred_fallthru
        _
    $region12: #{decode_block_forward.22} parent=5 // pred_fallthru
      _
    %p232 = scmp.lt.s32.totalorder %s13, 16
    // Predicated region
    $region21: #{decode_block_forward.22} parent=5 // pred_check
      %p233 = pneg %p232
    $region22: #{decode_block_forward.22} parent=5 // pred_check_branch
      %235 = sbr.rel (%p233) target = $region24
    $region23: #{decode_block_forward.22} parent=5 // pred_region
      // Predicated region
      $region25: #{decode_block_forward.22} parent=23 // pred_check
        %p236 = pneg %p47
      $region26: #{decode_block_forward.22} parent=23 // pred_check_branch
        %238 = sbr.rel (%p236) target = $region28
      $region27: #{decode_block_forward.22} parent=23 // pred_region
        %p239 = scmp.lt.s32.totalorder %s20, 1
        %s240 = scalar_select %p239, %s20, 1
        %p241 = scmp.lt.s32.totalorder %s21, 9
        %s242 = scalar_select %p241, %s21, 9
        %s243 = smul.addr %s242, 20
        %s244 = smul.addr %s240, 200
        %s245 = sadd.s32 %s243, %s244
        %s246 = smul.addr %s245, 4
        %s247 = scalar_lea.vmem %s0, %s246
      $region28: #{decode_block_forward.22} parent=23 // pred_fallthru
        _
      // Predicated region
      $region29: #{decode_block_forward.22} parent=23 // pred_check
        %p248 = pneg %p77
      $region30: #{decode_block_forward.22} parent=23 // pred_check_branch
        %250 = sbr.rel (%p248) target = $region32
      $region31: #{decode_block_forward.22} parent=23 // pred_region
        %s251 = sadd.s32 %s21, 1
        %p252 = scmp.lt.s32.totalorder %s20, 1
        %s253 = scalar_select %p252, %s20, 1
        %p254 = scmp.lt.s32.totalorder %s251, 9
        %s255 = scalar_select %p254, %s251, 9
        %s256 = smul.addr %s255, 20
        %s257 = smul.addr %s253, 200
        %s258 = sadd.s32 %s256, %s257
        %s259 = smul.addr %s258, 4
        %s260 = scalar_lea.vmem %s1, %s259
        %s261 = sadd.s32 %s21, 1
      $region32: #{decode_block_forward.22} parent=23 // pred_fallthru
        _
      // Predicated region
      $region33: #{decode_block_forward.22} parent=23 // pred_check
        %p262 = pneg %p107
      $region34: #{decode_block_forward.22} parent=23 // pred_check_branch
        %264 = sbr.rel (%p262) target = $region36
      $region35: #{decode_block_forward.22} parent=23 // pred_region
        %s265 = sadd.s32 %s21, 2
        %p266 = scmp.lt.s32.totalorder %s20, 1
        %s267 = scalar_select %p266, %s20, 1
        %p268 = scmp.lt.s32.totalorder %s265, 9
        %s269 = scalar_select %p268, %s265, 9
        %s270 = smul.addr %s269, 20
        %s271 = smul.addr %s267, 200
        %s272 = sadd.s32 %s270, %s271
        %s273 = smul.addr %s272, 4
        %s274 = scalar_lea.vmem %s2, %s273
        %s275 = sadd.s32 %s21, 2
      $region36: #{decode_block_forward.22} parent=23 // pred_fallthru
        _
    $region24: #{decode_block_forward.22} parent=5 // pred_fallthru
      _
    %p276 = scmp.le.s32.totalorder 1, %s13
    %p277 = scmp.lt.s32.totalorder %s13, 17
    %p278 = pnand %p276, %p277
    %p279 = pneg %p278
    // Predicated region
    $region37: #{decode_block_forward.22} parent=5 // pred_check
      _
    $region38: #{decode_block_forward.22} parent=5 // pred_check_branch
      %281 = sbr.rel (%p278) target = $region40
    $region39: #{decode_block_forward.22} parent=5 // pred_region
      %s282 = ssub.s32 %s13, 1
      %p283 = scmp.lt.s32.totalorder %s22, 1
      %s284 = scalar_select %p283, %s22, 1
      %p285 = scmp.lt.s32.totalorder %s23, 9
      %s286 = scalar_select %p285, %s23, 9
      %s287 = smul.addr %s286, 20
      %s288 = smul.addr %s284, 200
      %s289 = sadd.s32 %s287, %s288
      %s290 = smul.addr %s289, 4
      %s291 = scalar_lea.vmem %s0, %s290
      %p292 = pneg %p53
      %p293 = pneg %p50
      %s294 = sadd.s32 %s23, 1
      %p295 = scmp.lt.s32.totalorder %s22, 1
      %s296 = scalar_select %p295, %s22, 1
      %p297 = scmp.lt.s32.totalorder %s294, 9
      %s298 = scalar_select %p297, %s294, 9
      %s299 = smul.addr %s298, 20
      %s300 = smul.addr %s296, 200
      %s301 = sadd.s32 %s299, %s300
      %s302 = smul.addr %s301, 4
      %s303 = scalar_lea.vmem %s1, %s302
      %p304 = pneg %p83
      %p305 = pneg %p80
      %s306 = sadd.s32 %s23, 2
      %p307 = scmp.lt.s32.totalorder %s22, 1
      %s308 = scalar_select %p307, %s22, 1
      %p309 = scmp.lt.s32.totalorder %s306, 9
      %s310 = scalar_select %p309, %s306, 9
      %s311 = smul.addr %s310, 20
      %s312 = smul.addr %s308, 200
      %s313 = sadd.s32 %s311, %s312
      %s314 = smul.addr %s313, 4
      %s315 = scalar_lea.vmem %s2, %s314
      %p316 = pneg %p113
      %p317 = pneg %p110
      %p318 = pneg %p134
      %p319 = pneg %p131
      %p320 = pneg %p155
      %p321 = pneg %p152
      %p322 = pneg %p183
      %p323 = pneg %p180
      %p324 = scmp.lt.s32.totalorder %s22, 1
      %s325 = scalar_select %p324, %s22, 1
      %p326 = scmp.lt.s32.totalorder %s23, 7
      %s327 = scalar_select %p326, %s23, 7
      %s328 = smul.addr %s327, 8
      %s329 = smul.addr %s325, 64
      %s330 = sadd.s32 %s328, %s329
      %s331 = smul.addr %s330, 4
      %s332 = scalar_lea.vmem %s5, %s331
      %p333 = pneg %p211
      %p334 = pneg %p208
      %p335 = scmp.lt.s32.totalorder %s22, 1
      %s336 = scalar_select %p335, %s22, 1
      %p337 = scmp.lt.s32.totalorder %s23, 7
      %s338 = scalar_select %p337, %s23, 7
      %s339 = smul.addr %s336, 8
      %s340 = sadd.s32 %s338, %s339
      %s341 = smul.addr %s340, 2
      %s342 = scalar_lea.vmem %s6, %s341
      %p343 = scmp.lt.s32.totalorder %s22, 1
      %s344 = scalar_select %p343, %s22, 1
      %p345 = scmp.lt.s32.totalorder %s23, 9
      %s346 = scalar_select %p345, %s23, 9
      %s347 = smul.addr %s346, 20
      %s348 = smul.addr %s344, 200
      %s349 = sadd.s32 %s347, %s348
      %s350 = smul.addr %s349, 4
      %s351 = scalar_lea.vmem %s0, %s350
      %s352 = sadd.s32 %s23, 1
      %p353 = scmp.lt.s32.totalorder %s22, 1
      %s354 = scalar_select %p353, %s22, 1
      %p355 = scmp.lt.s32.totalorder %s352, 9
      %s356 = scalar_select %p355, %s352, 9
      %s357 = smul.addr %s356, 20
      %s358 = smul.addr %s354, 200
      %s359 = sadd.s32 %s357, %s358
      %s360 = smul.addr %s359, 4
      %s361 = scalar_lea.vmem %s1, %s360
      %s362 = sadd.s32 %s23, 1
      %s363 = sadd.s32 %s23, 2
      %p364 = scmp.lt.s32.totalorder %s22, 1
      %s365 = scalar_select %p364, %s22, 1
      %p366 = scmp.lt.s32.totalorder %s363, 9
      %s367 = scalar_select %p366, %s363, 9
      %s368 = smul.addr %s367, 20
      %s369 = smul.addr %s365, 200
      %s370 = sadd.s32 %s368, %s369
      %s371 = smul.addr %s370, 4
      %s372 = scalar_lea.vmem %s2, %s371
      %s373 = sadd.s32 %s23, 2
      %p374 = scmp.lt.s32.totalorder %s22, 1
      %s375 = scalar_select %p374, %s22, 1
      %p376 = scmp.lt.s32.totalorder %s23, 7
      %s377 = scalar_select %p376, %s23, 7
      %s378 = smul.addr %s377, 8
      %s379 = smul.addr %s375, 64
      %s380 = sadd.s32 %s378, %s379
      %s381 = smul.addr %s380, 4
      %s382 = scalar_lea.vmem %s5, %s381
      %p383 = scmp.lt.s32.totalorder %s22, 1
      %s384 = scalar_select %p383, %s22, 1
      %p385 = scmp.lt.s32.totalorder %s23, 7
      %s386 = scalar_select %p385, %s23, 7
      %s387 = smul.addr %s384, 8
      %s388 = sadd.s32 %s386, %s387
      %s389 = smul.addr %s388, 2
      %s390 = scalar_lea.vmem %s6, %s389
      %v392 = vld [vmem:[%s4] sm:$0x1]
      loop: start=0, step=1, limit=8
      $region41: #{decode_block_forward.22} parent=39 // loop_pre_header
        _
      $region42: #{decode_block_forward.22} parent=39 // loop_header
        %s394 = sphi 0, %s398
        %p395 = scmp.ge.s32.totalorder %s394, 8
        %v399 = vphi 0.0, %v1901
        %v400 = vphi 0.0, %v1910
      $region43: #{decode_block_forward.22} parent=39 // loop_header_branch
        %397 = sbr.rel (%p395) target = $region47
      $region44: #{decode_block_forward.22} parent=39 // loop_body
        %s401 = smul.u32 %s394, 2
        %s402 = smul.addr %s401, 4
        %s403 = scalar_lea.vmem %s351, %s402
        %v404 = vld [vmem:[%s403] sm:$0xf]
        %v405 = vld [vmem:[%s403 + $0x4] sm:$0x1]
        %v406 = vld [vmem:[%s3] sm:$0xf]
        %s407 = scalar_lea.vmem %s3, 4
        %v408 = vld [vmem:[%s407] sm:$0xf]
        %v411 = vunpack.c.l.b16 %v404
        %v412 = vunpack.c.l.b16 %v405
        %v413 = vpack.c.b16 %v412, %v411
        %v415 = vshrl.u32 %v413, 16
        %v417 = vshll.u32 %v413, 16
        %v419 = vrot.slane %v417, 1
        %v420 = vor.u32 %v415, %v419
        %vm421 = vcmask 64512
        %v423 = vsel %vm421, %v420, 0
        %vm425 = vcmask 1043456
        %v427 = vsel %vm425, %v408, 0
        %429 = vmatprep.subr.bf16.mxu0 0
        %430 = vmatpush1.bf16.msra.mxu0 0
        %431 = vmatprep.subr.bf16.mxu0 0
        %432 = vmatpush1.bf16.msra.mxu0 0
        %433 = vmatprep.subr.bf16.mxu0 0
        %434 = vmatpush1.bf16.msra.mxu0 0
        %435 = vmatprep.subr.bf16.mxu0 0
        %436 = vmatpush1.bf16.msra.mxu0 0
        %437 = vmatprep.subr.bf16.mxu0 0
        %438 = vmatpush1.bf16.msra.mxu0 0
        %439 = vmatprep.subr.bf16.mxu0 0
        %440 = vmatpush1.bf16.msra.mxu0 0
        %441 = vmatprep.subr.bf16.mxu0 0
        %442 = vmatpush1.bf16.msra.mxu0 0
        %443 = vmatprep.subr.bf16.mxu0 0
        %444 = vmatpush1.bf16.msra.mxu0 %v427
        %445 = vmatprep.subr.bf16.mxu0 0
        %446 = vmatpush2.bf16.msra.mxu0 0
        %447 = vmatprep.subr.bf16.mxu0 0
        %448 = vmatpush2.bf16.msra.mxu0 0
        %449 = vmatprep.subr.bf16.mxu0 0
        %450 = vmatpush2.bf16.msra.mxu0 0
        %451 = vmatprep.subr.bf16.mxu0 0
        %452 = vmatpush2.bf16.msra.mxu0 0
        %453 = vmatprep.subr.bf16.mxu0 0
        %454 = vmatpush2.bf16.msra.mxu0 0
        %455 = vmatprep.subr.bf16.mxu0 0
        %456 = vmatpush2.bf16.msra.mxu0 0
        %457 = vmatprep.subr.bf16.mxu0 0
        %458 = vmatpush2.bf16.msra.mxu0 0
        %459 = vmatprep.subr.bf16.mxu0 0
        %460 = vmatpush2.bf16.msra.mxu0 0
        %461 = vmatprep.mubr.bf16.mxu0 0
        %462 = vmatmul.mubr.bf16.gmra.mxu0 %v423
        %v463 = vpop.f32.mrf.mxu0
        %v464 = vadd.f32 0.0, %v463
        %v465 = vpop.f32.mrf.mxu0
        %v466 = vpop.f32.mrf.mxu0
        %v467 = vpop.f32.mrf.mxu0
        %468 = vdwg.mxu0
        %v470 = vsel %vm421, %v404, 0
        %v473 = vsel %vm425, %v406, 0
        %475 = vmatprep.subr.bf16.mxu0 0
        %476 = vmatpush1.bf16.msra.mxu0 0
        %477 = vmatprep.subr.bf16.mxu0 0
        %478 = vmatpush1.bf16.msra.mxu0 0
        %479 = vmatprep.subr.bf16.mxu0 0
        %480 = vmatpush1.bf16.msra.mxu0 0
        %481 = vmatprep.subr.bf16.mxu0 0
        %482 = vmatpush1.bf16.msra.mxu0 0
        %483 = vmatprep.subr.bf16.mxu0 0
        %484 = vmatpush1.bf16.msra.mxu0 0
        %485 = vmatprep.subr.bf16.mxu0 0
        %486 = vmatpush1.bf16.msra.mxu0 0
        %487 = vmatprep.subr.bf16.mxu0 0
        %488 = vmatpush1.bf16.msra.mxu0 0
        %489 = vmatprep.subr.bf16.mxu0 0
        %490 = vmatpush1.bf16.msra.mxu0 %v473
        %491 = vmatprep.subr.bf16.mxu0 0
        %492 = vmatpush2.bf16.msra.mxu0 0
        %493 = vmatprep.subr.bf16.mxu0 0
        %494 = vmatpush2.bf16.msra.mxu0 0
        %495 = vmatprep.subr.bf16.mxu0 0
        %496 = vmatpush2.bf16.msra.mxu0 0
        %497 = vmatprep.subr.bf16.mxu0 0
        %498 = vmatpush2.bf16.msra.mxu0 0
        %499 = vmatprep.subr.bf16.mxu0 0
        %500 = vmatpush2.bf16.msra.mxu0 0
        %501 = vmatprep.subr.bf16.mxu0 0
        %502 = vmatpush2.bf16.msra.mxu0 0
        %503 = vmatprep.subr.bf16.mxu0 0
        %504 = vmatpush2.bf16.msra.mxu0 0
        %505 = vmatprep.subr.bf16.mxu0 0
        %506 = vmatpush2.bf16.msra.mxu0 0
        %507 = vmatprep.mubr.bf16.mxu0 0
        %508 = vmatmul.mubr.bf16.gmra.mxu0 %v470
        %v509 = vpop.f32.mrf.mxu0
        %v510 = vadd.f32 %v464, %v509
        %v511 = vpop.f32.mrf.mxu0
        %v512 = vpop.f32.mrf.mxu0
        %v513 = vpop.f32.mrf.mxu0
        %514 = vdwg.mxu0
        %s515 = scalar_lea.vmem %s3, 8
        %v516 = vld [vmem:[%s515] sm:$0xf]
        %v517 = vrot.slane %v413, 1
        %v519 = vsel %vm421, %v517, 0
        %v522 = vsel %vm425, %v516, 0
        %524 = vmatprep.subr.bf16.mxu0 0
        %525 = vmatpush1.bf16.msra.mxu0 0
        %526 = vmatprep.subr.bf16.mxu0 0
        %527 = vmatpush1.bf16.msra.mxu0 0
        %528 = vmatprep.subr.bf16.mxu0 0
        %529 = vmatpush1.bf16.msra.mxu0 0
        %530 = vmatprep.subr.bf16.mxu0 0
        %531 = vmatpush1.bf16.msra.mxu0 0
        %532 = vmatprep.subr.bf16.mxu0 0
        %533 = vmatpush1.bf16.msra.mxu0 0
        %534 = vmatprep.subr.bf16.mxu0 0
        %535 = vmatpush1.bf16.msra.mxu0 0
        %536 = vmatprep.subr.bf16.mxu0 0
        %537 = vmatpush1.bf16.msra.mxu0 0
        %538 = vmatprep.subr.bf16.mxu0 0
        %539 = vmatpush1.bf16.msra.mxu0 %v522
        %540 = vmatprep.subr.bf16.mxu0 0
        %541 = vmatpush2.bf16.msra.mxu0 0
        %542 = vmatprep.subr.bf16.mxu0 0
        %543 = vmatpush2.bf16.msra.mxu0 0
        %544 = vmatprep.subr.bf16.mxu0 0
        %545 = vmatpush2.bf16.msra.mxu0 0
        %546 = vmatprep.subr.bf16.mxu0 0
        %547 = vmatpush2.bf16.msra.mxu0 0
        %548 = vmatprep.subr.bf16.mxu0 0
        %549 = vmatpush2.bf16.msra.mxu0 0
        %550 = vmatprep.subr.bf16.mxu0 0
        %551 = vmatpush2.bf16.msra.mxu0 0
        %552 = vmatprep.subr.bf16.mxu0 0
        %553 = vmatpush2.bf16.msra.mxu0 0
        %554 = vmatprep.subr.bf16.mxu0 0
        %555 = vmatpush2.bf16.msra.mxu0 0
        %556 = vmatprep.mubr.bf16.mxu0 0
        %557 = vmatmul.mubr.bf16.gmra.mxu0 %v519
        %v558 = vpop.f32.mrf.mxu0
        %v559 = vadd.f32 0.0, %v558
        %v560 = vpop.f32.mrf.mxu0
        %v561 = vpop.f32.mrf.mxu0
        %v562 = vpop.f32.mrf.mxu0
        %563 = vdwg.mxu0
        %v564 = vadd.f32 %v510, %v559
        %s565 = sadd.s32 %s394, 1
        %s566 = smul.u32 %s565, 2
        %s567 = smul.addr %s566, 4
        %s568 = scalar_lea.vmem %s351, %s567
        %v569 = vld [vmem:[%s568] sm:$0xf]
        %v570 = vld [vmem:[%s568 + $0x4] sm:$0x1]
        %s571 = scalar_lea.vmem %s3, 12
        %v572 = vld [vmem:[%s571] sm:$0xf]
        %v574 = vsel %vm421, %v569, 0
        %v577 = vsel %vm425, %v572, 0
        %579 = vmatprep.subr.bf16.mxu0 0
        %580 = vmatpush1.bf16.msra.mxu0 0
        %581 = vmatprep.subr.bf16.mxu0 0
        %582 = vmatpush1.bf16.msra.mxu0 0
        %583 = vmatprep.subr.bf16.mxu0 0
        %584 = vmatpush1.bf16.msra.mxu0 0
        %585 = vmatprep.subr.bf16.mxu0 0
        %586 = vmatpush1.bf16.msra.mxu0 0
        %587 = vmatprep.subr.bf16.mxu0 0
        %588 = vmatpush1.bf16.msra.mxu0 0
        %589 = vmatprep.subr.bf16.mxu0 0
        %590 = vmatpush1.bf16.msra.mxu0 0
        %591 = vmatprep.subr.bf16.mxu0 0
        %592 = vmatpush1.bf16.msra.mxu0 0
        %593 = vmatprep.subr.bf16.mxu0 0
        %594 = vmatpush1.bf16.msra.mxu0 %v577
        %595 = vmatprep.subr.bf16.mxu0 0
        %596 = vmatpush2.bf16.msra.mxu0 0
        %597 = vmatprep.subr.bf16.mxu0 0
        %598 = vmatpush2.bf16.msra.mxu0 0
        %599 = vmatprep.subr.bf16.mxu0 0
        %600 = vmatpush2.bf16.msra.mxu0 0
        %601 = vmatprep.subr.bf16.mxu0 0
        %602 = vmatpush2.bf16.msra.mxu0 0
        %603 = vmatprep.subr.bf16.mxu0 0
        %604 = vmatpush2.bf16.msra.mxu0 0
        %605 = vmatprep.subr.bf16.mxu0 0
        %606 = vmatpush2.bf16.msra.mxu0 0
        %607 = vmatprep.subr.bf16.mxu0 0
        %608 = vmatpush2.bf16.msra.mxu0 0
        %609 = vmatprep.subr.bf16.mxu0 0
        %610 = vmatpush2.bf16.msra.mxu0 0
        %611 = vmatprep.mubr.bf16.mxu0 0
        %612 = vmatmul.mubr.bf16.gmra.mxu0 %v574
        %v613 = vpop.f32.mrf.mxu0
        %v614 = vadd.f32 0.0, %v613
        %v615 = vpop.f32.mrf.mxu0
        %v616 = vpop.f32.mrf.mxu0
        %v617 = vpop.f32.mrf.mxu0
        %618 = vdwg.mxu0
        %v619 = vadd.f32 %v564, %v614
        %s620 = scalar_lea.vmem %s3, 16
        %v621 = vld [vmem:[%s620] sm:$0xf]
        %v624 = vunpack.c.l.b16 %v569
        %v625 = vunpack.c.l.b16 %v570
        %v626 = vpack.c.b16 %v625, %v624
        %v628 = vshrl.u32 %v626, 16
        %v630 = vshll.u32 %v626, 16
        %v632 = vrot.slane %v630, 1
        %v633 = vor.u32 %v628, %v632
        %v635 = vsel %vm421, %v633, 0
        %v638 = vsel %vm425, %v621, 0
        %640 = vmatprep.subr.bf16.mxu0 0
        %641 = vmatpush1.bf16.msra.mxu0 0
        %642 = vmatprep.subr.bf16.mxu0 0
        %643 = vmatpush1.bf16.msra.mxu0 0
        %644 = vmatprep.subr.bf16.mxu0 0
        %645 = vmatpush1.bf16.msra.mxu0 0
        %646 = vmatprep.subr.bf16.mxu0 0
        %647 = vmatpush1.bf16.msra.mxu0 0
        %648 = vmatprep.subr.bf16.mxu0 0
        %649 = vmatpush1.bf16.msra.mxu0 0
        %650 = vmatprep.subr.bf16.mxu0 0
        %651 = vmatpush1.bf16.msra.mxu0 0
        %652 = vmatprep.subr.bf16.mxu0 0
        %653 = vmatpush1.bf16.msra.mxu0 0
        %654 = vmatprep.subr.bf16.mxu0 0
        %655 = vmatpush1.bf16.msra.mxu0 %v638
        %656 = vmatprep.subr.bf16.mxu0 0
        %657 = vmatpush2.bf16.msra.mxu0 0
        %658 = vmatprep.subr.bf16.mxu0 0
        %659 = vmatpush2.bf16.msra.mxu0 0
        %660 = vmatprep.subr.bf16.mxu0 0
        %661 = vmatpush2.bf16.msra.mxu0 0
        %662 = vmatprep.subr.bf16.mxu0 0
        %663 = vmatpush2.bf16.msra.mxu0 0
        %664 = vmatprep.subr.bf16.mxu0 0
        %665 = vmatpush2.bf16.msra.mxu0 0
        %666 = vmatprep.subr.bf16.mxu0 0
        %667 = vmatpush2.bf16.msra.mxu0 0
        %668 = vmatprep.subr.bf16.mxu0 0
        %669 = vmatpush2.bf16.msra.mxu0 0
        %670 = vmatprep.subr.bf16.mxu0 0
        %671 = vmatpush2.bf16.msra.mxu0 0
        %672 = vmatprep.mubr.bf16.mxu0 0
        %673 = vmatmul.mubr.bf16.gmra.mxu0 %v635
        %v674 = vpop.f32.mrf.mxu0
        %v675 = vadd.f32 0.0, %v674
        %v676 = vpop.f32.mrf.mxu0
        %v677 = vpop.f32.mrf.mxu0
        %v678 = vpop.f32.mrf.mxu0
        %679 = vdwg.mxu0
        %v680 = vadd.f32 %v619, %v675
        %s681 = scalar_lea.vmem %s3, 20
        %v682 = vld [vmem:[%s681] sm:$0xf]
        %v683 = vrot.slane %v626, 1
        %v685 = vsel %vm421, %v683, 0
        %v688 = vsel %vm425, %v682, 0
        %690 = vmatprep.subr.bf16.mxu0 0
        %691 = vmatpush1.bf16.msra.mxu0 0
        %692 = vmatprep.subr.bf16.mxu0 0
        %693 = vmatpush1.bf16.msra.mxu0 0
        %694 = vmatprep.subr.bf16.mxu0 0
        %695 = vmatpush1.bf16.msra.mxu0 0
        %696 = vmatprep.subr.bf16.mxu0 0
        %697 = vmatpush1.bf16.msra.mxu0 0
        %698 = vmatprep.subr.bf16.mxu0 0
        %699 = vmatpush1.bf16.msra.mxu0 0
        %700 = vmatprep.subr.bf16.mxu0 0
        %701 = vmatpush1.bf16.msra.mxu0 0
        %702 = vmatprep.subr.bf16.mxu0 0
        %703 = vmatpush1.bf16.msra.mxu0 0
        %704 = vmatprep.subr.bf16.mxu0 0
        %705 = vmatpush1.bf16.msra.mxu0 %v688
        %706 = vmatprep.subr.bf16.mxu0 0
        %707 = vmatpush2.bf16.msra.mxu0 0
        %708 = vmatprep.subr.bf16.mxu0 0
        %709 = vmatpush2.bf16.msra.mxu0 0
        %710 = vmatprep.subr.bf16.mxu0 0
        %711 = vmatpush2.bf16.msra.mxu0 0
        %712 = vmatprep.subr.bf16.mxu0 0
        %713 = vmatpush2.bf16.msra.mxu0 0
        %714 = vmatprep.subr.bf16.mxu0 0
        %715 = vmatpush2.bf16.msra.mxu0 0
        %716 = vmatprep.subr.bf16.mxu0 0
        %717 = vmatpush2.bf16.msra.mxu0 0
        %718 = vmatprep.subr.bf16.mxu0 0
        %719 = vmatpush2.bf16.msra.mxu0 0
        %720 = vmatprep.subr.bf16.mxu0 0
        %721 = vmatpush2.bf16.msra.mxu0 0
        %722 = vmatprep.mubr.bf16.mxu0 0
        %723 = vmatmul.mubr.bf16.gmra.mxu0 %v685
        %v724 = vpop.f32.mrf.mxu0
        %v725 = vadd.f32 0.0, %v724
        %v726 = vpop.f32.mrf.mxu0
        %v727 = vpop.f32.mrf.mxu0
        %v728 = vpop.f32.mrf.mxu0
        %729 = vdwg.mxu0
        %v730 = vadd.f32 %v680, %v725
        %s731 = sadd.s32 %s394, 2
        %s732 = smul.u32 %s731, 2
        %s733 = smul.addr %s732, 4
        %s734 = scalar_lea.vmem %s351, %s733
        %v735 = vld [vmem:[%s734] sm:$0xf]
        %v736 = vld [vmem:[%s734 + $0x4] sm:$0x1]
        %s737 = scalar_lea.vmem %s3, 24
        %v738 = vld [vmem:[%s737] sm:$0xf]
        %v740 = vsel %vm421, %v735, 0
        %v743 = vsel %vm425, %v738, 0
        %745 = vmatprep.subr.bf16.mxu0 0
        %746 = vmatpush1.bf16.msra.mxu0 0
        %747 = vmatprep.subr.bf16.mxu0 0
        %748 = vmatpush1.bf16.msra.mxu0 0
        %749 = vmatprep.subr.bf16.mxu0 0
        %750 = vmatpush1.bf16.msra.mxu0 0
        %751 = vmatprep.subr.bf16.mxu0 0
        %752 = vmatpush1.bf16.msra.mxu0 0
        %753 = vmatprep.subr.bf16.mxu0 0
        %754 = vmatpush1.bf16.msra.mxu0 0
        %755 = vmatprep.subr.bf16.mxu0 0
        %756 = vmatpush1.bf16.msra.mxu0 0
        %757 = vmatprep.subr.bf16.mxu0 0
        %758 = vmatpush1.bf16.msra.mxu0 0
        %759 = vmatprep.subr.bf16.mxu0 0
        %760 = vmatpush1.bf16.msra.mxu0 %v743
        %761 = vmatprep.subr.bf16.mxu0 0
        %762 = vmatpush2.bf16.msra.mxu0 0
        %763 = vmatprep.subr.bf16.mxu0 0
        %764 = vmatpush2.bf16.msra.mxu0 0
        %765 = vmatprep.subr.bf16.mxu0 0
        %766 = vmatpush2.bf16.msra.mxu0 0
        %767 = vmatprep.subr.bf16.mxu0 0
        %768 = vmatpush2.bf16.msra.mxu0 0
        %769 = vmatprep.subr.bf16.mxu0 0
        %770 = vmatpush2.bf16.msra.mxu0 0
        %771 = vmatprep.subr.bf16.mxu0 0
        %772 = vmatpush2.bf16.msra.mxu0 0
        %773 = vmatprep.subr.bf16.mxu0 0
        %774 = vmatpush2.bf16.msra.mxu0 0
        %775 = vmatprep.subr.bf16.mxu0 0
        %776 = vmatpush2.bf16.msra.mxu0 0
        %777 = vmatprep.mubr.bf16.mxu0 0
        %778 = vmatmul.mubr.bf16.gmra.mxu0 %v740
        %v779 = vpop.f32.mrf.mxu0
        %v780 = vadd.f32 0.0, %v779
        %v781 = vpop.f32.mrf.mxu0
        %v782 = vpop.f32.mrf.mxu0
        %v783 = vpop.f32.mrf.mxu0
        %784 = vdwg.mxu0
        %v785 = vadd.f32 %v730, %v780
        %s786 = scalar_lea.vmem %s3, 28
        %v787 = vld [vmem:[%s786] sm:$0xf]
        %v790 = vunpack.c.l.b16 %v735
        %v791 = vunpack.c.l.b16 %v736
        %v792 = vpack.c.b16 %v791, %v790
        %v794 = vshrl.u32 %v792, 16
        %v796 = vshll.u32 %v792, 16
        %v798 = vrot.slane %v796, 1
        %v799 = vor.u32 %v794, %v798
        %v801 = vsel %vm421, %v799, 0
        %v804 = vsel %vm425, %v787, 0
        %806 = vmatprep.subr.bf16.mxu0 0
        %807 = vmatpush1.bf16.msra.mxu0 0
        %808 = vmatprep.subr.bf16.mxu0 0
        %809 = vmatpush1.bf16.msra.mxu0 0
        %810 = vmatprep.subr.bf16.mxu0 0
        %811 = vmatpush1.bf16.msra.mxu0 0
        %812 = vmatprep.subr.bf16.mxu0 0
        %813 = vmatpush1.bf16.msra.mxu0 0
        %814 = vmatprep.subr.bf16.mxu0 0
        %815 = vmatpush1.bf16.msra.mxu0 0
        %816 = vmatprep.subr.bf16.mxu0 0
        %817 = vmatpush1.bf16.msra.mxu0 0
        %818 = vmatprep.subr.bf16.mxu0 0
        %819 = vmatpush1.bf16.msra.mxu0 0
        %820 = vmatprep.subr.bf16.mxu0 0
        %821 = vmatpush1.bf16.msra.mxu0 %v804
        %822 = vmatprep.subr.bf16.mxu0 0
        %823 = vmatpush2.bf16.msra.mxu0 0
        %824 = vmatprep.subr.bf16.mxu0 0
        %825 = vmatpush2.bf16.msra.mxu0 0
        %826 = vmatprep.subr.bf16.mxu0 0
        %827 = vmatpush2.bf16.msra.mxu0 0
        %828 = vmatprep.subr.bf16.mxu0 0
        %829 = vmatpush2.bf16.msra.mxu0 0
        %830 = vmatprep.subr.bf16.mxu0 0
        %831 = vmatpush2.bf16.msra.mxu0 0
        %832 = vmatprep.subr.bf16.mxu0 0
        %833 = vmatpush2.bf16.msra.mxu0 0
        %834 = vmatprep.subr.bf16.mxu0 0
        %835 = vmatpush2.bf16.msra.mxu0 0
        %836 = vmatprep.subr.bf16.mxu0 0
        %837 = vmatpush2.bf16.msra.mxu0 0
        %838 = vmatprep.mubr.bf16.mxu0 0
        %839 = vmatmul.mubr.bf16.gmra.mxu0 %v801
        %v840 = vpop.f32.mrf.mxu0
        %v841 = vadd.f32 0.0, %v840
        %v842 = vpop.f32.mrf.mxu0
        %v843 = vpop.f32.mrf.mxu0
        %v844 = vpop.f32.mrf.mxu0
        %845 = vdwg.mxu0
        %v846 = vadd.f32 %v785, %v841
        %s847 = scalar_lea.vmem %s3, 32
        %v848 = vld [vmem:[%s847] sm:$0xf]
        %v849 = vrot.slane %v792, 1
        %v851 = vsel %vm421, %v849, 0
        %v854 = vsel %vm425, %v848, 0
        %856 = vmatprep.subr.bf16.mxu0 0
        %857 = vmatpush1.bf16.msra.mxu0 0
        %858 = vmatprep.subr.bf16.mxu0 0
        %859 = vmatpush1.bf16.msra.mxu0 0
        %860 = vmatprep.subr.bf16.mxu0 0
        %861 = vmatpush1.bf16.msra.mxu0 0
        %862 = vmatprep.subr.bf16.mxu0 0
        %863 = vmatpush1.bf16.msra.mxu0 0
        %864 = vmatprep.subr.bf16.mxu0 0
        %865 = vmatpush1.bf16.msra.mxu0 0
        %866 = vmatprep.subr.bf16.mxu0 0
        %867 = vmatpush1.bf16.msra.mxu0 0
        %868 = vmatprep.subr.bf16.mxu0 0
        %869 = vmatpush1.bf16.msra.mxu0 0
        %870 = vmatprep.subr.bf16.mxu0 0
        %871 = vmatpush1.bf16.msra.mxu0 %v854
        %872 = vmatprep.subr.bf16.mxu0 0
        %873 = vmatpush2.bf16.msra.mxu0 0
        %874 = vmatprep.subr.bf16.mxu0 0
        %875 = vmatpush2.bf16.msra.mxu0 0
        %876 = vmatprep.subr.bf16.mxu0 0
        %877 = vmatpush2.bf16.msra.mxu0 0
        %878 = vmatprep.subr.bf16.mxu0 0
        %879 = vmatpush2.bf16.msra.mxu0 0
        %880 = vmatprep.subr.bf16.mxu0 0
        %881 = vmatpush2.bf16.msra.mxu0 0
        %882 = vmatprep.subr.bf16.mxu0 0
        %883 = vmatpush2.bf16.msra.mxu0 0
        %884 = vmatprep.subr.bf16.mxu0 0
        %885 = vmatpush2.bf16.msra.mxu0 0
        %886 = vmatprep.subr.bf16.mxu0 0
        %887 = vmatpush2.bf16.msra.mxu0 0
        %888 = vmatprep.mubr.bf16.mxu0 0
        %889 = vmatmul.mubr.bf16.gmra.mxu0 %v851
        %v890 = vpop.f32.mrf.mxu0
        %v891 = vadd.f32 0.0, %v890
        %v892 = vpop.f32.mrf.mxu0
        %v893 = vpop.f32.mrf.mxu0
        %v894 = vpop.f32.mrf.mxu0
        %895 = vdwg.mxu0
        %v896 = vadd.f32 %v846, %v891
        %s897 = smul.addr %s401, 4
        %s898 = scalar_lea.vmem %s361, %s897
        %v899 = vld [vmem:[%s898] sm:$0xf]
        %v900 = vld [vmem:[%s898 + $0x4] sm:$0x1]
        %s901 = scalar_lea.vmem %s3, 36
        %v902 = vld [vmem:[%s901] sm:$0xf]
        %v904 = vsel %vm421, %v899, 0
        %v907 = vsel %vm425, %v902, 0
        %909 = vmatprep.subr.bf16.mxu0 0
        %910 = vmatpush1.bf16.msra.mxu0 0
        %911 = vmatprep.subr.bf16.mxu0 0
        %912 = vmatpush1.bf16.msra.mxu0 0
        %913 = vmatprep.subr.bf16.mxu0 0
        %914 = vmatpush1.bf16.msra.mxu0 0
        %915 = vmatprep.subr.bf16.mxu0 0
        %916 = vmatpush1.bf16.msra.mxu0 0
        %917 = vmatprep.subr.bf16.mxu0 0
        %918 = vmatpush1.bf16.msra.mxu0 0
        %919 = vmatprep.subr.bf16.mxu0 0
        %920 = vmatpush1.bf16.msra.mxu0 0
        %921 = vmatprep.subr.bf16.mxu0 0
        %922 = vmatpush1.bf16.msra.mxu0 0
        %923 = vmatprep.subr.bf16.mxu0 0
        %924 = vmatpush1.bf16.msra.mxu0 %v907
        %925 = vmatprep.subr.bf16.mxu0 0
        %926 = vmatpush2.bf16.msra.mxu0 0
        %927 = vmatprep.subr.bf16.mxu0 0
        %928 = vmatpush2.bf16.msra.mxu0 0
        %929 = vmatprep.subr.bf16.mxu0 0
        %930 = vmatpush2.bf16.msra.mxu0 0
        %931 = vmatprep.subr.bf16.mxu0 0
        %932 = vmatpush2.bf16.msra.mxu0 0
        %933 = vmatprep.subr.bf16.mxu0 0
        %934 = vmatpush2.bf16.msra.mxu0 0
        %935 = vmatprep.subr.bf16.mxu0 0
        %936 = vmatpush2.bf16.msra.mxu0 0
        %937 = vmatprep.subr.bf16.mxu0 0
        %938 = vmatpush2.bf16.msra.mxu0 0
        %939 = vmatprep.subr.bf16.mxu0 0
        %940 = vmatpush2.bf16.msra.mxu0 0
        %941 = vmatprep.mubr.bf16.mxu0 0
        %942 = vmatmul.mubr.bf16.gmra.mxu0 %v904
        %v943 = vpop.f32.mrf.mxu0
        %v944 = vadd.f32 0.0, %v943
        %v945 = vpop.f32.mrf.mxu0
        %v946 = vpop.f32.mrf.mxu0
        %v947 = vpop.f32.mrf.mxu0
        %948 = vdwg.mxu0
        %v949 = vadd.f32 %v896, %v944
        %s950 = scalar_lea.vmem %s3, 40
        %v951 = vld [vmem:[%s950] sm:$0xf]
        %v954 = vunpack.c.l.b16 %v899
        %v955 = vunpack.c.l.b16 %v900
        %v956 = vpack.c.b16 %v955, %v954
        %v958 = vshrl.u32 %v956, 16
        %v960 = vshll.u32 %v956, 16
        %v962 = vrot.slane %v960, 1
        %v963 = vor.u32 %v958, %v962
        %v965 = vsel %vm421, %v963, 0
        %v968 = vsel %vm425, %v951, 0
        %970 = vmatprep.subr.bf16.mxu0 0
        %971 = vmatpush1.bf16.msra.mxu0 0
        %972 = vmatprep.subr.bf16.mxu0 0
        %973 = vmatpush1.bf16.msra.mxu0 0
        %974 = vmatprep.subr.bf16.mxu0 0
        %975 = vmatpush1.bf16.msra.mxu0 0
        %976 = vmatprep.subr.bf16.mxu0 0
        %977 = vmatpush1.bf16.msra.mxu0 0
        %978 = vmatprep.subr.bf16.mxu0 0
        %979 = vmatpush1.bf16.msra.mxu0 0
        %980 = vmatprep.subr.bf16.mxu0 0
        %981 = vmatpush1.bf16.msra.mxu0 0
        %982 = vmatprep.subr.bf16.mxu0 0
        %983 = vmatpush1.bf16.msra.mxu0 0
        %984 = vmatprep.subr.bf16.mxu0 0
        %985 = vmatpush1.bf16.msra.mxu0 %v968
        %986 = vmatprep.subr.bf16.mxu0 0
        %987 = vmatpush2.bf16.msra.mxu0 0
        %988 = vmatprep.subr.bf16.mxu0 0
        %989 = vmatpush2.bf16.msra.mxu0 0
        %990 = vmatprep.subr.bf16.mxu0 0
        %991 = vmatpush2.bf16.msra.mxu0 0
        %992 = vmatprep.subr.bf16.mxu0 0
        %993 = vmatpush2.bf16.msra.mxu0 0
        %994 = vmatprep.subr.bf16.mxu0 0
        %995 = vmatpush2.bf16.msra.mxu0 0
        %996 = vmatprep.subr.bf16.mxu0 0
        %997 = vmatpush2.bf16.msra.mxu0 0
        %998 = vmatprep.subr.bf16.mxu0 0
        %999 = vmatpush2.bf16.msra.mxu0 0
        %1000 = vmatprep.subr.bf16.mxu0 0
        %1001 = vmatpush2.bf16.msra.mxu0 0
        %1002 = vmatprep.mubr.bf16.mxu0 0
        %1003 = vmatmul.mubr.bf16.gmra.mxu0 %v965
        %v1004 = vpop.f32.mrf.mxu0
        %v1005 = vadd.f32 0.0, %v1004
        %v1006 = vpop.f32.mrf.mxu0
        %v1007 = vpop.f32.mrf.mxu0
        %v1008 = vpop.f32.mrf.mxu0
        %1009 = vdwg.mxu0
        %v1010 = vadd.f32 %v949, %v1005
        %s1011 = scalar_lea.vmem %s3, 44
        %v1012 = vld [vmem:[%s1011] sm:$0xf]
        %v1013 = vrot.slane %v956, 1
        %v1015 = vsel %vm421, %v1013, 0
        %v1018 = vsel %vm425, %v1012, 0
        %1020 = vmatprep.subr.bf16.mxu0 0
        %1021 = vmatpush1.bf16.msra.mxu0 0
        %1022 = vmatprep.subr.bf16.mxu0 0
        %1023 = vmatpush1.bf16.msra.mxu0 0
        %1024 = vmatprep.subr.bf16.mxu0 0
        %1025 = vmatpush1.bf16.msra.mxu0 0
        %1026 = vmatprep.subr.bf16.mxu0 0
        %1027 = vmatpush1.bf16.msra.mxu0 0
        %1028 = vmatprep.subr.bf16.mxu0 0
        %1029 = vmatpush1.bf16.msra.mxu0 0
        %1030 = vmatprep.subr.bf16.mxu0 0
        %1031 = vmatpush1.bf16.msra.mxu0 0
        %1032 = vmatprep.subr.bf16.mxu0 0
        %1033 = vmatpush1.bf16.msra.mxu0 0
        %1034 = vmatprep.subr.bf16.mxu0 0
        %1035 = vmatpush1.bf16.msra.mxu0 %v1018
        %1036 = vmatprep.subr.bf16.mxu0 0
        %1037 = vmatpush2.bf16.msra.mxu0 0
        %1038 = vmatprep.subr.bf16.mxu0 0
        %1039 = vmatpush2.bf16.msra.mxu0 0
        %1040 = vmatprep.subr.bf16.mxu0 0
        %1041 = vmatpush2.bf16.msra.mxu0 0
        %1042 = vmatprep.subr.bf16.mxu0 0
        %1043 = vmatpush2.bf16.msra.mxu0 0
        %1044 = vmatprep.subr.bf16.mxu0 0
        %1045 = vmatpush2.bf16.msra.mxu0 0
        %1046 = vmatprep.subr.bf16.mxu0 0
        %1047 = vmatpush2.bf16.msra.mxu0 0
        %1048 = vmatprep.subr.bf16.mxu0 0
        %1049 = vmatpush2.bf16.msra.mxu0 0
        %1050 = vmatprep.subr.bf16.mxu0 0
        %1051 = vmatpush2.bf16.msra.mxu0 0
        %1052 = vmatprep.mubr.bf16.mxu0 0
        %1053 = vmatmul.mubr.bf16.gmra.mxu0 %v1015
        %v1054 = vpop.f32.mrf.mxu0
        %v1055 = vadd.f32 0.0, %v1054
        %v1056 = vpop.f32.mrf.mxu0
        %v1057 = vpop.f32.mrf.mxu0
        %v1058 = vpop.f32.mrf.mxu0
        %1059 = vdwg.mxu0
        %v1060 = vadd.f32 %v1010, %v1055
        %s1061 = smul.addr %s566, 4
        %s1062 = scalar_lea.vmem %s361, %s1061
        %v1063 = vld [vmem:[%s1062] sm:$0xf]
        %v1064 = vld [vmem:[%s1062 + $0x4] sm:$0x1]
        %s1065 = scalar_lea.vmem %s3, 48
        %v1066 = vld [vmem:[%s1065] sm:$0xf]
        %v1068 = vsel %vm421, %v1063, 0
        %v1071 = vsel %vm425, %v1066, 0
        %1073 = vmatprep.subr.bf16.mxu0 0
        %1074 = vmatpush1.bf16.msra.mxu0 0
        %1075 = vmatprep.subr.bf16.mxu0 0
        %1076 = vmatpush1.bf16.msra.mxu0 0
        %1077 = vmatprep.subr.bf16.mxu0 0
        %1078 = vmatpush1.bf16.msra.mxu0 0
        %1079 = vmatprep.subr.bf16.mxu0 0
        %1080 = vmatpush1.bf16.msra.mxu0 0
        %1081 = vmatprep.subr.bf16.mxu0 0
        %1082 = vmatpush1.bf16.msra.mxu0 0
        %1083 = vmatprep.subr.bf16.mxu0 0
        %1084 = vmatpush1.bf16.msra.mxu0 0
        %1085 = vmatprep.subr.bf16.mxu0 0
        %1086 = vmatpush1.bf16.msra.mxu0 0
        %1087 = vmatprep.subr.bf16.mxu0 0
        %1088 = vmatpush1.bf16.msra.mxu0 %v1071
        %1089 = vmatprep.subr.bf16.mxu0 0
        %1090 = vmatpush2.bf16.msra.mxu0 0
        %1091 = vmatprep.subr.bf16.mxu0 0
        %1092 = vmatpush2.bf16.msra.mxu0 0
        %1093 = vmatprep.subr.bf16.mxu0 0
        %1094 = vmatpush2.bf16.msra.mxu0 0
        %1095 = vmatprep.subr.bf16.mxu0 0
        %1096 = vmatpush2.bf16.msra.mxu0 0
        %1097 = vmatprep.subr.bf16.mxu0 0
        %1098 = vmatpush2.bf16.msra.mxu0 0
        %1099 = vmatprep.subr.bf16.mxu0 0
        %1100 = vmatpush2.bf16.msra.mxu0 0
        %1101 = vmatprep.subr.bf16.mxu0 0
        %1102 = vmatpush2.bf16.msra.mxu0 0
        %1103 = vmatprep.subr.bf16.mxu0 0
        %1104 = vmatpush2.bf16.msra.mxu0 0
        %1105 = vmatprep.mubr.bf16.mxu0 0
        %1106 = vmatmul.mubr.bf16.gmra.mxu0 %v1068
        %v1107 = vpop.f32.mrf.mxu0
        %v1108 = vadd.f32 0.0, %v1107
        %v1109 = vpop.f32.mrf.mxu0
        %v1110 = vpop.f32.mrf.mxu0
        %v1111 = vpop.f32.mrf.mxu0
        %1112 = vdwg.mxu0
        %v1113 = vadd.f32 %v1060, %v1108
        %s1114 = scalar_lea.vmem %s3, 52
        %v1115 = vld [vmem:[%s1114] sm:$0xf]
        %v1118 = vunpack.c.l.b16 %v1063
        %v1119 = vunpack.c.l.b16 %v1064
        %v1120 = vpack.c.b16 %v1119, %v1118
        %v1122 = vshrl.u32 %v1120, 16
        %v1124 = vshll.u32 %v1120, 16
        %v1126 = vrot.slane %v1124, 1
        %v1127 = vor.u32 %v1122, %v1126
        %v1129 = vsel %vm421, %v1127, 0
        %v1132 = vsel %vm425, %v1115, 0
        %1134 = vmatprep.subr.bf16.mxu0 0
        %1135 = vmatpush1.bf16.msra.mxu0 0
        %1136 = vmatprep.subr.bf16.mxu0 0
        %1137 = vmatpush1.bf16.msra.mxu0 0
        %1138 = vmatprep.subr.bf16.mxu0 0
        %1139 = vmatpush1.bf16.msra.mxu0 0
        %1140 = vmatprep.subr.bf16.mxu0 0
        %1141 = vmatpush1.bf16.msra.mxu0 0
        %1142 = vmatprep.subr.bf16.mxu0 0
        %1143 = vmatpush1.bf16.msra.mxu0 0
        %1144 = vmatprep.subr.bf16.mxu0 0
        %1145 = vmatpush1.bf16.msra.mxu0 0
        %1146 = vmatprep.subr.bf16.mxu0 0
        %1147 = vmatpush1.bf16.msra.mxu0 0
        %1148 = vmatprep.subr.bf16.mxu0 0
        %1149 = vmatpush1.bf16.msra.mxu0 %v1132
        %1150 = vmatprep.subr.bf16.mxu0 0
        %1151 = vmatpush2.bf16.msra.mxu0 0
        %1152 = vmatprep.subr.bf16.mxu0 0
        %1153 = vmatpush2.bf16.msra.mxu0 0
        %1154 = vmatprep.subr.bf16.mxu0 0
        %1155 = vmatpush2.bf16.msra.mxu0 0
        %1156 = vmatprep.subr.bf16.mxu0 0
        %1157 = vmatpush2.bf16.msra.mxu0 0
        %1158 = vmatprep.subr.bf16.mxu0 0
        %1159 = vmatpush2.bf16.msra.mxu0 0
        %1160 = vmatprep.subr.bf16.mxu0 0
        %1161 = vmatpush2.bf16.msra.mxu0 0
        %1162 = vmatprep.subr.bf16.mxu0 0
        %1163 = vmatpush2.bf16.msra.mxu0 0
        %1164 = vmatprep.subr.bf16.mxu0 0
        %1165 = vmatpush2.bf16.msra.mxu0 0
        %1166 = vmatprep.mubr.bf16.mxu0 0
        %1167 = vmatmul.mubr.bf16.gmra.mxu0 %v1129
        %v1168 = vpop.f32.mrf.mxu0
        %v1169 = vadd.f32 0.0, %v1168
        %v1170 = vpop.f32.mrf.mxu0
        %v1171 = vpop.f32.mrf.mxu0
        %v1172 = vpop.f32.mrf.mxu0
        %1173 = vdwg.mxu0
        %v1174 = vadd.f32 %v1113, %v1169
        %s1175 = scalar_lea.vmem %s3, 56
        %v1176 = vld [vmem:[%s1175] sm:$0xf]
        %v1177 = vrot.slane %v1120, 1
        %v1179 = vsel %vm421, %v1177, 0
        %v1182 = vsel %vm425, %v1176, 0
        %1184 = vmatprep.subr.bf16.mxu0 0
        %1185 = vmatpush1.bf16.msra.mxu0 0
        %1186 = vmatprep.subr.bf16.mxu0 0
        %1187 = vmatpush1.bf16.msra.mxu0 0
        %1188 = vmatprep.subr.bf16.mxu0 0
        %1189 = vmatpush1.bf16.msra.mxu0 0
        %1190 = vmatprep.subr.bf16.mxu0 0
        %1191 = vmatpush1.bf16.msra.mxu0 0
        %1192 = vmatprep.subr.bf16.mxu0 0
        %1193 = vmatpush1.bf16.msra.mxu0 0
        %1194 = vmatprep.subr.bf16.mxu0 0
        %1195 = vmatpush1.bf16.msra.mxu0 0
        %1196 = vmatprep.subr.bf16.mxu0 0
        %1197 = vmatpush1.bf16.msra.mxu0 0
        %1198 = vmatprep.subr.bf16.mxu0 0
        %1199 = vmatpush1.bf16.msra.mxu0 %v1182
        %1200 = vmatprep.subr.bf16.mxu0 0
        %1201 = vmatpush2.bf16.msra.mxu0 0
        %1202 = vmatprep.subr.bf16.mxu0 0
        %1203 = vmatpush2.bf16.msra.mxu0 0
        %1204 = vmatprep.subr.bf16.mxu0 0
        %1205 = vmatpush2.bf16.msra.mxu0 0
        %1206 = vmatprep.subr.bf16.mxu0 0
        %1207 = vmatpush2.bf16.msra.mxu0 0
        %1208 = vmatprep.subr.bf16.mxu0 0
        %1209 = vmatpush2.bf16.msra.mxu0 0
        %1210 = vmatprep.subr.bf16.mxu0 0
        %1211 = vmatpush2.bf16.msra.mxu0 0
        %1212 = vmatprep.subr.bf16.mxu0 0
        %1213 = vmatpush2.bf16.msra.mxu0 0
        %1214 = vmatprep.subr.bf16.mxu0 0
        %1215 = vmatpush2.bf16.msra.mxu0 0
        %1216 = vmatprep.mubr.bf16.mxu0 0
        %1217 = vmatmul.mubr.bf16.gmra.mxu0 %v1179
        %v1218 = vpop.f32.mrf.mxu0
        %v1219 = vadd.f32 0.0, %v1218
        %v1220 = vpop.f32.mrf.mxu0
        %v1221 = vpop.f32.mrf.mxu0
        %v1222 = vpop.f32.mrf.mxu0
        %1223 = vdwg.mxu0
        %v1224 = vadd.f32 %v1174, %v1219
        %s1225 = smul.addr %s732, 4
        %s1226 = scalar_lea.vmem %s361, %s1225
        %v1227 = vld [vmem:[%s1226] sm:$0xf]
        %v1228 = vld [vmem:[%s1226 + $0x4] sm:$0x1]
        %s1229 = scalar_lea.vmem %s3, 60
        %v1230 = vld [vmem:[%s1229] sm:$0xf]
        %v1232 = vsel %vm421, %v1227, 0
        %v1235 = vsel %vm425, %v1230, 0
        %1237 = vmatprep.subr.bf16.mxu0 0
        %1238 = vmatpush1.bf16.msra.mxu0 0
        %1239 = vmatprep.subr.bf16.mxu0 0
        %1240 = vmatpush1.bf16.msra.mxu0 0
        %1241 = vmatprep.subr.bf16.mxu0 0
        %1242 = vmatpush1.bf16.msra.mxu0 0
        %1243 = vmatprep.subr.bf16.mxu0 0
        %1244 = vmatpush1.bf16.msra.mxu0 0
        %1245 = vmatprep.subr.bf16.mxu0 0
        %1246 = vmatpush1.bf16.msra.mxu0 0
        %1247 = vmatprep.subr.bf16.mxu0 0
        %1248 = vmatpush1.bf16.msra.mxu0 0
        %1249 = vmatprep.subr.bf16.mxu0 0
        %1250 = vmatpush1.bf16.msra.mxu0 0
        %1251 = vmatprep.subr.bf16.mxu0 0
        %1252 = vmatpush1.bf16.msra.mxu0 %v1235
        %1253 = vmatprep.subr.bf16.mxu0 0
        %1254 = vmatpush2.bf16.msra.mxu0 0
        %1255 = vmatprep.subr.bf16.mxu0 0
        %1256 = vmatpush2.bf16.msra.mxu0 0
        %1257 = vmatprep.subr.bf16.mxu0 0
        %1258 = vmatpush2.bf16.msra.mxu0 0
        %1259 = vmatprep.subr.bf16.mxu0 0
        %1260 = vmatpush2.bf16.msra.mxu0 0
        %1261 = vmatprep.subr.bf16.mxu0 0
        %1262 = vmatpush2.bf16.msra.mxu0 0
        %1263 = vmatprep.subr.bf16.mxu0 0
        %1264 = vmatpush2.bf16.msra.mxu0 0
        %1265 = vmatprep.subr.bf16.mxu0 0
        %1266 = vmatpush2.bf16.msra.mxu0 0
        %1267 = vmatprep.subr.bf16.mxu0 0
        %1268 = vmatpush2.bf16.msra.mxu0 0
        %1269 = vmatprep.mubr.bf16.mxu0 0
        %1270 = vmatmul.mubr.bf16.gmra.mxu0 %v1232
        %v1271 = vpop.f32.mrf.mxu0
        %v1272 = vadd.f32 0.0, %v1271
        %v1273 = vpop.f32.mrf.mxu0
        %v1274 = vpop.f32.mrf.mxu0
        %v1275 = vpop.f32.mrf.mxu0
        %1276 = vdwg.mxu0
        %v1277 = vadd.f32 %v1224, %v1272
        %s1278 = scalar_lea.vmem %s3, 64
        %v1279 = vld [vmem:[%s1278] sm:$0xf]
        %v1282 = vunpack.c.l.b16 %v1227
        %v1283 = vunpack.c.l.b16 %v1228
        %v1284 = vpack.c.b16 %v1283, %v1282
        %v1286 = vshrl.u32 %v1284, 16
        %v1288 = vshll.u32 %v1284, 16
        %v1290 = vrot.slane %v1288, 1
        %v1291 = vor.u32 %v1286, %v1290
        %v1293 = vsel %vm421, %v1291, 0
        %v1296 = vsel %vm425, %v1279, 0
        %1298 = vmatprep.subr.bf16.mxu0 0
        %1299 = vmatpush1.bf16.msra.mxu0 0
        %1300 = vmatprep.subr.bf16.mxu0 0
        %1301 = vmatpush1.bf16.msra.mxu0 0
        %1302 = vmatprep.subr.bf16.mxu0 0
        %1303 = vmatpush1.bf16.msra.mxu0 0
        %1304 = vmatprep.subr.bf16.mxu0 0
        %1305 = vmatpush1.bf16.msra.mxu0 0
        %1306 = vmatprep.subr.bf16.mxu0 0
        %1307 = vmatpush1.bf16.msra.mxu0 0
        %1308 = vmatprep.subr.bf16.mxu0 0
        %1309 = vmatpush1.bf16.msra.mxu0 0
        %1310 = vmatprep.subr.bf16.mxu0 0
        %1311 = vmatpush1.bf16.msra.mxu0 0
        %1312 = vmatprep.subr.bf16.mxu0 0
        %1313 = vmatpush1.bf16.msra.mxu0 %v1296
        %1314 = vmatprep.subr.bf16.mxu0 0
        %1315 = vmatpush2.bf16.msra.mxu0 0
        %1316 = vmatprep.subr.bf16.mxu0 0
        %1317 = vmatpush2.bf16.msra.mxu0 0
        %1318 = vmatprep.subr.bf16.mxu0 0
        %1319 = vmatpush2.bf16.msra.mxu0 0
        %1320 = vmatprep.subr.bf16.mxu0 0
        %1321 = vmatpush2.bf16.msra.mxu0 0
        %1322 = vmatprep.subr.bf16.mxu0 0
        %1323 = vmatpush2.bf16.msra.mxu0 0
        %1324 = vmatprep.subr.bf16.mxu0 0
        %1325 = vmatpush2.bf16.msra.mxu0 0
        %1326 = vmatprep.subr.bf16.mxu0 0
        %1327 = vmatpush2.bf16.msra.mxu0 0
        %1328 = vmatprep.subr.bf16.mxu0 0
        %1329 = vmatpush2.bf16.msra.mxu0 0
        %1330 = vmatprep.mubr.bf16.mxu0 0
        %1331 = vmatmul.mubr.bf16.gmra.mxu0 %v1293
        %v1332 = vpop.f32.mrf.mxu0
        %v1333 = vadd.f32 0.0, %v1332
        %v1334 = vpop.f32.mrf.mxu0
        %v1335 = vpop.f32.mrf.mxu0
        %v1336 = vpop.f32.mrf.mxu0
        %1337 = vdwg.mxu0
        %v1338 = vadd.f32 %v1277, %v1333
        %s1339 = scalar_lea.vmem %s3, 68
        %v1340 = vld [vmem:[%s1339] sm:$0xf]
        %v1341 = vrot.slane %v1284, 1
        %v1343 = vsel %vm421, %v1341, 0
        %v1346 = vsel %vm425, %v1340, 0
        %1348 = vmatprep.subr.bf16.mxu0 0
        %1349 = vmatpush1.bf16.msra.mxu0 0
        %1350 = vmatprep.subr.bf16.mxu0 0
        %1351 = vmatpush1.bf16.msra.mxu0 0
        %1352 = vmatprep.subr.bf16.mxu0 0
        %1353 = vmatpush1.bf16.msra.mxu0 0
        %1354 = vmatprep.subr.bf16.mxu0 0
        %1355 = vmatpush1.bf16.msra.mxu0 0
        %1356 = vmatprep.subr.bf16.mxu0 0
        %1357 = vmatpush1.bf16.msra.mxu0 0
        %1358 = vmatprep.subr.bf16.mxu0 0
        %1359 = vmatpush1.bf16.msra.mxu0 0
        %1360 = vmatprep.subr.bf16.mxu0 0
        %1361 = vmatpush1.bf16.msra.mxu0 0
        %1362 = vmatprep.subr.bf16.mxu0 0
        %1363 = vmatpush1.bf16.msra.mxu0 %v1346
        %1364 = vmatprep.subr.bf16.mxu0 0
        %1365 = vmatpush2.bf16.msra.mxu0 0
        %1366 = vmatprep.subr.bf16.mxu0 0
        %1367 = vmatpush2.bf16.msra.mxu0 0
        %1368 = vmatprep.subr.bf16.mxu0 0
        %1369 = vmatpush2.bf16.msra.mxu0 0
        %1370 = vmatprep.subr.bf16.mxu0 0
        %1371 = vmatpush2.bf16.msra.mxu0 0
        %1372 = vmatprep.subr.bf16.mxu0 0
        %1373 = vmatpush2.bf16.msra.mxu0 0
        %1374 = vmatprep.subr.bf16.mxu0 0
        %1375 = vmatpush2.bf16.msra.mxu0 0
        %1376 = vmatprep.subr.bf16.mxu0 0
        %1377 = vmatpush2.bf16.msra.mxu0 0
        %1378 = vmatprep.subr.bf16.mxu0 0
        %1379 = vmatpush2.bf16.msra.mxu0 0
        %1380 = vmatprep.mubr.bf16.mxu0 0
        %1381 = vmatmul.mubr.bf16.gmra.mxu0 %v1343
        %v1382 = vpop.f32.mrf.mxu0
        %v1383 = vadd.f32 0.0, %v1382
        %v1384 = vpop.f32.mrf.mxu0
        %v1385 = vpop.f32.mrf.mxu0
        %v1386 = vpop.f32.mrf.mxu0
        %1387 = vdwg.mxu0
        %v1388 = vadd.f32 %v1338, %v1383
        %s1389 = smul.addr %s401, 4
        %s1390 = scalar_lea.vmem %s372, %s1389
        %v1391 = vld [vmem:[%s1390] sm:$0xf]
        %v1392 = vld [vmem:[%s1390 + $0x4] sm:$0x1]
        %s1393 = scalar_lea.vmem %s3, 72
        %v1394 = vld [vmem:[%s1393] sm:$0xf]
        %v1396 = vsel %vm421, %v1391, 0
        %v1399 = vsel %vm425, %v1394, 0
        %1401 = vmatprep.subr.bf16.mxu0 0
        %1402 = vmatpush1.bf16.msra.mxu0 0
        %1403 = vmatprep.subr.bf16.mxu0 0
        %1404 = vmatpush1.bf16.msra.mxu0 0
        %1405 = vmatprep.subr.bf16.mxu0 0
        %1406 = vmatpush1.bf16.msra.mxu0 0
        %1407 = vmatprep.subr.bf16.mxu0 0
        %1408 = vmatpush1.bf16.msra.mxu0 0
        %1409 = vmatprep.subr.bf16.mxu0 0
        %1410 = vmatpush1.bf16.msra.mxu0 0
        %1411 = vmatprep.subr.bf16.mxu0 0
        %1412 = vmatpush1.bf16.msra.mxu0 0
        %1413 = vmatprep.subr.bf16.mxu0 0
        %1414 = vmatpush1.bf16.msra.mxu0 0
        %1415 = vmatprep.subr.bf16.mxu0 0
        %1416 = vmatpush1.bf16.msra.mxu0 %v1399
        %1417 = vmatprep.subr.bf16.mxu0 0
        %1418 = vmatpush2.bf16.msra.mxu0 0
        %1419 = vmatprep.subr.bf16.mxu0 0
        %1420 = vmatpush2.bf16.msra.mxu0 0
        %1421 = vmatprep.subr.bf16.mxu0 0
        %1422 = vmatpush2.bf16.msra.mxu0 0
        %1423 = vmatprep.subr.bf16.mxu0 0
        %1424 = vmatpush2.bf16.msra.mxu0 0
        %1425 = vmatprep.subr.bf16.mxu0 0
        %1426 = vmatpush2.bf16.msra.mxu0 0
        %1427 = vmatprep.subr.bf16.mxu0 0
        %1428 = vmatpush2.bf16.msra.mxu0 0
        %1429 = vmatprep.subr.bf16.mxu0 0
        %1430 = vmatpush2.bf16.msra.mxu0 0
        %1431 = vmatprep.subr.bf16.mxu0 0
        %1432 = vmatpush2.bf16.msra.mxu0 0
        %1433 = vmatprep.mubr.bf16.mxu0 0
        %1434 = vmatmul.mubr.bf16.gmra.mxu0 %v1396
        %v1435 = vpop.f32.mrf.mxu0
        %v1436 = vadd.f32 0.0, %v1435
        %v1437 = vpop.f32.mrf.mxu0
        %v1438 = vpop.f32.mrf.mxu0
        %v1439 = vpop.f32.mrf.mxu0
        %1440 = vdwg.mxu0
        %v1441 = vadd.f32 %v1388, %v1436
        %s1442 = scalar_lea.vmem %s3, 76
        %v1443 = vld [vmem:[%s1442] sm:$0xf]
        %v1446 = vunpack.c.l.b16 %v1391
        %v1447 = vunpack.c.l.b16 %v1392
        %v1448 = vpack.c.b16 %v1447, %v1446
        %v1450 = vshrl.u32 %v1448, 16
        %v1452 = vshll.u32 %v1448, 16
        %v1454 = vrot.slane %v1452, 1
        %v1455 = vor.u32 %v1450, %v1454
        %v1457 = vsel %vm421, %v1455, 0
        %v1460 = vsel %vm425, %v1443, 0
        %1462 = vmatprep.subr.bf16.mxu0 0
        %1463 = vmatpush1.bf16.msra.mxu0 0
        %1464 = vmatprep.subr.bf16.mxu0 0
        %1465 = vmatpush1.bf16.msra.mxu0 0
        %1466 = vmatprep.subr.bf16.mxu0 0
        %1467 = vmatpush1.bf16.msra.mxu0 0
        %1468 = vmatprep.subr.bf16.mxu0 0
        %1469 = vmatpush1.bf16.msra.mxu0 0
        %1470 = vmatprep.subr.bf16.mxu0 0
        %1471 = vmatpush1.bf16.msra.mxu0 0
        %1472 = vmatprep.subr.bf16.mxu0 0
        %1473 = vmatpush1.bf16.msra.mxu0 0
        %1474 = vmatprep.subr.bf16.mxu0 0
        %1475 = vmatpush1.bf16.msra.mxu0 0
        %1476 = vmatprep.subr.bf16.mxu0 0
        %1477 = vmatpush1.bf16.msra.mxu0 %v1460
        %1478 = vmatprep.subr.bf16.mxu0 0
        %1479 = vmatpush2.bf16.msra.mxu0 0
        %1480 = vmatprep.subr.bf16.mxu0 0
        %1481 = vmatpush2.bf16.msra.mxu0 0
        %1482 = vmatprep.subr.bf16.mxu0 0
        %1483 = vmatpush2.bf16.msra.mxu0 0
        %1484 = vmatprep.subr.bf16.mxu0 0
        %1485 = vmatpush2.bf16.msra.mxu0 0
        %1486 = vmatprep.subr.bf16.mxu0 0
        %1487 = vmatpush2.bf16.msra.mxu0 0
        %1488 = vmatprep.subr.bf16.mxu0 0
        %1489 = vmatpush2.bf16.msra.mxu0 0
        %1490 = vmatprep.subr.bf16.mxu0 0
        %1491 = vmatpush2.bf16.msra.mxu0 0
        %1492 = vmatprep.subr.bf16.mxu0 0
        %1493 = vmatpush2.bf16.msra.mxu0 0
        %1494 = vmatprep.mubr.bf16.mxu0 0
        %1495 = vmatmul.mubr.bf16.gmra.mxu0 %v1457
        %v1496 = vpop.f32.mrf.mxu0
        %v1497 = vadd.f32 0.0, %v1496
        %v1498 = vpop.f32.mrf.mxu0
        %v1499 = vpop.f32.mrf.mxu0
        %v1500 = vpop.f32.mrf.mxu0
        %1501 = vdwg.mxu0
        %v1502 = vadd.f32 %v1441, %v1497
        %s1503 = scalar_lea.vmem %s3, 80
        %v1504 = vld [vmem:[%s1503] sm:$0xf]
        %v1505 = vrot.slane %v1448, 1
        %v1507 = vsel %vm421, %v1505, 0
        %v1510 = vsel %vm425, %v1504, 0
        %1512 = vmatprep.subr.bf16.mxu0 0
        %1513 = vmatpush1.bf16.msra.mxu0 0
        %1514 = vmatprep.subr.bf16.mxu0 0
        %1515 = vmatpush1.bf16.msra.mxu0 0
        %1516 = vmatprep.subr.bf16.mxu0 0
        %1517 = vmatpush1.bf16.msra.mxu0 0
        %1518 = vmatprep.subr.bf16.mxu0 0
        %1519 = vmatpush1.bf16.msra.mxu0 0
        %1520 = vmatprep.subr.bf16.mxu0 0
        %1521 = vmatpush1.bf16.msra.mxu0 0
        %1522 = vmatprep.subr.bf16.mxu0 0
        %1523 = vmatpush1.bf16.msra.mxu0 0
        %1524 = vmatprep.subr.bf16.mxu0 0
        %1525 = vmatpush1.bf16.msra.mxu0 0
        %1526 = vmatprep.subr.bf16.mxu0 0
        %1527 = vmatpush1.bf16.msra.mxu0 %v1510
        %1528 = vmatprep.subr.bf16.mxu0 0
        %1529 = vmatpush2.bf16.msra.mxu0 0
        %1530 = vmatprep.subr.bf16.mxu0 0
        %1531 = vmatpush2.bf16.msra.mxu0 0
        %1532 = vmatprep.subr.bf16.mxu0 0
        %1533 = vmatpush2.bf16.msra.mxu0 0
        %1534 = vmatprep.subr.bf16.mxu0 0
        %1535 = vmatpush2.bf16.msra.mxu0 0
        %1536 = vmatprep.subr.bf16.mxu0 0
        %1537 = vmatpush2.bf16.msra.mxu0 0
        %1538 = vmatprep.subr.bf16.mxu0 0
        %1539 = vmatpush2.bf16.msra.mxu0 0
        %1540 = vmatprep.subr.bf16.mxu0 0
        %1541 = vmatpush2.bf16.msra.mxu0 0
        %1542 = vmatprep.subr.bf16.mxu0 0
        %1543 = vmatpush2.bf16.msra.mxu0 0
        %1544 = vmatprep.mubr.bf16.mxu0 0
        %1545 = vmatmul.mubr.bf16.gmra.mxu0 %v1507
        %v1546 = vpop.f32.mrf.mxu0
        %v1547 = vadd.f32 0.0, %v1546
        %v1548 = vpop.f32.mrf.mxu0
        %v1549 = vpop.f32.mrf.mxu0
        %v1550 = vpop.f32.mrf.mxu0
        %1551 = vdwg.mxu0
        %v1552 = vadd.f32 %v1502, %v1547
        %s1553 = smul.addr %s566, 4
        %s1554 = scalar_lea.vmem %s372, %s1553
        %v1555 = vld [vmem:[%s1554] sm:$0xf]
        %v1556 = vld [vmem:[%s1554 + $0x4] sm:$0x1]
        %s1557 = scalar_lea.vmem %s3, 84
        %v1558 = vld [vmem:[%s1557] sm:$0xf]
        %v1560 = vsel %vm421, %v1555, 0
        %v1563 = vsel %vm425, %v1558, 0
        %1565 = vmatprep.subr.bf16.mxu0 0
        %1566 = vmatpush1.bf16.msra.mxu0 0
        %1567 = vmatprep.subr.bf16.mxu0 0
        %1568 = vmatpush1.bf16.msra.mxu0 0
        %1569 = vmatprep.subr.bf16.mxu0 0
        %1570 = vmatpush1.bf16.msra.mxu0 0
        %1571 = vmatprep.subr.bf16.mxu0 0
        %1572 = vmatpush1.bf16.msra.mxu0 0
        %1573 = vmatprep.subr.bf16.mxu0 0
        %1574 = vmatpush1.bf16.msra.mxu0 0
        %1575 = vmatprep.subr.bf16.mxu0 0
        %1576 = vmatpush1.bf16.msra.mxu0 0
        %1577 = vmatprep.subr.bf16.mxu0 0
        %1578 = vmatpush1.bf16.msra.mxu0 0
        %1579 = vmatprep.subr.bf16.mxu0 0
        %1580 = vmatpush1.bf16.msra.mxu0 %v1563
        %1581 = vmatprep.subr.bf16.mxu0 0
        %1582 = vmatpush2.bf16.msra.mxu0 0
        %1583 = vmatprep.subr.bf16.mxu0 0
        %1584 = vmatpush2.bf16.msra.mxu0 0
        %1585 = vmatprep.subr.bf16.mxu0 0
        %1586 = vmatpush2.bf16.msra.mxu0 0
        %1587 = vmatprep.subr.bf16.mxu0 0
        %1588 = vmatpush2.bf16.msra.mxu0 0
        %1589 = vmatprep.subr.bf16.mxu0 0
        %1590 = vmatpush2.bf16.msra.mxu0 0
        %1591 = vmatprep.subr.bf16.mxu0 0
        %1592 = vmatpush2.bf16.msra.mxu0 0
        %1593 = vmatprep.subr.bf16.mxu0 0
        %1594 = vmatpush2.bf16.msra.mxu0 0
        %1595 = vmatprep.subr.bf16.mxu0 0
        %1596 = vmatpush2.bf16.msra.mxu0 0
        %1597 = vmatprep.mubr.bf16.mxu0 0
        %1598 = vmatmul.mubr.bf16.gmra.mxu0 %v1560
        %v1599 = vpop.f32.mrf.mxu0
        %v1600 = vadd.f32 0.0, %v1599
        %v1601 = vpop.f32.mrf.mxu0
        %v1602 = vpop.f32.mrf.mxu0
        %v1603 = vpop.f32.mrf.mxu0
        %1604 = vdwg.mxu0
        %v1605 = vadd.f32 %v1552, %v1600
        %s1606 = scalar_lea.vmem %s3, 88
        %v1607 = vld [vmem:[%s1606] sm:$0xf]
        %v1610 = vunpack.c.l.b16 %v1555
        %v1611 = vunpack.c.l.b16 %v1556
        %v1612 = vpack.c.b16 %v1611, %v1610
        %v1614 = vshrl.u32 %v1612, 16
        %v1616 = vshll.u32 %v1612, 16
        %v1618 = vrot.slane %v1616, 1
        %v1619 = vor.u32 %v1614, %v1618
        %v1621 = vsel %vm421, %v1619, 0
        %v1624 = vsel %vm425, %v1607, 0
        %1626 = vmatprep.subr.bf16.mxu0 0
        %1627 = vmatpush1.bf16.msra.mxu0 0
        %1628 = vmatprep.subr.bf16.mxu0 0
        %1629 = vmatpush1.bf16.msra.mxu0 0
        %1630 = vmatprep.subr.bf16.mxu0 0
        %1631 = vmatpush1.bf16.msra.mxu0 0
        %1632 = vmatprep.subr.bf16.mxu0 0
        %1633 = vmatpush1.bf16.msra.mxu0 0
        %1634 = vmatprep.subr.bf16.mxu0 0
        %1635 = vmatpush1.bf16.msra.mxu0 0
        %1636 = vmatprep.subr.bf16.mxu0 0
        %1637 = vmatpush1.bf16.msra.mxu0 0
        %1638 = vmatprep.subr.bf16.mxu0 0
        %1639 = vmatpush1.bf16.msra.mxu0 0
        %1640 = vmatprep.subr.bf16.mxu0 0
        %1641 = vmatpush1.bf16.msra.mxu0 %v1624
        %1642 = vmatprep.subr.bf16.mxu0 0
        %1643 = vmatpush2.bf16.msra.mxu0 0
        %1644 = vmatprep.subr.bf16.mxu0 0
        %1645 = vmatpush2.bf16.msra.mxu0 0
        %1646 = vmatprep.subr.bf16.mxu0 0
        %1647 = vmatpush2.bf16.msra.mxu0 0
        %1648 = vmatprep.subr.bf16.mxu0 0
        %1649 = vmatpush2.bf16.msra.mxu0 0
        %1650 = vmatprep.subr.bf16.mxu0 0
        %1651 = vmatpush2.bf16.msra.mxu0 0
        %1652 = vmatprep.subr.bf16.mxu0 0
        %1653 = vmatpush2.bf16.msra.mxu0 0
        %1654 = vmatprep.subr.bf16.mxu0 0
        %1655 = vmatpush2.bf16.msra.mxu0 0
        %1656 = vmatprep.subr.bf16.mxu0 0
        %1657 = vmatpush2.bf16.msra.mxu0 0
        %1658 = vmatprep.mubr.bf16.mxu0 0
        %1659 = vmatmul.mubr.bf16.gmra.mxu0 %v1621
        %v1660 = vpop.f32.mrf.mxu0
        %v1661 = vadd.f32 0.0, %v1660
        %v1662 = vpop.f32.mrf.mxu0
        %v1663 = vpop.f32.mrf.mxu0
        %v1664 = vpop.f32.mrf.mxu0
        %1665 = vdwg.mxu0
        %v1666 = vadd.f32 %v1605, %v1661
        %s1667 = scalar_lea.vmem %s3, 92
        %v1668 = vld [vmem:[%s1667] sm:$0xf]
        %v1669 = vrot.slane %v1612, 1
        %v1671 = vsel %vm421, %v1669, 0
        %v1674 = vsel %vm425, %v1668, 0
        %1676 = vmatprep.subr.bf16.mxu0 0
        %1677 = vmatpush1.bf16.msra.mxu0 0
        %1678 = vmatprep.subr.bf16.mxu0 0
        %1679 = vmatpush1.bf16.msra.mxu0 0
        %1680 = vmatprep.subr.bf16.mxu0 0
        %1681 = vmatpush1.bf16.msra.mxu0 0
        %1682 = vmatprep.subr.bf16.mxu0 0
        %1683 = vmatpush1.bf16.msra.mxu0 0
        %1684 = vmatprep.subr.bf16.mxu0 0
        %1685 = vmatpush1.bf16.msra.mxu0 0
        %1686 = vmatprep.subr.bf16.mxu0 0
        %1687 = vmatpush1.bf16.msra.mxu0 0
        %1688 = vmatprep.subr.bf16.mxu0 0
        %1689 = vmatpush1.bf16.msra.mxu0 0
        %1690 = vmatprep.subr.bf16.mxu0 0
        %1691 = vmatpush1.bf16.msra.mxu0 %v1674
        %1692 = vmatprep.subr.bf16.mxu0 0
        %1693 = vmatpush2.bf16.msra.mxu0 0
        %1694 = vmatprep.subr.bf16.mxu0 0
        %1695 = vmatpush2.bf16.msra.mxu0 0
        %1696 = vmatprep.subr.bf16.mxu0 0
        %1697 = vmatpush2.bf16.msra.mxu0 0
        %1698 = vmatprep.subr.bf16.mxu0 0
        %1699 = vmatpush2.bf16.msra.mxu0 0
        %1700 = vmatprep.subr.bf16.mxu0 0
        %1701 = vmatpush2.bf16.msra.mxu0 0
        %1702 = vmatprep.subr.bf16.mxu0 0
        %1703 = vmatpush2.bf16.msra.mxu0 0
        %1704 = vmatprep.subr.bf16.mxu0 0
        %1705 = vmatpush2.bf16.msra.mxu0 0
        %1706 = vmatprep.subr.bf16.mxu0 0
        %1707 = vmatpush2.bf16.msra.mxu0 0
        %1708 = vmatprep.mubr.bf16.mxu0 0
        %1709 = vmatmul.mubr.bf16.gmra.mxu0 %v1671
        %v1710 = vpop.f32.mrf.mxu0
        %v1711 = vadd.f32 0.0, %v1710
        %v1712 = vpop.f32.mrf.mxu0
        %v1713 = vpop.f32.mrf.mxu0
        %v1714 = vpop.f32.mrf.mxu0
        %1715 = vdwg.mxu0
        %v1716 = vadd.f32 %v1666, %v1711
        %s1717 = smul.addr %s732, 4
        %s1718 = scalar_lea.vmem %s372, %s1717
        %v1719 = vld [vmem:[%s1718] sm:$0xf]
        %v1720 = vld [vmem:[%s1718 + $0x4] sm:$0x1]
        %s1721 = scalar_lea.vmem %s3, 96
        %v1722 = vld [vmem:[%s1721] sm:$0xf]
        %v1724 = vsel %vm421, %v1719, 0
        %v1727 = vsel %vm425, %v1722, 0
        %1729 = vmatprep.subr.bf16.mxu0 0
        %1730 = vmatpush1.bf16.msra.mxu0 0
        %1731 = vmatprep.subr.bf16.mxu0 0
        %1732 = vmatpush1.bf16.msra.mxu0 0
        %1733 = vmatprep.subr.bf16.mxu0 0
        %1734 = vmatpush1.bf16.msra.mxu0 0
        %1735 = vmatprep.subr.bf16.mxu0 0
        %1736 = vmatpush1.bf16.msra.mxu0 0
        %1737 = vmatprep.subr.bf16.mxu0 0
        %1738 = vmatpush1.bf16.msra.mxu0 0
        %1739 = vmatprep.subr.bf16.mxu0 0
        %1740 = vmatpush1.bf16.msra.mxu0 0
        %1741 = vmatprep.subr.bf16.mxu0 0
        %1742 = vmatpush1.bf16.msra.mxu0 0
        %1743 = vmatprep.subr.bf16.mxu0 0
        %1744 = vmatpush1.bf16.msra.mxu0 %v1727
        %1745 = vmatprep.subr.bf16.mxu0 0
        %1746 = vmatpush2.bf16.msra.mxu0 0
        %1747 = vmatprep.subr.bf16.mxu0 0
        %1748 = vmatpush2.bf16.msra.mxu0 0
        %1749 = vmatprep.subr.bf16.mxu0 0
        %1750 = vmatpush2.bf16.msra.mxu0 0
        %1751 = vmatprep.subr.bf16.mxu0 0
        %1752 = vmatpush2.bf16.msra.mxu0 0
        %1753 = vmatprep.subr.bf16.mxu0 0
        %1754 = vmatpush2.bf16.msra.mxu0 0
        %1755 = vmatprep.subr.bf16.mxu0 0
        %1756 = vmatpush2.bf16.msra.mxu0 0
        %1757 = vmatprep.subr.bf16.mxu0 0
        %1758 = vmatpush2.bf16.msra.mxu0 0
        %1759 = vmatprep.subr.bf16.mxu0 0
        %1760 = vmatpush2.bf16.msra.mxu0 0
        %1761 = vmatprep.mubr.bf16.mxu0 0
        %1762 = vmatmul.mubr.bf16.gmra.mxu0 %v1724
        %v1763 = vpop.f32.mrf.mxu0
        %v1764 = vadd.f32 0.0, %v1763
        %v1765 = vpop.f32.mrf.mxu0
        %v1766 = vpop.f32.mrf.mxu0
        %v1767 = vpop.f32.mrf.mxu0
        %1768 = vdwg.mxu0
        %v1769 = vadd.f32 %v1716, %v1764
        %s1770 = scalar_lea.vmem %s3, 100
        %v1771 = vld [vmem:[%s1770] sm:$0xf]
        %v1774 = vunpack.c.l.b16 %v1719
        %v1775 = vunpack.c.l.b16 %v1720
        %v1776 = vpack.c.b16 %v1775, %v1774
        %v1778 = vshrl.u32 %v1776, 16
        %v1780 = vshll.u32 %v1776, 16
        %v1782 = vrot.slane %v1780, 1
        %v1783 = vor.u32 %v1778, %v1782
        %v1785 = vsel %vm421, %v1783, 0
        %v1788 = vsel %vm425, %v1771, 0
        %1790 = vmatprep.subr.bf16.mxu0 0
        %1791 = vmatpush1.bf16.msra.mxu0 0
        %1792 = vmatprep.subr.bf16.mxu0 0
        %1793 = vmatpush1.bf16.msra.mxu0 0
        %1794 = vmatprep.subr.bf16.mxu0 0
        %1795 = vmatpush1.bf16.msra.mxu0 0
        %1796 = vmatprep.subr.bf16.mxu0 0
        %1797 = vmatpush1.bf16.msra.mxu0 0
        %1798 = vmatprep.subr.bf16.mxu0 0
        %1799 = vmatpush1.bf16.msra.mxu0 0
        %1800 = vmatprep.subr.bf16.mxu0 0
        %1801 = vmatpush1.bf16.msra.mxu0 0
        %1802 = vmatprep.subr.bf16.mxu0 0
        %1803 = vmatpush1.bf16.msra.mxu0 0
        %1804 = vmatprep.subr.bf16.mxu0 0
        %1805 = vmatpush1.bf16.msra.mxu0 %v1788
        %1806 = vmatprep.subr.bf16.mxu0 0
        %1807 = vmatpush2.bf16.msra.mxu0 0
        %1808 = vmatprep.subr.bf16.mxu0 0
        %1809 = vmatpush2.bf16.msra.mxu0 0
        %1810 = vmatprep.subr.bf16.mxu0 0
        %1811 = vmatpush2.bf16.msra.mxu0 0
        %1812 = vmatprep.subr.bf16.mxu0 0
        %1813 = vmatpush2.bf16.msra.mxu0 0
        %1814 = vmatprep.subr.bf16.mxu0 0
        %1815 = vmatpush2.bf16.msra.mxu0 0
        %1816 = vmatprep.subr.bf16.mxu0 0
        %1817 = vmatpush2.bf16.msra.mxu0 0
        %1818 = vmatprep.subr.bf16.mxu0 0
        %1819 = vmatpush2.bf16.msra.mxu0 0
        %1820 = vmatprep.subr.bf16.mxu0 0
        %1821 = vmatpush2.bf16.msra.mxu0 0
        %1822 = vmatprep.mubr.bf16.mxu0 0
        %1823 = vmatmul.mubr.bf16.gmra.mxu0 %v1785
        %v1824 = vpop.f32.mrf.mxu0
        %v1825 = vadd.f32 0.0, %v1824
        %v1826 = vpop.f32.mrf.mxu0
        %v1827 = vpop.f32.mrf.mxu0
        %v1828 = vpop.f32.mrf.mxu0
        %1829 = vdwg.mxu0
        %v1830 = vadd.f32 %v1769, %v1825
        %s1831 = scalar_lea.vmem %s3, 104
        %v1832 = vld [vmem:[%s1831] sm:$0xf]
        %v1833 = vrot.slane %v1776, 1
        %v1835 = vsel %vm421, %v1833, 0
        %v1838 = vsel %vm425, %v1832, 0
        %1840 = vmatprep.subr.bf16.mxu0 0
        %1841 = vmatpush1.bf16.msra.mxu0 0
        %1842 = vmatprep.subr.bf16.mxu0 0
        %1843 = vmatpush1.bf16.msra.mxu0 0
        %1844 = vmatprep.subr.bf16.mxu0 0
        %1845 = vmatpush1.bf16.msra.mxu0 0
        %1846 = vmatprep.subr.bf16.mxu0 0
        %1847 = vmatpush1.bf16.msra.mxu0 0
        %1848 = vmatprep.subr.bf16.mxu0 0
        %1849 = vmatpush1.bf16.msra.mxu0 0
        %1850 = vmatprep.subr.bf16.mxu0 0
        %1851 = vmatpush1.bf16.msra.mxu0 0
        %1852 = vmatprep.subr.bf16.mxu0 0
        %1853 = vmatpush1.bf16.msra.mxu0 0
        %1854 = vmatprep.subr.bf16.mxu0 0
        %1855 = vmatpush1.bf16.msra.mxu0 %v1838
        %1856 = vmatprep.subr.bf16.mxu0 0
        %1857 = vmatpush2.bf16.msra.mxu0 0
        %1858 = vmatprep.subr.bf16.mxu0 0
        %1859 = vmatpush2.bf16.msra.mxu0 0
        %1860 = vmatprep.subr.bf16.mxu0 0
        %1861 = vmatpush2.bf16.msra.mxu0 0
        %1862 = vmatprep.subr.bf16.mxu0 0
        %1863 = vmatpush2.bf16.msra.mxu0 0
        %1864 = vmatprep.subr.bf16.mxu0 0
        %1865 = vmatpush2.bf16.msra.mxu0 0
        %1866 = vmatprep.subr.bf16.mxu0 0
        %1867 = vmatpush2.bf16.msra.mxu0 0
        %1868 = vmatprep.subr.bf16.mxu0 0
        %1869 = vmatpush2.bf16.msra.mxu0 0
        %1870 = vmatprep.subr.bf16.mxu0 0
        %1871 = vmatpush2.bf16.msra.mxu0 0
        %1872 = vmatprep.mubr.bf16.mxu0 0
        %1873 = vmatmul.mubr.bf16.gmra.mxu0 %v1835
        %v1874 = vpop.f32.mrf.mxu0
        %v1875 = vadd.f32 0.0, %v1874
        %v1876 = vpop.f32.mrf.mxu0
        %v1877 = vpop.f32.mrf.mxu0
        %v1878 = vpop.f32.mrf.mxu0
        %1879 = vdwg.mxu0
        %v1880 = vadd.f32 %v1830, %v1875
        %v1882 = vlaneseq
        %v1883 = vshrl.u32 %v1882, 7
        %v1884 = vsub.s32 0, %v1883
        %v1885 = vrot.slane %v392, %v1884
        %v1887 = vadd.f32 %v1880, %v1885
        %v1888 = vpack.c.bf16 %v1887, %v1887
        %s1889 = smul.addr %s394, 4
        %s1890 = scalar_lea.vmem %s382, %s1889
        %vm1891 = vcmask 27648
        %1892 = vst.msk [vmem:[%s1890] sm:$0xf] %vm1891, %v1888
        %vm1893 = vcmask 31744
        %v1894 = vsel %vm1893, %v1887, 0.0
        %v1895 = vrot.slane %v1894, 4
        %v1896 = vadd.f32 %v1894, %v1895
        %v1897 = vrot.slane %v1896, 2
        %v1898 = vadd.f32 %v1896, %v1897
        %v1899 = vrot.slane %v1898, 1
        %v1900 = vadd.f32 %v1898, %v1899
        %v1901 = vadd.f32 %v399, %v1900
        %v1902 = vmul.f32 %v1887, %v1887
        %v1903 = vsel %vm1893, %v1902, 0.0
        %v1904 = vrot.slane %v1903, 4
        %v1905 = vadd.f32 %v1903, %v1904
        %v1906 = vrot.slane %v1905, 2
        %v1907 = vadd.f32 %v1905, %v1906
        %v1908 = vrot.slane %v1907, 1
        %v1909 = vadd.f32 %v1907, %v1908
        %v1910 = vadd.f32 %v400, %v1909
      $region45: #{decode_block_forward.22} parent=39 // loop_footer
        %s398 = sadd.s32 1, %s394
      $region46: #{decode_block_forward.22} parent=39 // loop_footer_branch
        %393 = sbr.rel target = $region42
      $region47: #{decode_block_forward.22} parent=39 // loop_exit
        _
      %vm1911 = vcmask 24576
      %1912 = vst.msk [vmem:[%s390] sm:$0x1] %vm1911, %v399
      %1913 = vst.msk [vmem:[%s390 + $0x1] sm:$0x1] %vm1911, %v400
      %p1914 = scmp.lt.s32.totalorder %s22, 1
      %s1915 = scalar_select %p1914, %s22, 1
      %p1916 = scmp.lt.s32.totalorder %s23, 7
      %s1917 = scalar_select %p1916, %s23, 7
      %s1918 = smul.addr %s1917, 8
      %s1919 = smul.addr %s1915, 64
      %s1920 = sadd.s32 %s1918, %s1919
      %s1921 = smul.addr %s1920, 4
      %s1922 = scalar_lea.vmem %s5, %s1921
      %p1923 = scmp.lt.s32.totalorder %s22, 1
      %s1924 = scalar_select %p1923, %s22, 1
      %p1925 = scmp.lt.s32.totalorder %s23, 7
      %s1926 = scalar_select %p1925, %s23, 7
      %s1927 = smul.addr %s1924, 8
      %s1928 = sadd.s32 %s1926, %s1927
      %s1929 = smul.addr %s1928, 2
      %s1930 = scalar_lea.vmem %s6, %s1929
      // Predicated region
      $region48: #{decode_block_forward.22} parent=39 // pred_check
        %p1931 = pneg %p180
      $region49: #{decode_block_forward.22} parent=39 // pred_check_branch
        %1933 = sbr.rel (%p1931) target = $region51
      $region50: #{decode_block_forward.22} parent=39 // pred_region
        _
      $region51: #{decode_block_forward.22} parent=39 // pred_fallthru
        _
      // Predicated region
      $region52: #{decode_block_forward.22} parent=39 // pred_check
        %p1934 = pneg %p208
      $region53: #{decode_block_forward.22} parent=39 // pred_check_branch
        %1936 = sbr.rel (%p1934) target = $region55
      $region54: #{decode_block_forward.22} parent=39 // pred_region
        _
      $region55: #{decode_block_forward.22} parent=39 // pred_fallthru
        _
    $region40: #{decode_block_forward.22} parent=5 // pred_fallthru
      _
    %p1937 = scmp.le.s32.totalorder 2, %s13
    // Predicated region
    $region56: #{decode_block_forward.22} parent=5 // pred_check
      %p1938 = pneg %p1937
    $region57: #{decode_block_forward.22} parent=5 // pred_check_branch
      %1940 = sbr.rel (%p1938) target = $region59
    $region58: #{decode_block_forward.22} parent=5 // pred_region
      %s1941 = ssub.s32 %s13, 2
      // Predicated region
      $region60: #{decode_block_forward.22} parent=58 // pred_check
        %p1942 = pneg %p186
      $region61: #{decode_block_forward.22} parent=58 // pred_check_branch
        %1944 = sbr.rel (%p1942) target = $region63
      $region62: #{decode_block_forward.22} parent=58 // pred_region
        %p1945 = scmp.lt.s32.totalorder %s24, 1
        %s1946 = scalar_select %p1945, %s24, 1
        %p1947 = scmp.lt.s32.totalorder %s25, 7
        %s1948 = scalar_select %p1947, %s25, 7
        %s1949 = smul.addr %s1948, 8
        %s1950 = smul.addr %s1946, 64
        %s1951 = sadd.s32 %s1949, %s1950
        %s1952 = smul.addr %s1951, 4
        %s1953 = scalar_lea.vmem %s5, %s1952
      $region63: #{decode_block_forward.22} parent=58 // pred_fallthru
        _
      // Predicated region
      $region64: #{decode_block_forward.22} parent=58 // pred_check
        %p1954 = pneg %p214
      $region65: #{decode_block_forward.22} parent=58 // pred_check_branch
        %1956 = sbr.rel (%p1954) target = $region67
      $region66: #{decode_block_forward.22} parent=58 // pred_region
        %p1957 = scmp.lt.s32.totalorder %s24, 1
        %s1958 = scalar_select %p1957, %s24, 1
        %p1959 = scmp.lt.s32.totalorder %s25, 7
        %s1960 = scalar_select %p1959, %s25, 7
        %s1961 = smul.addr %s1958, 8
        %s1962 = sadd.s32 %s1960, %s1961
        %s1963 = smul.addr %s1962, 2
        %s1964 = scalar_lea.vmem %s6, %s1963
      $region67: #{decode_block_forward.22} parent=58 // pred_fallthru
        _
    $region59: #{decode_block_forward.22} parent=5 // pred_fallthru
      _
  $region6: #{decode_block_forward.22} parent=0 // loop_footer
    %s17 = sadd.s32 1, %s13
  $region7: #{decode_block_forward.22} parent=0 // loop_footer_branch
    %12 = sbr.rel target = $region3
  $region8: #{decode_block_forward.22} parent=0 // loop_exit
    _

</llo_original>
